<compile_context>
chip_gen: v5e
topology: v5e:2x2
jax: 0.10.0
libtpu: 0.0.40
codegen_flags: <defaults>
</compile_context>

<pallas_src>
import jax
import jax.numpy as jnp
from jax.experimental import pallas as pl

# ----------------------------- configuration --------------------------------
BATCH = 2
IN_CHANNELS = 3
IMG = 16
PATCH = 4
NUM_PATCHES = (IMG // PATCH) ** 2          # 16
EMBED = 32
NUM_HEADS = 4
HEAD_DIM = EMBED // NUM_HEADS              # 8
NUM_ENCODERS = 2
NUM_CLASSES = 10
FFN = 2048                                 # nn.TransformerEncoderLayer default
SEQ = NUM_PATCHES + 1                      # 17
SEQ_PAD = 24                               # next multiple of 8 (sublane tile)
LN_EPS = 1e-5
CPP = IN_CHANNELS * PATCH * PATCH          # 48 pixels per patch
AUG_COLS = 56                              # 48 px + bias flag + cls flag + pad
QKV_PAD = 128                              # fused q|k|v (96) padded to 128 lanes
PER_LAYER = 12                             # arrays per encoder layer


# ------------------------------ fused kernel ---------------------------------
def vit_kernel(*refs):
    out_ref = refs[-1]
    patches_ref, w_emb_ref, pos_ref = refs[:3]
    n_layer_refs = NUM_ENCODERS * PER_LAYER
    layer_refs = refs[3:3 + n_layer_refs]
    hln_w, hln_b, hw, hb = refs[3 + n_layer_refs:-1]

    f32 = jnp.float32
    bf16 = jnp.bfloat16

    def layer_norm(v, w, b):
        mu = jnp.mean(v, axis=-1, keepdims=True)
        var = jnp.mean((v - mu) ** 2, axis=-1, keepdims=True)
        return (v - mu) * jax.lax.rsqrt(var + LN_EPS) * w + b

    # Patch embedding + conv bias + cls token via ONE augmented matmul (f32,
    # negligible FLOPs), then position embeddings broadcast in-kernel.
    emb = jnp.dot(patches_ref[...], w_emb_ref[...],
                  preferred_element_type=f32)                    # (B*SP, E)
    x = (emb.reshape(BATCH, SEQ_PAD, EMBED)
         + pos_ref[...]).reshape(BATCH * SEQ_PAD, EMBED)

    # Additive key mask generated in-kernel: 0 for real keys, -1e30 for pads.
    col = jax.lax.broadcasted_iota(jnp.int32, (SEQ_PAD, SEQ_PAD), 1)
    mask = jnp.where(col < SEQ, 0.0, -1e30).astype(f32)          # (SP, SP)

    scale = 1.0 / (HEAD_DIM ** 0.5)

    for layer in range(NUM_ENCODERS):
        (ln1_w, ln1_b, wqkv, bqkv, wo, bo,
         ln2_w, ln2_b, w1, b1, w2, b2) = layer_refs[
            layer * PER_LAYER:(layer + 1) * PER_LAYER]

        # ---- self-attention block:  x = x + SA(LN1(x)) ----
        xn = layer_norm(x, ln1_w[...], ln1_b[...])               # (B*SP, E) f32
        # One fused, lane-dense QKV projection (output padded to 128 lanes).
        qkv = jnp.dot(xn.astype(bf16), wqkv[...],
                      preferred_element_type=f32) + bqkv[...]    # (B*SP, 128)

        ctx_heads = []
        for h in range(NUM_HEADS):
            qh = qkv[:, h * HEAD_DIM:(h + 1) * HEAD_DIM]
            kh = qkv[:, EMBED + h * HEAD_DIM:EMBED + (h + 1) * HEAD_DIM]
            vh = qkv[:, 2 * EMBED + h * HEAD_DIM:2 * EMBED + (h + 1) * HEAD_DIM]
            qh = qh.reshape(BATCH, SEQ_PAD, HEAD_DIM)
            kh = kh.reshape(BATCH, SEQ_PAD, HEAD_DIM)
            vh = vh.reshape(BATCH, SEQ_PAD, HEAD_DIM)

            s = jnp.einsum("bqd,bkd->bqk",
                           qh.astype(bf16), kh.astype(bf16),
                           preferred_element_type=f32) * scale + mask
            p = jnp.exp(s - jnp.max(s, axis=-1, keepdims=True))   # f32 softmax
            p = p * pl.reciprocal(jnp.sum(p, axis=-1, keepdims=True),
                                  approx=True)
            ch = jnp.einsum("bqk,bkd->bqd",
                            p.astype(bf16), vh.astype(bf16),
                            preferred_element_type=f32)           # (B, SP, Dh)
            ctx_heads.append(ch.reshape(BATCH * SEQ_PAD, HEAD_DIM))

        # Head merge = small lane concat; output projection = ONE (48,32)@(32,32).
        ctx = jnp.concatenate(ctx_heads, axis=-1)                # (B*SP, E)
        x = x + jnp.dot(ctx.astype(bf16), wo[...],
                        preferred_element_type=f32) + bo[...]

        # ---- feed-forward block:  x = x + FF(LN2(x)) ----
        xn2 = layer_norm(x, ln2_w[...], ln2_b[...])
        hdn = jnp.dot(xn2.astype(bf16), w1[...],
                      preferred_element_type=f32) + b1[...]
        hdn = jnp.maximum(hdn, 0.0)                              # relu (f32)
        x = x + jnp.dot(hdn.astype(bf16), w2[...],
                        preferred_element_type=f32) + b2[...]

    # ---- classifier head on x[:, 0, :] (first patch token, as in the spec) --
    tok = x.reshape(BATCH, SEQ_PAD, EMBED)[:, 0, :]              # static slice
    tn = layer_norm(tok, hln_w[...], hln_b[...])
    out_ref[...] = (jnp.dot(tn.astype(bf16), hw[...],
                            preferred_element_type=f32) + hb[...])


# -------------------- constant weight packing (ONCE, not per call) -----------
def _pack_layer(lp):
    E = EMBED
    wi, bi = lp["in_proj_w"], lp["in_proj_b"]
    # Fused q|k|v weight: (E_in, 3E) padded to (E_in, 128); output columns are
    # naturally head-major (col = h*Dh + d), matching torch's head split.
    wqkv = jnp.concatenate(
        [wi[:E].T, wi[E:2 * E].T, wi[2 * E:].T,
         jnp.zeros((E, QKV_PAD - 3 * E), jnp.float32)], axis=1).astype(jnp.bfloat16)
    bqkv = jnp.concatenate(
        [bi, jnp.zeros((QKV_PAD - 3 * E,), jnp.float32)]).reshape(1, QKV_PAD)
    return [
        lp["ln1_w"].reshape(1, E), lp["ln1_b"].reshape(1, E),
        wqkv, bqkv,
        lp["out_proj_w"].T.astype(jnp.bfloat16), lp["out_proj_b"].reshape(1, E),
        lp["ln2_w"].reshape(1, E), lp["ln2_b"].reshape(1, E),
        lp["lin1_w"].T.astype(jnp.bfloat16), lp["lin1_b"].reshape(1, FFN),
        lp["lin2_w"].T.astype(jnp.bfloat16), lp["lin2_b"].reshape(1, E),
    ]


def pack_params(params):
    """Build every batch-invariant kernel input once (bf16 matmul weights)."""
    E = EMBED
    # Augmented embedding matrix: [conv_w.T ; conv_bias row ; cls row ; zeros].
    w_emb_aug = jnp.concatenate(
        [params["conv_w"].reshape(E, CPP).T,                     # (CPP, E)
         params["conv_b"].reshape(1, E),
         params["cls_token"].reshape(1, E),
         jnp.zeros((AUG_COLS - CPP - 2, E), jnp.float32)], axis=0)
    pos_pad = jnp.concatenate(
        [params["pos_emb"].reshape(SEQ, E),
         jnp.zeros((SEQ_PAD - SEQ, E), jnp.float32)], axis=0)    # (SP, E)

    packed = [w_emb_aug, pos_pad]
    for lp in params["layers"]:
        packed += _pack_layer(lp)
    packed += [params["head_ln_w"].reshape(1, E),
               params["head_ln_b"].reshape(1, E),
               params["head_w"].T.astype(jnp.bfloat16),
               params["head_b"].reshape(1, NUM_CLASSES)]
    return packed


# --------------------------------- forward ------------------------------------
def vit_forward(x, packed):
    B, C, H, W = x.shape
    assert B == BATCH and C == IN_CHANNELS and H == IMG and W == IMG
    p = PATCH
    Hp, Wp = H // p, W // p
    P = Hp * Wp

    # Input-dependent glue only: patch pixel rearrangement + indicator columns.
    patches = (x.reshape(B, C, Hp, p, Wp, p)
                 .transpose(0, 2, 4, 1, 3, 5)                    # (B,Hp,Wp,C,p,p)
                 .reshape(B, P, CPP))
    patch_block = jnp.concatenate(
        [patches,
         jnp.ones((B, P, 1), jnp.float32),                       # conv-bias flag
         jnp.zeros((B, P, AUG_COLS - CPP - 1), jnp.float32)],    # cls flag + pad
        axis=-1)
    cls_block = jnp.zeros((B, 1, AUG_COLS), jnp.float32).at[:, :, CPP + 1].set(1.0)
    pad_block = jnp.zeros((B, SEQ_PAD - SEQ, AUG_COLS), jnp.float32)
    patches_aug = jnp.concatenate([patch_block, cls_block, pad_block],
                                  axis=1).reshape(B * SEQ_PAD, AUG_COLS)

    return pl.pallas_call(
        vit_kernel,
        out_shape=jax.ShapeDtypeStruct((B, NUM_CLASSES), jnp.float32),
    )(patches_aug, *packed)


# --------------------------- parameter construction --------------------------
def make_params(key):
    def nrm(k, shape, scale=0.02):
        return scale * jax.random.normal(k, shape, jnp.float32)

    keys = iter(jax.random.split(key, 64))
    params = {
        "conv_w": nrm(next(keys), (EMBED, IN_CHANNELS, PATCH, PATCH), 0.1),
        "conv_b": nrm(next(keys), (EMBED,), 0.1),
        "cls_token": jax.random.normal(next(keys), (1, 1, EMBED), jnp.float32),
        "pos_emb": jax.random.normal(next(keys), (1, SEQ, EMBED), jnp.float32) * 0.1,
        "head_ln_w": jnp.ones((EMBED,), jnp.float32),
        "head_ln_b": jnp.zeros((EMBED,), jnp.float32),
        "head_w": nrm(next(keys), (NUM_CLASSES, EMBED), 0.05),
        "head_b": nrm(next(keys), (NUM_CLASSES,), 0.05),
        "layers": [],
    }
    for _ in range(NUM_ENCODERS):
        params["layers"].append({
            "ln1_w": jnp.ones((EMBED,), jnp.float32),
            "ln1_b": jnp.zeros((EMBED,), jnp.float32),
            "in_proj_w": nrm(next(keys), (3 * EMBED, EMBED), 0.05),
            "in_proj_b": nrm(next(keys), (3 * EMBED,), 0.02),
            "out_proj_w": nrm(next(keys), (EMBED, EMBED), 0.05),
            "out_proj_b": nrm(next(keys), (EMBED,), 0.02),
            "ln2_w": jnp.ones((EMBED,), jnp.float32),
            "ln2_b": jnp.zeros((EMBED,), jnp.float32),
            "lin1_w": nrm(next(keys), (FFN, EMBED), 0.02),
            "lin1_b": nrm(next(keys), (FFN,), 0.02),
            "lin2_w": nrm(next(keys), (EMBED, FFN), 0.02),
            "lin2_b": nrm(next(keys), (EMBED,), 0.02),
        })
    return params


# ---------------------------------- main --------------------------------------
if __name__ == "__main__":
    key = jax.random.PRNGKey(0)
    k_param, k_x = jax.random.split(key)
    params = make_params(k_param)
    packed = pack_params(params)                 # one-time constant packing
    x = jax.random.normal(k_x, (BATCH, IN_CHANNELS, IMG, IMG), jnp.float32)

    fwd = jax.jit(vit_forward)
    out = jax.block_until_ready(fwd(x, packed))
    assert out.shape == (BATCH, NUM_CLASSES), out.shape
    assert bool(jnp.all(jnp.isfinite(out)))
    print("KERNEL_OK")
</pallas_src>

<mosaic_0001>
module attributes {stable_mosaic.version = 11 : i64} {
  func.func @vit_kernel(%arg0: memref<48x56xf32, #tpu.memory_space<vmem>>, %arg1: memref<56x32xf32, #tpu.memory_space<vmem>>, %arg2: memref<24x32xf32, #tpu.memory_space<vmem>>, %arg3: memref<1x32xf32, #tpu.memory_space<vmem>>, %arg4: memref<1x32xf32, #tpu.memory_space<vmem>>, %arg5: memref<32x128xbf16, #tpu.memory_space<vmem>>, %arg6: memref<1x128xf32, #tpu.memory_space<vmem>>, %arg7: memref<32x32xbf16, #tpu.memory_space<vmem>>, %arg8: memref<1x32xf32, #tpu.memory_space<vmem>>, %arg9: memref<1x32xf32, #tpu.memory_space<vmem>>, %arg10: memref<1x32xf32, #tpu.memory_space<vmem>>, %arg11: memref<32x2048xbf16, #tpu.memory_space<vmem>>, %arg12: memref<1x2048xf32, #tpu.memory_space<vmem>>, %arg13: memref<2048x32xbf16, #tpu.memory_space<vmem>>, %arg14: memref<1x32xf32, #tpu.memory_space<vmem>>, %arg15: memref<1x32xf32, #tpu.memory_space<vmem>>, %arg16: memref<1x32xf32, #tpu.memory_space<vmem>>, %arg17: memref<32x128xbf16, #tpu.memory_space<vmem>>, %arg18: memref<1x128xf32, #tpu.memory_space<vmem>>, %arg19: memref<32x32xbf16, #tpu.memory_space<vmem>>, %arg20: memref<1x32xf32, #tpu.memory_space<vmem>>, %arg21: memref<1x32xf32, #tpu.memory_space<vmem>>, %arg22: memref<1x32xf32, #tpu.memory_space<vmem>>, %arg23: memref<32x2048xbf16, #tpu.memory_space<vmem>>, %arg24: memref<1x2048xf32, #tpu.memory_space<vmem>>, %arg25: memref<2048x32xbf16, #tpu.memory_space<vmem>>, %arg26: memref<1x32xf32, #tpu.memory_space<vmem>>, %arg27: memref<1x32xf32, #tpu.memory_space<vmem>>, %arg28: memref<1x32xf32, #tpu.memory_space<vmem>>, %arg29: memref<32x10xbf16, #tpu.memory_space<vmem>>, %arg30: memref<1x10xf32, #tpu.memory_space<vmem>>, %arg31: memref<2x10xf32, #tpu.memory_space<vmem>>) attributes {dimension_semantics = [], scalar_prefetch = 0 : i64, scratch_operands = 0 : i64, tpu.core_type = #tpu.core_type<tc>} {
    %c0 = arith.constant 0 : index
    %c0_0 = arith.constant 0 : index
    %0 = vector.load %arg0[%c0, %c0_0] : memref<48x56xf32, #tpu.memory_space<vmem>>, vector<48x56xf32>
    %c0_1 = arith.constant 0 : index
    %c0_2 = arith.constant 0 : index
    %1 = vector.load %arg1[%c0_1, %c0_2] : memref<56x32xf32, #tpu.memory_space<vmem>>, vector<56x32xf32>
    %cst = arith.constant dense<0.000000e+00> : vector<48x32xf32>
    %2 = tpu.matmul %0, %1, %cst {dimension_numbers = #tpu.dot_dimension_numbers<[1], [0], [0], [1], [0, 0, 1, 1], [], []>} : vector<48x56xf32>, vector<56x32xf32>, vector<48x32xf32> -> vector<48x32xf32>
    %3 = vector.shape_cast %2 : vector<48x32xf32> to vector<2x24x32xf32>
    %c0_3 = arith.constant 0 : index
    %c0_4 = arith.constant 0 : index
    %4 = vector.load %arg2[%c0_3, %c0_4] : memref<24x32xf32, #tpu.memory_space<vmem>>, vector<24x32xf32>
    %5 = vector.shape_cast %4 : vector<24x32xf32> to vector<1x24x32xf32>
    %6 = vector.broadcast %5 : vector<1x24x32xf32> to vector<2x24x32xf32>
    %7 = arith.addf %3, %6 : vector<2x24x32xf32>
    %8 = vector.shape_cast %7 : vector<2x24x32xf32> to vector<48x32xf32>
    %9 = tpu.iota {dimensions = array<i32: 1>} : vector<24x24xi32>
    %c17_i32 = arith.constant 17 : i32
    %10 = vector.broadcast %c17_i32 : i32 to vector<24x24xi32>
    %11 = arith.cmpi slt, %9, %10 : vector<24x24xi32>
    %cst_5 = arith.constant 0.000000e+00 : f32
    %cst_6 = arith.constant -1.000000e+30 : f32
    %12 = vector.broadcast %cst_5 : f32 to vector<24x24xf32>
    %13 = vector.broadcast %cst_6 : f32 to vector<24x24xf32>
    %14 = arith.select %11, %12, %13 : vector<24x24xi1>, vector<24x24xf32>
    %c0_7 = arith.constant 0 : index
    %c0_8 = arith.constant 0 : index
    %15 = vector.load %arg3[%c0_7, %c0_8] : memref<1x32xf32, #tpu.memory_space<vmem>>, vector<1x32xf32>
    %c0_9 = arith.constant 0 : index
    %c0_10 = arith.constant 0 : index
    %16 = vector.load %arg4[%c0_9, %c0_10] : memref<1x32xf32, #tpu.memory_space<vmem>>, vector<1x32xf32>
    %cst_11 = arith.constant dense<0.000000e+00> : vector<48xf32>
    %17 = vector.multi_reduction <add>, %8, %cst_11 [1] : vector<48x32xf32> to vector<48xf32>
    %18 = vector.shape_cast %17 : vector<48xf32> to vector<48x1xf32>
    %cst_12 = arith.constant 3.200000e+01 : f32
    %19 = vector.broadcast %cst_12 : f32 to vector<48x1xf32>
    %20 = arith.divf %18, %19 : vector<48x1xf32>
    %21 = vector.broadcast %20 : vector<48x1xf32> to vector<48x32xf32>
    %22 = arith.subf %8, %21 : vector<48x32xf32>
    %23 = arith.mulf %22, %22 : vector<48x32xf32>
    %cst_13 = arith.constant dense<0.000000e+00> : vector<48xf32>
    %24 = vector.multi_reduction <add>, %23, %cst_13 [1] : vector<48x32xf32> to vector<48xf32>
    %25 = vector.shape_cast %24 : vector<48xf32> to vector<48x1xf32>
    %cst_14 = arith.constant 3.200000e+01 : f32
    %26 = vector.broadcast %cst_14 : f32 to vector<48x1xf32>
    %27 = arith.divf %25, %26 : vector<48x1xf32>
    %28 = vector.broadcast %20 : vector<48x1xf32> to vector<48x32xf32>
    %29 = arith.subf %8, %28 : vector<48x32xf32>
    %cst_15 = arith.constant 9.99999974E-6 : f32
    %30 = vector.broadcast %cst_15 : f32 to vector<48x1xf32>
    %31 = arith.addf %27, %30 : vector<48x1xf32>
    %32 = math.rsqrt %31 : vector<48x1xf32>
    %33 = vector.broadcast %32 : vector<48x1xf32> to vector<48x32xf32>
    %34 = arith.mulf %29, %33 : vector<48x32xf32>
    %35 = vector.broadcast %15 : vector<1x32xf32> to vector<48x32xf32>
    %36 = arith.mulf %34, %35 : vector<48x32xf32>
    %37 = vector.broadcast %16 : vector<1x32xf32> to vector<48x32xf32>
    %38 = arith.addf %36, %37 : vector<48x32xf32>
    %39 = arith.truncf %38 : vector<48x32xf32> to vector<48x32xbf16>
    %c0_16 = arith.constant 0 : index
    %c0_17 = arith.constant 0 : index
    %40 = vector.load %arg5[%c0_16, %c0_17] : memref<32x128xbf16, #tpu.memory_space<vmem>>, vector<32x128xbf16>
    %cst_18 = arith.constant dense<0.000000e+00> : vector<48x128xf32>
    %41 = tpu.matmul %39, %40, %cst_18 {dimension_numbers = #tpu.dot_dimension_numbers<[1], [0], [0], [1], [0, 0, 1, 1], [], []>} : vector<48x32xbf16>, vector<32x128xbf16>, vector<48x128xf32> -> vector<48x128xf32>
    %c0_19 = arith.constant 0 : index
    %c0_20 = arith.constant 0 : index
    %42 = vector.load %arg6[%c0_19, %c0_20] : memref<1x128xf32, #tpu.memory_space<vmem>>, vector<1x128xf32>
    %43 = vector.broadcast %42 : vector<1x128xf32> to vector<48x128xf32>
    %44 = arith.addf %41, %43 : vector<48x128xf32>
    %45 = vector.extract_strided_slice %44 {offsets = [0, 0], sizes = [48, 8], strides = [1, 1]} : vector<48x128xf32> to vector<48x8xf32>
    %46 = vector.extract_strided_slice %44 {offsets = [0, 32], sizes = [48, 8], strides = [1, 1]} : vector<48x128xf32> to vector<48x8xf32>
    %47 = vector.extract_strided_slice %44 {offsets = [0, 64], sizes = [48, 8], strides = [1, 1]} : vector<48x128xf32> to vector<48x8xf32>
    %48 = vector.shape_cast %45 : vector<48x8xf32> to vector<2x24x8xf32>
    %49 = vector.shape_cast %46 : vector<48x8xf32> to vector<2x24x8xf32>
    %50 = vector.shape_cast %47 : vector<48x8xf32> to vector<2x24x8xf32>
    %51 = arith.truncf %48 : vector<2x24x8xf32> to vector<2x24x8xbf16>
    %52 = arith.truncf %49 : vector<2x24x8xf32> to vector<2x24x8xbf16>
    "tpu.trace_start"() <{level = 10 : i32, message = "bqd,bkd->bqk"}> : () -> ()
    %cst_21 = arith.constant dense<0.000000e+00> : vector<2x24x24xf32>
    %53 = tpu.matmul %51, %52, %cst_21 {dimension_numbers = #tpu.dot_dimension_numbers<[2], [2], [1], [1], [0, 0, 0, 1, 1, 1], [0], [0]>} : vector<2x24x8xbf16>, vector<2x24x8xbf16>, vector<2x24x24xf32> -> vector<2x24x24xf32>
    "tpu.trace_stop"() : () -> ()
    %cst_22 = arith.constant 0.353553385 : f32
    %54 = vector.broadcast %cst_22 : f32 to vector<2x24x24xf32>
    %55 = arith.mulf %53, %54 : vector<2x24x24xf32>
    %56 = vector.shape_cast %14 : vector<24x24xf32> to vector<1x24x24xf32>
    %57 = vector.broadcast %56 : vector<1x24x24xf32> to vector<2x24x24xf32>
    %58 = arith.addf %55, %57 : vector<2x24x24xf32>
    %cst_23 = arith.constant dense<0xFF800000> : vector<2x24xf32>
    %59 = vector.multi_reduction <maximumf>, %58, %cst_23 [2] : vector<2x24x24xf32> to vector<2x24xf32>
    %60 = vector.shape_cast %59 : vector<2x24xf32> to vector<2x24x1xf32>
    %61 = vector.broadcast %60 : vector<2x24x1xf32> to vector<2x24x24xf32>
    %62 = arith.subf %58, %61 : vector<2x24x24xf32>
    %63 = math.exp %62 : vector<2x24x24xf32>
    %cst_24 = arith.constant dense<0.000000e+00> : vector<2x24xf32>
    %64 = vector.multi_reduction <add>, %63, %cst_24 [2] : vector<2x24x24xf32> to vector<2x24xf32>
    %65 = vector.shape_cast %64 : vector<2x24xf32> to vector<2x24x1xf32>
    %66 = tpu.reciprocal %65 {approx = true} : vector<2x24x1xf32> -> vector<2x24x1xf32>
    %67 = vector.broadcast %66 : vector<2x24x1xf32> to vector<2x24x24xf32>
    %68 = arith.mulf %63, %67 : vector<2x24x24xf32>
    %69 = arith.truncf %68 : vector<2x24x24xf32> to vector<2x24x24xbf16>
    %70 = arith.truncf %50 : vector<2x24x8xf32> to vector<2x24x8xbf16>
    "tpu.trace_start"() <{level = 10 : i32, message = "bqk,bkd->bqd"}> : () -> ()
    %cst_25 = arith.constant dense<0.000000e+00> : vector<2x24x8xf32>
    %71 = tpu.matmul %69, %70, %cst_25 {dimension_numbers = #tpu.dot_dimension_numbers<[2], [1], [1], [2], [0, 0, 0, 1, 1, 2], [0], [0]>} : vector<2x24x24xbf16>, vector<2x24x8xbf16>, vector<2x24x8xf32> -> vector<2x24x8xf32>
    "tpu.trace_stop"() : () -> ()
    %72 = vector.shape_cast %71 : vector<2x24x8xf32> to vector<48x8xf32>
    %73 = vector.extract_strided_slice %44 {offsets = [0, 8], sizes = [48, 8], strides = [1, 1]} : vector<48x128xf32> to vector<48x8xf32>
    %74 = vector.extract_strided_slice %44 {offsets = [0, 40], sizes = [48, 8], strides = [1, 1]} : vector<48x128xf32> to vector<48x8xf32>
    %75 = vector.extract_strided_slice %44 {offsets = [0, 72], sizes = [48, 8], strides = [1, 1]} : vector<48x128xf32> to vector<48x8xf32>
    %76 = vector.shape_cast %73 : vector<48x8xf32> to vector<2x24x8xf32>
    %77 = vector.shape_cast %74 : vector<48x8xf32> to vector<2x24x8xf32>
    %78 = vector.shape_cast %75 : vector<48x8xf32> to vector<2x24x8xf32>
    %79 = arith.truncf %76 : vector<2x24x8xf32> to vector<2x24x8xbf16>
    %80 = arith.truncf %77 : vector<2x24x8xf32> to vector<2x24x8xbf16>
    "tpu.trace_start"() <{level = 10 : i32, message = "bqd,bkd->bqk"}> : () -> ()
    %cst_26 = arith.constant dense<0.000000e+00> : vector<2x24x24xf32>
    %81 = tpu.matmul %79, %80, %cst_26 {dimension_numbers = #tpu.dot_dimension_numbers<[2], [2], [1], [1], [0, 0, 0, 1, 1, 1], [0], [0]>} : vector<2x24x8xbf16>, vector<2x24x8xbf16>, vector<2x24x24xf32> -> vector<2x24x24xf32>
    "tpu.trace_stop"() : () -> ()
    %cst_27 = arith.constant 0.353553385 : f32
    %82 = vector.broadcast %cst_27 : f32 to vector<2x24x24xf32>
    %83 = arith.mulf %81, %82 : vector<2x24x24xf32>
    %84 = vector.shape_cast %14 : vector<24x24xf32> to vector<1x24x24xf32>
    %85 = vector.broadcast %84 : vector<1x24x24xf32> to vector<2x24x24xf32>
    %86 = arith.addf %83, %85 : vector<2x24x24xf32>
    %cst_28 = arith.constant dense<0xFF800000> : vector<2x24xf32>
    %87 = vector.multi_reduction <maximumf>, %86, %cst_28 [2] : vector<2x24x24xf32> to vector<2x24xf32>
    %88 = vector.shape_cast %87 : vector<2x24xf32> to vector<2x24x1xf32>
    %89 = vector.broadcast %88 : vector<2x24x1xf32> to vector<2x24x24xf32>
    %90 = arith.subf %86, %89 : vector<2x24x24xf32>
    %91 = math.exp %90 : vector<2x24x24xf32>
    %cst_29 = arith.constant dense<0.000000e+00> : vector<2x24xf32>
    %92 = vector.multi_reduction <add>, %91, %cst_29 [2] : vector<2x24x24xf32> to vector<2x24xf32>
    %93 = vector.shape_cast %92 : vector<2x24xf32> to vector<2x24x1xf32>
    %94 = tpu.reciprocal %93 {approx = true} : vector<2x24x1xf32> -> vector<2x24x1xf32>
    %95 = vector.broadcast %94 : vector<2x24x1xf32> to vector<2x24x24xf32>
    %96 = arith.mulf %91, %95 : vector<2x24x24xf32>
    %97 = arith.truncf %96 : vector<2x24x24xf32> to vector<2x24x24xbf16>
    %98 = arith.truncf %78 : vector<2x24x8xf32> to vector<2x24x8xbf16>
    "tpu.trace_start"() <{level = 10 : i32, message = "bqk,bkd->bqd"}> : () -> ()
    %cst_30 = arith.constant dense<0.000000e+00> : vector<2x24x8xf32>
    %99 = tpu.matmul %97, %98, %cst_30 {dimension_numbers = #tpu.dot_dimension_numbers<[2], [1], [1], [2], [0, 0, 0, 1, 1, 2], [0], [0]>} : vector<2x24x24xbf16>, vector<2x24x8xbf16>, vector<2x24x8xf32> -> vector<2x24x8xf32>
    "tpu.trace_stop"() : () -> ()
    %100 = vector.shape_cast %99 : vector<2x24x8xf32> to vector<48x8xf32>
    %101 = vector.extract_strided_slice %44 {offsets = [0, 16], sizes = [48, 8], strides = [1, 1]} : vector<48x128xf32> to vector<48x8xf32>
    %102 = vector.extract_strided_slice %44 {offsets = [0, 48], sizes = [48, 8], strides = [1, 1]} : vector<48x128xf32> to vector<48x8xf32>
    %103 = vector.extract_strided_slice %44 {offsets = [0, 80], sizes = [48, 8], strides = [1, 1]} : vector<48x128xf32> to vector<48x8xf32>
    %104 = vector.shape_cast %101 : vector<48x8xf32> to vector<2x24x8xf32>
    %105 = vector.shape_cast %102 : vector<48x8xf32> to vector<2x24x8xf32>
    %106 = vector.shape_cast %103 : vector<48x8xf32> to vector<2x24x8xf32>
    %107 = arith.truncf %104 : vector<2x24x8xf32> to vector<2x24x8xbf16>
    %108 = arith.truncf %105 : vector<2x24x8xf32> to vector<2x24x8xbf16>
    "tpu.trace_start"() <{level = 10 : i32, message = "bqd,bkd->bqk"}> : () -> ()
    %cst_31 = arith.constant dense<0.000000e+00> : vector<2x24x24xf32>
    %109 = tpu.matmul %107, %108, %cst_31 {dimension_numbers = #tpu.dot_dimension_numbers<[2], [2], [1], [1], [0, 0, 0, 1, 1, 1], [0], [0]>} : vector<2x24x8xbf16>, vector<2x24x8xbf16>, vector<2x24x24xf32> -> vector<2x24x24xf32>
    "tpu.trace_stop"() : () -> ()
    %cst_32 = arith.constant 0.353553385 : f32
    %110 = vector.broadcast %cst_32 : f32 to vector<2x24x24xf32>
    %111 = arith.mulf %109, %110 : vector<2x24x24xf32>
    %112 = vector.shape_cast %14 : vector<24x24xf32> to vector<1x24x24xf32>
    %113 = vector.broadcast %112 : vector<1x24x24xf32> to vector<2x24x24xf32>
    %114 = arith.addf %111, %113 : vector<2x24x24xf32>
    %cst_33 = arith.constant dense<0xFF800000> : vector<2x24xf32>
    %115 = vector.multi_reduction <maximumf>, %114, %cst_33 [2] : vector<2x24x24xf32> to vector<2x24xf32>
    %116 = vector.shape_cast %115 : vector<2x24xf32> to vector<2x24x1xf32>
    %117 = vector.broadcast %116 : vector<2x24x1xf32> to vector<2x24x24xf32>
    %118 = arith.subf %114, %117 : vector<2x24x24xf32>
    %119 = math.exp %118 : vector<2x24x24xf32>
    %cst_34 = arith.constant dense<0.000000e+00> : vector<2x24xf32>
    %120 = vector.multi_reduction <add>, %119, %cst_34 [2] : vector<2x24x24xf32> to vector<2x24xf32>
    %121 = vector.shape_cast %120 : vector<2x24xf32> to vector<2x24x1xf32>
    %122 = tpu.reciprocal %121 {approx = true} : vector<2x24x1xf32> -> vector<2x24x1xf32>
    %123 = vector.broadcast %122 : vector<2x24x1xf32> to vector<2x24x24xf32>
    %124 = arith.mulf %119, %123 : vector<2x24x24xf32>
    %125 = arith.truncf %124 : vector<2x24x24xf32> to vector<2x24x24xbf16>
    %126 = arith.truncf %106 : vector<2x24x8xf32> to vector<2x24x8xbf16>
    "tpu.trace_start"() <{level = 10 : i32, message = "bqk,bkd->bqd"}> : () -> ()
    %cst_35 = arith.constant dense<0.000000e+00> : vector<2x24x8xf32>
    %127 = tpu.matmul %125, %126, %cst_35 {dimension_numbers = #tpu.dot_dimension_numbers<[2], [1], [1], [2], [0, 0, 0, 1, 1, 2], [0], [0]>} : vector<2x24x24xbf16>, vector<2x24x8xbf16>, vector<2x24x8xf32> -> vector<2x24x8xf32>
    "tpu.trace_stop"() : () -> ()
    %128 = vector.shape_cast %127 : vector<2x24x8xf32> to vector<48x8xf32>
    %129 = vector.extract_strided_slice %44 {offsets = [0, 24], sizes = [48, 8], strides = [1, 1]} : vector<48x128xf32> to vector<48x8xf32>
    %130 = vector.extract_strided_slice %44 {offsets = [0, 56], sizes = [48, 8], strides = [1, 1]} : vector<48x128xf32> to vector<48x8xf32>
    %131 = vector.extract_strided_slice %44 {offsets = [0, 88], sizes = [48, 8], strides = [1, 1]} : vector<48x128xf32> to vector<48x8xf32>
    %132 = vector.shape_cast %129 : vector<48x8xf32> to vector<2x24x8xf32>
    %133 = vector.shape_cast %130 : vector<48x8xf32> to vector<2x24x8xf32>
    %134 = vector.shape_cast %131 : vector<48x8xf32> to vector<2x24x8xf32>
    %135 = arith.truncf %132 : vector<2x24x8xf32> to vector<2x24x8xbf16>
    %136 = arith.truncf %133 : vector<2x24x8xf32> to vector<2x24x8xbf16>
    "tpu.trace_start"() <{level = 10 : i32, message = "bqd,bkd->bqk"}> : () -> ()
    %cst_36 = arith.constant dense<0.000000e+00> : vector<2x24x24xf32>
    %137 = tpu.matmul %135, %136, %cst_36 {dimension_numbers = #tpu.dot_dimension_numbers<[2], [2], [1], [1], [0, 0, 0, 1, 1, 1], [0], [0]>} : vector<2x24x8xbf16>, vector<2x24x8xbf16>, vector<2x24x24xf32> -> vector<2x24x24xf32>
    "tpu.trace_stop"() : () -> ()
    %cst_37 = arith.constant 0.353553385 : f32
    %138 = vector.broadcast %cst_37 : f32 to vector<2x24x24xf32>
    %139 = arith.mulf %137, %138 : vector<2x24x24xf32>
    %140 = vector.shape_cast %14 : vector<24x24xf32> to vector<1x24x24xf32>
    %141 = vector.broadcast %140 : vector<1x24x24xf32> to vector<2x24x24xf32>
    %142 = arith.addf %139, %141 : vector<2x24x24xf32>
    %cst_38 = arith.constant dense<0xFF800000> : vector<2x24xf32>
    %143 = vector.multi_reduction <maximumf>, %142, %cst_38 [2] : vector<2x24x24xf32> to vector<2x24xf32>
    %144 = vector.shape_cast %143 : vector<2x24xf32> to vector<2x24x1xf32>
    %145 = vector.broadcast %144 : vector<2x24x1xf32> to vector<2x24x24xf32>
    %146 = arith.subf %142, %145 : vector<2x24x24xf32>
    %147 = math.exp %146 : vector<2x24x24xf32>
    %cst_39 = arith.constant dense<0.000000e+00> : vector<2x24xf32>
    %148 = vector.multi_reduction <add>, %147, %cst_39 [2] : vector<2x24x24xf32> to vector<2x24xf32>
    %149 = vector.shape_cast %148 : vector<2x24xf32> to vector<2x24x1xf32>
    %150 = tpu.reciprocal %149 {approx = true} : vector<2x24x1xf32> -> vector<2x24x1xf32>
    %151 = vector.broadcast %150 : vector<2x24x1xf32> to vector<2x24x24xf32>
    %152 = arith.mulf %147, %151 : vector<2x24x24xf32>
    %153 = arith.truncf %152 : vector<2x24x24xf32> to vector<2x24x24xbf16>
    %154 = arith.truncf %134 : vector<2x24x8xf32> to vector<2x24x8xbf16>
    "tpu.trace_start"() <{level = 10 : i32, message = "bqk,bkd->bqd"}> : () -> ()
    %cst_40 = arith.constant dense<0.000000e+00> : vector<2x24x8xf32>
    %155 = tpu.matmul %153, %154, %cst_40 {dimension_numbers = #tpu.dot_dimension_numbers<[2], [1], [1], [2], [0, 0, 0, 1, 1, 2], [0], [0]>} : vector<2x24x24xbf16>, vector<2x24x8xbf16>, vector<2x24x8xf32> -> vector<2x24x8xf32>
    "tpu.trace_stop"() : () -> ()
    %156 = vector.shape_cast %155 : vector<2x24x8xf32> to vector<48x8xf32>
    %157 = tpu.concatenate %72, %100, %128, %156 in 1 : vector<48x8xf32>, vector<48x8xf32>, vector<48x8xf32>, vector<48x8xf32> -> vector<48x32xf32>
    %158 = arith.truncf %157 : vector<48x32xf32> to vector<48x32xbf16>
    %c0_41 = arith.constant 0 : index
    %c0_42 = arith.constant 0 : index
    %159 = vector.load %arg7[%c0_41, %c0_42] : memref<32x32xbf16, #tpu.memory_space<vmem>>, vector<32x32xbf16>
    %cst_43 = arith.constant dense<0.000000e+00> : vector<48x32xf32>
    %160 = tpu.matmul %158, %159, %cst_43 {dimension_numbers = #tpu.dot_dimension_numbers<[1], [0], [0], [1], [0, 0, 1, 1], [], []>} : vector<48x32xbf16>, vector<32x32xbf16>, vector<48x32xf32> -> vector<48x32xf32>
    %161 = arith.addf %8, %160 : vector<48x32xf32>
    %c0_44 = arith.constant 0 : index
    %c0_45 = arith.constant 0 : index
    %162 = vector.load %arg8[%c0_44, %c0_45] : memref<1x32xf32, #tpu.memory_space<vmem>>, vector<1x32xf32>
    %163 = vector.broadcast %162 : vector<1x32xf32> to vector<48x32xf32>
    %164 = arith.addf %161, %163 : vector<48x32xf32>
    %c0_46 = arith.constant 0 : index
    %c0_47 = arith.constant 0 : index
    %165 = vector.load %arg9[%c0_46, %c0_47] : memref<1x32xf32, #tpu.memory_space<vmem>>, vector<1x32xf32>
    %c0_48 = arith.constant 0 : index
    %c0_49 = arith.constant 0 : index
    %166 = vector.load %arg10[%c0_48, %c0_49] : memref<1x32xf32, #tpu.memory_space<vmem>>, vector<1x32xf32>
    %cst_50 = arith.constant dense<0.000000e+00> : vector<48xf32>
    %167 = vector.multi_reduction <add>, %164, %cst_50 [1] : vector<48x32xf32> to vector<48xf32>
    %168 = vector.shape_cast %167 : vector<48xf32> to vector<48x1xf32>
    %cst_51 = arith.constant 3.200000e+01 : f32
    %169 = vector.broadcast %cst_51 : f32 to vector<48x1xf32>
    %170 = arith.divf %168, %169 : vector<48x1xf32>
    %171 = vector.broadcast %170 : vector<48x1xf32> to vector<48x32xf32>
    %172 = arith.subf %164, %171 : vector<48x32xf32>
    %173 = arith.mulf %172, %172 : vector<48x32xf32>
    %cst_52 = arith.constant dense<0.000000e+00> : vector<48xf32>
    %174 = vector.multi_reduction <add>, %173, %cst_52 [1] : vector<48x32xf32> to vector<48xf32>
    %175 = vector.shape_cast %174 : vector<48xf32> to vector<48x1xf32>
    %cst_53 = arith.constant 3.200000e+01 : f32
    %176 = vector.broadcast %cst_53 : f32 to vector<48x1xf32>
    %177 = arith.divf %175, %176 : vector<48x1xf32>
    %178 = vector.broadcast %170 : vector<48x1xf32> to vector<48x32xf32>
    %179 = arith.subf %164, %178 : vector<48x32xf32>
    %cst_54 = arith.constant 9.99999974E-6 : f32
    %180 = vector.broadcast %cst_54 : f32 to vector<48x1xf32>
    %181 = arith.addf %177, %180 : vector<48x1xf32>
    %182 = math.rsqrt %181 : vector<48x1xf32>
    %183 = vector.broadcast %182 : vector<48x1xf32> to vector<48x32xf32>
    %184 = arith.mulf %179, %183 : vector<48x32xf32>
    %185 = vector.broadcast %165 : vector<1x32xf32> to vector<48x32xf32>
    %186 = arith.mulf %184, %185 : vector<48x32xf32>
    %187 = vector.broadcast %166 : vector<1x32xf32> to vector<48x32xf32>
    %188 = arith.addf %186, %187 : vector<48x32xf32>
    %189 = arith.truncf %188 : vector<48x32xf32> to vector<48x32xbf16>
    %c0_55 = arith.constant 0 : index
    %c0_56 = arith.constant 0 : index
    %190 = vector.load %arg11[%c0_55, %c0_56] : memref<32x2048xbf16, #tpu.memory_space<vmem>>, vector<32x2048xbf16>
    %cst_57 = arith.constant dense<0.000000e+00> : vector<48x2048xf32>
    %191 = tpu.matmul %189, %190, %cst_57 {dimension_numbers = #tpu.dot_dimension_numbers<[1], [0], [0], [1], [0, 0, 1, 1], [], []>} : vector<48x32xbf16>, vector<32x2048xbf16>, vector<48x2048xf32> -> vector<48x2048xf32>
    %c0_58 = arith.constant 0 : index
    %c0_59 = arith.constant 0 : index
    %192 = vector.load %arg12[%c0_58, %c0_59] : memref<1x2048xf32, #tpu.memory_space<vmem>>, vector<1x2048xf32>
    %193 = vector.broadcast %192 : vector<1x2048xf32> to vector<48x2048xf32>
    %194 = arith.addf %191, %193 : vector<48x2048xf32>
    %cst_60 = arith.constant 0.000000e+00 : f32
    %195 = vector.broadcast %cst_60 : f32 to vector<48x2048xf32>
    %196 = arith.maximumf %194, %195 : vector<48x2048xf32>
    %197 = arith.truncf %196 : vector<48x2048xf32> to vector<48x2048xbf16>
    %c0_61 = arith.constant 0 : index
    %c0_62 = arith.constant 0 : index
    %198 = vector.load %arg13[%c0_61, %c0_62] : memref<2048x32xbf16, #tpu.memory_space<vmem>>, vector<2048x32xbf16>
    %cst_63 = arith.constant dense<0.000000e+00> : vector<48x32xf32>
    %199 = tpu.matmul %197, %198, %cst_63 {dimension_numbers = #tpu.dot_dimension_numbers<[1], [0], [0], [1], [0, 0, 1, 1], [], []>} : vector<48x2048xbf16>, vector<2048x32xbf16>, vector<48x32xf32> -> vector<48x32xf32>
    %200 = arith.addf %164, %199 : vector<48x32xf32>
    %c0_64 = arith.constant 0 : index
    %c0_65 = arith.constant 0 : index
    %201 = vector.load %arg14[%c0_64, %c0_65] : memref<1x32xf32, #tpu.memory_space<vmem>>, vector<1x32xf32>
    %202 = vector.broadcast %201 : vector<1x32xf32> to vector<48x32xf32>
    %203 = arith.addf %200, %202 : vector<48x32xf32>
    %c0_66 = arith.constant 0 : index
    %c0_67 = arith.constant 0 : index
    %204 = vector.load %arg15[%c0_66, %c0_67] : memref<1x32xf32, #tpu.memory_space<vmem>>, vector<1x32xf32>
    %c0_68 = arith.constant 0 : index
    %c0_69 = arith.constant 0 : index
    %205 = vector.load %arg16[%c0_68, %c0_69] : memref<1x32xf32, #tpu.memory_space<vmem>>, vector<1x32xf32>
    %cst_70 = arith.constant dense<0.000000e+00> : vector<48xf32>
    %206 = vector.multi_reduction <add>, %203, %cst_70 [1] : vector<48x32xf32> to vector<48xf32>
    %207 = vector.shape_cast %206 : vector<48xf32> to vector<48x1xf32>
    %cst_71 = arith.constant 3.200000e+01 : f32
    %208 = vector.broadcast %cst_71 : f32 to vector<48x1xf32>
    %209 = arith.divf %207, %208 : vector<48x1xf32>
    %210 = vector.broadcast %209 : vector<48x1xf32> to vector<48x32xf32>
    %211 = arith.subf %203, %210 : vector<48x32xf32>
    %212 = arith.mulf %211, %211 : vector<48x32xf32>
    %cst_72 = arith.constant dense<0.000000e+00> : vector<48xf32>
    %213 = vector.multi_reduction <add>, %212, %cst_72 [1] : vector<48x32xf32> to vector<48xf32>
    %214 = vector.shape_cast %213 : vector<48xf32> to vector<48x1xf32>
    %cst_73 = arith.constant 3.200000e+01 : f32
    %215 = vector.broadcast %cst_73 : f32 to vector<48x1xf32>
    %216 = arith.divf %214, %215 : vector<48x1xf32>
    %217 = vector.broadcast %209 : vector<48x1xf32> to vector<48x32xf32>
    %218 = arith.subf %203, %217 : vector<48x32xf32>
    %cst_74 = arith.constant 9.99999974E-6 : f32
    %219 = vector.broadcast %cst_74 : f32 to vector<48x1xf32>
    %220 = arith.addf %216, %219 : vector<48x1xf32>
    %221 = math.rsqrt %220 : vector<48x1xf32>
    %222 = vector.broadcast %221 : vector<48x1xf32> to vector<48x32xf32>
    %223 = arith.mulf %218, %222 : vector<48x32xf32>
    %224 = vector.broadcast %204 : vector<1x32xf32> to vector<48x32xf32>
    %225 = arith.mulf %223, %224 : vector<48x32xf32>
    %226 = vector.broadcast %205 : vector<1x32xf32> to vector<48x32xf32>
    %227 = arith.addf %225, %226 : vector<48x32xf32>
    %228 = arith.truncf %227 : vector<48x32xf32> to vector<48x32xbf16>
    %c0_75 = arith.constant 0 : index
    %c0_76 = arith.constant 0 : index
    %229 = vector.load %arg17[%c0_75, %c0_76] : memref<32x128xbf16, #tpu.memory_space<vmem>>, vector<32x128xbf16>
    %cst_77 = arith.constant dense<0.000000e+00> : vector<48x128xf32>
    %230 = tpu.matmul %228, %229, %cst_77 {dimension_numbers = #tpu.dot_dimension_numbers<[1], [0], [0], [1], [0, 0, 1, 1], [], []>} : vector<48x32xbf16>, vector<32x128xbf16>, vector<48x128xf32> -> vector<48x128xf32>
    %c0_78 = arith.constant 0 : index
    %c0_79 = arith.constant 0 : index
    %231 = vector.load %arg18[%c0_78, %c0_79] : memref<1x128xf32, #tpu.memory_space<vmem>>, vector<1x128xf32>
    %232 = vector.broadcast %231 : vector<1x128xf32> to vector<48x128xf32>
    %233 = arith.addf %230, %232 : vector<48x128xf32>
    %234 = vector.extract_strided_slice %233 {offsets = [0, 0], sizes = [48, 8], strides = [1, 1]} : vector<48x128xf32> to vector<48x8xf32>
    %235 = vector.extract_strided_slice %233 {offsets = [0, 32], sizes = [48, 8], strides = [1, 1]} : vector<48x128xf32> to vector<48x8xf32>
    %236 = vector.extract_strided_slice %233 {offsets = [0, 64], sizes = [48, 8], strides = [1, 1]} : vector<48x128xf32> to vector<48x8xf32>
    %237 = vector.shape_cast %234 : vector<48x8xf32> to vector<2x24x8xf32>
    %238 = vector.shape_cast %235 : vector<48x8xf32> to vector<2x24x8xf32>
    %239 = vector.shape_cast %236 : vector<48x8xf32> to vector<2x24x8xf32>
    %240 = arith.truncf %237 : vector<2x24x8xf32> to vector<2x24x8xbf16>
    %241 = arith.truncf %238 : vector<2x24x8xf32> to vector<2x24x8xbf16>
    "tpu.trace_start"() <{level = 10 : i32, message = "bqd,bkd->bqk"}> : () -> ()
    %cst_80 = arith.constant dense<0.000000e+00> : vector<2x24x24xf32>
    %242 = tpu.matmul %240, %241, %cst_80 {dimension_numbers = #tpu.dot_dimension_numbers<[2], [2], [1], [1], [0, 0, 0, 1, 1, 1], [0], [0]>} : vector<2x24x8xbf16>, vector<2x24x8xbf16>, vector<2x24x24xf32> -> vector<2x24x24xf32>
    "tpu.trace_stop"() : () -> ()
    %cst_81 = arith.constant 0.353553385 : f32
    %243 = vector.broadcast %cst_81 : f32 to vector<2x24x24xf32>
    %244 = arith.mulf %242, %243 : vector<2x24x24xf32>
    %245 = vector.shape_cast %14 : vector<24x24xf32> to vector<1x24x24xf32>
    %246 = vector.broadcast %245 : vector<1x24x24xf32> to vector<2x24x24xf32>
    %247 = arith.addf %244, %246 : vector<2x24x24xf32>
    %cst_82 = arith.constant dense<0xFF800000> : vector<2x24xf32>
    %248 = vector.multi_reduction <maximumf>, %247, %cst_82 [2] : vector<2x24x24xf32> to vector<2x24xf32>
    %249 = vector.shape_cast %248 : vector<2x24xf32> to vector<2x24x1xf32>
    %250 = vector.broadcast %249 : vector<2x24x1xf32> to vector<2x24x24xf32>
    %251 = arith.subf %247, %250 : vector<2x24x24xf32>
    %252 = math.exp %251 : vector<2x24x24xf32>
    %cst_83 = arith.constant dense<0.000000e+00> : vector<2x24xf32>
    %253 = vector.multi_reduction <add>, %252, %cst_83 [2] : vector<2x24x24xf32> to vector<2x24xf32>
    %254 = vector.shape_cast %253 : vector<2x24xf32> to vector<2x24x1xf32>
    %255 = tpu.reciprocal %254 {approx = true} : vector<2x24x1xf32> -> vector<2x24x1xf32>
    %256 = vector.broadcast %255 : vector<2x24x1xf32> to vector<2x24x24xf32>
    %257 = arith.mulf %252, %256 : vector<2x24x24xf32>
    %258 = arith.truncf %257 : vector<2x24x24xf32> to vector<2x24x24xbf16>
    %259 = arith.truncf %239 : vector<2x24x8xf32> to vector<2x24x8xbf16>
    "tpu.trace_start"() <{level = 10 : i32, message = "bqk,bkd->bqd"}> : () -> ()
    %cst_84 = arith.constant dense<0.000000e+00> : vector<2x24x8xf32>
    %260 = tpu.matmul %258, %259, %cst_84 {dimension_numbers = #tpu.dot_dimension_numbers<[2], [1], [1], [2], [0, 0, 0, 1, 1, 2], [0], [0]>} : vector<2x24x24xbf16>, vector<2x24x8xbf16>, vector<2x24x8xf32> -> vector<2x24x8xf32>
    "tpu.trace_stop"() : () -> ()
    %261 = vector.shape_cast %260 : vector<2x24x8xf32> to vector<48x8xf32>
    %262 = vector.extract_strided_slice %233 {offsets = [0, 8], sizes = [48, 8], strides = [1, 1]} : vector<48x128xf32> to vector<48x8xf32>
    %263 = vector.extract_strided_slice %233 {offsets = [0, 40], sizes = [48, 8], strides = [1, 1]} : vector<48x128xf32> to vector<48x8xf32>
    %264 = vector.extract_strided_slice %233 {offsets = [0, 72], sizes = [48, 8], strides = [1, 1]} : vector<48x128xf32> to vector<48x8xf32>
    %265 = vector.shape_cast %262 : vector<48x8xf32> to vector<2x24x8xf32>
    %266 = vector.shape_cast %263 : vector<48x8xf32> to vector<2x24x8xf32>
    %267 = vector.shape_cast %264 : vector<48x8xf32> to vector<2x24x8xf32>
    %268 = arith.truncf %265 : vector<2x24x8xf32> to vector<2x24x8xbf16>
    %269 = arith.truncf %266 : vector<2x24x8xf32> to vector<2x24x8xbf16>
    "tpu.trace_start"() <{level = 10 : i32, message = "bqd,bkd->bqk"}> : () -> ()
    %cst_85 = arith.constant dense<0.000000e+00> : vector<2x24x24xf32>
    %270 = tpu.matmul %268, %269, %cst_85 {dimension_numbers = #tpu.dot_dimension_numbers<[2], [2], [1], [1], [0, 0, 0, 1, 1, 1], [0], [0]>} : vector<2x24x8xbf16>, vector<2x24x8xbf16>, vector<2x24x24xf32> -> vector<2x24x24xf32>
    "tpu.trace_stop"() : () -> ()
    %cst_86 = arith.constant 0.353553385 : f32
    %271 = vector.broadcast %cst_86 : f32 to vector<2x24x24xf32>
    %272 = arith.mulf %270, %271 : vector<2x24x24xf32>
    %273 = vector.shape_cast %14 : vector<24x24xf32> to vector<1x24x24xf32>
    %274 = vector.broadcast %273 : vector<1x24x24xf32> to vector<2x24x24xf32>
    %275 = arith.addf %272, %274 : vector<2x24x24xf32>
    %cst_87 = arith.constant dense<0xFF800000> : vector<2x24xf32>
    %276 = vector.multi_reduction <maximumf>, %275, %cst_87 [2] : vector<2x24x24xf32> to vector<2x24xf32>
    %277 = vector.shape_cast %276 : vector<2x24xf32> to vector<2x24x1xf32>
    %278 = vector.broadcast %277 : vector<2x24x1xf32> to vector<2x24x24xf32>
    %279 = arith.subf %275, %278 : vector<2x24x24xf32>
    %280 = math.exp %279 : vector<2x24x24xf32>
    %cst_88 = arith.constant dense<0.000000e+00> : vector<2x24xf32>
    %281 = vector.multi_reduction <add>, %280, %cst_88 [2] : vector<2x24x24xf32> to vector<2x24xf32>
    %282 = vector.shape_cast %281 : vector<2x24xf32> to vector<2x24x1xf32>
    %283 = tpu.reciprocal %282 {approx = true} : vector<2x24x1xf32> -> vector<2x24x1xf32>
    %284 = vector.broadcast %283 : vector<2x24x1xf32> to vector<2x24x24xf32>
    %285 = arith.mulf %280, %284 : vector<2x24x24xf32>
    %286 = arith.truncf %285 : vector<2x24x24xf32> to vector<2x24x24xbf16>
    %287 = arith.truncf %267 : vector<2x24x8xf32> to vector<2x24x8xbf16>
    "tpu.trace_start"() <{level = 10 : i32, message = "bqk,bkd->bqd"}> : () -> ()
    %cst_89 = arith.constant dense<0.000000e+00> : vector<2x24x8xf32>
    %288 = tpu.matmul %286, %287, %cst_89 {dimension_numbers = #tpu.dot_dimension_numbers<[2], [1], [1], [2], [0, 0, 0, 1, 1, 2], [0], [0]>} : vector<2x24x24xbf16>, vector<2x24x8xbf16>, vector<2x24x8xf32> -> vector<2x24x8xf32>
    "tpu.trace_stop"() : () -> ()
    %289 = vector.shape_cast %288 : vector<2x24x8xf32> to vector<48x8xf32>
    %290 = vector.extract_strided_slice %233 {offsets = [0, 16], sizes = [48, 8], strides = [1, 1]} : vector<48x128xf32> to vector<48x8xf32>
    %291 = vector.extract_strided_slice %233 {offsets = [0, 48], sizes = [48, 8], strides = [1, 1]} : vector<48x128xf32> to vector<48x8xf32>
    %292 = vector.extract_strided_slice %233 {offsets = [0, 80], sizes = [48, 8], strides = [1, 1]} : vector<48x128xf32> to vector<48x8xf32>
    %293 = vector.shape_cast %290 : vector<48x8xf32> to vector<2x24x8xf32>
    %294 = vector.shape_cast %291 : vector<48x8xf32> to vector<2x24x8xf32>
    %295 = vector.shape_cast %292 : vector<48x8xf32> to vector<2x24x8xf32>
    %296 = arith.truncf %293 : vector<2x24x8xf32> to vector<2x24x8xbf16>
    %297 = arith.truncf %294 : vector<2x24x8xf32> to vector<2x24x8xbf16>
    "tpu.trace_start"() <{level = 10 : i32, message = "bqd,bkd->bqk"}> : () -> ()
    %cst_90 = arith.constant dense<0.000000e+00> : vector<2x24x24xf32>
    %298 = tpu.matmul %296, %297, %cst_90 {dimension_numbers = #tpu.dot_dimension_numbers<[2], [2], [1], [1], [0, 0, 0, 1, 1, 1], [0], [0]>} : vector<2x24x8xbf16>, vector<2x24x8xbf16>, vector<2x24x24xf32> -> vector<2x24x24xf32>
    "tpu.trace_stop"() : () -> ()
    %cst_91 = arith.constant 0.353553385 : f32
    %299 = vector.broadcast %cst_91 : f32 to vector<2x24x24xf32>
    %300 = arith.mulf %298, %299 : vector<2x24x24xf32>
    %301 = vector.shape_cast %14 : vector<24x24xf32> to vector<1x24x24xf32>
    %302 = vector.broadcast %301 : vector<1x24x24xf32> to vector<2x24x24xf32>
    %303 = arith.addf %300, %302 : vector<2x24x24xf32>
    %cst_92 = arith.constant dense<0xFF800000> : vector<2x24xf32>
    %304 = vector.multi_reduction <maximumf>, %303, %cst_92 [2] : vector<2x24x24xf32> to vector<2x24xf32>
    %305 = vector.shape_cast %304 : vector<2x24xf32> to vector<2x24x1xf32>
    %306 = vector.broadcast %305 : vector<2x24x1xf32> to vector<2x24x24xf32>
    %307 = arith.subf %303, %306 : vector<2x24x24xf32>
    %308 = math.exp %307 : vector<2x24x24xf32>
    %cst_93 = arith.constant dense<0.000000e+00> : vector<2x24xf32>
    %309 = vector.multi_reduction <add>, %308, %cst_93 [2] : vector<2x24x24xf32> to vector<2x24xf32>
    %310 = vector.shape_cast %309 : vector<2x24xf32> to vector<2x24x1xf32>
    %311 = tpu.reciprocal %310 {approx = true} : vector<2x24x1xf32> -> vector<2x24x1xf32>
    %312 = vector.broadcast %311 : vector<2x24x1xf32> to vector<2x24x24xf32>
    %313 = arith.mulf %308, %312 : vector<2x24x24xf32>
    %314 = arith.truncf %313 : vector<2x24x24xf32> to vector<2x24x24xbf16>
    %315 = arith.truncf %295 : vector<2x24x8xf32> to vector<2x24x8xbf16>
    "tpu.trace_start"() <{level = 10 : i32, message = "bqk,bkd->bqd"}> : () -> ()
    %cst_94 = arith.constant dense<0.000000e+00> : vector<2x24x8xf32>
    %316 = tpu.matmul %314, %315, %cst_94 {dimension_numbers = #tpu.dot_dimension_numbers<[2], [1], [1], [2], [0, 0, 0, 1, 1, 2], [0], [0]>} : vector<2x24x24xbf16>, vector<2x24x8xbf16>, vector<2x24x8xf32> -> vector<2x24x8xf32>
    "tpu.trace_stop"() : () -> ()
    %317 = vector.shape_cast %316 : vector<2x24x8xf32> to vector<48x8xf32>
    %318 = vector.extract_strided_slice %233 {offsets = [0, 24], sizes = [48, 8], strides = [1, 1]} : vector<48x128xf32> to vector<48x8xf32>
    %319 = vector.extract_strided_slice %233 {offsets = [0, 56], sizes = [48, 8], strides = [1, 1]} : vector<48x128xf32> to vector<48x8xf32>
    %320 = vector.extract_strided_slice %233 {offsets = [0, 88], sizes = [48, 8], strides = [1, 1]} : vector<48x128xf32> to vector<48x8xf32>
    %321 = vector.shape_cast %318 : vector<48x8xf32> to vector<2x24x8xf32>
    %322 = vector.shape_cast %319 : vector<48x8xf32> to vector<2x24x8xf32>
    %323 = vector.shape_cast %320 : vector<48x8xf32> to vector<2x24x8xf32>
    %324 = arith.truncf %321 : vector<2x24x8xf32> to vector<2x24x8xbf16>
    %325 = arith.truncf %322 : vector<2x24x8xf32> to vector<2x24x8xbf16>
    "tpu.trace_start"() <{level = 10 : i32, message = "bqd,bkd->bqk"}> : () -> ()
    %cst_95 = arith.constant dense<0.000000e+00> : vector<2x24x24xf32>
    %326 = tpu.matmul %324, %325, %cst_95 {dimension_numbers = #tpu.dot_dimension_numbers<[2], [2], [1], [1], [0, 0, 0, 1, 1, 1], [0], [0]>} : vector<2x24x8xbf16>, vector<2x24x8xbf16>, vector<2x24x24xf32> -> vector<2x24x24xf32>
    "tpu.trace_stop"() : () -> ()
    %cst_96 = arith.constant 0.353553385 : f32
    %327 = vector.broadcast %cst_96 : f32 to vector<2x24x24xf32>
    %328 = arith.mulf %326, %327 : vector<2x24x24xf32>
    %329 = vector.shape_cast %14 : vector<24x24xf32> to vector<1x24x24xf32>
    %330 = vector.broadcast %329 : vector<1x24x24xf32> to vector<2x24x24xf32>
    %331 = arith.addf %328, %330 : vector<2x24x24xf32>
    %cst_97 = arith.constant dense<0xFF800000> : vector<2x24xf32>
    %332 = vector.multi_reduction <maximumf>, %331, %cst_97 [2] : vector<2x24x24xf32> to vector<2x24xf32>
    %333 = vector.shape_cast %332 : vector<2x24xf32> to vector<2x24x1xf32>
    %334 = vector.broadcast %333 : vector<2x24x1xf32> to vector<2x24x24xf32>
    %335 = arith.subf %331, %334 : vector<2x24x24xf32>
    %336 = math.exp %335 : vector<2x24x24xf32>
    %cst_98 = arith.constant dense<0.000000e+00> : vector<2x24xf32>
    %337 = vector.multi_reduction <add>, %336, %cst_98 [2] : vector<2x24x24xf32> to vector<2x24xf32>
    %338 = vector.shape_cast %337 : vector<2x24xf32> to vector<2x24x1xf32>
    %339 = tpu.reciprocal %338 {approx = true} : vector<2x24x1xf32> -> vector<2x24x1xf32>
    %340 = vector.broadcast %339 : vector<2x24x1xf32> to vector<2x24x24xf32>
    %341 = arith.mulf %336, %340 : vector<2x24x24xf32>
    %342 = arith.truncf %341 : vector<2x24x24xf32> to vector<2x24x24xbf16>
    %343 = arith.truncf %323 : vector<2x24x8xf32> to vector<2x24x8xbf16>
    "tpu.trace_start"() <{level = 10 : i32, message = "bqk,bkd->bqd"}> : () -> ()
    %cst_99 = arith.constant dense<0.000000e+00> : vector<2x24x8xf32>
    %344 = tpu.matmul %342, %343, %cst_99 {dimension_numbers = #tpu.dot_dimension_numbers<[2], [1], [1], [2], [0, 0, 0, 1, 1, 2], [0], [0]>} : vector<2x24x24xbf16>, vector<2x24x8xbf16>, vector<2x24x8xf32> -> vector<2x24x8xf32>
    "tpu.trace_stop"() : () -> ()
    %345 = vector.shape_cast %344 : vector<2x24x8xf32> to vector<48x8xf32>
    %346 = tpu.concatenate %261, %289, %317, %345 in 1 : vector<48x8xf32>, vector<48x8xf32>, vector<48x8xf32>, vector<48x8xf32> -> vector<48x32xf32>
    %347 = arith.truncf %346 : vector<48x32xf32> to vector<48x32xbf16>
    %c0_100 = arith.constant 0 : index
    %c0_101 = arith.constant 0 : index
    %348 = vector.load %arg19[%c0_100, %c0_101] : memref<32x32xbf16, #tpu.memory_space<vmem>>, vector<32x32xbf16>
    %cst_102 = arith.constant dense<0.000000e+00> : vector<48x32xf32>
    %349 = tpu.matmul %347, %348, %cst_102 {dimension_numbers = #tpu.dot_dimension_numbers<[1], [0], [0], [1], [0, 0, 1, 1], [], []>} : vector<48x32xbf16>, vector<32x32xbf16>, vector<48x32xf32> -> vector<48x32xf32>
    %350 = arith.addf %203, %349 : vector<48x32xf32>
    %c0_103 = arith.constant 0 : index
    %c0_104 = arith.constant 0 : index
    %351 = vector.load %arg20[%c0_103, %c0_104] : memref<1x32xf32, #tpu.memory_space<vmem>>, vector<1x32xf32>
    %352 = vector.broadcast %351 : vector<1x32xf32> to vector<48x32xf32>
    %353 = arith.addf %350, %352 : vector<48x32xf32>
    %c0_105 = arith.constant 0 : index
    %c0_106 = arith.constant 0 : index
    %354 = vector.load %arg21[%c0_105, %c0_106] : memref<1x32xf32, #tpu.memory_space<vmem>>, vector<1x32xf32>
    %c0_107 = arith.constant 0 : index
    %c0_108 = arith.constant 0 : index
    %355 = vector.load %arg22[%c0_107, %c0_108] : memref<1x32xf32, #tpu.memory_space<vmem>>, vector<1x32xf32>
    %cst_109 = arith.constant dense<0.000000e+00> : vector<48xf32>
    %356 = vector.multi_reduction <add>, %353, %cst_109 [1] : vector<48x32xf32> to vector<48xf32>
    %357 = vector.shape_cast %356 : vector<48xf32> to vector<48x1xf32>
    %cst_110 = arith.constant 3.200000e+01 : f32
    %358 = vector.broadcast %cst_110 : f32 to vector<48x1xf32>
    %359 = arith.divf %357, %358 : vector<48x1xf32>
    %360 = vector.broadcast %359 : vector<48x1xf32> to vector<48x32xf32>
    %361 = arith.subf %353, %360 : vector<48x32xf32>
    %362 = arith.mulf %361, %361 : vector<48x32xf32>
    %cst_111 = arith.constant dense<0.000000e+00> : vector<48xf32>
    %363 = vector.multi_reduction <add>, %362, %cst_111 [1] : vector<48x32xf32> to vector<48xf32>
    %364 = vector.shape_cast %363 : vector<48xf32> to vector<48x1xf32>
    %cst_112 = arith.constant 3.200000e+01 : f32
    %365 = vector.broadcast %cst_112 : f32 to vector<48x1xf32>
    %366 = arith.divf %364, %365 : vector<48x1xf32>
    %367 = vector.broadcast %359 : vector<48x1xf32> to vector<48x32xf32>
    %368 = arith.subf %353, %367 : vector<48x32xf32>
    %cst_113 = arith.constant 9.99999974E-6 : f32
    %369 = vector.broadcast %cst_113 : f32 to vector<48x1xf32>
    %370 = arith.addf %366, %369 : vector<48x1xf32>
    %371 = math.rsqrt %370 : vector<48x1xf32>
    %372 = vector.broadcast %371 : vector<48x1xf32> to vector<48x32xf32>
    %373 = arith.mulf %368, %372 : vector<48x32xf32>
    %374 = vector.broadcast %354 : vector<1x32xf32> to vector<48x32xf32>
    %375 = arith.mulf %373, %374 : vector<48x32xf32>
    %376 = vector.broadcast %355 : vector<1x32xf32> to vector<48x32xf32>
    %377 = arith.addf %375, %376 : vector<48x32xf32>
    %378 = arith.truncf %377 : vector<48x32xf32> to vector<48x32xbf16>
    %c0_114 = arith.constant 0 : index
    %c0_115 = arith.constant 0 : index
    %379 = vector.load %arg23[%c0_114, %c0_115] : memref<32x2048xbf16, #tpu.memory_space<vmem>>, vector<32x2048xbf16>
    %cst_116 = arith.constant dense<0.000000e+00> : vector<48x2048xf32>
    %380 = tpu.matmul %378, %379, %cst_116 {dimension_numbers = #tpu.dot_dimension_numbers<[1], [0], [0], [1], [0, 0, 1, 1], [], []>} : vector<48x32xbf16>, vector<32x2048xbf16>, vector<48x2048xf32> -> vector<48x2048xf32>
    %c0_117 = arith.constant 0 : index
    %c0_118 = arith.constant 0 : index
    %381 = vector.load %arg24[%c0_117, %c0_118] : memref<1x2048xf32, #tpu.memory_space<vmem>>, vector<1x2048xf32>
    %382 = vector.broadcast %381 : vector<1x2048xf32> to vector<48x2048xf32>
    %383 = arith.addf %380, %382 : vector<48x2048xf32>
    %cst_119 = arith.constant 0.000000e+00 : f32
    %384 = vector.broadcast %cst_119 : f32 to vector<48x2048xf32>
    %385 = arith.maximumf %383, %384 : vector<48x2048xf32>
    %386 = arith.truncf %385 : vector<48x2048xf32> to vector<48x2048xbf16>
    %c0_120 = arith.constant 0 : index
    %c0_121 = arith.constant 0 : index
    %387 = vector.load %arg25[%c0_120, %c0_121] : memref<2048x32xbf16, #tpu.memory_space<vmem>>, vector<2048x32xbf16>
    %cst_122 = arith.constant dense<0.000000e+00> : vector<48x32xf32>
    %388 = tpu.matmul %386, %387, %cst_122 {dimension_numbers = #tpu.dot_dimension_numbers<[1], [0], [0], [1], [0, 0, 1, 1], [], []>} : vector<48x2048xbf16>, vector<2048x32xbf16>, vector<48x32xf32> -> vector<48x32xf32>
    %389 = arith.addf %353, %388 : vector<48x32xf32>
    %c0_123 = arith.constant 0 : index
    %c0_124 = arith.constant 0 : index
    %390 = vector.load %arg26[%c0_123, %c0_124] : memref<1x32xf32, #tpu.memory_space<vmem>>, vector<1x32xf32>
    %391 = vector.broadcast %390 : vector<1x32xf32> to vector<48x32xf32>
    %392 = arith.addf %389, %391 : vector<48x32xf32>
    %393 = vector.shape_cast %392 : vector<48x32xf32> to vector<2x24x32xf32>
    %394 = vector.extract_strided_slice %393 {offsets = [0, 0, 0], sizes = [2, 1, 32], strides = [1, 1, 1]} : vector<2x24x32xf32> to vector<2x1x32xf32>
    %395 = vector.shape_cast %394 : vector<2x1x32xf32> to vector<2x32xf32>
    %c0_125 = arith.constant 0 : index
    %c0_126 = arith.constant 0 : index
    %396 = vector.load %arg27[%c0_125, %c0_126] : memref<1x32xf32, #tpu.memory_space<vmem>>, vector<1x32xf32>
    %c0_127 = arith.constant 0 : index
    %c0_128 = arith.constant 0 : index
    %397 = vector.load %arg28[%c0_127, %c0_128] : memref<1x32xf32, #tpu.memory_space<vmem>>, vector<1x32xf32>
    %cst_129 = arith.constant dense<0.000000e+00> : vector<2xf32>
    %398 = vector.multi_reduction <add>, %395, %cst_129 [1] : vector<2x32xf32> to vector<2xf32>
    %399 = vector.shape_cast %398 : vector<2xf32> to vector<2x1xf32>
    %cst_130 = arith.constant 3.200000e+01 : f32
    %400 = vector.broadcast %cst_130 : f32 to vector<2x1xf32>
    %401 = arith.divf %399, %400 : vector<2x1xf32>
    %402 = vector.broadcast %401 : vector<2x1xf32> to vector<2x32xf32>
    %403 = arith.subf %395, %402 : vector<2x32xf32>
    %404 = arith.mulf %403, %403 : vector<2x32xf32>
    %cst_131 = arith.constant dense<0.000000e+00> : vector<2xf32>
    %405 = vector.multi_reduction <add>, %404, %cst_131 [1] : vector<2x32xf32> to vector<2xf32>
    %406 = vector.shape_cast %405 : vector<2xf32> to vector<2x1xf32>
    %cst_132 = arith.constant 3.200000e+01 : f32
    %407 = vector.broadcast %cst_132 : f32 to vector<2x1xf32>
    %408 = arith.divf %406, %407 : vector<2x1xf32>
    %409 = vector.broadcast %401 : vector<2x1xf32> to vector<2x32xf32>
    %410 = arith.subf %395, %409 : vector<2x32xf32>
    %cst_133 = arith.constant 9.99999974E-6 : f32
    %411 = vector.broadcast %cst_133 : f32 to vector<2x1xf32>
    %412 = arith.addf %408, %411 : vector<2x1xf32>
    %413 = math.rsqrt %412 : vector<2x1xf32>
    %414 = vector.broadcast %413 : vector<2x1xf32> to vector<2x32xf32>
    %415 = arith.mulf %410, %414 : vector<2x32xf32>
    %416 = vector.broadcast %396 : vector<1x32xf32> to vector<2x32xf32>
    %417 = arith.mulf %415, %416 : vector<2x32xf32>
    %418 = vector.broadcast %397 : vector<1x32xf32> to vector<2x32xf32>
    %419 = arith.addf %417, %418 : vector<2x32xf32>
    %420 = arith.truncf %419 : vector<2x32xf32> to vector<2x32xbf16>
    %c0_134 = arith.constant 0 : index
    %c0_135 = arith.constant 0 : index
    %421 = vector.load %arg29[%c0_134, %c0_135] : memref<32x10xbf16, #tpu.memory_space<vmem>>, vector<32x10xbf16>
    %cst_136 = arith.constant dense<0.000000e+00> : vector<2x10xf32>
    %422 = tpu.matmul %420, %421, %cst_136 {dimension_numbers = #tpu.dot_dimension_numbers<[1], [0], [0], [1], [0, 0, 1, 1], [], []>} : vector<2x32xbf16>, vector<32x10xbf16>, vector<2x10xf32> -> vector<2x10xf32>
    %c0_137 = arith.constant 0 : index
    %c0_138 = arith.constant 0 : index
    %423 = vector.load %arg30[%c0_137, %c0_138] : memref<1x10xf32, #tpu.memory_space<vmem>>, vector<1x10xf32>
    %424 = vector.broadcast %423 : vector<1x10xf32> to vector<2x10xf32>
    %425 = arith.addf %422, %424 : vector<2x10xf32>
    %c0_139 = arith.constant 0 : index
    %c0_140 = arith.constant 0 : index
    %426 = vector.load %arg31[%c0_139, %c0_140] : memref<2x10xf32, #tpu.memory_space<vmem>>, vector<2x10xf32>
    tpu.vector_store %arg31[%c0_139, %c0_140], %425 {strides = array<i32>} : memref<2x10xf32, #tpu.memory_space<vmem>>, vector<2x10xf32>,
    return
  }
}

</mosaic_0001>

<llo_original>
// kernel: vit_forward.1
$region0: #{vit_forward.1}
  #allocation0 [shape = 'u32[]', space=smem, size = 0x4, offset = 0x4, fixed_abs, tag = 'smem constant byte address 0x4 - core index']
  #allocation1 [shape = 'u32[72,128]{1,0:T(1,128)}', space=vmem, size = 0x9000, scoped, tag = 'internal scratch']
  %s0 = inlined_call_operand.smem [shape: u32[32], index: -1, kind: input, shape index: {}]
  %s1 = sld [smem:[%s0]]
  %s2 = scalar_lea.smem %s0, 1
  %s3 = sld [smem:[%s2]]
  %s4 = scalar_lea.smem %s0, 2
  %s5 = sld [smem:[%s4]]
  %s6 = scalar_lea.smem %s0, 3
  %s7 = sld [smem:[%s6]]
  %s8 = scalar_lea.smem %s0, 4
  %s9 = sld [smem:[%s8]]
  %s10 = scalar_lea.smem %s0, 5
  %s11 = sld [smem:[%s10]]
  %s12 = scalar_lea.smem %s0, 6
  %s13 = sld [smem:[%s12]]
  %s14 = scalar_lea.smem %s0, 7
  %s15 = sld [smem:[%s14]]
  %s16 = scalar_lea.smem %s0, 8
  %s17 = sld [smem:[%s16]]
  %s18 = scalar_lea.smem %s0, 9
  %s19 = sld [smem:[%s18]]
  %s20 = scalar_lea.smem %s0, 10
  %s21 = sld [smem:[%s20]]
  %s22 = scalar_lea.smem %s0, 11
  %s23 = sld [smem:[%s22]]
  %s24 = scalar_lea.smem %s0, 12
  %s25 = sld [smem:[%s24]]
  %s26 = scalar_lea.smem %s0, 13
  %s27 = sld [smem:[%s26]]
  %s28 = scalar_lea.smem %s0, 14
  %s29 = sld [smem:[%s28]]
  %s30 = scalar_lea.smem %s0, 15
  %s31 = sld [smem:[%s30]]
  %s32 = scalar_lea.smem %s0, 16
  %s33 = sld [smem:[%s32]]
  %s34 = scalar_lea.smem %s0, 17
  %s35 = sld [smem:[%s34]]
  %s36 = scalar_lea.smem %s0, 18
  %s37 = sld [smem:[%s36]]
  %s38 = scalar_lea.smem %s0, 19
  %s39 = sld [smem:[%s38]]
  %s40 = scalar_lea.smem %s0, 20
  %s41 = sld [smem:[%s40]]
  %s42 = scalar_lea.smem %s0, 21
  %s43 = sld [smem:[%s42]]
  %s44 = scalar_lea.smem %s0, 22
  %s45 = sld [smem:[%s44]]
  %s46 = scalar_lea.smem %s0, 23
  %s47 = sld [smem:[%s46]]
  %s48 = scalar_lea.smem %s0, 24
  %s49 = sld [smem:[%s48]]
  %s50 = scalar_lea.smem %s0, 25
  %s51 = sld [smem:[%s50]]
  %s52 = scalar_lea.smem %s0, 26
  %s53 = sld [smem:[%s52]]
  %s54 = scalar_lea.smem %s0, 27
  %s55 = sld [smem:[%s54]]
  %s56 = scalar_lea.smem %s0, 28
  %s57 = sld [smem:[%s56]]
  %s58 = scalar_lea.smem %s0, 29
  %s59 = sld [smem:[%s58]]
  %s60 = scalar_lea.smem %s0, 30
  %s61 = sld [smem:[%s60]]
  %s62 = scalar_lea.smem %s0, 31
  %s63 = sld [smem:[%s62]]
  %s64 = sld [smem:[#allocation0]]
  $region134: #{vit_forward.1} parent=0
    _
  %s66 = ssub.s32 1, %s64
  %s67 = scalar_select 0, %s66, %s64
  $region1: #{vit_forward.1} parent=0
    #allocation2 [shape = 'u8[1024]{0}', space=vmem, size = 0x400, scoped, tag = 'output window, operand 0, single buffered']
    #allocation3 [shape = 's32[1]{0}', space=sflag, size = 0x4, scoped, tag = 'scoped memory for vit_forward.1']
    %68 = vsyncpa [#allocation3], 0
    // Predicated region
    $region2: #{vit_forward.1} parent=1 // pred_check
      _
    $region3: #{vit_forward.1} parent=1 // pred_check_branch
      %70 = sbr.rel (0) target = $region5
    $region4: #{vit_forward.1} parent=1 // pred_region
      _
    $region5: #{vit_forward.1} parent=1 // pred_fallthru
      _
    // Predicated region
    $region6: #{vit_forward.1} parent=1 // pred_check
      _
    $region7: #{vit_forward.1} parent=1 // pred_check_branch
      %72 = sbr.rel (0) target = $region9
    $region8: #{vit_forward.1} parent=1 // pred_region
      _
    $region9: #{vit_forward.1} parent=1 // pred_fallthru
      _
    // Predicated region
    $region10: #{vit_forward.1} parent=1 // pred_check
      _
    $region11: #{vit_forward.1} parent=1 // pred_check_branch
      %74 = sbr.rel (0) target = $region13
    $region12: #{vit_forward.1} parent=1 // pred_region
      _
    $region13: #{vit_forward.1} parent=1 // pred_fallthru
      _
    // Predicated region
    $region14: #{vit_forward.1} parent=1 // pred_check
      _
    $region15: #{vit_forward.1} parent=1 // pred_check_branch
      %76 = sbr.rel (0) target = $region17
    $region16: #{vit_forward.1} parent=1 // pred_region
      _
    $region17: #{vit_forward.1} parent=1 // pred_fallthru
      _
    // Predicated region
    $region18: #{vit_forward.1} parent=1 // pred_check
      _
    $region19: #{vit_forward.1} parent=1 // pred_check_branch
      %78 = sbr.rel (0) target = $region21
    $region20: #{vit_forward.1} parent=1 // pred_region
      _
    $region21: #{vit_forward.1} parent=1 // pred_fallthru
      _
    // Predicated region
    $region22: #{vit_forward.1} parent=1 // pred_check
      _
    $region23: #{vit_forward.1} parent=1 // pred_check_branch
      %80 = sbr.rel (0) target = $region25
    $region24: #{vit_forward.1} parent=1 // pred_region
      _
    $region25: #{vit_forward.1} parent=1 // pred_fallthru
      _
    // Predicated region
    $region26: #{vit_forward.1} parent=1 // pred_check
      _
    $region27: #{vit_forward.1} parent=1 // pred_check_branch
      %82 = sbr.rel (0) target = $region29
    $region28: #{vit_forward.1} parent=1 // pred_region
      _
    $region29: #{vit_forward.1} parent=1 // pred_fallthru
      _
    // Predicated region
    $region30: #{vit_forward.1} parent=1 // pred_check
      _
    $region31: #{vit_forward.1} parent=1 // pred_check_branch
      %84 = sbr.rel (0) target = $region33
    $region32: #{vit_forward.1} parent=1 // pred_region
      _
    $region33: #{vit_forward.1} parent=1 // pred_fallthru
      _
    // Predicated region
    $region34: #{vit_forward.1} parent=1 // pred_check
      _
    $region35: #{vit_forward.1} parent=1 // pred_check_branch
      %86 = sbr.rel (0) target = $region37
    $region36: #{vit_forward.1} parent=1 // pred_region
      _
    $region37: #{vit_forward.1} parent=1 // pred_fallthru
      _
    // Predicated region
    $region38: #{vit_forward.1} parent=1 // pred_check
      _
    $region39: #{vit_forward.1} parent=1 // pred_check_branch
      %88 = sbr.rel (0) target = $region41
    $region40: #{vit_forward.1} parent=1 // pred_region
      _
    $region41: #{vit_forward.1} parent=1 // pred_fallthru
      _
    // Predicated region
    $region42: #{vit_forward.1} parent=1 // pred_check
      _
    $region43: #{vit_forward.1} parent=1 // pred_check_branch
      %90 = sbr.rel (0) target = $region45
    $region44: #{vit_forward.1} parent=1 // pred_region
      _
    $region45: #{vit_forward.1} parent=1 // pred_fallthru
      _
    // Predicated region
    $region46: #{vit_forward.1} parent=1 // pred_check
      _
    $region47: #{vit_forward.1} parent=1 // pred_check_branch
      %92 = sbr.rel (0) target = $region49
    $region48: #{vit_forward.1} parent=1 // pred_region
      _
    $region49: #{vit_forward.1} parent=1 // pred_fallthru
      _
    // Predicated region
    $region50: #{vit_forward.1} parent=1 // pred_check
      _
    $region51: #{vit_forward.1} parent=1 // pred_check_branch
      %94 = sbr.rel (0) target = $region53
    $region52: #{vit_forward.1} parent=1 // pred_region
      _
    $region53: #{vit_forward.1} parent=1 // pred_fallthru
      _
    // Predicated region
    $region54: #{vit_forward.1} parent=1 // pred_check
      _
    $region55: #{vit_forward.1} parent=1 // pred_check_branch
      %96 = sbr.rel (0) target = $region57
    $region56: #{vit_forward.1} parent=1 // pred_region
      _
    $region57: #{vit_forward.1} parent=1 // pred_fallthru
      _
    // Predicated region
    $region58: #{vit_forward.1} parent=1 // pred_check
      _
    $region59: #{vit_forward.1} parent=1 // pred_check_branch
      %98 = sbr.rel (0) target = $region61
    $region60: #{vit_forward.1} parent=1 // pred_region
      _
    $region61: #{vit_forward.1} parent=1 // pred_fallthru
      _
    // Predicated region
    $region62: #{vit_forward.1} parent=1 // pred_check
      _
    $region63: #{vit_forward.1} parent=1 // pred_check_branch
      %100 = sbr.rel (0) target = $region65
    $region64: #{vit_forward.1} parent=1 // pred_region
      _
    $region65: #{vit_forward.1} parent=1 // pred_fallthru
      _
    // Predicated region
    $region66: #{vit_forward.1} parent=1 // pred_check
      _
    $region67: #{vit_forward.1} parent=1 // pred_check_branch
      %102 = sbr.rel (0) target = $region69
    $region68: #{vit_forward.1} parent=1 // pred_region
      _
    $region69: #{vit_forward.1} parent=1 // pred_fallthru
      _
    // Predicated region
    $region70: #{vit_forward.1} parent=1 // pred_check
      _
    $region71: #{vit_forward.1} parent=1 // pred_check_branch
      %104 = sbr.rel (0) target = $region73
    $region72: #{vit_forward.1} parent=1 // pred_region
      _
    $region73: #{vit_forward.1} parent=1 // pred_fallthru
      _
    // Predicated region
    $region74: #{vit_forward.1} parent=1 // pred_check
      _
    $region75: #{vit_forward.1} parent=1 // pred_check_branch
      %106 = sbr.rel (0) target = $region77
    $region76: #{vit_forward.1} parent=1 // pred_region
      _
    $region77: #{vit_forward.1} parent=1 // pred_fallthru
      _
    // Predicated region
    $region78: #{vit_forward.1} parent=1 // pred_check
      _
    $region79: #{vit_forward.1} parent=1 // pred_check_branch
      %108 = sbr.rel (0) target = $region81
    $region80: #{vit_forward.1} parent=1 // pred_region
      _
    $region81: #{vit_forward.1} parent=1 // pred_fallthru
      _
    // Predicated region
    $region82: #{vit_forward.1} parent=1 // pred_check
      _
    $region83: #{vit_forward.1} parent=1 // pred_check_branch
      %110 = sbr.rel (0) target = $region85
    $region84: #{vit_forward.1} parent=1 // pred_region
      _
    $region85: #{vit_forward.1} parent=1 // pred_fallthru
      _
    // Predicated region
    $region86: #{vit_forward.1} parent=1 // pred_check
      _
    $region87: #{vit_forward.1} parent=1 // pred_check_branch
      %112 = sbr.rel (0) target = $region89
    $region88: #{vit_forward.1} parent=1 // pred_region
      _
    $region89: #{vit_forward.1} parent=1 // pred_fallthru
      _
    // Predicated region
    $region90: #{vit_forward.1} parent=1 // pred_check
      _
    $region91: #{vit_forward.1} parent=1 // pred_check_branch
      %114 = sbr.rel (0) target = $region93
    $region92: #{vit_forward.1} parent=1 // pred_region
      _
    $region93: #{vit_forward.1} parent=1 // pred_fallthru
      _
    // Predicated region
    $region94: #{vit_forward.1} parent=1 // pred_check
      _
    $region95: #{vit_forward.1} parent=1 // pred_check_branch
      %116 = sbr.rel (0) target = $region97
    $region96: #{vit_forward.1} parent=1 // pred_region
      _
    $region97: #{vit_forward.1} parent=1 // pred_fallthru
      _
    // Predicated region
    $region98: #{vit_forward.1} parent=1 // pred_check
      _
    $region99: #{vit_forward.1} parent=1 // pred_check_branch
      %118 = sbr.rel (0) target = $region101
    $region100: #{vit_forward.1} parent=1 // pred_region
      _
    $region101: #{vit_forward.1} parent=1 // pred_fallthru
      _
    // Predicated region
    $region102: #{vit_forward.1} parent=1 // pred_check
      _
    $region103: #{vit_forward.1} parent=1 // pred_check_branch
      %120 = sbr.rel (0) target = $region105
    $region104: #{vit_forward.1} parent=1 // pred_region
      _
    $region105: #{vit_forward.1} parent=1 // pred_fallthru
      _
    // Predicated region
    $region106: #{vit_forward.1} parent=1 // pred_check
      _
    $region107: #{vit_forward.1} parent=1 // pred_check_branch
      %122 = sbr.rel (0) target = $region109
    $region108: #{vit_forward.1} parent=1 // pred_region
      _
    $region109: #{vit_forward.1} parent=1 // pred_fallthru
      _
    // Predicated region
    $region110: #{vit_forward.1} parent=1 // pred_check
      _
    $region111: #{vit_forward.1} parent=1 // pred_check_branch
      %124 = sbr.rel (0) target = $region113
    $region112: #{vit_forward.1} parent=1 // pred_region
      _
    $region113: #{vit_forward.1} parent=1 // pred_fallthru
      _
    // Predicated region
    $region114: #{vit_forward.1} parent=1 // pred_check
      _
    $region115: #{vit_forward.1} parent=1 // pred_check_branch
      %126 = sbr.rel (0) target = $region117
    $region116: #{vit_forward.1} parent=1 // pred_region
      _
    $region117: #{vit_forward.1} parent=1 // pred_fallthru
      _
    // Predicated region
    $region118: #{vit_forward.1} parent=1 // pred_check
      _
    $region119: #{vit_forward.1} parent=1 // pred_check_branch
      %128 = sbr.rel (0) target = $region121
    $region120: #{vit_forward.1} parent=1 // pred_region
      _
    $region121: #{vit_forward.1} parent=1 // pred_fallthru
      _
    // Predicated region
    $region122: #{vit_forward.1} parent=1 // pred_check
      _
    $region123: #{vit_forward.1} parent=1 // pred_check_branch
      %130 = sbr.rel (0) target = $region125
    $region124: #{vit_forward.1} parent=1 // pred_region
      _
    $region125: #{vit_forward.1} parent=1 // pred_fallthru
      _
    %v132 = vld [vmem:[%s1] sm:$0xff]
    %v133 = vld [vmem:[%s1 + $0x8] sm:$0xff]
    %v134 = vld [vmem:[%s1 + $0x10] sm:$0xff]
    %v135 = vld [vmem:[%s1 + $0x18] sm:$0xff]
    %v136 = vld [vmem:[%s1 + $0x20] sm:$0xff]
    %v137 = vld [vmem:[%s1 + $0x28] sm:$0xff]
    %v138 = vld [vmem:[%s3] sm:$0xff]
    %v139 = vld [vmem:[%s3 + $0x8] sm:$0xff]
    %v140 = vld [vmem:[%s3 + $0x10] sm:$0xff]
    %v141 = vld [vmem:[%s3 + $0x18] sm:$0xff]
    %v142 = vld [vmem:[%s3 + $0x20] sm:$0xff]
    %v143 = vld [vmem:[%s3 + $0x28] sm:$0xff]
    %v144 = vld [vmem:[%s3 + $0x30] sm:$0xff]
    %vm145 = vcmask 457728
    %v147 = vsel %vm145, %v132, 0
    %v150 = vsel %vm145, %v133, 0
    %v153 = vsel %vm145, %v134, 0
    %v156 = vsel %vm145, %v135, 0
    %v159 = vsel %vm145, %v136, 0
    %v162 = vsel %vm145, %v137, 0
    %164 = vmatpush.msra.mxu0 0.0
    %165 = vmatpush.msra.mxu0 0.0
    %166 = vmatpush.msra.mxu0 0.0
    %167 = vmatpush.msra.mxu0 0.0
    %168 = vmatpush.msra.mxu0 0.0
    %169 = vmatpush.msra.mxu0 0.0
    %170 = vmatpush.msra.mxu0 0.0
    %171 = vmatpush.msra.mxu0 0.0
    %172 = vmatpush.msra.mxu0 0.0
    %173 = vmatpush.msra.mxu0 %v144
    %174 = vmatpush.msra.mxu0 %v143
    %175 = vmatpush.msra.mxu0 %v142
    %176 = vmatpush.msra.mxu0 %v141
    %177 = vmatpush.msra.mxu0 %v140
    %178 = vmatpush.msra.mxu0 %v139
    %179 = vmatpush.msra.mxu0 %v138
    %180 = vmatmul.f32.gmra.mxu0 %v147
    %v181 = vpop.f32.mrf.mxu0
    %v182 = vadd.f32 0.0, %v181
    %183 = vmatmul.f32.gmra.mxu0 %v150
    %v184 = vpop.f32.mrf.mxu0
    %v185 = vadd.f32 0.0, %v184
    %186 = vmatmul.f32.gmra.mxu0 %v153
    %v187 = vpop.f32.mrf.mxu0
    %v188 = vadd.f32 0.0, %v187
    %189 = vmatmul.f32.gmra.mxu0 %v156
    %v190 = vpop.f32.mrf.mxu0
    %v191 = vadd.f32 0.0, %v190
    %192 = vmatmul.f32.gmra.mxu0 %v159
    %v193 = vpop.f32.mrf.mxu0
    %v194 = vadd.f32 0.0, %v193
    %195 = vmatmul.f32.gmra.mxu0 %v162
    %v196 = vpop.f32.mrf.mxu0
    %v197 = vadd.f32 0.0, %v196
    %198 = vdwg.mxu0
    %v199 = vld [vmem:[%s5] sm:$0xff]
    %v200 = vld [vmem:[%s5 + $0x8] sm:$0xff]
    %v201 = vld [vmem:[%s5 + $0x10] sm:$0xff]
    %v202 = vadd.f32 %v182, %v199
    %v203 = vadd.f32 %v185, %v200
    %v204 = vadd.f32 %v188, %v201
    %v205 = vadd.f32 %v191, %v199
    %v206 = vadd.f32 %v194, %v200
    %v207 = vadd.f32 %v197, %v201
    %v208 = vlaneseq
    %v209 = vand.u32 %v208, 127
    %vm210 = vcmp.lt.s32.totalorder %v209, 17
    %v211 = vsel %vm210, 0.0, -1e+30
    %v212 = vld [vmem:[%s7] sm:$0x1]
    %v213 = vld [vmem:[%s9] sm:$0x1]
    %vm214 = vcmask 261120
    %v215 = vsel %vm214, %v202, 0.0
    %216 = vadd.xlane.f32.xlu0 %v215
    %v217 = vpop.xlane.xlu0 %216
    %v218 = vsel %vm214, %v203, 0.0
    %219 = vadd.xlane.f32.xlu0 %v218
    %v220 = vpop.xlane.xlu0 %219
    %v221 = vsel %vm214, %v204, 0.0
    %222 = vadd.xlane.f32.xlu0 %v221
    %v223 = vpop.xlane.xlu0 %222
    %v224 = vsel %vm214, %v205, 0.0
    %225 = vadd.xlane.f32.xlu0 %v224
    %v226 = vpop.xlane.xlu0 %225
    %v227 = vsel %vm214, %v206, 0.0
    %228 = vadd.xlane.f32.xlu0 %v227
    %v229 = vpop.xlane.xlu0 %228
    %v230 = vsel %vm214, %v207, 0.0
    %231 = vadd.xlane.f32.xlu0 %v230
    %v232 = vpop.xlane.xlu0 %231
    %v233 = vrcp.pop 32.0
    %v234 = vmul.f32 32.0, %v233
    %v235 = vsub.f32 1.0, %v234
    %v236 = vmul.f32 %v233, %v235
    %v237 = vadd.f32 %v233, %v236
    %vm238 = vweird.f32 %v233
    %v239 = vsel %vm238, %v233, %v237
    %v240 = vmul.f32 %v217, %v239
    %v241 = vmul.f32 %v220, %v239
    %v242 = vmul.f32 %v223, %v239
    %v243 = vmul.f32 %v226, %v239
    %v244 = vmul.f32 %v229, %v239
    %v245 = vmul.f32 %v232, %v239
    %v246 = vsub.f32 %v202, %v240
    %v247 = vsub.f32 %v203, %v241
    %v248 = vsub.f32 %v204, %v242
    %v249 = vsub.f32 %v205, %v243
    %v250 = vsub.f32 %v206, %v244
    %v251 = vsub.f32 %v207, %v245
    %v252 = vmul.f32 %v246, %v246
    %v253 = vmul.f32 %v247, %v247
    %v254 = vmul.f32 %v248, %v248
    %v255 = vmul.f32 %v249, %v249
    %v256 = vmul.f32 %v250, %v250
    %v257 = vmul.f32 %v251, %v251
    %v258 = vsel %vm214, %v252, 0.0
    %259 = vadd.xlane.f32.xlu0 %v258
    %v260 = vpop.xlane.xlu0 %259
    %v261 = vsel %vm214, %v253, 0.0
    %262 = vadd.xlane.f32.xlu0 %v261
    %v263 = vpop.xlane.xlu0 %262
    %v264 = vsel %vm214, %v254, 0.0
    %265 = vadd.xlane.f32.xlu0 %v264
    %v266 = vpop.xlane.xlu0 %265
    %v267 = vsel %vm214, %v255, 0.0
    %268 = vadd.xlane.f32.xlu0 %v267
    %v269 = vpop.xlane.xlu0 %268
    %v270 = vsel %vm214, %v256, 0.0
    %271 = vadd.xlane.f32.xlu0 %v270
    %v272 = vpop.xlane.xlu0 %271
    %v273 = vsel %vm214, %v257, 0.0
    %274 = vadd.xlane.f32.xlu0 %v273
    %v275 = vpop.xlane.xlu0 %274
    %v276 = vmul.f32 %v260, %v239
    %v277 = vmul.f32 %v263, %v239
    %v278 = vmul.f32 %v266, %v239
    %v279 = vmul.f32 %v269, %v239
    %v280 = vmul.f32 %v272, %v239
    %v281 = vmul.f32 %v275, %v239
    %v282 = vadd.f32 %v276, 1e-05
    %v283 = vadd.f32 %v277, 1e-05
    %v284 = vadd.f32 %v278, 1e-05
    %v285 = vadd.f32 %v279, 1e-05
    %v286 = vadd.f32 %v280, 1e-05
    %v287 = vadd.f32 %v281, 1e-05
    %v288 = vrsqrt.pop %v282
    %v289 = vmul.f32 %v288, %v282
    %v290 = vmul.f32 %v289, %v288
    %v291 = vmul.f32 0.5, %v290
    %v292 = vsub.f32 1.5, %v291
    %v293 = vmul.f32 %v288, %v292
    %vm294 = vweird.f32 %v282
    %vm295 = vweird.f32 %v288
    %vm296 = vmor %vm294, %vm295
    %v297 = vsel %vm296, %v288, %v293
    %v298 = vrsqrt.pop %v283
    %v299 = vmul.f32 %v298, %v283
    %v300 = vmul.f32 %v299, %v298
    %v301 = vmul.f32 0.5, %v300
    %v302 = vsub.f32 1.5, %v301
    %v303 = vmul.f32 %v298, %v302
    %vm304 = vweird.f32 %v283
    %vm305 = vweird.f32 %v298
    %vm306 = vmor %vm304, %vm305
    %v307 = vsel %vm306, %v298, %v303
    %v308 = vrsqrt.pop %v284
    %v309 = vmul.f32 %v308, %v284
    %v310 = vmul.f32 %v309, %v308
    %v311 = vmul.f32 0.5, %v310
    %v312 = vsub.f32 1.5, %v311
    %v313 = vmul.f32 %v308, %v312
    %vm314 = vweird.f32 %v284
    %vm315 = vweird.f32 %v308
    %vm316 = vmor %vm314, %vm315
    %v317 = vsel %vm316, %v308, %v313
    %v318 = vrsqrt.pop %v285
    %v319 = vmul.f32 %v318, %v285
    %v320 = vmul.f32 %v319, %v318
    %v321 = vmul.f32 0.5, %v320
    %v322 = vsub.f32 1.5, %v321
    %v323 = vmul.f32 %v318, %v322
    %vm324 = vweird.f32 %v285
    %vm325 = vweird.f32 %v318
    %vm326 = vmor %vm324, %vm325
    %v327 = vsel %vm326, %v318, %v323
    %v328 = vrsqrt.pop %v286
    %v329 = vmul.f32 %v328, %v286
    %v330 = vmul.f32 %v329, %v328
    %v331 = vmul.f32 0.5, %v330
    %v332 = vsub.f32 1.5, %v331
    %v333 = vmul.f32 %v328, %v332
    %vm334 = vweird.f32 %v286
    %vm335 = vweird.f32 %v328
    %vm336 = vmor %vm334, %vm335
    %v337 = vsel %vm336, %v328, %v333
    %v338 = vrsqrt.pop %v287
    %v339 = vmul.f32 %v338, %v287
    %v340 = vmul.f32 %v339, %v338
    %v341 = vmul.f32 0.5, %v340
    %v342 = vsub.f32 1.5, %v341
    %v343 = vmul.f32 %v338, %v342
    %vm344 = vweird.f32 %v287
    %vm345 = vweird.f32 %v338
    %vm346 = vmor %vm344, %vm345
    %v347 = vsel %vm346, %v338, %v343
    %v348 = vmul.f32 %v246, %v297
    %v349 = vmul.f32 %v247, %v307
    %v350 = vmul.f32 %v248, %v317
    %v351 = vmul.f32 %v249, %v327
    %v352 = vmul.f32 %v250, %v337
    %v353 = vmul.f32 %v251, %v347
    %v355 = vperm.slane %v212, 0
    %v357 = vmul.f32 %v348, %v355
    %v358 = vmul.f32 %v349, %v355
    %v359 = vmul.f32 %v350, %v355
    %v360 = vmul.f32 %v351, %v355
    %v361 = vmul.f32 %v352, %v355
    %v362 = vmul.f32 %v353, %v355
    %v364 = vperm.slane %v213, 0
    %v366 = vadd.f32 %v357, %v364
    %v367 = vadd.f32 %v358, %v364
    %v368 = vadd.f32 %v359, %v364
    %v369 = vadd.f32 %v360, %v364
    %v370 = vadd.f32 %v361, %v364
    %v371 = vadd.f32 %v362, %v364
    %v372 = vpack.c.bf16 %v367, %v366
    %v373 = vpack.c.bf16 %v369, %v368
    %v374 = vpack.c.bf16 %v371, %v370
    %v375 = vld [vmem:[%s11] sm:$0xf]
    %v376 = vld [vmem:[%s11 + $0x4] sm:$0xf]
    %v377 = vld [vmem:[%s11 + $0x8] sm:$0xf]
    %v378 = vld [vmem:[%s11 + $0xc] sm:$0xf]
    %v379 = vld [vmem:[%s13] sm:$0x1]
    %v381 = vperm.slane %v379, 0
    %v387 = vunpack.c.l.b16 %v375
    %v388 = vunpack.c.l.b16 %v376
    %v389 = vunpack.c.l.b16 %v377
    %v390 = vunpack.c.l.b16 %v378
    %v391 = vpack.c.b16 %v388, %v387
    %v392 = vpack.c.b16 %v390, %v389
    %v396 = vsel %vm214, %v372, 0
    %v399 = vsel %vm214, %v373, 0
    %v402 = vsel %vm214, %v374, 0
    %404 = vmatpush.bf16.msra.mxu0 0
    %405 = vmatpush.bf16.msra.mxu0 0
    %406 = vmatpush.bf16.msra.mxu0 0
    %407 = vmatpush.bf16.msra.mxu0 0
    %408 = vmatpush.bf16.msra.mxu0 0
    %409 = vmatpush.bf16.msra.mxu0 0
    %410 = vmatpush.bf16.msra.mxu0 %v392
    %411 = vmatpush.bf16.msra.mxu0 %v391
    %412 = vmatmul.bf16.gmra.mxu0 %v396
    %v413 = vpop.f32.mrf.mxu0
    %v414 = vadd.f32 %v381, %v413
    %v415 = vpop.f32.mrf.mxu0
    %v416 = vadd.f32 %v381, %v415
    %417 = vmatmul.bf16.gmra.mxu0 %v399
    %v418 = vpop.f32.mrf.mxu0
    %v419 = vadd.f32 %v381, %v418
    %v420 = vpop.f32.mrf.mxu0
    %v421 = vadd.f32 %v381, %v420
    %422 = vmatmul.bf16.gmra.mxu0 %v402
    %v423 = vpop.f32.mrf.mxu0
    %v424 = vadd.f32 %v381, %v423
    %v425 = vpop.f32.mrf.mxu0
    %v426 = vadd.f32 %v381, %v425
    %427 = vdwg.mxu0
    %v428 = vpack.c.bf16 %v414, %v414
    %v429 = vpack.c.bf16 %v416, %v416
    %v430 = vpack.c.bf16 %v419, %v419
    %v431 = vpack.c.bf16 %v421, %v421
    %v432 = vpack.c.bf16 %v424, %v424
    %v433 = vpack.c.bf16 %v426, %v426
    %v437 = vunpack.c.l.b16 %v428
    %v438 = vunpack.c.l.b16 %v429
    %v439 = vunpack.c.l.b16 %v430
    %v440 = vpack.c.b16 %v438, %v437
    %v441 = vpack.c.b16 %v439, %v439
    %442 = vrot.lane.b32.xlu0 %v440, 96
    %v443 = vpop.permute.xlu0 %442
    %444 = vrot.lane.b32.xlu0 %v441, 96
    %v445 = vpop.permute.xlu0 %444
    %vm446 = vcmask 64512
    %v448 = vsel %vm446, %v440, 0
    %v451 = vsel %vm446, %v441, 0
    %v454 = vsel %vm446, %v443, 0
    %v457 = vsel %vm446, %v445, 0
    %459 = vmatpush.bf16.xpose.msra.mxu0 0
    %460 = vmatpush.bf16.xpose.msra.mxu0 0
    %461 = vmatpush.bf16.xpose.msra.mxu0 0
    %462 = vmatpush.bf16.xpose.msra.mxu0 0
    %463 = vmatpush.bf16.xpose.msra.mxu0 0
    %464 = vmatpush.bf16.xpose.msra.mxu0 0
    %465 = vmatpush.bf16.xpose.msra.mxu0 %v457
    %466 = vmatpush.bf16.xpose.msra.mxu0 %v454
    %467 = vmatmul.bf16.gmra.mxu0 %v448
    %v468 = vpop.f32.mrf.mxu0
    %v469 = vadd.f32 0.0, %v468
    %v470 = vpop.f32.mrf.mxu0
    %v471 = vadd.f32 0.0, %v470
    %472 = vmatmul.bf16.gmra.mxu0 %v451
    %v473 = vpop.f32.mrf.mxu0
    %v474 = vadd.f32 0.0, %v473
    %v475 = vpop.f32.mrf.mxu0
    %476 = vdwg.mxu0
    %v480 = vunpack.c.l.b16 %v431
    %v481 = vunpack.c.l.b16 %v432
    %v482 = vunpack.c.l.b16 %v433
    %v483 = vpack.c.b16 %v481, %v480
    %v484 = vpack.c.b16 %v482, %v482
    %485 = vrot.lane.b32.xlu0 %v483, 96
    %v486 = vpop.permute.xlu0 %485
    %487 = vrot.lane.b32.xlu0 %v484, 96
    %v488 = vpop.permute.xlu0 %487
    %v490 = vsel %vm446, %v483, 0
    %v493 = vsel %vm446, %v484, 0
    %v496 = vsel %vm446, %v486, 0
    %v499 = vsel %vm446, %v488, 0
    %501 = vmatpush.bf16.xpose.msra.mxu0 0
    %502 = vmatpush.bf16.xpose.msra.mxu0 0
    %503 = vmatpush.bf16.xpose.msra.mxu0 0
    %504 = vmatpush.bf16.xpose.msra.mxu0 0
    %505 = vmatpush.bf16.xpose.msra.mxu0 0
    %506 = vmatpush.bf16.xpose.msra.mxu0 0
    %507 = vmatpush.bf16.xpose.msra.mxu0 %v499
    %508 = vmatpush.bf16.xpose.msra.mxu0 %v496
    %509 = vmatmul.bf16.gmra.mxu0 %v490
    %v510 = vpop.f32.mrf.mxu0
    %v511 = vadd.f32 0.0, %v510
    %v512 = vpop.f32.mrf.mxu0
    %v513 = vadd.f32 0.0, %v512
    %514 = vmatmul.bf16.gmra.mxu0 %v493
    %v515 = vpop.f32.mrf.mxu0
    %v516 = vadd.f32 0.0, %v515
    %v517 = vpop.f32.mrf.mxu0
    %518 = vdwg.mxu0
    %v519 = vmul.f32 %v469, 0.35355338
    %v520 = vmul.f32 %v471, 0.35355338
    %v521 = vmul.f32 %v474, 0.35355338
    %v522 = vmul.f32 %v511, 0.35355338
    %v523 = vmul.f32 %v513, 0.35355338
    %v524 = vmul.f32 %v516, 0.35355338
    %v525 = vadd.f32 %v519, %v211
    %v526 = vadd.f32 %v520, %v211
    %v527 = vadd.f32 %v521, %v211
    %v528 = vadd.f32 %v522, %v211
    %v529 = vadd.f32 %v523, %v211
    %v530 = vadd.f32 %v524, %v211
    %vm531 = vcmask 195584
    %v532 = vsel %vm531, %v525, -inf
    %533 = vmax.xlane.f32.xlu0 %v532
    %v534 = vpop.xlane.xlu0 %533
    %v535 = vsel %vm531, %v526, -inf
    %536 = vmax.xlane.f32.xlu0 %v535
    %v537 = vpop.xlane.xlu0 %536
    %v538 = vsel %vm531, %v527, -inf
    %539 = vmax.xlane.f32.xlu0 %v538
    %v540 = vpop.xlane.xlu0 %539
    %v541 = vsel %vm531, %v528, -inf
    %542 = vmax.xlane.f32.xlu0 %v541
    %v543 = vpop.xlane.xlu0 %542
    %v544 = vsel %vm531, %v529, -inf
    %545 = vmax.xlane.f32.xlu0 %v544
    %v546 = vpop.xlane.xlu0 %545
    %v547 = vsel %vm531, %v530, -inf
    %548 = vmax.xlane.f32.xlu0 %v547
    %v549 = vpop.xlane.xlu0 %548
    %v550 = vsub.f32 %v525, %v534
    %v551 = vsub.f32 %v526, %v537
    %v552 = vsub.f32 %v527, %v540
    %v553 = vsub.f32 %v528, %v543
    %v554 = vsub.f32 %v529, %v546
    %v555 = vsub.f32 %v530, %v549
    %v556 = vmul.f32 %v550, 1.442695
    %v557 = vpow.pop %v556
    %v558 = vmul.f32 %v551, 1.442695
    %v559 = vpow.pop %v558
    %v560 = vmul.f32 %v552, 1.442695
    %v561 = vpow.pop %v560
    %v562 = vmul.f32 %v553, 1.442695
    %v563 = vpow.pop %v562
    %v564 = vmul.f32 %v554, 1.442695
    %v565 = vpow.pop %v564
    %v566 = vmul.f32 %v555, 1.442695
    %v567 = vpow.pop %v566
    %v568 = vsel %vm531, %v557, 0.0
    %569 = vadd.xlane.f32.xlu0 %v568
    %v570 = vpop.xlane.xlu0 %569
    %v571 = vsel %vm531, %v559, 0.0
    %572 = vadd.xlane.f32.xlu0 %v571
    %v573 = vpop.xlane.xlu0 %572
    %v574 = vsel %vm531, %v561, 0.0
    %575 = vadd.xlane.f32.xlu0 %v574
    %v576 = vpop.xlane.xlu0 %575
    %v577 = vsel %vm531, %v563, 0.0
    %578 = vadd.xlane.f32.xlu0 %v577
    %v579 = vpop.xlane.xlu0 %578
    %v580 = vsel %vm531, %v565, 0.0
    %581 = vadd.xlane.f32.xlu0 %v580
    %v582 = vpop.xlane.xlu0 %581
    %v583 = vsel %vm531, %v567, 0.0
    %584 = vadd.xlane.f32.xlu0 %v583
    %v585 = vpop.xlane.xlu0 %584
    %v586 = vrcp.pop %v570
    %v587 = vrcp.pop %v573
    %v588 = vrcp.pop %v576
    %v589 = vrcp.pop %v579
    %v590 = vrcp.pop %v582
    %v591 = vrcp.pop %v585
    %v592 = vmul.f32 %v557, %v586
    %v593 = vmul.f32 %v559, %v587
    %v594 = vmul.f32 %v561, %v588
    %v595 = vmul.f32 %v563, %v589
    %v596 = vmul.f32 %v565, %v590
    %v597 = vmul.f32 %v567, %v591
    %v598 = vpack.c.bf16 %v592, %v592
    %v599 = vpack.c.bf16 %v593, %v593
    %v600 = vpack.c.bf16 %v594, %v594
    %v601 = vpack.c.bf16 %v595, %v595
    %v602 = vpack.c.bf16 %v596, %v596
    %v603 = vpack.c.bf16 %v597, %v597
    %v607 = vunpack.c.l.b16 %v598
    %v608 = vunpack.c.l.b16 %v599
    %v609 = vunpack.c.l.b16 %v600
    %v610 = vpack.c.b16 %v608, %v607
    %v611 = vpack.c.b16 %v609, %v609
    %612 = vrot.lane.b32.xlu0 %v440, 64
    %v613 = vpop.permute.xlu0 %612
    %614 = vrot.lane.b32.xlu0 %v441, 64
    %v615 = vpop.permute.xlu0 %614
    %v618 = vsel %vm531, %v610, 0
    %v621 = vsel %vm531, %v611, 0
    %vm623 = vcmask 1043456
    %v625 = vsel %vm623, %v615, 0
    %627 = vmatpush.bf16.msra.mxu0 0
    %628 = vmatpush.bf16.msra.mxu0 0
    %629 = vmatpush.bf16.msra.mxu0 0
    %630 = vmatpush.bf16.msra.mxu0 0
    %631 = vmatpush.bf16.msra.mxu0 0
    %632 = vmatpush.bf16.msra.mxu0 0
    %633 = vmatpush.bf16.msra.mxu0 %v625
    %634 = vmatpush.bf16.msra.mxu0 %v613
    %635 = vmatmul.bf16.gmra.mxu0 %v618
    %v636 = vpop.f32.mrf.mxu0
    %v637 = vadd.f32 0.0, %v636
    %v638 = vpop.f32.mrf.mxu0
    %v639 = vadd.f32 0.0, %v638
    %640 = vmatmul.bf16.gmra.mxu0 %v621
    %v641 = vpop.f32.mrf.mxu0
    %v642 = vadd.f32 0.0, %v641
    %v643 = vpop.f32.mrf.mxu0
    %644 = vdwg.mxu0
    %v648 = vunpack.c.l.b16 %v601
    %v649 = vunpack.c.l.b16 %v602
    %v650 = vunpack.c.l.b16 %v603
    %v651 = vpack.c.b16 %v649, %v648
    %v652 = vpack.c.b16 %v650, %v650
    %653 = vrot.lane.b32.xlu0 %v483, 64
    %v654 = vpop.permute.xlu0 %653
    %655 = vrot.lane.b32.xlu0 %v484, 64
    %v656 = vpop.permute.xlu0 %655
    %v659 = vsel %vm531, %v651, 0
    %v662 = vsel %vm531, %v652, 0
    %v665 = vsel %vm623, %v656, 0
    %667 = vmatpush.bf16.msra.mxu0 0
    %668 = vmatpush.bf16.msra.mxu0 0
    %669 = vmatpush.bf16.msra.mxu0 0
    %670 = vmatpush.bf16.msra.mxu0 0
    %671 = vmatpush.bf16.msra.mxu0 0
    %672 = vmatpush.bf16.msra.mxu0 0
    %673 = vmatpush.bf16.msra.mxu0 %v665
    %674 = vmatpush.bf16.msra.mxu0 %v654
    %675 = vmatmul.bf16.gmra.mxu0 %v659
    %v676 = vpop.f32.mrf.mxu0
    %v677 = vadd.f32 0.0, %v676
    %v678 = vpop.f32.mrf.mxu0
    %v679 = vadd.f32 0.0, %v678
    %680 = vmatmul.bf16.gmra.mxu0 %v662
    %v681 = vpop.f32.mrf.mxu0
    %v682 = vadd.f32 0.0, %v681
    %v683 = vpop.f32.mrf.mxu0
    %684 = vdwg.mxu0
    %685 = vrot.lane.b32.xlu0 %v440, 120
    %v686 = vpop.permute.xlu0 %685
    %687 = vrot.lane.b32.xlu0 %v441, 120
    %v688 = vpop.permute.xlu0 %687
    %689 = vrot.lane.b32.xlu0 %v440, 88
    %v690 = vpop.permute.xlu0 %689
    %691 = vrot.lane.b32.xlu0 %v441, 88
    %v692 = vpop.permute.xlu0 %691
    %v694 = vsel %vm446, %v686, 0
    %v697 = vsel %vm446, %v688, 0
    %v700 = vsel %vm446, %v690, 0
    %v703 = vsel %vm446, %v692, 0
    %705 = vmatpush.bf16.xpose.msra.mxu0 0
    %706 = vmatpush.bf16.xpose.msra.mxu0 0
    %707 = vmatpush.bf16.xpose.msra.mxu0 0
    %708 = vmatpush.bf16.xpose.msra.mxu0 0
    %709 = vmatpush.bf16.xpose.msra.mxu0 0
    %710 = vmatpush.bf16.xpose.msra.mxu0 0
    %711 = vmatpush.bf16.xpose.msra.mxu0 %v703
    %712 = vmatpush.bf16.xpose.msra.mxu0 %v700
    %713 = vmatmul.bf16.gmra.mxu0 %v694
    %v714 = vpop.f32.mrf.mxu0
    %v715 = vadd.f32 0.0, %v714
    %v716 = vpop.f32.mrf.mxu0
    %v717 = vadd.f32 0.0, %v716
    %718 = vmatmul.bf16.gmra.mxu0 %v697
    %v719 = vpop.f32.mrf.mxu0
    %v720 = vadd.f32 0.0, %v719
    %v721 = vpop.f32.mrf.mxu0
    %722 = vdwg.mxu0
    %723 = vrot.lane.b32.xlu0 %v483, 120
    %v724 = vpop.permute.xlu0 %723
    %725 = vrot.lane.b32.xlu0 %v484, 120
    %v726 = vpop.permute.xlu0 %725
    %727 = vrot.lane.b32.xlu0 %v483, 88
    %v728 = vpop.permute.xlu0 %727
    %729 = vrot.lane.b32.xlu0 %v484, 88
    %v730 = vpop.permute.xlu0 %729
    %v732 = vsel %vm446, %v724, 0
    %v735 = vsel %vm446, %v726, 0
    %v738 = vsel %vm446, %v728, 0
    %v741 = vsel %vm446, %v730, 0
    %743 = vmatpush.bf16.xpose.msra.mxu0 0
    %744 = vmatpush.bf16.xpose.msra.mxu0 0
    %745 = vmatpush.bf16.xpose.msra.mxu0 0
    %746 = vmatpush.bf16.xpose.msra.mxu0 0
    %747 = vmatpush.bf16.xpose.msra.mxu0 0
    %748 = vmatpush.bf16.xpose.msra.mxu0 0
    %749 = vmatpush.bf16.xpose.msra.mxu0 %v741
    %750 = vmatpush.bf16.xpose.msra.mxu0 %v738
    %751 = vmatmul.bf16.gmra.mxu0 %v732
    %v752 = vpop.f32.mrf.mxu0
    %v753 = vadd.f32 0.0, %v752
    %v754 = vpop.f32.mrf.mxu0
    %v755 = vadd.f32 0.0, %v754
    %756 = vmatmul.bf16.gmra.mxu0 %v735
    %v757 = vpop.f32.mrf.mxu0
    %v758 = vadd.f32 0.0, %v757
    %v759 = vpop.f32.mrf.mxu0
    %760 = vdwg.mxu0
    %v761 = vmul.f32 %v715, 0.35355338
    %v762 = vmul.f32 %v717, 0.35355338
    %v763 = vmul.f32 %v720, 0.35355338
    %v764 = vmul.f32 %v753, 0.35355338
    %v765 = vmul.f32 %v755, 0.35355338
    %v766 = vmul.f32 %v758, 0.35355338
    %v767 = vadd.f32 %v761, %v211
    %v768 = vadd.f32 %v762, %v211
    %v769 = vadd.f32 %v763, %v211
    %v770 = vadd.f32 %v764, %v211
    %v771 = vadd.f32 %v765, %v211
    %v772 = vadd.f32 %v766, %v211
    %v773 = vsel %vm531, %v767, -inf
    %774 = vmax.xlane.f32.xlu0 %v773
    %v775 = vpop.xlane.xlu0 %774
    %v776 = vsel %vm531, %v768, -inf
    %777 = vmax.xlane.f32.xlu0 %v776
    %v778 = vpop.xlane.xlu0 %777
    %v779 = vsel %vm531, %v769, -inf
    %780 = vmax.xlane.f32.xlu0 %v779
    %v781 = vpop.xlane.xlu0 %780
    %v782 = vsel %vm531, %v770, -inf
    %783 = vmax.xlane.f32.xlu0 %v782
    %v784 = vpop.xlane.xlu0 %783
    %v785 = vsel %vm531, %v771, -inf
    %786 = vmax.xlane.f32.xlu0 %v785
    %v787 = vpop.xlane.xlu0 %786
    %v788 = vsel %vm531, %v772, -inf
    %789 = vmax.xlane.f32.xlu0 %v788
    %v790 = vpop.xlane.xlu0 %789
    %v791 = vsub.f32 %v767, %v775
    %v792 = vsub.f32 %v768, %v778
    %v793 = vsub.f32 %v769, %v781
    %v794 = vsub.f32 %v770, %v784
    %v795 = vsub.f32 %v771, %v787
    %v796 = vsub.f32 %v772, %v790
    %v797 = vmul.f32 %v791, 1.442695
    %v798 = vpow.pop %v797
    %v799 = vmul.f32 %v792, 1.442695
    %v800 = vpow.pop %v799
    %v801 = vmul.f32 %v793, 1.442695
    %v802 = vpow.pop %v801
    %v803 = vmul.f32 %v794, 1.442695
    %v804 = vpow.pop %v803
    %v805 = vmul.f32 %v795, 1.442695
    %v806 = vpow.pop %v805
    %v807 = vmul.f32 %v796, 1.442695
    %v808 = vpow.pop %v807
    %v809 = vsel %vm531, %v798, 0.0
    %810 = vadd.xlane.f32.xlu0 %v809
    %v811 = vpop.xlane.xlu0 %810
    %v812 = vsel %vm531, %v800, 0.0
    %813 = vadd.xlane.f32.xlu0 %v812
    %v814 = vpop.xlane.xlu0 %813
    %v815 = vsel %vm531, %v802, 0.0
    %816 = vadd.xlane.f32.xlu0 %v815
    %v817 = vpop.xlane.xlu0 %816
    %v818 = vsel %vm531, %v804, 0.0
    %819 = vadd.xlane.f32.xlu0 %v818
    %v820 = vpop.xlane.xlu0 %819
    %v821 = vsel %vm531, %v806, 0.0
    %822 = vadd.xlane.f32.xlu0 %v821
    %v823 = vpop.xlane.xlu0 %822
    %v824 = vsel %vm531, %v808, 0.0
    %825 = vadd.xlane.f32.xlu0 %v824
    %v826 = vpop.xlane.xlu0 %825
    %v827 = vrcp.pop %v811
    %v828 = vrcp.pop %v814
    %v829 = vrcp.pop %v817
    %v830 = vrcp.pop %v820
    %v831 = vrcp.pop %v823
    %v832 = vrcp.pop %v826
    %v833 = vmul.f32 %v798, %v827
    %v834 = vmul.f32 %v800, %v828
    %v835 = vmul.f32 %v802, %v829
    %v836 = vmul.f32 %v804, %v830
    %v837 = vmul.f32 %v806, %v831
    %v838 = vmul.f32 %v808, %v832
    %v839 = vpack.c.bf16 %v833, %v833
    %v840 = vpack.c.bf16 %v834, %v834
    %v841 = vpack.c.bf16 %v835, %v835
    %v842 = vpack.c.bf16 %v836, %v836
    %v843 = vpack.c.bf16 %v837, %v837
    %v844 = vpack.c.bf16 %v838, %v838
    %v848 = vunpack.c.l.b16 %v839
    %v849 = vunpack.c.l.b16 %v840
    %v850 = vunpack.c.l.b16 %v841
    %v851 = vpack.c.b16 %v849, %v848
    %v852 = vpack.c.b16 %v850, %v850
    %853 = vrot.lane.b32.xlu0 %v440, 56
    %v854 = vpop.permute.xlu0 %853
    %855 = vrot.lane.b32.xlu0 %v441, 56
    %v856 = vpop.permute.xlu0 %855
    %v859 = vsel %vm531, %v851, 0
    %v862 = vsel %vm531, %v852, 0
    %v865 = vsel %vm623, %v856, 0
    %867 = vmatpush.bf16.msra.mxu0 0
    %868 = vmatpush.bf16.msra.mxu0 0
    %869 = vmatpush.bf16.msra.mxu0 0
    %870 = vmatpush.bf16.msra.mxu0 0
    %871 = vmatpush.bf16.msra.mxu0 0
    %872 = vmatpush.bf16.msra.mxu0 0
    %873 = vmatpush.bf16.msra.mxu0 %v865
    %874 = vmatpush.bf16.msra.mxu0 %v854
    %875 = vmatmul.bf16.gmra.mxu0 %v859
    %v876 = vpop.f32.mrf.mxu0
    %v877 = vadd.f32 0.0, %v876
    %v878 = vpop.f32.mrf.mxu0
    %v879 = vadd.f32 0.0, %v878
    %880 = vmatmul.bf16.gmra.mxu0 %v862
    %v881 = vpop.f32.mrf.mxu0
    %v882 = vadd.f32 0.0, %v881
    %v883 = vpop.f32.mrf.mxu0
    %884 = vdwg.mxu0
    %v888 = vunpack.c.l.b16 %v842
    %v889 = vunpack.c.l.b16 %v843
    %v890 = vunpack.c.l.b16 %v844
    %v891 = vpack.c.b16 %v889, %v888
    %v892 = vpack.c.b16 %v890, %v890
    %893 = vrot.lane.b32.xlu0 %v483, 56
    %v894 = vpop.permute.xlu0 %893
    %895 = vrot.lane.b32.xlu0 %v484, 56
    %v896 = vpop.permute.xlu0 %895
    %v899 = vsel %vm531, %v891, 0
    %v902 = vsel %vm531, %v892, 0
    %v905 = vsel %vm623, %v896, 0
    %907 = vmatpush.bf16.msra.mxu0 0
    %908 = vmatpush.bf16.msra.mxu0 0
    %909 = vmatpush.bf16.msra.mxu0 0
    %910 = vmatpush.bf16.msra.mxu0 0
    %911 = vmatpush.bf16.msra.mxu0 0
    %912 = vmatpush.bf16.msra.mxu0 0
    %913 = vmatpush.bf16.msra.mxu0 %v905
    %914 = vmatpush.bf16.msra.mxu0 %v894
    %915 = vmatmul.bf16.gmra.mxu0 %v899
    %v916 = vpop.f32.mrf.mxu0
    %v917 = vadd.f32 0.0, %v916
    %v918 = vpop.f32.mrf.mxu0
    %v919 = vadd.f32 0.0, %v918
    %920 = vmatmul.bf16.gmra.mxu0 %v902
    %v921 = vpop.f32.mrf.mxu0
    %v922 = vadd.f32 0.0, %v921
    %v923 = vpop.f32.mrf.mxu0
    %924 = vdwg.mxu0
    %925 = vrot.lane.b32.xlu0 %v440, 112
    %v926 = vpop.permute.xlu0 %925
    %927 = vrot.lane.b32.xlu0 %v441, 112
    %v928 = vpop.permute.xlu0 %927
    %929 = vrot.lane.b32.xlu0 %v440, 80
    %v930 = vpop.permute.xlu0 %929
    %931 = vrot.lane.b32.xlu0 %v441, 80
    %v932 = vpop.permute.xlu0 %931
    %v934 = vsel %vm446, %v926, 0
    %v937 = vsel %vm446, %v928, 0
    %v940 = vsel %vm446, %v930, 0
    %v943 = vsel %vm446, %v932, 0
    %945 = vmatpush.bf16.xpose.msra.mxu0 0
    %946 = vmatpush.bf16.xpose.msra.mxu0 0
    %947 = vmatpush.bf16.xpose.msra.mxu0 0
    %948 = vmatpush.bf16.xpose.msra.mxu0 0
    %949 = vmatpush.bf16.xpose.msra.mxu0 0
    %950 = vmatpush.bf16.xpose.msra.mxu0 0
    %951 = vmatpush.bf16.xpose.msra.mxu0 %v943
    %952 = vmatpush.bf16.xpose.msra.mxu0 %v940
    %953 = vmatmul.bf16.gmra.mxu0 %v934
    %v954 = vpop.f32.mrf.mxu0
    %v955 = vadd.f32 0.0, %v954
    %v956 = vpop.f32.mrf.mxu0
    %v957 = vadd.f32 0.0, %v956
    %958 = vmatmul.bf16.gmra.mxu0 %v937
    %v959 = vpop.f32.mrf.mxu0
    %v960 = vadd.f32 0.0, %v959
    %v961 = vpop.f32.mrf.mxu0
    %962 = vdwg.mxu0
    %963 = vrot.lane.b32.xlu0 %v483, 112
    %v964 = vpop.permute.xlu0 %963
    %965 = vrot.lane.b32.xlu0 %v484, 112
    %v966 = vpop.permute.xlu0 %965
    %967 = vrot.lane.b32.xlu0 %v483, 80
    %v968 = vpop.permute.xlu0 %967
    %969 = vrot.lane.b32.xlu0 %v484, 80
    %v970 = vpop.permute.xlu0 %969
    %v972 = vsel %vm446, %v964, 0
    %v975 = vsel %vm446, %v966, 0
    %v978 = vsel %vm446, %v968, 0
    %v981 = vsel %vm446, %v970, 0
    %983 = vmatpush.bf16.xpose.msra.mxu0 0
    %984 = vmatpush.bf16.xpose.msra.mxu0 0
    %985 = vmatpush.bf16.xpose.msra.mxu0 0
    %986 = vmatpush.bf16.xpose.msra.mxu0 0
    %987 = vmatpush.bf16.xpose.msra.mxu0 0
    %988 = vmatpush.bf16.xpose.msra.mxu0 0
    %989 = vmatpush.bf16.xpose.msra.mxu0 %v981
    %990 = vmatpush.bf16.xpose.msra.mxu0 %v978
    %991 = vmatmul.bf16.gmra.mxu0 %v972
    %v992 = vpop.f32.mrf.mxu0
    %v993 = vadd.f32 0.0, %v992
    %v994 = vpop.f32.mrf.mxu0
    %v995 = vadd.f32 0.0, %v994
    %996 = vmatmul.bf16.gmra.mxu0 %v975
    %v997 = vpop.f32.mrf.mxu0
    %v998 = vadd.f32 0.0, %v997
    %v999 = vpop.f32.mrf.mxu0
    %1000 = vdwg.mxu0
    %v1001 = vmul.f32 %v955, 0.35355338
    %v1002 = vmul.f32 %v957, 0.35355338
    %v1003 = vmul.f32 %v960, 0.35355338
    %v1004 = vmul.f32 %v993, 0.35355338
    %v1005 = vmul.f32 %v995, 0.35355338
    %v1006 = vmul.f32 %v998, 0.35355338
    %v1007 = vadd.f32 %v1001, %v211
    %v1008 = vadd.f32 %v1002, %v211
    %v1009 = vadd.f32 %v1003, %v211
    %v1010 = vadd.f32 %v1004, %v211
    %v1011 = vadd.f32 %v1005, %v211
    %v1012 = vadd.f32 %v1006, %v211
    %v1013 = vsel %vm531, %v1007, -inf
    %1014 = vmax.xlane.f32.xlu0 %v1013
    %v1015 = vpop.xlane.xlu0 %1014
    %v1016 = vsel %vm531, %v1008, -inf
    %1017 = vmax.xlane.f32.xlu0 %v1016
    %v1018 = vpop.xlane.xlu0 %1017
    %v1019 = vsel %vm531, %v1009, -inf
    %1020 = vmax.xlane.f32.xlu0 %v1019
    %v1021 = vpop.xlane.xlu0 %1020
    %v1022 = vsel %vm531, %v1010, -inf
    %1023 = vmax.xlane.f32.xlu0 %v1022
    %v1024 = vpop.xlane.xlu0 %1023
    %v1025 = vsel %vm531, %v1011, -inf
    %1026 = vmax.xlane.f32.xlu0 %v1025
    %v1027 = vpop.xlane.xlu0 %1026
    %v1028 = vsel %vm531, %v1012, -inf
    %1029 = vmax.xlane.f32.xlu0 %v1028
    %v1030 = vpop.xlane.xlu0 %1029
    %v1031 = vsub.f32 %v1007, %v1015
    %v1032 = vsub.f32 %v1008, %v1018
    %v1033 = vsub.f32 %v1009, %v1021
    %v1034 = vsub.f32 %v1010, %v1024
    %v1035 = vsub.f32 %v1011, %v1027
    %v1036 = vsub.f32 %v1012, %v1030
    %v1037 = vmul.f32 %v1031, 1.442695
    %v1038 = vpow.pop %v1037
    %v1039 = vmul.f32 %v1032, 1.442695
    %v1040 = vpow.pop %v1039
    %v1041 = vmul.f32 %v1033, 1.442695
    %v1042 = vpow.pop %v1041
    %v1043 = vmul.f32 %v1034, 1.442695
    %v1044 = vpow.pop %v1043
    %v1045 = vmul.f32 %v1035, 1.442695
    %v1046 = vpow.pop %v1045
    %v1047 = vmul.f32 %v1036, 1.442695
    %v1048 = vpow.pop %v1047
    %v1049 = vsel %vm531, %v1038, 0.0
    %1050 = vadd.xlane.f32.xlu0 %v1049
    %v1051 = vpop.xlane.xlu0 %1050
    %v1052 = vsel %vm531, %v1040, 0.0
    %1053 = vadd.xlane.f32.xlu0 %v1052
    %v1054 = vpop.xlane.xlu0 %1053
    %v1055 = vsel %vm531, %v1042, 0.0
    %1056 = vadd.xlane.f32.xlu0 %v1055
    %v1057 = vpop.xlane.xlu0 %1056
    %v1058 = vsel %vm531, %v1044, 0.0
    %1059 = vadd.xlane.f32.xlu0 %v1058
    %v1060 = vpop.xlane.xlu0 %1059
    %v1061 = vsel %vm531, %v1046, 0.0
    %1062 = vadd.xlane.f32.xlu0 %v1061
    %v1063 = vpop.xlane.xlu0 %1062
    %v1064 = vsel %vm531, %v1048, 0.0
    %1065 = vadd.xlane.f32.xlu0 %v1064
    %v1066 = vpop.xlane.xlu0 %1065
    %v1067 = vrcp.pop %v1051
    %v1068 = vrcp.pop %v1054
    %v1069 = vrcp.pop %v1057
    %v1070 = vrcp.pop %v1060
    %v1071 = vrcp.pop %v1063
    %v1072 = vrcp.pop %v1066
    %v1073 = vmul.f32 %v1038, %v1067
    %v1074 = vmul.f32 %v1040, %v1068
    %v1075 = vmul.f32 %v1042, %v1069
    %v1076 = vmul.f32 %v1044, %v1070
    %v1077 = vmul.f32 %v1046, %v1071
    %v1078 = vmul.f32 %v1048, %v1072
    %v1079 = vpack.c.bf16 %v1073, %v1073
    %v1080 = vpack.c.bf16 %v1074, %v1074
    %v1081 = vpack.c.bf16 %v1075, %v1075
    %v1082 = vpack.c.bf16 %v1076, %v1076
    %v1083 = vpack.c.bf16 %v1077, %v1077
    %v1084 = vpack.c.bf16 %v1078, %v1078
    %v1088 = vunpack.c.l.b16 %v1079
    %v1089 = vunpack.c.l.b16 %v1080
    %v1090 = vunpack.c.l.b16 %v1081
    %v1091 = vpack.c.b16 %v1089, %v1088
    %v1092 = vpack.c.b16 %v1090, %v1090
    %1093 = vrot.lane.b32.xlu0 %v440, 48
    %v1094 = vpop.permute.xlu0 %1093
    %1095 = vrot.lane.b32.xlu0 %v441, 48
    %v1096 = vpop.permute.xlu0 %1095
    %v1099 = vsel %vm531, %v1091, 0
    %v1102 = vsel %vm531, %v1092, 0
    %v1105 = vsel %vm623, %v1096, 0
    %1107 = vmatpush.bf16.msra.mxu0 0
    %1108 = vmatpush.bf16.msra.mxu0 0
    %1109 = vmatpush.bf16.msra.mxu0 0
    %1110 = vmatpush.bf16.msra.mxu0 0
    %1111 = vmatpush.bf16.msra.mxu0 0
    %1112 = vmatpush.bf16.msra.mxu0 0
    %1113 = vmatpush.bf16.msra.mxu0 %v1105
    %1114 = vmatpush.bf16.msra.mxu0 %v1094
    %1115 = vmatmul.bf16.gmra.mxu0 %v1099
    %v1116 = vpop.f32.mrf.mxu0
    %v1117 = vadd.f32 0.0, %v1116
    %v1118 = vpop.f32.mrf.mxu0
    %v1119 = vadd.f32 0.0, %v1118
    %1120 = vmatmul.bf16.gmra.mxu0 %v1102
    %v1121 = vpop.f32.mrf.mxu0
    %v1122 = vadd.f32 0.0, %v1121
    %v1123 = vpop.f32.mrf.mxu0
    %1124 = vdwg.mxu0
    %v1128 = vunpack.c.l.b16 %v1082
    %v1129 = vunpack.c.l.b16 %v1083
    %v1130 = vunpack.c.l.b16 %v1084
    %v1131 = vpack.c.b16 %v1129, %v1128
    %v1132 = vpack.c.b16 %v1130, %v1130
    %1133 = vrot.lane.b32.xlu0 %v483, 48
    %v1134 = vpop.permute.xlu0 %1133
    %1135 = vrot.lane.b32.xlu0 %v484, 48
    %v1136 = vpop.permute.xlu0 %1135
    %v1139 = vsel %vm531, %v1131, 0
    %v1142 = vsel %vm531, %v1132, 0
    %v1145 = vsel %vm623, %v1136, 0
    %1147 = vmatpush.bf16.msra.mxu0 0
    %1148 = vmatpush.bf16.msra.mxu0 0
    %1149 = vmatpush.bf16.msra.mxu0 0
    %1150 = vmatpush.bf16.msra.mxu0 0
    %1151 = vmatpush.bf16.msra.mxu0 0
    %1152 = vmatpush.bf16.msra.mxu0 0
    %1153 = vmatpush.bf16.msra.mxu0 %v1145
    %1154 = vmatpush.bf16.msra.mxu0 %v1134
    %1155 = vmatmul.bf16.gmra.mxu0 %v1139
    %v1156 = vpop.f32.mrf.mxu0
    %v1157 = vadd.f32 0.0, %v1156
    %v1158 = vpop.f32.mrf.mxu0
    %v1159 = vadd.f32 0.0, %v1158
    %1160 = vmatmul.bf16.gmra.mxu0 %v1142
    %v1161 = vpop.f32.mrf.mxu0
    %v1162 = vadd.f32 0.0, %v1161
    %v1163 = vpop.f32.mrf.mxu0
    %1164 = vdwg.mxu0
    %1165 = vrot.lane.b32.xlu0 %v440, 104
    %v1166 = vpop.permute.xlu0 %1165
    %1167 = vrot.lane.b32.xlu0 %v441, 104
    %v1168 = vpop.permute.xlu0 %1167
    %1169 = vrot.lane.b32.xlu0 %v440, 72
    %v1170 = vpop.permute.xlu0 %1169
    %1171 = vrot.lane.b32.xlu0 %v441, 72
    %v1172 = vpop.permute.xlu0 %1171
    %v1174 = vsel %vm446, %v1166, 0
    %v1177 = vsel %vm446, %v1168, 0
    %v1180 = vsel %vm446, %v1170, 0
    %v1183 = vsel %vm446, %v1172, 0
    %1185 = vmatpush.bf16.xpose.msra.mxu0 0
    %1186 = vmatpush.bf16.xpose.msra.mxu0 0
    %1187 = vmatpush.bf16.xpose.msra.mxu0 0
    %1188 = vmatpush.bf16.xpose.msra.mxu0 0
    %1189 = vmatpush.bf16.xpose.msra.mxu0 0
    %1190 = vmatpush.bf16.xpose.msra.mxu0 0
    %1191 = vmatpush.bf16.xpose.msra.mxu0 %v1183
    %1192 = vmatpush.bf16.xpose.msra.mxu0 %v1180
    %1193 = vmatmul.bf16.gmra.mxu0 %v1174
    %v1194 = vpop.f32.mrf.mxu0
    %v1195 = vadd.f32 0.0, %v1194
    %v1196 = vpop.f32.mrf.mxu0
    %v1197 = vadd.f32 0.0, %v1196
    %1198 = vmatmul.bf16.gmra.mxu0 %v1177
    %v1199 = vpop.f32.mrf.mxu0
    %v1200 = vadd.f32 0.0, %v1199
    %v1201 = vpop.f32.mrf.mxu0
    %1202 = vdwg.mxu0
    %1203 = vrot.lane.b32.xlu0 %v483, 104
    %v1204 = vpop.permute.xlu0 %1203
    %1205 = vrot.lane.b32.xlu0 %v484, 104
    %v1206 = vpop.permute.xlu0 %1205
    %1207 = vrot.lane.b32.xlu0 %v483, 72
    %v1208 = vpop.permute.xlu0 %1207
    %1209 = vrot.lane.b32.xlu0 %v484, 72
    %v1210 = vpop.permute.xlu0 %1209
    %v1212 = vsel %vm446, %v1204, 0
    %v1215 = vsel %vm446, %v1206, 0
    %v1218 = vsel %vm446, %v1208, 0
    %v1221 = vsel %vm446, %v1210, 0
    %1223 = vmatpush.bf16.xpose.msra.mxu0 0
    %1224 = vmatpush.bf16.xpose.msra.mxu0 0
    %1225 = vmatpush.bf16.xpose.msra.mxu0 0
    %1226 = vmatpush.bf16.xpose.msra.mxu0 0
    %1227 = vmatpush.bf16.xpose.msra.mxu0 0
    %1228 = vmatpush.bf16.xpose.msra.mxu0 0
    %1229 = vmatpush.bf16.xpose.msra.mxu0 %v1221
    %1230 = vmatpush.bf16.xpose.msra.mxu0 %v1218
    %1231 = vmatmul.bf16.gmra.mxu0 %v1212
    %v1232 = vpop.f32.mrf.mxu0
    %v1233 = vadd.f32 0.0, %v1232
    %v1234 = vpop.f32.mrf.mxu0
    %v1235 = vadd.f32 0.0, %v1234
    %1236 = vmatmul.bf16.gmra.mxu0 %v1215
    %v1237 = vpop.f32.mrf.mxu0
    %v1238 = vadd.f32 0.0, %v1237
    %v1239 = vpop.f32.mrf.mxu0
    %1240 = vdwg.mxu0
    %v1241 = vmul.f32 %v1195, 0.35355338
    %v1242 = vmul.f32 %v1197, 0.35355338
    %v1243 = vmul.f32 %v1200, 0.35355338
    %v1244 = vmul.f32 %v1233, 0.35355338
    %v1245 = vmul.f32 %v1235, 0.35355338
    %v1246 = vmul.f32 %v1238, 0.35355338
    %v1247 = vadd.f32 %v1241, %v211
    %v1248 = vadd.f32 %v1242, %v211
    %v1249 = vadd.f32 %v1243, %v211
    %v1250 = vadd.f32 %v1244, %v211
    %v1251 = vadd.f32 %v1245, %v211
    %v1252 = vadd.f32 %v1246, %v211
    %v1253 = vsel %vm531, %v1247, -inf
    %1254 = vmax.xlane.f32.xlu0 %v1253
    %v1255 = vpop.xlane.xlu0 %1254
    %v1256 = vsel %vm531, %v1248, -inf
    %1257 = vmax.xlane.f32.xlu0 %v1256
    %v1258 = vpop.xlane.xlu0 %1257
    %v1259 = vsel %vm531, %v1249, -inf
    %1260 = vmax.xlane.f32.xlu0 %v1259
    %v1261 = vpop.xlane.xlu0 %1260
    %v1262 = vsel %vm531, %v1250, -inf
    %1263 = vmax.xlane.f32.xlu0 %v1262
    %v1264 = vpop.xlane.xlu0 %1263
    %v1265 = vsel %vm531, %v1251, -inf
    %1266 = vmax.xlane.f32.xlu0 %v1265
    %v1267 = vpop.xlane.xlu0 %1266
    %v1268 = vsel %vm531, %v1252, -inf
    %1269 = vmax.xlane.f32.xlu0 %v1268
    %v1270 = vpop.xlane.xlu0 %1269
    %v1271 = vsub.f32 %v1247, %v1255
    %v1272 = vsub.f32 %v1248, %v1258
    %v1273 = vsub.f32 %v1249, %v1261
    %v1274 = vsub.f32 %v1250, %v1264
    %v1275 = vsub.f32 %v1251, %v1267
    %v1276 = vsub.f32 %v1252, %v1270
    %v1277 = vmul.f32 %v1271, 1.442695
    %v1278 = vpow.pop %v1277
    %v1279 = vmul.f32 %v1272, 1.442695
    %v1280 = vpow.pop %v1279
    %v1281 = vmul.f32 %v1273, 1.442695
    %v1282 = vpow.pop %v1281
    %v1283 = vmul.f32 %v1274, 1.442695
    %v1284 = vpow.pop %v1283
    %v1285 = vmul.f32 %v1275, 1.442695
    %v1286 = vpow.pop %v1285
    %v1287 = vmul.f32 %v1276, 1.442695
    %v1288 = vpow.pop %v1287
    %v1289 = vsel %vm531, %v1278, 0.0
    %1290 = vadd.xlane.f32.xlu0 %v1289
    %v1291 = vpop.xlane.xlu0 %1290
    %v1292 = vsel %vm531, %v1280, 0.0
    %1293 = vadd.xlane.f32.xlu0 %v1292
    %v1294 = vpop.xlane.xlu0 %1293
    %v1295 = vsel %vm531, %v1282, 0.0
    %1296 = vadd.xlane.f32.xlu0 %v1295
    %v1297 = vpop.xlane.xlu0 %1296
    %v1298 = vsel %vm531, %v1284, 0.0
    %1299 = vadd.xlane.f32.xlu0 %v1298
    %v1300 = vpop.xlane.xlu0 %1299
    %v1301 = vsel %vm531, %v1286, 0.0
    %1302 = vadd.xlane.f32.xlu0 %v1301
    %v1303 = vpop.xlane.xlu0 %1302
    %v1304 = vsel %vm531, %v1288, 0.0
    %1305 = vadd.xlane.f32.xlu0 %v1304
    %v1306 = vpop.xlane.xlu0 %1305
    %v1307 = vrcp.pop %v1291
    %v1308 = vrcp.pop %v1294
    %v1309 = vrcp.pop %v1297
    %v1310 = vrcp.pop %v1300
    %v1311 = vrcp.pop %v1303
    %v1312 = vrcp.pop %v1306
    %v1313 = vmul.f32 %v1278, %v1307
    %v1314 = vmul.f32 %v1280, %v1308
    %v1315 = vmul.f32 %v1282, %v1309
    %v1316 = vmul.f32 %v1284, %v1310
    %v1317 = vmul.f32 %v1286, %v1311
    %v1318 = vmul.f32 %v1288, %v1312
    %v1319 = vpack.c.bf16 %v1313, %v1313
    %v1320 = vpack.c.bf16 %v1314, %v1314
    %v1321 = vpack.c.bf16 %v1315, %v1315
    %v1322 = vpack.c.bf16 %v1316, %v1316
    %v1323 = vpack.c.bf16 %v1317, %v1317
    %v1324 = vpack.c.bf16 %v1318, %v1318
    %v1328 = vunpack.c.l.b16 %v1319
    %v1329 = vunpack.c.l.b16 %v1320
    %v1330 = vunpack.c.l.b16 %v1321
    %v1331 = vpack.c.b16 %v1329, %v1328
    %v1332 = vpack.c.b16 %v1330, %v1330
    %1333 = vrot.lane.b32.xlu0 %v440, 40
    %v1334 = vpop.permute.xlu0 %1333
    %1335 = vrot.lane.b32.xlu0 %v441, 40
    %v1336 = vpop.permute.xlu0 %1335
    %v1339 = vsel %vm531, %v1331, 0
    %v1342 = vsel %vm531, %v1332, 0
    %v1345 = vsel %vm623, %v1336, 0
    %1347 = vmatpush.bf16.msra.mxu0 0
    %1348 = vmatpush.bf16.msra.mxu0 0
    %1349 = vmatpush.bf16.msra.mxu0 0
    %1350 = vmatpush.bf16.msra.mxu0 0
    %1351 = vmatpush.bf16.msra.mxu0 0
    %1352 = vmatpush.bf16.msra.mxu0 0
    %1353 = vmatpush.bf16.msra.mxu0 %v1345
    %1354 = vmatpush.bf16.msra.mxu0 %v1334
    %1355 = vmatmul.bf16.gmra.mxu0 %v1339
    %v1356 = vpop.f32.mrf.mxu0
    %v1357 = vadd.f32 0.0, %v1356
    %v1358 = vpop.f32.mrf.mxu0
    %v1359 = vadd.f32 0.0, %v1358
    %1360 = vmatmul.bf16.gmra.mxu0 %v1342
    %v1361 = vpop.f32.mrf.mxu0
    %v1362 = vadd.f32 0.0, %v1361
    %v1363 = vpop.f32.mrf.mxu0
    %1364 = vdwg.mxu0
    %v1368 = vunpack.c.l.b16 %v1322
    %v1369 = vunpack.c.l.b16 %v1323
    %v1370 = vunpack.c.l.b16 %v1324
    %v1371 = vpack.c.b16 %v1369, %v1368
    %v1372 = vpack.c.b16 %v1370, %v1370
    %1373 = vrot.lane.b32.xlu0 %v483, 40
    %v1374 = vpop.permute.xlu0 %1373
    %1375 = vrot.lane.b32.xlu0 %v484, 40
    %v1376 = vpop.permute.xlu0 %1375
    %v1379 = vsel %vm531, %v1371, 0
    %v1382 = vsel %vm531, %v1372, 0
    %v1385 = vsel %vm623, %v1376, 0
    %1387 = vmatpush.bf16.msra.mxu0 0
    %1388 = vmatpush.bf16.msra.mxu0 0
    %1389 = vmatpush.bf16.msra.mxu0 0
    %1390 = vmatpush.bf16.msra.mxu0 0
    %1391 = vmatpush.bf16.msra.mxu0 0
    %1392 = vmatpush.bf16.msra.mxu0 0
    %1393 = vmatpush.bf16.msra.mxu0 %v1385
    %1394 = vmatpush.bf16.msra.mxu0 %v1374
    %1395 = vmatmul.bf16.gmra.mxu0 %v1379
    %v1396 = vpop.f32.mrf.mxu0
    %v1397 = vadd.f32 0.0, %v1396
    %v1398 = vpop.f32.mrf.mxu0
    %v1399 = vadd.f32 0.0, %v1398
    %1400 = vmatmul.bf16.gmra.mxu0 %v1382
    %v1401 = vpop.f32.mrf.mxu0
    %v1402 = vadd.f32 0.0, %v1401
    %v1403 = vpop.f32.mrf.mxu0
    %1404 = vdwg.mxu0
    %1411 = vrot.lane.b32.xlu0 %v877, 8
    %v1412 = vpop.permute.xlu0 %1411
    %1413 = vrot.lane.b32.xlu0 %v879, 8
    %v1414 = vpop.permute.xlu0 %1413
    %1415 = vrot.lane.b32.xlu0 %v882, 8
    %v1416 = vpop.permute.xlu0 %1415
    %1417 = vrot.lane.b32.xlu0 %v917, 8
    %v1418 = vpop.permute.xlu0 %1417
    %1419 = vrot.lane.b32.xlu0 %v919, 8
    %v1420 = vpop.permute.xlu0 %1419
    %1421 = vrot.lane.b32.xlu0 %v922, 8
    %v1422 = vpop.permute.xlu0 %1421
    %1435 = vrot.lane.b32.xlu0 %v1117, 16
    %v1436 = vpop.permute.xlu0 %1435
    %1437 = vrot.lane.b32.xlu0 %v1119, 16
    %v1438 = vpop.permute.xlu0 %1437
    %1439 = vrot.lane.b32.xlu0 %v1122, 16
    %v1440 = vpop.permute.xlu0 %1439
    %1441 = vrot.lane.b32.xlu0 %v1157, 16
    %v1442 = vpop.permute.xlu0 %1441
    %1443 = vrot.lane.b32.xlu0 %v1159, 16
    %v1444 = vpop.permute.xlu0 %1443
    %1445 = vrot.lane.b32.xlu0 %v1162, 16
    %v1446 = vpop.permute.xlu0 %1445
    %1459 = vrot.lane.b32.xlu0 %v1357, 24
    %v1460 = vpop.permute.xlu0 %1459
    %1461 = vrot.lane.b32.xlu0 %v1359, 24
    %v1462 = vpop.permute.xlu0 %1461
    %1463 = vrot.lane.b32.xlu0 %v1362, 24
    %v1464 = vpop.permute.xlu0 %1463
    %1465 = vrot.lane.b32.xlu0 %v1397, 24
    %v1466 = vpop.permute.xlu0 %1465
    %1467 = vrot.lane.b32.xlu0 %v1399, 24
    %v1468 = vpop.permute.xlu0 %1467
    %1469 = vrot.lane.b32.xlu0 %v1402, 24
    %v1470 = vpop.permute.xlu0 %1469
    %v1477 = vsel %vm446, %v637, %v1412
    %v1478 = vsel %vm446, %v639, %v1414
    %v1479 = vsel %vm446, %v642, %v1416
    %v1480 = vsel %vm446, %v677, %v1418
    %v1481 = vsel %vm446, %v679, %v1420
    %v1482 = vsel %vm446, %v682, %v1422
    %vm1483 = vcmask 130048
    %v1484 = vsel %vm1483, %v1477, %v1436
    %v1485 = vsel %vm1483, %v1478, %v1438
    %v1486 = vsel %vm1483, %v1479, %v1440
    %v1487 = vsel %vm1483, %v1480, %v1442
    %v1488 = vsel %vm1483, %v1481, %v1444
    %v1489 = vsel %vm1483, %v1482, %v1446
    %v1490 = vsel %vm531, %v1484, %v1460
    %v1491 = vsel %vm531, %v1485, %v1462
    %v1492 = vsel %vm531, %v1486, %v1464
    %v1493 = vsel %vm531, %v1487, %v1466
    %v1494 = vsel %vm531, %v1488, %v1468
    %v1495 = vsel %vm531, %v1489, %v1470
    %v1496 = vpack.c.bf16 %v1491, %v1490
    %v1497 = vpack.c.bf16 %v1493, %v1492
    %v1498 = vpack.c.bf16 %v1495, %v1494
    %v1499 = vld [vmem:[%s15] sm:$0xf]
    %v1500 = vld [vmem:[%s15 + $0x4] sm:$0xf]
    %v1501 = vld [vmem:[%s15 + $0x8] sm:$0xf]
    %v1502 = vld [vmem:[%s15 + $0xc] sm:$0xf]
    %v1507 = vunpack.c.l.b16 %v1499
    %v1508 = vunpack.c.l.b16 %v1500
    %v1509 = vunpack.c.l.b16 %v1501
    %v1510 = vunpack.c.l.b16 %v1502
    %v1511 = vpack.c.b16 %v1508, %v1507
    %v1512 = vpack.c.b16 %v1510, %v1509
    %v1516 = vsel %vm214, %v1496, 0
    %v1519 = vsel %vm214, %v1497, 0
    %v1522 = vsel %vm214, %v1498, 0
    %1524 = vmatpush.bf16.msra.mxu0 0
    %1525 = vmatpush.bf16.msra.mxu0 0
    %1526 = vmatpush.bf16.msra.mxu0 0
    %1527 = vmatpush.bf16.msra.mxu0 0
    %1528 = vmatpush.bf16.msra.mxu0 0
    %1529 = vmatpush.bf16.msra.mxu0 0
    %1530 = vmatpush.bf16.msra.mxu0 %v1512
    %1531 = vmatpush.bf16.msra.mxu0 %v1511
    %1532 = vmatmul.bf16.gmra.mxu0 %v1516
    %v1533 = vpop.f32.mrf.mxu0
    %v1534 = vadd.f32 0.0, %v1533
    %v1535 = vpop.f32.mrf.mxu0
    %v1536 = vadd.f32 0.0, %v1535
    %1537 = vmatmul.bf16.gmra.mxu0 %v1519
    %v1538 = vpop.f32.mrf.mxu0
    %v1539 = vadd.f32 0.0, %v1538
    %v1540 = vpop.f32.mrf.mxu0
    %v1541 = vadd.f32 0.0, %v1540
    %1542 = vmatmul.bf16.gmra.mxu0 %v1522
    %v1543 = vpop.f32.mrf.mxu0
    %v1544 = vadd.f32 0.0, %v1543
    %v1545 = vpop.f32.mrf.mxu0
    %v1546 = vadd.f32 0.0, %v1545
    %1547 = vdwg.mxu0
    %v1548 = vadd.f32 %v202, %v1534
    %v1549 = vadd.f32 %v203, %v1536
    %v1550 = vadd.f32 %v204, %v1539
    %v1551 = vadd.f32 %v205, %v1541
    %v1552 = vadd.f32 %v206, %v1544
    %v1553 = vadd.f32 %v207, %v1546
    %v1554 = vld [vmem:[%s17] sm:$0x1]
    %v1556 = vperm.slane %v1554, 0
    %v1558 = vadd.f32 %v1548, %v1556
    %v1559 = vadd.f32 %v1549, %v1556
    %v1560 = vadd.f32 %v1550, %v1556
    %v1561 = vadd.f32 %v1551, %v1556
    %v1562 = vadd.f32 %v1552, %v1556
    %v1563 = vadd.f32 %v1553, %v1556
    %v1564 = vld [vmem:[%s19] sm:$0x1]
    %v1565 = vld [vmem:[%s21] sm:$0x1]
    %v1566 = vsel %vm214, %v1558, 0.0
    %1567 = vadd.xlane.f32.xlu0 %v1566
    %v1568 = vpop.xlane.xlu0 %1567
    %v1569 = vsel %vm214, %v1559, 0.0
    %1570 = vadd.xlane.f32.xlu0 %v1569
    %v1571 = vpop.xlane.xlu0 %1570
    %v1572 = vsel %vm214, %v1560, 0.0
    %1573 = vadd.xlane.f32.xlu0 %v1572
    %v1574 = vpop.xlane.xlu0 %1573
    %v1575 = vsel %vm214, %v1561, 0.0
    %1576 = vadd.xlane.f32.xlu0 %v1575
    %v1577 = vpop.xlane.xlu0 %1576
    %v1578 = vsel %vm214, %v1562, 0.0
    %1579 = vadd.xlane.f32.xlu0 %v1578
    %v1580 = vpop.xlane.xlu0 %1579
    %v1581 = vsel %vm214, %v1563, 0.0
    %1582 = vadd.xlane.f32.xlu0 %v1581
    %v1583 = vpop.xlane.xlu0 %1582
    %v1584 = vmul.f32 %v1568, %v239
    %v1585 = vmul.f32 %v1571, %v239
    %v1586 = vmul.f32 %v1574, %v239
    %v1587 = vmul.f32 %v1577, %v239
    %v1588 = vmul.f32 %v1580, %v239
    %v1589 = vmul.f32 %v1583, %v239
    %v1590 = vsub.f32 %v1558, %v1584
    %v1591 = vsub.f32 %v1559, %v1585
    %v1592 = vsub.f32 %v1560, %v1586
    %v1593 = vsub.f32 %v1561, %v1587
    %v1594 = vsub.f32 %v1562, %v1588
    %v1595 = vsub.f32 %v1563, %v1589
    %v1596 = vmul.f32 %v1590, %v1590
    %v1597 = vmul.f32 %v1591, %v1591
    %v1598 = vmul.f32 %v1592, %v1592
    %v1599 = vmul.f32 %v1593, %v1593
    %v1600 = vmul.f32 %v1594, %v1594
    %v1601 = vmul.f32 %v1595, %v1595
    %v1602 = vsel %vm214, %v1596, 0.0
    %1603 = vadd.xlane.f32.xlu0 %v1602
    %v1604 = vpop.xlane.xlu0 %1603
    %v1605 = vsel %vm214, %v1597, 0.0
    %1606 = vadd.xlane.f32.xlu0 %v1605
    %v1607 = vpop.xlane.xlu0 %1606
    %v1608 = vsel %vm214, %v1598, 0.0
    %1609 = vadd.xlane.f32.xlu0 %v1608
    %v1610 = vpop.xlane.xlu0 %1609
    %v1611 = vsel %vm214, %v1599, 0.0
    %1612 = vadd.xlane.f32.xlu0 %v1611
    %v1613 = vpop.xlane.xlu0 %1612
    %v1614 = vsel %vm214, %v1600, 0.0
    %1615 = vadd.xlane.f32.xlu0 %v1614
    %v1616 = vpop.xlane.xlu0 %1615
    %v1617 = vsel %vm214, %v1601, 0.0
    %1618 = vadd.xlane.f32.xlu0 %v1617
    %v1619 = vpop.xlane.xlu0 %1618
    %v1620 = vmul.f32 %v1604, %v239
    %v1621 = vmul.f32 %v1607, %v239
    %v1622 = vmul.f32 %v1610, %v239
    %v1623 = vmul.f32 %v1613, %v239
    %v1624 = vmul.f32 %v1616, %v239
    %v1625 = vmul.f32 %v1619, %v239
    %v1626 = vadd.f32 %v1620, 1e-05
    %v1627 = vadd.f32 %v1621, 1e-05
    %v1628 = vadd.f32 %v1622, 1e-05
    %v1629 = vadd.f32 %v1623, 1e-05
    %v1630 = vadd.f32 %v1624, 1e-05
    %v1631 = vadd.f32 %v1625, 1e-05
    %v1632 = vrsqrt.pop %v1626
    %v1633 = vmul.f32 %v1632, %v1626
    %v1634 = vmul.f32 %v1633, %v1632
    %v1635 = vmul.f32 0.5, %v1634
    %v1636 = vsub.f32 1.5, %v1635
    %v1637 = vmul.f32 %v1632, %v1636
    %vm1638 = vweird.f32 %v1626
    %vm1639 = vweird.f32 %v1632
    %vm1640 = vmor %vm1638, %vm1639
    %v1641 = vsel %vm1640, %v1632, %v1637
    %v1642 = vrsqrt.pop %v1627
    %v1643 = vmul.f32 %v1642, %v1627
    %v1644 = vmul.f32 %v1643, %v1642
    %v1645 = vmul.f32 0.5, %v1644
    %v1646 = vsub.f32 1.5, %v1645
    %v1647 = vmul.f32 %v1642, %v1646
    %vm1648 = vweird.f32 %v1627
    %vm1649 = vweird.f32 %v1642
    %vm1650 = vmor %vm1648, %vm1649
    %v1651 = vsel %vm1650, %v1642, %v1647
    %v1652 = vrsqrt.pop %v1628
    %v1653 = vmul.f32 %v1652, %v1628
    %v1654 = vmul.f32 %v1653, %v1652
    %v1655 = vmul.f32 0.5, %v1654
    %v1656 = vsub.f32 1.5, %v1655
    %v1657 = vmul.f32 %v1652, %v1656
    %vm1658 = vweird.f32 %v1628
    %vm1659 = vweird.f32 %v1652
    %vm1660 = vmor %vm1658, %vm1659
    %v1661 = vsel %vm1660, %v1652, %v1657
    %v1662 = vrsqrt.pop %v1629
    %v1663 = vmul.f32 %v1662, %v1629
    %v1664 = vmul.f32 %v1663, %v1662
    %v1665 = vmul.f32 0.5, %v1664
    %v1666 = vsub.f32 1.5, %v1665
    %v1667 = vmul.f32 %v1662, %v1666
    %vm1668 = vweird.f32 %v1629
    %vm1669 = vweird.f32 %v1662
    %vm1670 = vmor %vm1668, %vm1669
    %v1671 = vsel %vm1670, %v1662, %v1667
    %v1672 = vrsqrt.pop %v1630
    %v1673 = vmul.f32 %v1672, %v1630
    %v1674 = vmul.f32 %v1673, %v1672
    %v1675 = vmul.f32 0.5, %v1674
    %v1676 = vsub.f32 1.5, %v1675
    %v1677 = vmul.f32 %v1672, %v1676
    %vm1678 = vweird.f32 %v1630
    %vm1679 = vweird.f32 %v1672
    %vm1680 = vmor %vm1678, %vm1679
    %v1681 = vsel %vm1680, %v1672, %v1677
    %v1682 = vrsqrt.pop %v1631
    %v1683 = vmul.f32 %v1682, %v1631
    %v1684 = vmul.f32 %v1683, %v1682
    %v1685 = vmul.f32 0.5, %v1684
    %v1686 = vsub.f32 1.5, %v1685
    %v1687 = vmul.f32 %v1682, %v1686
    %vm1688 = vweird.f32 %v1631
    %vm1689 = vweird.f32 %v1682
    %vm1690 = vmor %vm1688, %vm1689
    %v1691 = vsel %vm1690, %v1682, %v1687
    %v1692 = vmul.f32 %v1590, %v1641
    %v1693 = vmul.f32 %v1591, %v1651
    %v1694 = vmul.f32 %v1592, %v1661
    %v1695 = vmul.f32 %v1593, %v1671
    %v1696 = vmul.f32 %v1594, %v1681
    %v1697 = vmul.f32 %v1595, %v1691
    %v1699 = vperm.slane %v1564, 0
    %v1701 = vmul.f32 %v1692, %v1699
    %v1702 = vmul.f32 %v1693, %v1699
    %v1703 = vmul.f32 %v1694, %v1699
    %v1704 = vmul.f32 %v1695, %v1699
    %v1705 = vmul.f32 %v1696, %v1699
    %v1706 = vmul.f32 %v1697, %v1699
    %v1708 = vperm.slane %v1565, 0
    %v1710 = vadd.f32 %v1701, %v1708
    %v1711 = vadd.f32 %v1702, %v1708
    %v1712 = vadd.f32 %v1703, %v1708
    %v1713 = vadd.f32 %v1704, %v1708
    %v1714 = vadd.f32 %v1705, %v1708
    %v1715 = vadd.f32 %v1706, %v1708
    %v1716 = vpack.c.bf16 %v1711, %v1710
    %v1717 = vpack.c.bf16 %v1713, %v1712
    %v1718 = vpack.c.bf16 %v1715, %v1714
    %v1719 = vld [vmem:[%s23] sm:$0xff]
    %v1720 = vld [vmem:[%s23 + $0x8] sm:$0xff]
    %v1721 = vld [vmem:[%s23 + $0x10] sm:$0xff]
    %v1722 = vld [vmem:[%s23 + $0x18] sm:$0xff]
    %v1723 = vld [vmem:[%s23 + $0x20] sm:$0xff]
    %v1724 = vld [vmem:[%s23 + $0x28] sm:$0xff]
    %v1725 = vld [vmem:[%s23 + $0x30] sm:$0xff]
    %v1726 = vld [vmem:[%s23 + $0x38] sm:$0xff]
    %v1727 = vld [vmem:[%s23 + $0x40] sm:$0xff]
    %v1728 = vld [vmem:[%s23 + $0x48] sm:$0xff]
    %v1729 = vld [vmem:[%s23 + $0x50] sm:$0xff]
    %v1730 = vld [vmem:[%s23 + $0x58] sm:$0xff]
    %v1731 = vld [vmem:[%s23 + $0x60] sm:$0xff]
    %v1732 = vld [vmem:[%s23 + $0x68] sm:$0xff]
    %v1733 = vld [vmem:[%s23 + $0x70] sm:$0xff]
    %v1734 = vld [vmem:[%s23 + $0x78] sm:$0xff]
    %v1735 = vld [vmem:[%s23 + $0x80] sm:$0xff]
    %v1736 = vld [vmem:[%s23 + $0x88] sm:$0xff]
    %v1737 = vld [vmem:[%s23 + $0x90] sm:$0xff]
    %v1738 = vld [vmem:[%s23 + $0x98] sm:$0xff]
    %v1739 = vld [vmem:[%s23 + $0xa0] sm:$0xff]
    %v1740 = vld [vmem:[%s23 + $0xa8] sm:$0xff]
    %v1741 = vld [vmem:[%s23 + $0xb0] sm:$0xff]
    %v1742 = vld [vmem:[%s23 + $0xb8] sm:$0xff]
    %v1743 = vld [vmem:[%s23 + $0xc0] sm:$0xff]
    %v1744 = vld [vmem:[%s23 + $0xc8] sm:$0xff]
    %v1745 = vld [vmem:[%s23 + $0xd0] sm:$0xff]
    %v1746 = vld [vmem:[%s23 + $0xd8] sm:$0xff]
    %v1747 = vld [vmem:[%s23 + $0xe0] sm:$0xff]
    %v1748 = vld [vmem:[%s23 + $0xe8] sm:$0xff]
    %v1749 = vld [vmem:[%s23 + $0xf0] sm:$0xff]
    %v1750 = vld [vmem:[%s23 + $0xf8] sm:$0xff]
    %v1751 = vld [vmem:[%s25] sm:$0xff]
    %v1752 = vld [vmem:[%s25 + $0x8] sm:$0xff]
    %v1755 = vperm.slane %v1751, 0
    %v1756 = vperm.slane %v1751, 1
    %v1757 = vperm.slane %v1751, 2
    %v1758 = vperm.slane %v1751, 3
    %v1759 = vperm.slane %v1751, 4
    %v1760 = vperm.slane %v1751, 5
    %v1761 = vperm.slane %v1751, 6
    %v1762 = vperm.slane %v1751, 7
    %v1763 = vperm.slane %v1752, 0
    %v1764 = vperm.slane %v1752, 1
    %v1765 = vperm.slane %v1752, 2
    %v1766 = vperm.slane %v1752, 3
    %v1767 = vperm.slane %v1752, 4
    %v1768 = vperm.slane %v1752, 5
    %v1769 = vperm.slane %v1752, 6
    %v1770 = vperm.slane %v1752, 7
    %v1819 = vunpack.c.l.b16 %v1719
    %v1820 = vunpack.c.h.b16 %v1719
    %v1821 = vunpack.c.l.b16 %v1720
    %v1822 = vunpack.c.h.b16 %v1720
    %v1823 = vunpack.c.l.b16 %v1721
    %v1824 = vunpack.c.h.b16 %v1721
    %v1825 = vunpack.c.l.b16 %v1722
    %v1826 = vunpack.c.h.b16 %v1722
    %v1827 = vunpack.c.l.b16 %v1723
    %v1828 = vunpack.c.h.b16 %v1723
    %v1829 = vunpack.c.l.b16 %v1724
    %v1830 = vunpack.c.h.b16 %v1724
    %v1831 = vunpack.c.l.b16 %v1725
    %v1832 = vunpack.c.h.b16 %v1725
    %v1833 = vunpack.c.l.b16 %v1726
    %v1834 = vunpack.c.h.b16 %v1726
    %v1835 = vunpack.c.l.b16 %v1727
    %v1836 = vunpack.c.h.b16 %v1727
    %v1837 = vunpack.c.l.b16 %v1728
    %v1838 = vunpack.c.h.b16 %v1728
    %v1839 = vunpack.c.l.b16 %v1729
    %v1840 = vunpack.c.h.b16 %v1729
    %v1841 = vunpack.c.l.b16 %v1730
    %v1842 = vunpack.c.h.b16 %v1730
    %v1843 = vunpack.c.l.b16 %v1731
    %v1844 = vunpack.c.h.b16 %v1731
    %v1845 = vunpack.c.l.b16 %v1732
    %v1846 = vunpack.c.h.b16 %v1732
    %v1847 = vunpack.c.l.b16 %v1733
    %v1848 = vunpack.c.h.b16 %v1733
    %v1849 = vunpack.c.l.b16 %v1734
    %v1850 = vunpack.c.h.b16 %v1734
    %v1851 = vunpack.c.l.b16 %v1735
    %v1852 = vunpack.c.h.b16 %v1735
    %v1853 = vunpack.c.l.b16 %v1736
    %v1854 = vunpack.c.h.b16 %v1736
    %v1855 = vunpack.c.l.b16 %v1737
    %v1856 = vunpack.c.h.b16 %v1737
    %v1857 = vunpack.c.l.b16 %v1738
    %v1858 = vunpack.c.h.b16 %v1738
    %v1859 = vunpack.c.l.b16 %v1739
    %v1860 = vunpack.c.h.b16 %v1739
    %v1861 = vunpack.c.l.b16 %v1740
    %v1862 = vunpack.c.h.b16 %v1740
    %v1863 = vunpack.c.l.b16 %v1741
    %v1864 = vunpack.c.h.b16 %v1741
    %v1865 = vunpack.c.l.b16 %v1742
    %v1866 = vunpack.c.h.b16 %v1742
    %v1867 = vunpack.c.l.b16 %v1743
    %v1868 = vunpack.c.h.b16 %v1743
    %v1869 = vunpack.c.l.b16 %v1744
    %v1870 = vunpack.c.h.b16 %v1744
    %v1871 = vunpack.c.l.b16 %v1745
    %v1872 = vunpack.c.h.b16 %v1745
    %v1873 = vunpack.c.l.b16 %v1746
    %v1874 = vunpack.c.h.b16 %v1746
    %v1875 = vunpack.c.l.b16 %v1747
    %v1876 = vunpack.c.h.b16 %v1747
    %v1877 = vunpack.c.l.b16 %v1748
    %v1878 = vunpack.c.h.b16 %v1748
    %v1879 = vunpack.c.l.b16 %v1749
    %v1880 = vunpack.c.h.b16 %v1749
    %v1881 = vunpack.c.l.b16 %v1750
    %v1882 = vunpack.c.h.b16 %v1750
    %v1883 = vpack.c.b16 %v1835, %v1819
    %v1884 = vpack.c.b16 %v1836, %v1820
    %v1885 = vpack.c.b16 %v1837, %v1821
    %v1886 = vpack.c.b16 %v1838, %v1822
    %v1887 = vpack.c.b16 %v1839, %v1823
    %v1888 = vpack.c.b16 %v1840, %v1824
    %v1889 = vpack.c.b16 %v1841, %v1825
    %v1890 = vpack.c.b16 %v1842, %v1826
    %v1891 = vpack.c.b16 %v1843, %v1827
    %v1892 = vpack.c.b16 %v1844, %v1828
    %v1893 = vpack.c.b16 %v1845, %v1829
    %v1894 = vpack.c.b16 %v1846, %v1830
    %v1895 = vpack.c.b16 %v1847, %v1831
    %v1896 = vpack.c.b16 %v1848, %v1832
    %v1897 = vpack.c.b16 %v1849, %v1833
    %v1898 = vpack.c.b16 %v1850, %v1834
    %v1899 = vpack.c.b16 %v1867, %v1851
    %v1900 = vpack.c.b16 %v1868, %v1852
    %v1901 = vpack.c.b16 %v1869, %v1853
    %v1902 = vpack.c.b16 %v1870, %v1854
    %v1903 = vpack.c.b16 %v1871, %v1855
    %v1904 = vpack.c.b16 %v1872, %v1856
    %v1905 = vpack.c.b16 %v1873, %v1857
    %v1906 = vpack.c.b16 %v1874, %v1858
    %v1907 = vpack.c.b16 %v1875, %v1859
    %v1908 = vpack.c.b16 %v1876, %v1860
    %v1909 = vpack.c.b16 %v1877, %v1861
    %v1910 = vpack.c.b16 %v1878, %v1862
    %v1911 = vpack.c.b16 %v1879, %v1863
    %v1912 = vpack.c.b16 %v1880, %v1864
    %v1913 = vpack.c.b16 %v1881, %v1865
    %v1914 = vpack.c.b16 %v1882, %v1866
    %v1948 = vsel %vm214, %v1716, 0
    %v1951 = vsel %vm214, %v1717, 0
    %v1954 = vsel %vm214, %v1718, 0
    %1956 = vmatpush.bf16.msra.mxu0 0
    %1957 = vmatpush.bf16.msra.mxu0 0
    %1958 = vmatpush.bf16.msra.mxu0 0
    %1959 = vmatpush.bf16.msra.mxu0 0
    %1960 = vmatpush.bf16.msra.mxu0 0
    %1961 = vmatpush.bf16.msra.mxu0 0
    %1962 = vmatpush.bf16.msra.mxu0 %v1899
    %1963 = vmatpush.bf16.msra.mxu0 %v1883
    %1964 = vmatmul.bf16.gmra.mxu0 %v1948
    %v1965 = vpop.f32.mrf.mxu0
    %v1966 = vadd.f32 %v1755, %v1965
    %v1967 = vpop.f32.mrf.mxu0
    %v1968 = vadd.f32 %v1755, %v1967
    %1969 = vmatmul.bf16.gmra.mxu0 %v1951
    %v1970 = vpop.f32.mrf.mxu0
    %v1971 = vadd.f32 %v1755, %v1970
    %v1972 = vpop.f32.mrf.mxu0
    %v1973 = vadd.f32 %v1755, %v1972
    %1974 = vmatmul.bf16.gmra.mxu0 %v1954
    %v1975 = vpop.f32.mrf.mxu0
    %v1976 = vadd.f32 %v1755, %v1975
    %v1977 = vpop.f32.mrf.mxu0
    %v1978 = vadd.f32 %v1755, %v1977
    %1979 = vdwg.mxu0
    %1980 = vmatpush.bf16.msra.mxu0 0
    %1981 = vmatpush.bf16.msra.mxu0 0
    %1982 = vmatpush.bf16.msra.mxu0 0
    %1983 = vmatpush.bf16.msra.mxu0 0
    %1984 = vmatpush.bf16.msra.mxu0 0
    %1985 = vmatpush.bf16.msra.mxu0 0
    %1986 = vmatpush.bf16.msra.mxu0 %v1900
    %1987 = vmatpush.bf16.msra.mxu0 %v1884
    %1988 = vmatmul.bf16.gmra.mxu0 %v1948
    %v1989 = vpop.f32.mrf.mxu0
    %v1990 = vadd.f32 %v1756, %v1989
    %v1991 = vpop.f32.mrf.mxu0
    %v1992 = vadd.f32 %v1756, %v1991
    %1993 = vmatmul.bf16.gmra.mxu0 %v1951
    %v1994 = vpop.f32.mrf.mxu0
    %v1995 = vadd.f32 %v1756, %v1994
    %v1996 = vpop.f32.mrf.mxu0
    %v1997 = vadd.f32 %v1756, %v1996
    %1998 = vmatmul.bf16.gmra.mxu0 %v1954
    %v1999 = vpop.f32.mrf.mxu0
    %v2000 = vadd.f32 %v1756, %v1999
    %v2001 = vpop.f32.mrf.mxu0
    %v2002 = vadd.f32 %v1756, %v2001
    %2003 = vdwg.mxu0
    %2004 = vmatpush.bf16.msra.mxu0 0
    %2005 = vmatpush.bf16.msra.mxu0 0
    %2006 = vmatpush.bf16.msra.mxu0 0
    %2007 = vmatpush.bf16.msra.mxu0 0
    %2008 = vmatpush.bf16.msra.mxu0 0
    %2009 = vmatpush.bf16.msra.mxu0 0
    %2010 = vmatpush.bf16.msra.mxu0 %v1901
    %2011 = vmatpush.bf16.msra.mxu0 %v1885
    %2012 = vmatmul.bf16.gmra.mxu0 %v1948
    %v2013 = vpop.f32.mrf.mxu0
    %v2014 = vadd.f32 %v1757, %v2013
    %v2015 = vpop.f32.mrf.mxu0
    %v2016 = vadd.f32 %v1757, %v2015
    %2017 = vmatmul.bf16.gmra.mxu0 %v1951
    %v2018 = vpop.f32.mrf.mxu0
    %v2019 = vadd.f32 %v1757, %v2018
    %v2020 = vpop.f32.mrf.mxu0
    %v2021 = vadd.f32 %v1757, %v2020
    %2022 = vmatmul.bf16.gmra.mxu0 %v1954
    %v2023 = vpop.f32.mrf.mxu0
    %v2024 = vadd.f32 %v1757, %v2023
    %v2025 = vpop.f32.mrf.mxu0
    %v2026 = vadd.f32 %v1757, %v2025
    %2027 = vdwg.mxu0
    %2028 = vmatpush.bf16.msra.mxu0 0
    %2029 = vmatpush.bf16.msra.mxu0 0
    %2030 = vmatpush.bf16.msra.mxu0 0
    %2031 = vmatpush.bf16.msra.mxu0 0
    %2032 = vmatpush.bf16.msra.mxu0 0
    %2033 = vmatpush.bf16.msra.mxu0 0
    %2034 = vmatpush.bf16.msra.mxu0 %v1902
    %2035 = vmatpush.bf16.msra.mxu0 %v1886
    %2036 = vmatmul.bf16.gmra.mxu0 %v1948
    %v2037 = vpop.f32.mrf.mxu0
    %v2038 = vadd.f32 %v1758, %v2037
    %v2039 = vpop.f32.mrf.mxu0
    %v2040 = vadd.f32 %v1758, %v2039
    %2041 = vmatmul.bf16.gmra.mxu0 %v1951
    %v2042 = vpop.f32.mrf.mxu0
    %v2043 = vadd.f32 %v1758, %v2042
    %v2044 = vpop.f32.mrf.mxu0
    %v2045 = vadd.f32 %v1758, %v2044
    %2046 = vmatmul.bf16.gmra.mxu0 %v1954
    %v2047 = vpop.f32.mrf.mxu0
    %v2048 = vadd.f32 %v1758, %v2047
    %v2049 = vpop.f32.mrf.mxu0
    %v2050 = vadd.f32 %v1758, %v2049
    %2051 = vdwg.mxu0
    %2052 = vmatpush.bf16.msra.mxu0 0
    %2053 = vmatpush.bf16.msra.mxu0 0
    %2054 = vmatpush.bf16.msra.mxu0 0
    %2055 = vmatpush.bf16.msra.mxu0 0
    %2056 = vmatpush.bf16.msra.mxu0 0
    %2057 = vmatpush.bf16.msra.mxu0 0
    %2058 = vmatpush.bf16.msra.mxu0 %v1903
    %2059 = vmatpush.bf16.msra.mxu0 %v1887
    %2060 = vmatmul.bf16.gmra.mxu0 %v1948
    %v2061 = vpop.f32.mrf.mxu0
    %v2062 = vadd.f32 %v1759, %v2061
    %v2063 = vpop.f32.mrf.mxu0
    %v2064 = vadd.f32 %v1759, %v2063
    %2065 = vmatmul.bf16.gmra.mxu0 %v1951
    %v2066 = vpop.f32.mrf.mxu0
    %v2067 = vadd.f32 %v1759, %v2066
    %v2068 = vpop.f32.mrf.mxu0
    %v2069 = vadd.f32 %v1759, %v2068
    %2070 = vmatmul.bf16.gmra.mxu0 %v1954
    %v2071 = vpop.f32.mrf.mxu0
    %v2072 = vadd.f32 %v1759, %v2071
    %v2073 = vpop.f32.mrf.mxu0
    %v2074 = vadd.f32 %v1759, %v2073
    %2075 = vdwg.mxu0
    %2076 = vmatpush.bf16.msra.mxu0 0
    %2077 = vmatpush.bf16.msra.mxu0 0
    %2078 = vmatpush.bf16.msra.mxu0 0
    %2079 = vmatpush.bf16.msra.mxu0 0
    %2080 = vmatpush.bf16.msra.mxu0 0
    %2081 = vmatpush.bf16.msra.mxu0 0
    %2082 = vmatpush.bf16.msra.mxu0 %v1904
    %2083 = vmatpush.bf16.msra.mxu0 %v1888
    %2084 = vmatmul.bf16.gmra.mxu0 %v1948
    %v2085 = vpop.f32.mrf.mxu0
    %v2086 = vadd.f32 %v1760, %v2085
    %v2087 = vpop.f32.mrf.mxu0
    %v2088 = vadd.f32 %v1760, %v2087
    %2089 = vmatmul.bf16.gmra.mxu0 %v1951
    %v2090 = vpop.f32.mrf.mxu0
    %v2091 = vadd.f32 %v1760, %v2090
    %v2092 = vpop.f32.mrf.mxu0
    %v2093 = vadd.f32 %v1760, %v2092
    %2094 = vmatmul.bf16.gmra.mxu0 %v1954
    %v2095 = vpop.f32.mrf.mxu0
    %v2096 = vadd.f32 %v1760, %v2095
    %v2097 = vpop.f32.mrf.mxu0
    %v2098 = vadd.f32 %v1760, %v2097
    %2099 = vdwg.mxu0
    %2100 = vmatpush.bf16.msra.mxu0 0
    %2101 = vmatpush.bf16.msra.mxu0 0
    %2102 = vmatpush.bf16.msra.mxu0 0
    %2103 = vmatpush.bf16.msra.mxu0 0
    %2104 = vmatpush.bf16.msra.mxu0 0
    %2105 = vmatpush.bf16.msra.mxu0 0
    %2106 = vmatpush.bf16.msra.mxu0 %v1905
    %2107 = vmatpush.bf16.msra.mxu0 %v1889
    %2108 = vmatmul.bf16.gmra.mxu0 %v1948
    %v2109 = vpop.f32.mrf.mxu0
    %v2110 = vadd.f32 %v1761, %v2109
    %v2111 = vpop.f32.mrf.mxu0
    %v2112 = vadd.f32 %v1761, %v2111
    %2113 = vmatmul.bf16.gmra.mxu0 %v1951
    %v2114 = vpop.f32.mrf.mxu0
    %v2115 = vadd.f32 %v1761, %v2114
    %v2116 = vpop.f32.mrf.mxu0
    %v2117 = vadd.f32 %v1761, %v2116
    %2118 = vmatmul.bf16.gmra.mxu0 %v1954
    %v2119 = vpop.f32.mrf.mxu0
    %v2120 = vadd.f32 %v1761, %v2119
    %v2121 = vpop.f32.mrf.mxu0
    %v2122 = vadd.f32 %v1761, %v2121
    %2123 = vdwg.mxu0
    %2124 = vmatpush.bf16.msra.mxu0 0
    %2125 = vmatpush.bf16.msra.mxu0 0
    %2126 = vmatpush.bf16.msra.mxu0 0
    %2127 = vmatpush.bf16.msra.mxu0 0
    %2128 = vmatpush.bf16.msra.mxu0 0
    %2129 = vmatpush.bf16.msra.mxu0 0
    %2130 = vmatpush.bf16.msra.mxu0 %v1906
    %2131 = vmatpush.bf16.msra.mxu0 %v1890
    %2132 = vmatmul.bf16.gmra.mxu0 %v1948
    %v2133 = vpop.f32.mrf.mxu0
    %v2134 = vadd.f32 %v1762, %v2133
    %v2135 = vpop.f32.mrf.mxu0
    %v2136 = vadd.f32 %v1762, %v2135
    %2137 = vmatmul.bf16.gmra.mxu0 %v1951
    %v2138 = vpop.f32.mrf.mxu0
    %v2139 = vadd.f32 %v1762, %v2138
    %v2140 = vpop.f32.mrf.mxu0
    %v2141 = vadd.f32 %v1762, %v2140
    %2142 = vmatmul.bf16.gmra.mxu0 %v1954
    %v2143 = vpop.f32.mrf.mxu0
    %v2144 = vadd.f32 %v1762, %v2143
    %v2145 = vpop.f32.mrf.mxu0
    %v2146 = vadd.f32 %v1762, %v2145
    %2147 = vdwg.mxu0
    %2148 = vmatpush.bf16.msra.mxu0 0
    %2149 = vmatpush.bf16.msra.mxu0 0
    %2150 = vmatpush.bf16.msra.mxu0 0
    %2151 = vmatpush.bf16.msra.mxu0 0
    %2152 = vmatpush.bf16.msra.mxu0 0
    %2153 = vmatpush.bf16.msra.mxu0 0
    %2154 = vmatpush.bf16.msra.mxu0 %v1907
    %2155 = vmatpush.bf16.msra.mxu0 %v1891
    %2156 = vmatmul.bf16.gmra.mxu0 %v1948
    %v2157 = vpop.f32.mrf.mxu0
    %v2158 = vadd.f32 %v1763, %v2157
    %v2159 = vpop.f32.mrf.mxu0
    %v2160 = vadd.f32 %v1763, %v2159
    %2161 = vmatmul.bf16.gmra.mxu0 %v1951
    %v2162 = vpop.f32.mrf.mxu0
    %v2163 = vadd.f32 %v1763, %v2162
    %v2164 = vpop.f32.mrf.mxu0
    %v2165 = vadd.f32 %v1763, %v2164
    %2166 = vmatmul.bf16.gmra.mxu0 %v1954
    %v2167 = vpop.f32.mrf.mxu0
    %v2168 = vadd.f32 %v1763, %v2167
    %v2169 = vpop.f32.mrf.mxu0
    %v2170 = vadd.f32 %v1763, %v2169
    %2171 = vdwg.mxu0
    %2172 = vmatpush.bf16.msra.mxu0 0
    %2173 = vmatpush.bf16.msra.mxu0 0
    %2174 = vmatpush.bf16.msra.mxu0 0
    %2175 = vmatpush.bf16.msra.mxu0 0
    %2176 = vmatpush.bf16.msra.mxu0 0
    %2177 = vmatpush.bf16.msra.mxu0 0
    %2178 = vmatpush.bf16.msra.mxu0 %v1908
    %2179 = vmatpush.bf16.msra.mxu0 %v1892
    %2180 = vmatmul.bf16.gmra.mxu0 %v1948
    %v2181 = vpop.f32.mrf.mxu0
    %v2182 = vadd.f32 %v1764, %v2181
    %v2183 = vpop.f32.mrf.mxu0
    %v2184 = vadd.f32 %v1764, %v2183
    %2185 = vmatmul.bf16.gmra.mxu0 %v1951
    %v2186 = vpop.f32.mrf.mxu0
    %v2187 = vadd.f32 %v1764, %v2186
    %v2188 = vpop.f32.mrf.mxu0
    %v2189 = vadd.f32 %v1764, %v2188
    %2190 = vmatmul.bf16.gmra.mxu0 %v1954
    %v2191 = vpop.f32.mrf.mxu0
    %v2192 = vadd.f32 %v1764, %v2191
    %v2193 = vpop.f32.mrf.mxu0
    %v2194 = vadd.f32 %v1764, %v2193
    %2195 = vdwg.mxu0
    %2196 = vmatpush.bf16.msra.mxu0 0
    %2197 = vmatpush.bf16.msra.mxu0 0
    %2198 = vmatpush.bf16.msra.mxu0 0
    %2199 = vmatpush.bf16.msra.mxu0 0
    %2200 = vmatpush.bf16.msra.mxu0 0
    %2201 = vmatpush.bf16.msra.mxu0 0
    %2202 = vmatpush.bf16.msra.mxu0 %v1909
    %2203 = vmatpush.bf16.msra.mxu0 %v1893
    %2204 = vmatmul.bf16.gmra.mxu0 %v1948
    %v2205 = vpop.f32.mrf.mxu0
    %v2206 = vadd.f32 %v1765, %v2205
    %v2207 = vpop.f32.mrf.mxu0
    %v2208 = vadd.f32 %v1765, %v2207
    %2209 = vmatmul.bf16.gmra.mxu0 %v1951
    %v2210 = vpop.f32.mrf.mxu0
    %v2211 = vadd.f32 %v1765, %v2210
    %v2212 = vpop.f32.mrf.mxu0
    %v2213 = vadd.f32 %v1765, %v2212
    %2214 = vmatmul.bf16.gmra.mxu0 %v1954
    %v2215 = vpop.f32.mrf.mxu0
    %v2216 = vadd.f32 %v1765, %v2215
    %v2217 = vpop.f32.mrf.mxu0
    %v2218 = vadd.f32 %v1765, %v2217
    %2219 = vdwg.mxu0
    %2220 = vmatpush.bf16.msra.mxu0 0
    %2221 = vmatpush.bf16.msra.mxu0 0
    %2222 = vmatpush.bf16.msra.mxu0 0
    %2223 = vmatpush.bf16.msra.mxu0 0
    %2224 = vmatpush.bf16.msra.mxu0 0
    %2225 = vmatpush.bf16.msra.mxu0 0
    %2226 = vmatpush.bf16.msra.mxu0 %v1910
    %2227 = vmatpush.bf16.msra.mxu0 %v1894
    %2228 = vmatmul.bf16.gmra.mxu0 %v1948
    %v2229 = vpop.f32.mrf.mxu0
    %v2230 = vadd.f32 %v1766, %v2229
    %v2231 = vpop.f32.mrf.mxu0
    %v2232 = vadd.f32 %v1766, %v2231
    %2233 = vmatmul.bf16.gmra.mxu0 %v1951
    %v2234 = vpop.f32.mrf.mxu0
    %v2235 = vadd.f32 %v1766, %v2234
    %v2236 = vpop.f32.mrf.mxu0
    %v2237 = vadd.f32 %v1766, %v2236
    %2238 = vmatmul.bf16.gmra.mxu0 %v1954
    %v2239 = vpop.f32.mrf.mxu0
    %v2240 = vadd.f32 %v1766, %v2239
    %v2241 = vpop.f32.mrf.mxu0
    %v2242 = vadd.f32 %v1766, %v2241
    %2243 = vdwg.mxu0
    %2244 = vmatpush.bf16.msra.mxu0 0
    %2245 = vmatpush.bf16.msra.mxu0 0
    %2246 = vmatpush.bf16.msra.mxu0 0
    %2247 = vmatpush.bf16.msra.mxu0 0
    %2248 = vmatpush.bf16.msra.mxu0 0
    %2249 = vmatpush.bf16.msra.mxu0 0
    %2250 = vmatpush.bf16.msra.mxu0 %v1911
    %2251 = vmatpush.bf16.msra.mxu0 %v1895
    %2252 = vmatmul.bf16.gmra.mxu0 %v1948
    %v2253 = vpop.f32.mrf.mxu0
    %v2254 = vadd.f32 %v1767, %v2253
    %v2255 = vpop.f32.mrf.mxu0
    %v2256 = vadd.f32 %v1767, %v2255
    %2257 = vmatmul.bf16.gmra.mxu0 %v1951
    %v2258 = vpop.f32.mrf.mxu0
    %v2259 = vadd.f32 %v1767, %v2258
    %v2260 = vpop.f32.mrf.mxu0
    %v2261 = vadd.f32 %v1767, %v2260
    %2262 = vmatmul.bf16.gmra.mxu0 %v1954
    %v2263 = vpop.f32.mrf.mxu0
    %v2264 = vadd.f32 %v1767, %v2263
    %v2265 = vpop.f32.mrf.mxu0
    %v2266 = vadd.f32 %v1767, %v2265
    %2267 = vdwg.mxu0
    %2268 = vmatpush.bf16.msra.mxu0 0
    %2269 = vmatpush.bf16.msra.mxu0 0
    %2270 = vmatpush.bf16.msra.mxu0 0
    %2271 = vmatpush.bf16.msra.mxu0 0
    %2272 = vmatpush.bf16.msra.mxu0 0
    %2273 = vmatpush.bf16.msra.mxu0 0
    %2274 = vmatpush.bf16.msra.mxu0 %v1912
    %2275 = vmatpush.bf16.msra.mxu0 %v1896
    %2276 = vmatmul.bf16.gmra.mxu0 %v1948
    %v2277 = vpop.f32.mrf.mxu0
    %v2278 = vadd.f32 %v1768, %v2277
    %v2279 = vpop.f32.mrf.mxu0
    %v2280 = vadd.f32 %v1768, %v2279
    %2281 = vmatmul.bf16.gmra.mxu0 %v1951
    %v2282 = vpop.f32.mrf.mxu0
    %v2283 = vadd.f32 %v1768, %v2282
    %v2284 = vpop.f32.mrf.mxu0
    %v2285 = vadd.f32 %v1768, %v2284
    %2286 = vmatmul.bf16.gmra.mxu0 %v1954
    %v2287 = vpop.f32.mrf.mxu0
    %v2288 = vadd.f32 %v1768, %v2287
    %v2289 = vpop.f32.mrf.mxu0
    %v2290 = vadd.f32 %v1768, %v2289
    %2291 = vdwg.mxu0
    %2292 = vmatpush.bf16.msra.mxu0 0
    %2293 = vmatpush.bf16.msra.mxu0 0
    %2294 = vmatpush.bf16.msra.mxu0 0
    %2295 = vmatpush.bf16.msra.mxu0 0
    %2296 = vmatpush.bf16.msra.mxu0 0
    %2297 = vmatpush.bf16.msra.mxu0 0
    %2298 = vmatpush.bf16.msra.mxu0 %v1913
    %2299 = vmatpush.bf16.msra.mxu0 %v1897
    %2300 = vmatmul.bf16.gmra.mxu0 %v1948
    %v2301 = vpop.f32.mrf.mxu0
    %v2302 = vadd.f32 %v1769, %v2301
    %v2303 = vpop.f32.mrf.mxu0
    %v2304 = vadd.f32 %v1769, %v2303
    %2305 = vmatmul.bf16.gmra.mxu0 %v1951
    %v2306 = vpop.f32.mrf.mxu0
    %v2307 = vadd.f32 %v1769, %v2306
    %v2308 = vpop.f32.mrf.mxu0
    %v2309 = vadd.f32 %v1769, %v2308
    %2310 = vmatmul.bf16.gmra.mxu0 %v1954
    %v2311 = vpop.f32.mrf.mxu0
    %v2312 = vadd.f32 %v1769, %v2311
    %v2313 = vpop.f32.mrf.mxu0
    %v2314 = vadd.f32 %v1769, %v2313
    %2315 = vdwg.mxu0
    %2316 = vmatpush.bf16.msra.mxu0 0
    %2317 = vmatpush.bf16.msra.mxu0 0
    %2318 = vmatpush.bf16.msra.mxu0 0
    %2319 = vmatpush.bf16.msra.mxu0 0
    %2320 = vmatpush.bf16.msra.mxu0 0
    %2321 = vmatpush.bf16.msra.mxu0 0
    %2322 = vmatpush.bf16.msra.mxu0 %v1914
    %2323 = vmatpush.bf16.msra.mxu0 %v1898
    %2324 = vmatmul.bf16.gmra.mxu0 %v1948
    %v2325 = vpop.f32.mrf.mxu0
    %v2326 = vadd.f32 %v1770, %v2325
    %v2327 = vpop.f32.mrf.mxu0
    %v2328 = vadd.f32 %v1770, %v2327
    %2329 = vmatmul.bf16.gmra.mxu0 %v1951
    %v2330 = vpop.f32.mrf.mxu0
    %v2331 = vadd.f32 %v1770, %v2330
    %v2332 = vpop.f32.mrf.mxu0
    %v2333 = vadd.f32 %v1770, %v2332
    %2334 = vmatmul.bf16.gmra.mxu0 %v1954
    %v2335 = vpop.f32.mrf.mxu0
    %v2336 = vadd.f32 %v1770, %v2335
    %v2337 = vpop.f32.mrf.mxu0
    %v2338 = vadd.f32 %v1770, %v2337
    %2339 = vdwg.mxu0
    %v2340 = vmax.f32 %v1966, 0.0
    %v2341 = vmax.f32 %v1990, 0.0
    %v2342 = vmax.f32 %v2014, 0.0
    %v2343 = vmax.f32 %v2038, 0.0
    %v2344 = vmax.f32 %v2062, 0.0
    %v2345 = vmax.f32 %v2086, 0.0
    %v2346 = vmax.f32 %v2110, 0.0
    %v2347 = vmax.f32 %v2134, 0.0
    %v2348 = vmax.f32 %v2158, 0.0
    %v2349 = vmax.f32 %v2182, 0.0
    %v2350 = vmax.f32 %v2206, 0.0
    %v2351 = vmax.f32 %v2230, 0.0
    %v2352 = vmax.f32 %v2254, 0.0
    %v2353 = vmax.f32 %v2278, 0.0
    %v2354 = vmax.f32 %v2302, 0.0
    %v2355 = vmax.f32 %v2326, 0.0
    %v2356 = vmax.f32 %v1968, 0.0
    %v2357 = vmax.f32 %v1992, 0.0
    %v2358 = vmax.f32 %v2016, 0.0
    %v2359 = vmax.f32 %v2040, 0.0
    %v2360 = vmax.f32 %v2064, 0.0
    %v2361 = vmax.f32 %v2088, 0.0
    %v2362 = vmax.f32 %v2112, 0.0
    %v2363 = vmax.f32 %v2136, 0.0
    %v2364 = vmax.f32 %v2160, 0.0
    %v2365 = vmax.f32 %v2184, 0.0
    %v2366 = vmax.f32 %v2208, 0.0
    %v2367 = vmax.f32 %v2232, 0.0
    %v2368 = vmax.f32 %v2256, 0.0
    %v2369 = vmax.f32 %v2280, 0.0
    %v2370 = vmax.f32 %v2304, 0.0
    %v2371 = vmax.f32 %v2328, 0.0
    %v2372 = vmax.f32 %v1971, 0.0
    %v2373 = vmax.f32 %v1995, 0.0
    %v2374 = vmax.f32 %v2019, 0.0
    %v2375 = vmax.f32 %v2043, 0.0
    %v2376 = vmax.f32 %v2067, 0.0
    %v2377 = vmax.f32 %v2091, 0.0
    %v2378 = vmax.f32 %v2115, 0.0
    %v2379 = vmax.f32 %v2139, 0.0
    %v2380 = vmax.f32 %v2163, 0.0
    %v2381 = vmax.f32 %v2187, 0.0
    %v2382 = vmax.f32 %v2211, 0.0
    %v2383 = vmax.f32 %v2235, 0.0
    %v2384 = vmax.f32 %v2259, 0.0
    %v2385 = vmax.f32 %v2283, 0.0
    %v2386 = vmax.f32 %v2307, 0.0
    %v2387 = vmax.f32 %v2331, 0.0
    %v2388 = vmax.f32 %v1973, 0.0
    %v2389 = vmax.f32 %v1997, 0.0
    %v2390 = vmax.f32 %v2021, 0.0
    %v2391 = vmax.f32 %v2045, 0.0
    %v2392 = vmax.f32 %v2069, 0.0
    %v2393 = vmax.f32 %v2093, 0.0
    %v2394 = vmax.f32 %v2117, 0.0
    %v2395 = vmax.f32 %v2141, 0.0
    %v2396 = vmax.f32 %v2165, 0.0
    %v2397 = vmax.f32 %v2189, 0.0
    %v2398 = vmax.f32 %v2213, 0.0
    %v2399 = vmax.f32 %v2237, 0.0
    %v2400 = vmax.f32 %v2261, 0.0
    %v2401 = vmax.f32 %v2285, 0.0
    %v2402 = vmax.f32 %v2309, 0.0
    %v2403 = vmax.f32 %v2333, 0.0
    %v2404 = vmax.f32 %v1976, 0.0
    %v2405 = vmax.f32 %v2000, 0.0
    %v2406 = vmax.f32 %v2024, 0.0
    %v2407 = vmax.f32 %v2048, 0.0
    %v2408 = vmax.f32 %v2072, 0.0
    %v2409 = vmax.f32 %v2096, 0.0
    %v2410 = vmax.f32 %v2120, 0.0
    %v2411 = vmax.f32 %v2144, 0.0
    %v2412 = vmax.f32 %v2168, 0.0
    %v2413 = vmax.f32 %v2192, 0.0
    %v2414 = vmax.f32 %v2216, 0.0
    %v2415 = vmax.f32 %v2240, 0.0
    %v2416 = vmax.f32 %v2264, 0.0
    %v2417 = vmax.f32 %v2288, 0.0
    %v2418 = vmax.f32 %v2312, 0.0
    %v2419 = vmax.f32 %v2336, 0.0
    %v2420 = vmax.f32 %v1978, 0.0
    %v2421 = vmax.f32 %v2002, 0.0
    %v2422 = vmax.f32 %v2026, 0.0
    %v2423 = vmax.f32 %v2050, 0.0
    %v2424 = vmax.f32 %v2074, 0.0
    %v2425 = vmax.f32 %v2098, 0.0
    %v2426 = vmax.f32 %v2122, 0.0
    %v2427 = vmax.f32 %v2146, 0.0
    %v2428 = vmax.f32 %v2170, 0.0
    %v2429 = vmax.f32 %v2194, 0.0
    %v2430 = vmax.f32 %v2218, 0.0
    %v2431 = vmax.f32 %v2242, 0.0
    %v2432 = vmax.f32 %v2266, 0.0
    %v2433 = vmax.f32 %v2290, 0.0
    %v2434 = vmax.f32 %v2314, 0.0
    %v2435 = vmax.f32 %v2338, 0.0
    %v2436 = vpack.c.bf16 %v2356, %v2340
    %v2437 = vpack.c.bf16 %v2357, %v2341
    %v2438 = vpack.c.bf16 %v2358, %v2342
    %v2439 = vpack.c.bf16 %v2359, %v2343
    %v2440 = vpack.c.bf16 %v2360, %v2344
    %v2441 = vpack.c.bf16 %v2361, %v2345
    %v2442 = vpack.c.bf16 %v2362, %v2346
    %v2443 = vpack.c.bf16 %v2363, %v2347
    %v2444 = vpack.c.bf16 %v2364, %v2348
    %v2445 = vpack.c.bf16 %v2365, %v2349
    %v2446 = vpack.c.bf16 %v2366, %v2350
    %v2447 = vpack.c.bf16 %v2367, %v2351
    %v2448 = vpack.c.bf16 %v2368, %v2352
    %v2449 = vpack.c.bf16 %v2369, %v2353
    %v2450 = vpack.c.bf16 %v2370, %v2354
    %v2451 = vpack.c.bf16 %v2371, %v2355
    %v2452 = vpack.c.bf16 %v2388, %v2372
    %v2453 = vpack.c.bf16 %v2389, %v2373
    %v2454 = vpack.c.bf16 %v2390, %v2374
    %v2455 = vpack.c.bf16 %v2391, %v2375
    %v2456 = vpack.c.bf16 %v2392, %v2376
    %v2457 = vpack.c.bf16 %v2393, %v2377
    %v2458 = vpack.c.bf16 %v2394, %v2378
    %v2459 = vpack.c.bf16 %v2395, %v2379
    %v2460 = vpack.c.bf16 %v2396, %v2380
    %v2461 = vpack.c.bf16 %v2397, %v2381
    %v2462 = vpack.c.bf16 %v2398, %v2382
    %v2463 = vpack.c.bf16 %v2399, %v2383
    %v2464 = vpack.c.bf16 %v2400, %v2384
    %v2465 = vpack.c.bf16 %v2401, %v2385
    %v2466 = vpack.c.bf16 %v2402, %v2386
    %v2467 = vpack.c.bf16 %v2403, %v2387
    %v2468 = vpack.c.bf16 %v2420, %v2404
    %v2469 = vpack.c.bf16 %v2421, %v2405
    %v2470 = vpack.c.bf16 %v2422, %v2406
    %v2471 = vpack.c.bf16 %v2423, %v2407
    %v2472 = vpack.c.bf16 %v2424, %v2408
    %v2473 = vpack.c.bf16 %v2425, %v2409
    %v2474 = vpack.c.bf16 %v2426, %v2410
    %v2475 = vpack.c.bf16 %v2427, %v2411
    %v2476 = vpack.c.bf16 %v2428, %v2412
    %v2477 = vpack.c.bf16 %v2429, %v2413
    %v2478 = vpack.c.bf16 %v2430, %v2414
    %v2479 = vpack.c.bf16 %v2431, %v2415
    %v2480 = vpack.c.bf16 %v2432, %v2416
    %v2481 = vpack.c.bf16 %v2433, %v2417
    %v2482 = vpack.c.bf16 %v2434, %v2418
    %v2483 = vpack.c.bf16 %v2435, %v2419
    %v2484 = vld [vmem:[%s27] sm:$0xf]
    %v2485 = vld [vmem:[%s27 + $0x4] sm:$0xf]
    %v2486 = vld [vmem:[%s27 + $0x8] sm:$0xf]
    %v2487 = vld [vmem:[%s27 + $0xc] sm:$0xf]
    %v2488 = vld [vmem:[%s27 + $0x10] sm:$0xf]
    %v2489 = vld [vmem:[%s27 + $0x14] sm:$0xf]
    %v2490 = vld [vmem:[%s27 + $0x18] sm:$0xf]
    %v2491 = vld [vmem:[%s27 + $0x1c] sm:$0xf]
    %v2492 = vld [vmem:[%s27 + $0x20] sm:$0xf]
    %v2493 = vld [vmem:[%s27 + $0x24] sm:$0xf]
    %v2494 = vld [vmem:[%s27 + $0x28] sm:$0xf]
    %v2495 = vld [vmem:[%s27 + $0x2c] sm:$0xf]
    %v2496 = vld [vmem:[%s27 + $0x30] sm:$0xf]
    %v2497 = vld [vmem:[%s27 + $0x34] sm:$0xf]
    %v2498 = vld [vmem:[%s27 + $0x38] sm:$0xf]
    %v2499 = vld [vmem:[%s27 + $0x3c] sm:$0xf]
    %v2500 = vld [vmem:[%s27 + $0x40] sm:$0xf]
    %v2501 = vld [vmem:[%s27 + $0x44] sm:$0xf]
    %v2502 = vld [vmem:[%s27 + $0x48] sm:$0xf]
    %v2503 = vld [vmem:[%s27 + $0x4c] sm:$0xf]
    %v2504 = vld [vmem:[%s27 + $0x50] sm:$0xf]
    %v2505 = vld [vmem:[%s27 + $0x54] sm:$0xf]
    %v2506 = vld [vmem:[%s27 + $0x58] sm:$0xf]
    %v2507 = vld [vmem:[%s27 + $0x5c] sm:$0xf]
    %v2508 = vld [vmem:[%s27 + $0x60] sm:$0xf]
    %v2509 = vld [vmem:[%s27 + $0x64] sm:$0xf]
    %v2510 = vld [vmem:[%s27 + $0x68] sm:$0xf]
    %v2511 = vld [vmem:[%s27 + $0x6c] sm:$0xf]
    %v2512 = vld [vmem:[%s27 + $0x70] sm:$0xf]
    %v2513 = vld [vmem:[%s27 + $0x74] sm:$0xf]
    %v2514 = vld [vmem:[%s27 + $0x78] sm:$0xf]
    %v2515 = vld [vmem:[%s27 + $0x7c] sm:$0xf]
    %v2516 = vld [vmem:[%s27 + $0x80] sm:$0xf]
    %v2517 = vld [vmem:[%s27 + $0x84] sm:$0xf]
    %v2518 = vld [vmem:[%s27 + $0x88] sm:$0xf]
    %v2519 = vld [vmem:[%s27 + $0x8c] sm:$0xf]
    %v2520 = vld [vmem:[%s27 + $0x90] sm:$0xf]
    %v2521 = vld [vmem:[%s27 + $0x94] sm:$0xf]
    %v2522 = vld [vmem:[%s27 + $0x98] sm:$0xf]
    %v2523 = vld [vmem:[%s27 + $0x9c] sm:$0xf]
    %v2524 = vld [vmem:[%s27 + $0xa0] sm:$0xf]
    %v2525 = vld [vmem:[%s27 + $0xa4] sm:$0xf]
    %v2526 = vld [vmem:[%s27 + $0xa8] sm:$0xf]
    %v2527 = vld [vmem:[%s27 + $0xac] sm:$0xf]
    %v2528 = vld [vmem:[%s27 + $0xb0] sm:$0xf]
    %v2529 = vld [vmem:[%s27 + $0xb4] sm:$0xf]
    %v2530 = vld [vmem:[%s27 + $0xb8] sm:$0xf]
    %v2531 = vld [vmem:[%s27 + $0xbc] sm:$0xf]
    %v2532 = vld [vmem:[%s27 + $0xc0] sm:$0xf]
    %v2533 = vld [vmem:[%s27 + $0xc4] sm:$0xf]
    %v2534 = vld [vmem:[%s27 + $0xc8] sm:$0xf]
    %v2535 = vld [vmem:[%s27 + $0xcc] sm:$0xf]
    %v2536 = vld [vmem:[%s27 + $0xd0] sm:$0xf]
    %v2537 = vld [vmem:[%s27 + $0xd4] sm:$0xf]
    %v2538 = vld [vmem:[%s27 + $0xd8] sm:$0xf]
    %v2539 = vld [vmem:[%s27 + $0xdc] sm:$0xf]
    %v2540 = vld [vmem:[%s27 + $0xe0] sm:$0xf]
    %v2541 = vld [vmem:[%s27 + $0xe4] sm:$0xf]
    %v2542 = vld [vmem:[%s27 + $0xe8] sm:$0xf]
    %v2543 = vld [vmem:[%s27 + $0xec] sm:$0xf]
    %v2544 = vld [vmem:[%s27 + $0xf0] sm:$0xf]
    %v2545 = vld [vmem:[%s27 + $0xf4] sm:$0xf]
    %v2546 = vld [vmem:[%s27 + $0xf8] sm:$0xf]
    %v2547 = vld [vmem:[%s27 + $0xfc] sm:$0xf]
    %v2548 = vld [vmem:[%s27 + $0x100] sm:$0xf]
    %v2549 = vld [vmem:[%s27 + $0x104] sm:$0xf]
    %v2550 = vld [vmem:[%s27 + $0x108] sm:$0xf]
    %v2551 = vld [vmem:[%s27 + $0x10c] sm:$0xf]
    %v2552 = vld [vmem:[%s27 + $0x110] sm:$0xf]
    %v2553 = vld [vmem:[%s27 + $0x114] sm:$0xf]
    %v2554 = vld [vmem:[%s27 + $0x118] sm:$0xf]
    %v2555 = vld [vmem:[%s27 + $0x11c] sm:$0xf]
    %v2556 = vld [vmem:[%s27 + $0x120] sm:$0xf]
    %v2557 = vld [vmem:[%s27 + $0x124] sm:$0xf]
    %v2558 = vld [vmem:[%s27 + $0x128] sm:$0xf]
    %v2559 = vld [vmem:[%s27 + $0x12c] sm:$0xf]
    %v2560 = vld [vmem:[%s27 + $0x130] sm:$0xf]
    %v2561 = vld [vmem:[%s27 + $0x134] sm:$0xf]
    %v2562 = vld [vmem:[%s27 + $0x138] sm:$0xf]
    %v2563 = vld [vmem:[%s27 + $0x13c] sm:$0xf]
    %v2564 = vld [vmem:[%s27 + $0x140] sm:$0xf]
    %v2565 = vld [vmem:[%s27 + $0x144] sm:$0xf]
    %v2566 = vld [vmem:[%s27 + $0x148] sm:$0xf]
    %v2567 = vld [vmem:[%s27 + $0x14c] sm:$0xf]
    %v2568 = vld [vmem:[%s27 + $0x150] sm:$0xf]
    %v2569 = vld [vmem:[%s27 + $0x154] sm:$0xf]
    %v2570 = vld [vmem:[%s27 + $0x158] sm:$0xf]
    %v2571 = vld [vmem:[%s27 + $0x15c] sm:$0xf]
    %v2572 = vld [vmem:[%s27 + $0x160] sm:$0xf]
    %v2573 = vld [vmem:[%s27 + $0x164] sm:$0xf]
    %v2574 = vld [vmem:[%s27 + $0x168] sm:$0xf]
    %v2575 = vld [vmem:[%s27 + $0x16c] sm:$0xf]
    %v2576 = vld [vmem:[%s27 + $0x170] sm:$0xf]
    %v2577 = vld [vmem:[%s27 + $0x174] sm:$0xf]
    %v2578 = vld [vmem:[%s27 + $0x178] sm:$0xf]
    %v2579 = vld [vmem:[%s27 + $0x17c] sm:$0xf]
    %v2580 = vld [vmem:[%s27 + $0x180] sm:$0xf]
    %v2581 = vld [vmem:[%s27 + $0x184] sm:$0xf]
    %v2582 = vld [vmem:[%s27 + $0x188] sm:$0xf]
    %v2583 = vld [vmem:[%s27 + $0x18c] sm:$0xf]
    %v2584 = vld [vmem:[%s27 + $0x190] sm:$0xf]
    %v2585 = vld [vmem:[%s27 + $0x194] sm:$0xf]
    %v2586 = vld [vmem:[%s27 + $0x198] sm:$0xf]
    %v2587 = vld [vmem:[%s27 + $0x19c] sm:$0xf]
    %v2588 = vld [vmem:[%s27 + $0x1a0] sm:$0xf]
    %v2589 = vld [vmem:[%s27 + $0x1a4] sm:$0xf]
    %v2590 = vld [vmem:[%s27 + $0x1a8] sm:$0xf]
    %v2591 = vld [vmem:[%s27 + $0x1ac] sm:$0xf]
    %v2592 = vld [vmem:[%s27 + $0x1b0] sm:$0xf]
    %v2593 = vld [vmem:[%s27 + $0x1b4] sm:$0xf]
    %v2594 = vld [vmem:[%s27 + $0x1b8] sm:$0xf]
    %v2595 = vld [vmem:[%s27 + $0x1bc] sm:$0xf]
    %v2596 = vld [vmem:[%s27 + $0x1c0] sm:$0xf]
    %v2597 = vld [vmem:[%s27 + $0x1c4] sm:$0xf]
    %v2598 = vld [vmem:[%s27 + $0x1c8] sm:$0xf]
    %v2599 = vld [vmem:[%s27 + $0x1cc] sm:$0xf]
    %v2600 = vld [vmem:[%s27 + $0x1d0] sm:$0xf]
    %v2601 = vld [vmem:[%s27 + $0x1d4] sm:$0xf]
    %v2602 = vld [vmem:[%s27 + $0x1d8] sm:$0xf]
    %v2603 = vld [vmem:[%s27 + $0x1dc] sm:$0xf]
    %v2604 = vld [vmem:[%s27 + $0x1e0] sm:$0xf]
    %v2605 = vld [vmem:[%s27 + $0x1e4] sm:$0xf]
    %v2606 = vld [vmem:[%s27 + $0x1e8] sm:$0xf]
    %v2607 = vld [vmem:[%s27 + $0x1ec] sm:$0xf]
    %v2608 = vld [vmem:[%s27 + $0x1f0] sm:$0xf]
    %v2609 = vld [vmem:[%s27 + $0x1f4] sm:$0xf]
    %v2610 = vld [vmem:[%s27 + $0x1f8] sm:$0xf]
    %v2611 = vld [vmem:[%s27 + $0x1fc] sm:$0xf]
    %v2612 = vld [vmem:[%s27 + $0x200] sm:$0xf]
    %v2613 = vld [vmem:[%s27 + $0x204] sm:$0xf]
    %v2614 = vld [vmem:[%s27 + $0x208] sm:$0xf]
    %v2615 = vld [vmem:[%s27 + $0x20c] sm:$0xf]
    %v2616 = vld [vmem:[%s27 + $0x210] sm:$0xf]
    %v2617 = vld [vmem:[%s27 + $0x214] sm:$0xf]
    %v2618 = vld [vmem:[%s27 + $0x218] sm:$0xf]
    %v2619 = vld [vmem:[%s27 + $0x21c] sm:$0xf]
    %v2620 = vld [vmem:[%s27 + $0x220] sm:$0xf]
    %v2621 = vld [vmem:[%s27 + $0x224] sm:$0xf]
    %v2622 = vld [vmem:[%s27 + $0x228] sm:$0xf]
    %v2623 = vld [vmem:[%s27 + $0x22c] sm:$0xf]
    %v2624 = vld [vmem:[%s27 + $0x230] sm:$0xf]
    %v2625 = vld [vmem:[%s27 + $0x234] sm:$0xf]
    %v2626 = vld [vmem:[%s27 + $0x238] sm:$0xf]
    %v2627 = vld [vmem:[%s27 + $0x23c] sm:$0xf]
    %v2628 = vld [vmem:[%s27 + $0x240] sm:$0xf]
    %v2629 = vld [vmem:[%s27 + $0x244] sm:$0xf]
    %v2630 = vld [vmem:[%s27 + $0x248] sm:$0xf]
    %v2631 = vld [vmem:[%s27 + $0x24c] sm:$0xf]
    %v2632 = vld [vmem:[%s27 + $0x250] sm:$0xf]
    %v2633 = vld [vmem:[%s27 + $0x254] sm:$0xf]
    %v2634 = vld [vmem:[%s27 + $0x258] sm:$0xf]
    %v2635 = vld [vmem:[%s27 + $0x25c] sm:$0xf]
    %v2636 = vld [vmem:[%s27 + $0x260] sm:$0xf]
    %v2637 = vld [vmem:[%s27 + $0x264] sm:$0xf]
    %v2638 = vld [vmem:[%s27 + $0x268] sm:$0xf]
    %v2639 = vld [vmem:[%s27 + $0x26c] sm:$0xf]
    %v2640 = vld [vmem:[%s27 + $0x270] sm:$0xf]
    %v2641 = vld [vmem:[%s27 + $0x274] sm:$0xf]
    %v2642 = vld [vmem:[%s27 + $0x278] sm:$0xf]
    %v2643 = vld [vmem:[%s27 + $0x27c] sm:$0xf]
    %v2644 = vld [vmem:[%s27 + $0x280] sm:$0xf]
    %v2645 = vld [vmem:[%s27 + $0x284] sm:$0xf]
    %v2646 = vld [vmem:[%s27 + $0x288] sm:$0xf]
    %v2647 = vld [vmem:[%s27 + $0x28c] sm:$0xf]
    %v2648 = vld [vmem:[%s27 + $0x290] sm:$0xf]
    %v2649 = vld [vmem:[%s27 + $0x294] sm:$0xf]
    %v2650 = vld [vmem:[%s27 + $0x298] sm:$0xf]
    %v2651 = vld [vmem:[%s27 + $0x29c] sm:$0xf]
    %v2652 = vld [vmem:[%s27 + $0x2a0] sm:$0xf]
    %v2653 = vld [vmem:[%s27 + $0x2a4] sm:$0xf]
    %v2654 = vld [vmem:[%s27 + $0x2a8] sm:$0xf]
    %v2655 = vld [vmem:[%s27 + $0x2ac] sm:$0xf]
    %v2656 = vld [vmem:[%s27 + $0x2b0] sm:$0xf]
    %v2657 = vld [vmem:[%s27 + $0x2b4] sm:$0xf]
    %v2658 = vld [vmem:[%s27 + $0x2b8] sm:$0xf]
    %v2659 = vld [vmem:[%s27 + $0x2bc] sm:$0xf]
    %v2660 = vld [vmem:[%s27 + $0x2c0] sm:$0xf]
    %v2661 = vld [vmem:[%s27 + $0x2c4] sm:$0xf]
    %v2662 = vld [vmem:[%s27 + $0x2c8] sm:$0xf]
    %v2663 = vld [vmem:[%s27 + $0x2cc] sm:$0xf]
    %v2664 = vld [vmem:[%s27 + $0x2d0] sm:$0xf]
    %v2665 = vld [vmem:[%s27 + $0x2d4] sm:$0xf]
    %v2666 = vld [vmem:[%s27 + $0x2d8] sm:$0xf]
    %v2667 = vld [vmem:[%s27 + $0x2dc] sm:$0xf]
    %v2668 = vld [vmem:[%s27 + $0x2e0] sm:$0xf]
    %v2669 = vld [vmem:[%s27 + $0x2e4] sm:$0xf]
    %v2670 = vld [vmem:[%s27 + $0x2e8] sm:$0xf]
    %v2671 = vld [vmem:[%s27 + $0x2ec] sm:$0xf]
    %v2672 = vld [vmem:[%s27 + $0x2f0] sm:$0xf]
    %v2673 = vld [vmem:[%s27 + $0x2f4] sm:$0xf]
    %v2674 = vld [vmem:[%s27 + $0x2f8] sm:$0xf]
    %v2675 = vld [vmem:[%s27 + $0x2fc] sm:$0xf]
    %v2676 = vld [vmem:[%s27 + $0x300] sm:$0xf]
    %v2677 = vld [vmem:[%s27 + $0x304] sm:$0xf]
    %v2678 = vld [vmem:[%s27 + $0x308] sm:$0xf]
    %v2679 = vld [vmem:[%s27 + $0x30c] sm:$0xf]
    %v2680 = vld [vmem:[%s27 + $0x310] sm:$0xf]
    %v2681 = vld [vmem:[%s27 + $0x314] sm:$0xf]
    %v2682 = vld [vmem:[%s27 + $0x318] sm:$0xf]
    %v2683 = vld [vmem:[%s27 + $0x31c] sm:$0xf]
    %v2684 = vld [vmem:[%s27 + $0x320] sm:$0xf]
    %v2685 = vld [vmem:[%s27 + $0x324] sm:$0xf]
    %v2686 = vld [vmem:[%s27 + $0x328] sm:$0xf]
    %v2687 = vld [vmem:[%s27 + $0x32c] sm:$0xf]
    %v2688 = vld [vmem:[%s27 + $0x330] sm:$0xf]
    %v2689 = vld [vmem:[%s27 + $0x334] sm:$0xf]
    %v2690 = vld [vmem:[%s27 + $0x338] sm:$0xf]
    %v2691 = vld [vmem:[%s27 + $0x33c] sm:$0xf]
    %v2692 = vld [vmem:[%s27 + $0x340] sm:$0xf]
    %v2693 = vld [vmem:[%s27 + $0x344] sm:$0xf]
    %v2694 = vld [vmem:[%s27 + $0x348] sm:$0xf]
    %v2695 = vld [vmem:[%s27 + $0x34c] sm:$0xf]
    %v2696 = vld [vmem:[%s27 + $0x350] sm:$0xf]
    %v2697 = vld [vmem:[%s27 + $0x354] sm:$0xf]
    %v2698 = vld [vmem:[%s27 + $0x358] sm:$0xf]
    %v2699 = vld [vmem:[%s27 + $0x35c] sm:$0xf]
    %v2700 = vld [vmem:[%s27 + $0x360] sm:$0xf]
    %v2701 = vld [vmem:[%s27 + $0x364] sm:$0xf]
    %v2702 = vld [vmem:[%s27 + $0x368] sm:$0xf]
    %v2703 = vld [vmem:[%s27 + $0x36c] sm:$0xf]
    %v2704 = vld [vmem:[%s27 + $0x370] sm:$0xf]
    %v2705 = vld [vmem:[%s27 + $0x374] sm:$0xf]
    %v2706 = vld [vmem:[%s27 + $0x378] sm:$0xf]
    %v2707 = vld [vmem:[%s27 + $0x37c] sm:$0xf]
    %v2708 = vld [vmem:[%s27 + $0x380] sm:$0xf]
    %v2709 = vld [vmem:[%s27 + $0x384] sm:$0xf]
    %v2710 = vld [vmem:[%s27 + $0x388] sm:$0xf]
    %v2711 = vld [vmem:[%s27 + $0x38c] sm:$0xf]
    %v2712 = vld [vmem:[%s27 + $0x390] sm:$0xf]
    %v2713 = vld [vmem:[%s27 + $0x394] sm:$0xf]
    %v2714 = vld [vmem:[%s27 + $0x398] sm:$0xf]
    %v2715 = vld [vmem:[%s27 + $0x39c] sm:$0xf]
    %v2716 = vld [vmem:[%s27 + $0x3a0] sm:$0xf]
    %v2717 = vld [vmem:[%s27 + $0x3a4] sm:$0xf]
    %v2718 = vld [vmem:[%s27 + $0x3a8] sm:$0xf]
    %v2719 = vld [vmem:[%s27 + $0x3ac] sm:$0xf]
    %v2720 = vld [vmem:[%s27 + $0x3b0] sm:$0xf]
    %v2721 = vld [vmem:[%s27 + $0x3b4] sm:$0xf]
    %v2722 = vld [vmem:[%s27 + $0x3b8] sm:$0xf]
    %v2723 = vld [vmem:[%s27 + $0x3bc] sm:$0xf]
    %v2724 = vld [vmem:[%s27 + $0x3c0] sm:$0xf]
    %v2725 = vld [vmem:[%s27 + $0x3c4] sm:$0xf]
    %v2726 = vld [vmem:[%s27 + $0x3c8] sm:$0xf]
    %v2727 = vld [vmem:[%s27 + $0x3cc] sm:$0xf]
    %v2728 = vld [vmem:[%s27 + $0x3d0] sm:$0xf]
    %v2729 = vld [vmem:[%s27 + $0x3d4] sm:$0xf]
    %v2730 = vld [vmem:[%s27 + $0x3d8] sm:$0xf]
    %v2731 = vld [vmem:[%s27 + $0x3dc] sm:$0xf]
    %v2732 = vld [vmem:[%s27 + $0x3e0] sm:$0xf]
    %v2733 = vld [vmem:[%s27 + $0x3e4] sm:$0xf]
    %v2734 = vld [vmem:[%s27 + $0x3e8] sm:$0xf]
    %v2735 = vld [vmem:[%s27 + $0x3ec] sm:$0xf]
    %v2736 = vld [vmem:[%s27 + $0x3f0] sm:$0xf]
    %v2737 = vld [vmem:[%s27 + $0x3f4] sm:$0xf]
    %v2738 = vld [vmem:[%s27 + $0x3f8] sm:$0xf]
    %v2739 = vld [vmem:[%s27 + $0x3fc] sm:$0xf]
    %v2996 = vunpack.c.l.b16 %v2484
    %v2997 = vunpack.c.l.b16 %v2485
    %v2998 = vunpack.c.l.b16 %v2486
    %v2999 = vunpack.c.l.b16 %v2487
    %v3000 = vunpack.c.l.b16 %v2488
    %v3001 = vunpack.c.l.b16 %v2489
    %v3002 = vunpack.c.l.b16 %v2490
    %v3003 = vunpack.c.l.b16 %v2491
    %v3004 = vunpack.c.l.b16 %v2492
    %v3005 = vunpack.c.l.b16 %v2493
    %v3006 = vunpack.c.l.b16 %v2494
    %v3007 = vunpack.c.l.b16 %v2495
    %v3008 = vunpack.c.l.b16 %v2496
    %v3009 = vunpack.c.l.b16 %v2497
    %v3010 = vunpack.c.l.b16 %v2498
    %v3011 = vunpack.c.l.b16 %v2499
    %v3012 = vunpack.c.l.b16 %v2500
    %v3013 = vunpack.c.l.b16 %v2501
    %v3014 = vunpack.c.l.b16 %v2502
    %v3015 = vunpack.c.l.b16 %v2503
    %v3016 = vunpack.c.l.b16 %v2504
    %v3017 = vunpack.c.l.b16 %v2505
    %v3018 = vunpack.c.l.b16 %v2506
    %v3019 = vunpack.c.l.b16 %v2507
    %v3020 = vunpack.c.l.b16 %v2508
    %v3021 = vunpack.c.l.b16 %v2509
    %v3022 = vunpack.c.l.b16 %v2510
    %v3023 = vunpack.c.l.b16 %v2511
    %v3024 = vunpack.c.l.b16 %v2512
    %v3025 = vunpack.c.l.b16 %v2513
    %v3026 = vunpack.c.l.b16 %v2514
    %v3027 = vunpack.c.l.b16 %v2515
    %v3028 = vunpack.c.l.b16 %v2516
    %v3029 = vunpack.c.l.b16 %v2517
    %v3030 = vunpack.c.l.b16 %v2518
    %v3031 = vunpack.c.l.b16 %v2519
    %v3032 = vunpack.c.l.b16 %v2520
    %v3033 = vunpack.c.l.b16 %v2521
    %v3034 = vunpack.c.l.b16 %v2522
    %v3035 = vunpack.c.l.b16 %v2523
    %v3036 = vunpack.c.l.b16 %v2524
    %v3037 = vunpack.c.l.b16 %v2525
    %v3038 = vunpack.c.l.b16 %v2526
    %v3039 = vunpack.c.l.b16 %v2527
    %v3040 = vunpack.c.l.b16 %v2528
    %v3041 = vunpack.c.l.b16 %v2529
    %v3042 = vunpack.c.l.b16 %v2530
    %v3043 = vunpack.c.l.b16 %v2531
    %v3044 = vunpack.c.l.b16 %v2532
    %v3045 = vunpack.c.l.b16 %v2533
    %v3046 = vunpack.c.l.b16 %v2534
    %v3047 = vunpack.c.l.b16 %v2535
    %v3048 = vunpack.c.l.b16 %v2536
    %v3049 = vunpack.c.l.b16 %v2537
    %v3050 = vunpack.c.l.b16 %v2538
    %v3051 = vunpack.c.l.b16 %v2539
    %v3052 = vunpack.c.l.b16 %v2540
    %v3053 = vunpack.c.l.b16 %v2541
    %v3054 = vunpack.c.l.b16 %v2542
    %v3055 = vunpack.c.l.b16 %v2543
    %v3056 = vunpack.c.l.b16 %v2544
    %v3057 = vunpack.c.l.b16 %v2545
    %v3058 = vunpack.c.l.b16 %v2546
    %v3059 = vunpack.c.l.b16 %v2547
    %v3060 = vunpack.c.l.b16 %v2548
    %v3061 = vunpack.c.l.b16 %v2549
    %v3062 = vunpack.c.l.b16 %v2550
    %v3063 = vunpack.c.l.b16 %v2551
    %v3064 = vunpack.c.l.b16 %v2552
    %v3065 = vunpack.c.l.b16 %v2553
    %v3066 = vunpack.c.l.b16 %v2554
    %v3067 = vunpack.c.l.b16 %v2555
    %v3068 = vunpack.c.l.b16 %v2556
    %v3069 = vunpack.c.l.b16 %v2557
    %v3070 = vunpack.c.l.b16 %v2558
    %v3071 = vunpack.c.l.b16 %v2559
    %v3072 = vunpack.c.l.b16 %v2560
    %v3073 = vunpack.c.l.b16 %v2561
    %v3074 = vunpack.c.l.b16 %v2562
    %v3075 = vunpack.c.l.b16 %v2563
    %v3076 = vunpack.c.l.b16 %v2564
    %v3077 = vunpack.c.l.b16 %v2565
    %v3078 = vunpack.c.l.b16 %v2566
    %v3079 = vunpack.c.l.b16 %v2567
    %v3080 = vunpack.c.l.b16 %v2568
    %v3081 = vunpack.c.l.b16 %v2569
    %v3082 = vunpack.c.l.b16 %v2570
    %v3083 = vunpack.c.l.b16 %v2571
    %v3084 = vunpack.c.l.b16 %v2572
    %v3085 = vunpack.c.l.b16 %v2573
    %v3086 = vunpack.c.l.b16 %v2574
    %v3087 = vunpack.c.l.b16 %v2575
    %v3088 = vunpack.c.l.b16 %v2576
    %v3089 = vunpack.c.l.b16 %v2577
    %v3090 = vunpack.c.l.b16 %v2578
    %v3091 = vunpack.c.l.b16 %v2579
    %v3092 = vunpack.c.l.b16 %v2580
    %v3093 = vunpack.c.l.b16 %v2581
    %v3094 = vunpack.c.l.b16 %v2582
    %v3095 = vunpack.c.l.b16 %v2583
    %v3096 = vunpack.c.l.b16 %v2584
    %v3097 = vunpack.c.l.b16 %v2585
    %v3098 = vunpack.c.l.b16 %v2586
    %v3099 = vunpack.c.l.b16 %v2587
    %v3100 = vunpack.c.l.b16 %v2588
    %v3101 = vunpack.c.l.b16 %v2589
    %v3102 = vunpack.c.l.b16 %v2590
    %v3103 = vunpack.c.l.b16 %v2591
    %v3104 = vunpack.c.l.b16 %v2592
    %v3105 = vunpack.c.l.b16 %v2593
    %v3106 = vunpack.c.l.b16 %v2594
    %v3107 = vunpack.c.l.b16 %v2595
    %v3108 = vunpack.c.l.b16 %v2596
    %v3109 = vunpack.c.l.b16 %v2597
    %v3110 = vunpack.c.l.b16 %v2598
    %v3111 = vunpack.c.l.b16 %v2599
    %v3112 = vunpack.c.l.b16 %v2600
    %v3113 = vunpack.c.l.b16 %v2601
    %v3114 = vunpack.c.l.b16 %v2602
    %v3115 = vunpack.c.l.b16 %v2603
    %v3116 = vunpack.c.l.b16 %v2604
    %v3117 = vunpack.c.l.b16 %v2605
    %v3118 = vunpack.c.l.b16 %v2606
    %v3119 = vunpack.c.l.b16 %v2607
    %v3120 = vunpack.c.l.b16 %v2608
    %v3121 = vunpack.c.l.b16 %v2609
    %v3122 = vunpack.c.l.b16 %v2610
    %v3123 = vunpack.c.l.b16 %v2611
    %v3124 = vunpack.c.l.b16 %v2612
    %v3125 = vunpack.c.l.b16 %v2613
    %v3126 = vunpack.c.l.b16 %v2614
    %v3127 = vunpack.c.l.b16 %v2615
    %v3128 = vunpack.c.l.b16 %v2616
    %v3129 = vunpack.c.l.b16 %v2617
    %v3130 = vunpack.c.l.b16 %v2618
    %v3131 = vunpack.c.l.b16 %v2619
    %v3132 = vunpack.c.l.b16 %v2620
    %v3133 = vunpack.c.l.b16 %v2621
    %v3134 = vunpack.c.l.b16 %v2622
    %v3135 = vunpack.c.l.b16 %v2623
    %v3136 = vunpack.c.l.b16 %v2624
    %v3137 = vunpack.c.l.b16 %v2625
    %v3138 = vunpack.c.l.b16 %v2626
    %v3139 = vunpack.c.l.b16 %v2627
    %v3140 = vunpack.c.l.b16 %v2628
    %v3141 = vunpack.c.l.b16 %v2629
    %v3142 = vunpack.c.l.b16 %v2630
    %v3143 = vunpack.c.l.b16 %v2631
    %v3144 = vunpack.c.l.b16 %v2632
    %v3145 = vunpack.c.l.b16 %v2633
    %v3146 = vunpack.c.l.b16 %v2634
    %v3147 = vunpack.c.l.b16 %v2635
    %v3148 = vunpack.c.l.b16 %v2636
    %v3149 = vunpack.c.l.b16 %v2637
    %v3150 = vunpack.c.l.b16 %v2638
    %v3151 = vunpack.c.l.b16 %v2639
    %v3152 = vunpack.c.l.b16 %v2640
    %v3153 = vunpack.c.l.b16 %v2641
    %v3154 = vunpack.c.l.b16 %v2642
    %v3155 = vunpack.c.l.b16 %v2643
    %v3156 = vunpack.c.l.b16 %v2644
    %v3157 = vunpack.c.l.b16 %v2645
    %v3158 = vunpack.c.l.b16 %v2646
    %v3159 = vunpack.c.l.b16 %v2647
    %v3160 = vunpack.c.l.b16 %v2648
    %v3161 = vunpack.c.l.b16 %v2649
    %v3162 = vunpack.c.l.b16 %v2650
    %v3163 = vunpack.c.l.b16 %v2651
    %v3164 = vunpack.c.l.b16 %v2652
    %v3165 = vunpack.c.l.b16 %v2653
    %v3166 = vunpack.c.l.b16 %v2654
    %v3167 = vunpack.c.l.b16 %v2655
    %v3168 = vunpack.c.l.b16 %v2656
    %v3169 = vunpack.c.l.b16 %v2657
    %v3170 = vunpack.c.l.b16 %v2658
    %v3171 = vunpack.c.l.b16 %v2659
    %v3172 = vunpack.c.l.b16 %v2660
    %v3173 = vunpack.c.l.b16 %v2661
    %v3174 = vunpack.c.l.b16 %v2662
    %v3175 = vunpack.c.l.b16 %v2663
    %v3176 = vunpack.c.l.b16 %v2664
    %v3177 = vunpack.c.l.b16 %v2665
    %v3178 = vunpack.c.l.b16 %v2666
    %v3179 = vunpack.c.l.b16 %v2667
    %v3180 = vunpack.c.l.b16 %v2668
    %v3181 = vunpack.c.l.b16 %v2669
    %v3182 = vunpack.c.l.b16 %v2670
    %v3183 = vunpack.c.l.b16 %v2671
    %v3184 = vunpack.c.l.b16 %v2672
    %v3185 = vunpack.c.l.b16 %v2673
    %v3186 = vunpack.c.l.b16 %v2674
    %v3187 = vunpack.c.l.b16 %v2675
    %v3188 = vunpack.c.l.b16 %v2676
    %v3189 = vunpack.c.l.b16 %v2677
    %v3190 = vunpack.c.l.b16 %v2678
    %v3191 = vunpack.c.l.b16 %v2679
    %v3192 = vunpack.c.l.b16 %v2680
    %v3193 = vunpack.c.l.b16 %v2681
    %v3194 = vunpack.c.l.b16 %v2682
    %v3195 = vunpack.c.l.b16 %v2683
    %v3196 = vunpack.c.l.b16 %v2684
    %v3197 = vunpack.c.l.b16 %v2685
    %v3198 = vunpack.c.l.b16 %v2686
    %v3199 = vunpack.c.l.b16 %v2687
    %v3200 = vunpack.c.l.b16 %v2688
    %v3201 = vunpack.c.l.b16 %v2689
    %v3202 = vunpack.c.l.b16 %v2690
    %v3203 = vunpack.c.l.b16 %v2691
    %v3204 = vunpack.c.l.b16 %v2692
    %v3205 = vunpack.c.l.b16 %v2693
    %v3206 = vunpack.c.l.b16 %v2694
    %v3207 = vunpack.c.l.b16 %v2695
    %v3208 = vunpack.c.l.b16 %v2696
    %v3209 = vunpack.c.l.b16 %v2697
    %v3210 = vunpack.c.l.b16 %v2698
    %v3211 = vunpack.c.l.b16 %v2699
    %v3212 = vunpack.c.l.b16 %v2700
    %v3213 = vunpack.c.l.b16 %v2701
    %v3214 = vunpack.c.l.b16 %v2702
    %v3215 = vunpack.c.l.b16 %v2703
    %v3216 = vunpack.c.l.b16 %v2704
    %v3217 = vunpack.c.l.b16 %v2705
    %v3218 = vunpack.c.l.b16 %v2706
    %v3219 = vunpack.c.l.b16 %v2707
    %v3220 = vunpack.c.l.b16 %v2708
    %v3221 = vunpack.c.l.b16 %v2709
    %v3222 = vunpack.c.l.b16 %v2710
    %v3223 = vunpack.c.l.b16 %v2711
    %v3224 = vunpack.c.l.b16 %v2712
    %v3225 = vunpack.c.l.b16 %v2713
    %v3226 = vunpack.c.l.b16 %v2714
    %v3227 = vunpack.c.l.b16 %v2715
    %v3228 = vunpack.c.l.b16 %v2716
    %v3229 = vunpack.c.l.b16 %v2717
    %v3230 = vunpack.c.l.b16 %v2718
    %v3231 = vunpack.c.l.b16 %v2719
    %v3232 = vunpack.c.l.b16 %v2720
    %v3233 = vunpack.c.l.b16 %v2721
    %v3234 = vunpack.c.l.b16 %v2722
    %v3235 = vunpack.c.l.b16 %v2723
    %v3236 = vunpack.c.l.b16 %v2724
    %v3237 = vunpack.c.l.b16 %v2725
    %v3238 = vunpack.c.l.b16 %v2726
    %v3239 = vunpack.c.l.b16 %v2727
    %v3240 = vunpack.c.l.b16 %v2728
    %v3241 = vunpack.c.l.b16 %v2729
    %v3242 = vunpack.c.l.b16 %v2730
    %v3243 = vunpack.c.l.b16 %v2731
    %v3244 = vunpack.c.l.b16 %v2732
    %v3245 = vunpack.c.l.b16 %v2733
    %v3246 = vunpack.c.l.b16 %v2734
    %v3247 = vunpack.c.l.b16 %v2735
    %v3248 = vunpack.c.l.b16 %v2736
    %v3249 = vunpack.c.l.b16 %v2737
    %v3250 = vunpack.c.l.b16 %v2738
    %v3251 = vunpack.c.l.b16 %v2739
    %v3252 = vpack.c.b16 %v2997, %v2996
    %v3253 = vpack.c.b16 %v2999, %v2998
    %v3254 = vpack.c.b16 %v3001, %v3000
    %v3255 = vpack.c.b16 %v3003, %v3002
    %v3256 = vpack.c.b16 %v3005, %v3004
    %v3257 = vpack.c.b16 %v3007, %v3006
    %v3258 = vpack.c.b16 %v3009, %v3008
    %v3259 = vpack.c.b16 %v3011, %v3010
    %v3260 = vpack.c.b16 %v3013, %v3012
    %v3261 = vpack.c.b16 %v3015, %v3014
    %v3262 = vpack.c.b16 %v3017, %v3016
    %v3263 = vpack.c.b16 %v3019, %v3018
    %v3264 = vpack.c.b16 %v3021, %v3020
    %v3265 = vpack.c.b16 %v3023, %v3022
    %v3266 = vpack.c.b16 %v3025, %v3024
    %v3267 = vpack.c.b16 %v3027, %v3026
    %v3268 = vpack.c.b16 %v3029, %v3028
    %v3269 = vpack.c.b16 %v3031, %v3030
    %v3270 = vpack.c.b16 %v3033, %v3032
    %v3271 = vpack.c.b16 %v3035, %v3034
    %v3272 = vpack.c.b16 %v3037, %v3036
    %v3273 = vpack.c.b16 %v3039, %v3038
    %v3274 = vpack.c.b16 %v3041, %v3040
    %v3275 = vpack.c.b16 %v3043, %v3042
    %v3276 = vpack.c.b16 %v3045, %v3044
    %v3277 = vpack.c.b16 %v3047, %v3046
    %v3278 = vpack.c.b16 %v3049, %v3048
    %v3279 = vpack.c.b16 %v3051, %v3050
    %v3280 = vpack.c.b16 %v3053, %v3052
    %v3281 = vpack.c.b16 %v3055, %v3054
    %v3282 = vpack.c.b16 %v3057, %v3056
    %v3283 = vpack.c.b16 %v3059, %v3058
    %v3284 = vpack.c.b16 %v3061, %v3060
    %v3285 = vpack.c.b16 %v3063, %v3062
    %v3286 = vpack.c.b16 %v3065, %v3064
    %v3287 = vpack.c.b16 %v3067, %v3066
    %v3288 = vpack.c.b16 %v3069, %v3068
    %v3289 = vpack.c.b16 %v3071, %v3070
    %v3290 = vpack.c.b16 %v3073, %v3072
    %v3291 = vpack.c.b16 %v3075, %v3074
    %v3292 = vpack.c.b16 %v3077, %v3076
    %v3293 = vpack.c.b16 %v3079, %v3078
    %v3294 = vpack.c.b16 %v3081, %v3080
    %v3295 = vpack.c.b16 %v3083, %v3082
    %v3296 = vpack.c.b16 %v3085, %v3084
    %v3297 = vpack.c.b16 %v3087, %v3086
    %v3298 = vpack.c.b16 %v3089, %v3088
    %v3299 = vpack.c.b16 %v3091, %v3090
    %v3300 = vpack.c.b16 %v3093, %v3092
    %v3301 = vpack.c.b16 %v3095, %v3094
    %v3302 = vpack.c.b16 %v3097, %v3096
    %v3303 = vpack.c.b16 %v3099, %v3098
    %v3304 = vpack.c.b16 %v3101, %v3100
    %v3305 = vpack.c.b16 %v3103, %v3102
    %v3306 = vpack.c.b16 %v3105, %v3104
    %v3307 = vpack.c.b16 %v3107, %v3106
    %v3308 = vpack.c.b16 %v3109, %v3108
    %v3309 = vpack.c.b16 %v3111, %v3110
    %v3310 = vpack.c.b16 %v3113, %v3112
    %v3311 = vpack.c.b16 %v3115, %v3114
    %v3312 = vpack.c.b16 %v3117, %v3116
    %v3313 = vpack.c.b16 %v3119, %v3118
    %v3314 = vpack.c.b16 %v3121, %v3120
    %v3315 = vpack.c.b16 %v3123, %v3122
    %v3316 = vpack.c.b16 %v3125, %v3124
    %v3317 = vpack.c.b16 %v3127, %v3126
    %v3318 = vpack.c.b16 %v3129, %v3128
    %v3319 = vpack.c.b16 %v3131, %v3130
    %v3320 = vpack.c.b16 %v3133, %v3132
    %v3321 = vpack.c.b16 %v3135, %v3134
    %v3322 = vpack.c.b16 %v3137, %v3136
    %v3323 = vpack.c.b16 %v3139, %v3138
    %v3324 = vpack.c.b16 %v3141, %v3140
    %v3325 = vpack.c.b16 %v3143, %v3142
    %v3326 = vpack.c.b16 %v3145, %v3144
    %v3327 = vpack.c.b16 %v3147, %v3146
    %v3328 = vpack.c.b16 %v3149, %v3148
    %v3329 = vpack.c.b16 %v3151, %v3150
    %v3330 = vpack.c.b16 %v3153, %v3152
    %v3331 = vpack.c.b16 %v3155, %v3154
    %v3332 = vpack.c.b16 %v3157, %v3156
    %v3333 = vpack.c.b16 %v3159, %v3158
    %v3334 = vpack.c.b16 %v3161, %v3160
    %v3335 = vpack.c.b16 %v3163, %v3162
    %v3336 = vpack.c.b16 %v3165, %v3164
    %v3337 = vpack.c.b16 %v3167, %v3166
    %v3338 = vpack.c.b16 %v3169, %v3168
    %v3339 = vpack.c.b16 %v3171, %v3170
    %v3340 = vpack.c.b16 %v3173, %v3172
    %v3341 = vpack.c.b16 %v3175, %v3174
    %v3342 = vpack.c.b16 %v3177, %v3176
    %v3343 = vpack.c.b16 %v3179, %v3178
    %v3344 = vpack.c.b16 %v3181, %v3180
    %v3345 = vpack.c.b16 %v3183, %v3182
    %v3346 = vpack.c.b16 %v3185, %v3184
    %v3347 = vpack.c.b16 %v3187, %v3186
    %v3348 = vpack.c.b16 %v3189, %v3188
    %v3349 = vpack.c.b16 %v3191, %v3190
    %v3350 = vpack.c.b16 %v3193, %v3192
    %v3351 = vpack.c.b16 %v3195, %v3194
    %v3352 = vpack.c.b16 %v3197, %v3196
    %v3353 = vpack.c.b16 %v3199, %v3198
    %v3354 = vpack.c.b16 %v3201, %v3200
    %v3355 = vpack.c.b16 %v3203, %v3202
    %v3356 = vpack.c.b16 %v3205, %v3204
    %v3357 = vpack.c.b16 %v3207, %v3206
    %v3358 = vpack.c.b16 %v3209, %v3208
    %v3359 = vpack.c.b16 %v3211, %v3210
    %v3360 = vpack.c.b16 %v3213, %v3212
    %v3361 = vpack.c.b16 %v3215, %v3214
    %v3362 = vpack.c.b16 %v3217, %v3216
    %v3363 = vpack.c.b16 %v3219, %v3218
    %v3364 = vpack.c.b16 %v3221, %v3220
    %v3365 = vpack.c.b16 %v3223, %v3222
    %v3366 = vpack.c.b16 %v3225, %v3224
    %v3367 = vpack.c.b16 %v3227, %v3226
    %v3368 = vpack.c.b16 %v3229, %v3228
    %v3369 = vpack.c.b16 %v3231, %v3230
    %v3370 = vpack.c.b16 %v3233, %v3232
    %v3371 = vpack.c.b16 %v3235, %v3234
    %v3372 = vpack.c.b16 %v3237, %v3236
    %v3373 = vpack.c.b16 %v3239, %v3238
    %v3374 = vpack.c.b16 %v3241, %v3240
    %v3375 = vpack.c.b16 %v3243, %v3242
    %v3376 = vpack.c.b16 %v3245, %v3244
    %v3377 = vpack.c.b16 %v3247, %v3246
    %v3378 = vpack.c.b16 %v3249, %v3248
    %v3379 = vpack.c.b16 %v3251, %v3250
    %3508 = vmatpush.bf16.msra.mxu0 %v3259
    %3509 = vmatpush.bf16.msra.mxu0 %v3258
    %3510 = vmatpush.bf16.msra.mxu0 %v3257
    %3511 = vmatpush.bf16.msra.mxu0 %v3256
    %3512 = vmatpush.bf16.msra.mxu0 %v3255
    %3513 = vmatpush.bf16.msra.mxu0 %v3254
    %3514 = vmatpush.bf16.msra.mxu0 %v3253
    %3515 = vmatpush.bf16.msra.mxu0 %v3252
    %3516 = vmatmul.bf16.gmra.mxu0 %v2436
    %v3517 = vpop.f32.mrf.mxu0
    %v3518 = vadd.f32 0.0, %v3517
    %v3519 = vpop.f32.mrf.mxu0
    %v3520 = vadd.f32 0.0, %v3519
    %3521 = vmatmul.bf16.gmra.mxu0 %v2452
    %v3522 = vpop.f32.mrf.mxu0
    %v3523 = vadd.f32 0.0, %v3522
    %v3524 = vpop.f32.mrf.mxu0
    %v3525 = vadd.f32 0.0, %v3524
    %3526 = vmatmul.bf16.gmra.mxu0 %v2468
    %v3527 = vpop.f32.mrf.mxu0
    %v3528 = vadd.f32 0.0, %v3527
    %v3529 = vpop.f32.mrf.mxu0
    %v3530 = vadd.f32 0.0, %v3529
    %3531 = vdwg.mxu0
    %3532 = vmatpush.bf16.msra.mxu0 %v3267
    %3533 = vmatpush.bf16.msra.mxu0 %v3266
    %3534 = vmatpush.bf16.msra.mxu0 %v3265
    %3535 = vmatpush.bf16.msra.mxu0 %v3264
    %3536 = vmatpush.bf16.msra.mxu0 %v3263
    %3537 = vmatpush.bf16.msra.mxu0 %v3262
    %3538 = vmatpush.bf16.msra.mxu0 %v3261
    %3539 = vmatpush.bf16.msra.mxu0 %v3260
    %3540 = vmatmul.bf16.gmra.mxu0 %v2437
    %v3541 = vpop.f32.mrf.mxu0
    %v3542 = vadd.f32 %v3518, %v3541
    %v3543 = vpop.f32.mrf.mxu0
    %v3544 = vadd.f32 %v3520, %v3543
    %3545 = vmatmul.bf16.gmra.mxu0 %v2453
    %v3546 = vpop.f32.mrf.mxu0
    %v3547 = vadd.f32 %v3523, %v3546
    %v3548 = vpop.f32.mrf.mxu0
    %v3549 = vadd.f32 %v3525, %v3548
    %3550 = vmatmul.bf16.gmra.mxu0 %v2469
    %v3551 = vpop.f32.mrf.mxu0
    %v3552 = vadd.f32 %v3528, %v3551
    %v3553 = vpop.f32.mrf.mxu0
    %v3554 = vadd.f32 %v3530, %v3553
    %3555 = vdwg.mxu0
    %3556 = vmatpush.bf16.msra.mxu0 %v3275
    %3557 = vmatpush.bf16.msra.mxu0 %v3274
    %3558 = vmatpush.bf16.msra.mxu0 %v3273
    %3559 = vmatpush.bf16.msra.mxu0 %v3272
    %3560 = vmatpush.bf16.msra.mxu0 %v3271
    %3561 = vmatpush.bf16.msra.mxu0 %v3270
    %3562 = vmatpush.bf16.msra.mxu0 %v3269
    %3563 = vmatpush.bf16.msra.mxu0 %v3268
    %3564 = vmatmul.bf16.gmra.mxu0 %v2438
    %v3565 = vpop.f32.mrf.mxu0
    %v3566 = vadd.f32 %v3542, %v3565
    %v3567 = vpop.f32.mrf.mxu0
    %v3568 = vadd.f32 %v3544, %v3567
    %3569 = vmatmul.bf16.gmra.mxu0 %v2454
    %v3570 = vpop.f32.mrf.mxu0
    %v3571 = vadd.f32 %v3547, %v3570
    %v3572 = vpop.f32.mrf.mxu0
    %v3573 = vadd.f32 %v3549, %v3572
    %3574 = vmatmul.bf16.gmra.mxu0 %v2470
    %v3575 = vpop.f32.mrf.mxu0
    %v3576 = vadd.f32 %v3552, %v3575
    %v3577 = vpop.f32.mrf.mxu0
    %v3578 = vadd.f32 %v3554, %v3577
    %3579 = vdwg.mxu0
    %3580 = vmatpush.bf16.msra.mxu0 %v3283
    %3581 = vmatpush.bf16.msra.mxu0 %v3282
    %3582 = vmatpush.bf16.msra.mxu0 %v3281
    %3583 = vmatpush.bf16.msra.mxu0 %v3280
    %3584 = vmatpush.bf16.msra.mxu0 %v3279
    %3585 = vmatpush.bf16.msra.mxu0 %v3278
    %3586 = vmatpush.bf16.msra.mxu0 %v3277
    %3587 = vmatpush.bf16.msra.mxu0 %v3276
    %3588 = vmatmul.bf16.gmra.mxu0 %v2439
    %v3589 = vpop.f32.mrf.mxu0
    %v3590 = vadd.f32 %v3566, %v3589
    %v3591 = vpop.f32.mrf.mxu0
    %v3592 = vadd.f32 %v3568, %v3591
    %3593 = vmatmul.bf16.gmra.mxu0 %v2455
    %v3594 = vpop.f32.mrf.mxu0
    %v3595 = vadd.f32 %v3571, %v3594
    %v3596 = vpop.f32.mrf.mxu0
    %v3597 = vadd.f32 %v3573, %v3596
    %3598 = vmatmul.bf16.gmra.mxu0 %v2471
    %v3599 = vpop.f32.mrf.mxu0
    %v3600 = vadd.f32 %v3576, %v3599
    %v3601 = vpop.f32.mrf.mxu0
    %v3602 = vadd.f32 %v3578, %v3601
    %3603 = vdwg.mxu0
    %3604 = vmatpush.bf16.msra.mxu0 %v3291
    %3605 = vmatpush.bf16.msra.mxu0 %v3290
    %3606 = vmatpush.bf16.msra.mxu0 %v3289
    %3607 = vmatpush.bf16.msra.mxu0 %v3288
    %3608 = vmatpush.bf16.msra.mxu0 %v3287
    %3609 = vmatpush.bf16.msra.mxu0 %v3286
    %3610 = vmatpush.bf16.msra.mxu0 %v3285
    %3611 = vmatpush.bf16.msra.mxu0 %v3284
    %3612 = vmatmul.bf16.gmra.mxu0 %v2440
    %v3613 = vpop.f32.mrf.mxu0
    %v3614 = vadd.f32 %v3590, %v3613
    %v3615 = vpop.f32.mrf.mxu0
    %v3616 = vadd.f32 %v3592, %v3615
    %3617 = vmatmul.bf16.gmra.mxu0 %v2456
    %v3618 = vpop.f32.mrf.mxu0
    %v3619 = vadd.f32 %v3595, %v3618
    %v3620 = vpop.f32.mrf.mxu0
    %v3621 = vadd.f32 %v3597, %v3620
    %3622 = vmatmul.bf16.gmra.mxu0 %v2472
    %v3623 = vpop.f32.mrf.mxu0
    %v3624 = vadd.f32 %v3600, %v3623
    %v3625 = vpop.f32.mrf.mxu0
    %v3626 = vadd.f32 %v3602, %v3625
    %3627 = vdwg.mxu0
    %3628 = vmatpush.bf16.msra.mxu0 %v3299
    %3629 = vmatpush.bf16.msra.mxu0 %v3298
    %3630 = vmatpush.bf16.msra.mxu0 %v3297
    %3631 = vmatpush.bf16.msra.mxu0 %v3296
    %3632 = vmatpush.bf16.msra.mxu0 %v3295
    %3633 = vmatpush.bf16.msra.mxu0 %v3294
    %3634 = vmatpush.bf16.msra.mxu0 %v3293
    %3635 = vmatpush.bf16.msra.mxu0 %v3292
    %3636 = vmatmul.bf16.gmra.mxu0 %v2441
    %v3637 = vpop.f32.mrf.mxu0
    %v3638 = vadd.f32 %v3614, %v3637
    %v3639 = vpop.f32.mrf.mxu0
    %v3640 = vadd.f32 %v3616, %v3639
    %3641 = vmatmul.bf16.gmra.mxu0 %v2457
    %v3642 = vpop.f32.mrf.mxu0
    %v3643 = vadd.f32 %v3619, %v3642
    %v3644 = vpop.f32.mrf.mxu0
    %v3645 = vadd.f32 %v3621, %v3644
    %3646 = vmatmul.bf16.gmra.mxu0 %v2473
    %v3647 = vpop.f32.mrf.mxu0
    %v3648 = vadd.f32 %v3624, %v3647
    %v3649 = vpop.f32.mrf.mxu0
    %v3650 = vadd.f32 %v3626, %v3649
    %3651 = vdwg.mxu0
    %3652 = vmatpush.bf16.msra.mxu0 %v3307
    %3653 = vmatpush.bf16.msra.mxu0 %v3306
    %3654 = vmatpush.bf16.msra.mxu0 %v3305
    %3655 = vmatpush.bf16.msra.mxu0 %v3304
    %3656 = vmatpush.bf16.msra.mxu0 %v3303
    %3657 = vmatpush.bf16.msra.mxu0 %v3302
    %3658 = vmatpush.bf16.msra.mxu0 %v3301
    %3659 = vmatpush.bf16.msra.mxu0 %v3300
    %3660 = vmatmul.bf16.gmra.mxu0 %v2442
    %v3661 = vpop.f32.mrf.mxu0
    %v3662 = vadd.f32 %v3638, %v3661
    %v3663 = vpop.f32.mrf.mxu0
    %v3664 = vadd.f32 %v3640, %v3663
    %3665 = vmatmul.bf16.gmra.mxu0 %v2458
    %v3666 = vpop.f32.mrf.mxu0
    %v3667 = vadd.f32 %v3643, %v3666
    %v3668 = vpop.f32.mrf.mxu0
    %v3669 = vadd.f32 %v3645, %v3668
    %3670 = vmatmul.bf16.gmra.mxu0 %v2474
    %v3671 = vpop.f32.mrf.mxu0
    %v3672 = vadd.f32 %v3648, %v3671
    %v3673 = vpop.f32.mrf.mxu0
    %v3674 = vadd.f32 %v3650, %v3673
    %3675 = vdwg.mxu0
    %3676 = vmatpush.bf16.msra.mxu0 %v3315
    %3677 = vmatpush.bf16.msra.mxu0 %v3314
    %3678 = vmatpush.bf16.msra.mxu0 %v3313
    %3679 = vmatpush.bf16.msra.mxu0 %v3312
    %3680 = vmatpush.bf16.msra.mxu0 %v3311
    %3681 = vmatpush.bf16.msra.mxu0 %v3310
    %3682 = vmatpush.bf16.msra.mxu0 %v3309
    %3683 = vmatpush.bf16.msra.mxu0 %v3308
    %3684 = vmatmul.bf16.gmra.mxu0 %v2443
    %v3685 = vpop.f32.mrf.mxu0
    %v3686 = vadd.f32 %v3662, %v3685
    %v3687 = vpop.f32.mrf.mxu0
    %v3688 = vadd.f32 %v3664, %v3687
    %3689 = vmatmul.bf16.gmra.mxu0 %v2459
    %v3690 = vpop.f32.mrf.mxu0
    %v3691 = vadd.f32 %v3667, %v3690
    %v3692 = vpop.f32.mrf.mxu0
    %v3693 = vadd.f32 %v3669, %v3692
    %3694 = vmatmul.bf16.gmra.mxu0 %v2475
    %v3695 = vpop.f32.mrf.mxu0
    %v3696 = vadd.f32 %v3672, %v3695
    %v3697 = vpop.f32.mrf.mxu0
    %v3698 = vadd.f32 %v3674, %v3697
    %3699 = vdwg.mxu0
    %3700 = vmatpush.bf16.msra.mxu0 %v3323
    %3701 = vmatpush.bf16.msra.mxu0 %v3322
    %3702 = vmatpush.bf16.msra.mxu0 %v3321
    %3703 = vmatpush.bf16.msra.mxu0 %v3320
    %3704 = vmatpush.bf16.msra.mxu0 %v3319
    %3705 = vmatpush.bf16.msra.mxu0 %v3318
    %3706 = vmatpush.bf16.msra.mxu0 %v3317
    %3707 = vmatpush.bf16.msra.mxu0 %v3316
    %3708 = vmatmul.bf16.gmra.mxu0 %v2444
    %v3709 = vpop.f32.mrf.mxu0
    %v3710 = vadd.f32 %v3686, %v3709
    %v3711 = vpop.f32.mrf.mxu0
    %v3712 = vadd.f32 %v3688, %v3711
    %3713 = vmatmul.bf16.gmra.mxu0 %v2460
    %v3714 = vpop.f32.mrf.mxu0
    %v3715 = vadd.f32 %v3691, %v3714
    %v3716 = vpop.f32.mrf.mxu0
    %v3717 = vadd.f32 %v3693, %v3716
    %3718 = vmatmul.bf16.gmra.mxu0 %v2476
    %v3719 = vpop.f32.mrf.mxu0
    %v3720 = vadd.f32 %v3696, %v3719
    %v3721 = vpop.f32.mrf.mxu0
    %v3722 = vadd.f32 %v3698, %v3721
    %3723 = vdwg.mxu0
    %3724 = vmatpush.bf16.msra.mxu0 %v3331
    %3725 = vmatpush.bf16.msra.mxu0 %v3330
    %3726 = vmatpush.bf16.msra.mxu0 %v3329
    %3727 = vmatpush.bf16.msra.mxu0 %v3328
    %3728 = vmatpush.bf16.msra.mxu0 %v3327
    %3729 = vmatpush.bf16.msra.mxu0 %v3326
    %3730 = vmatpush.bf16.msra.mxu0 %v3325
    %3731 = vmatpush.bf16.msra.mxu0 %v3324
    %3732 = vmatmul.bf16.gmra.mxu0 %v2445
    %v3733 = vpop.f32.mrf.mxu0
    %v3734 = vadd.f32 %v3710, %v3733
    %v3735 = vpop.f32.mrf.mxu0
    %v3736 = vadd.f32 %v3712, %v3735
    %3737 = vmatmul.bf16.gmra.mxu0 %v2461
    %v3738 = vpop.f32.mrf.mxu0
    %v3739 = vadd.f32 %v3715, %v3738
    %v3740 = vpop.f32.mrf.mxu0
    %v3741 = vadd.f32 %v3717, %v3740
    %3742 = vmatmul.bf16.gmra.mxu0 %v2477
    %v3743 = vpop.f32.mrf.mxu0
    %v3744 = vadd.f32 %v3720, %v3743
    %v3745 = vpop.f32.mrf.mxu0
    %v3746 = vadd.f32 %v3722, %v3745
    %3747 = vdwg.mxu0
    %3748 = vmatpush.bf16.msra.mxu0 %v3339
    %3749 = vmatpush.bf16.msra.mxu0 %v3338
    %3750 = vmatpush.bf16.msra.mxu0 %v3337
    %3751 = vmatpush.bf16.msra.mxu0 %v3336
    %3752 = vmatpush.bf16.msra.mxu0 %v3335
    %3753 = vmatpush.bf16.msra.mxu0 %v3334
    %3754 = vmatpush.bf16.msra.mxu0 %v3333
    %3755 = vmatpush.bf16.msra.mxu0 %v3332
    %3756 = vmatmul.bf16.gmra.mxu0 %v2446
    %v3757 = vpop.f32.mrf.mxu0
    %v3758 = vadd.f32 %v3734, %v3757
    %v3759 = vpop.f32.mrf.mxu0
    %v3760 = vadd.f32 %v3736, %v3759
    %3761 = vmatmul.bf16.gmra.mxu0 %v2462
    %v3762 = vpop.f32.mrf.mxu0
    %v3763 = vadd.f32 %v3739, %v3762
    %v3764 = vpop.f32.mrf.mxu0
    %v3765 = vadd.f32 %v3741, %v3764
    %3766 = vmatmul.bf16.gmra.mxu0 %v2478
    %v3767 = vpop.f32.mrf.mxu0
    %v3768 = vadd.f32 %v3744, %v3767
    %v3769 = vpop.f32.mrf.mxu0
    %v3770 = vadd.f32 %v3746, %v3769
    %3771 = vdwg.mxu0
    %3772 = vmatpush.bf16.msra.mxu0 %v3347
    %3773 = vmatpush.bf16.msra.mxu0 %v3346
    %3774 = vmatpush.bf16.msra.mxu0 %v3345
    %3775 = vmatpush.bf16.msra.mxu0 %v3344
    %3776 = vmatpush.bf16.msra.mxu0 %v3343
    %3777 = vmatpush.bf16.msra.mxu0 %v3342
    %3778 = vmatpush.bf16.msra.mxu0 %v3341
    %3779 = vmatpush.bf16.msra.mxu0 %v3340
    %3780 = vmatmul.bf16.gmra.mxu0 %v2447
    %v3781 = vpop.f32.mrf.mxu0
    %v3782 = vadd.f32 %v3758, %v3781
    %v3783 = vpop.f32.mrf.mxu0
    %v3784 = vadd.f32 %v3760, %v3783
    %3785 = vmatmul.bf16.gmra.mxu0 %v2463
    %v3786 = vpop.f32.mrf.mxu0
    %v3787 = vadd.f32 %v3763, %v3786
    %v3788 = vpop.f32.mrf.mxu0
    %v3789 = vadd.f32 %v3765, %v3788
    %3790 = vmatmul.bf16.gmra.mxu0 %v2479
    %v3791 = vpop.f32.mrf.mxu0
    %v3792 = vadd.f32 %v3768, %v3791
    %v3793 = vpop.f32.mrf.mxu0
    %v3794 = vadd.f32 %v3770, %v3793
    %3795 = vdwg.mxu0
    %3796 = vmatpush.bf16.msra.mxu0 %v3355
    %3797 = vmatpush.bf16.msra.mxu0 %v3354
    %3798 = vmatpush.bf16.msra.mxu0 %v3353
    %3799 = vmatpush.bf16.msra.mxu0 %v3352
    %3800 = vmatpush.bf16.msra.mxu0 %v3351
    %3801 = vmatpush.bf16.msra.mxu0 %v3350
    %3802 = vmatpush.bf16.msra.mxu0 %v3349
    %3803 = vmatpush.bf16.msra.mxu0 %v3348
    %3804 = vmatmul.bf16.gmra.mxu0 %v2448
    %v3805 = vpop.f32.mrf.mxu0
    %v3806 = vadd.f32 %v3782, %v3805
    %v3807 = vpop.f32.mrf.mxu0
    %v3808 = vadd.f32 %v3784, %v3807
    %3809 = vmatmul.bf16.gmra.mxu0 %v2464
    %v3810 = vpop.f32.mrf.mxu0
    %v3811 = vadd.f32 %v3787, %v3810
    %v3812 = vpop.f32.mrf.mxu0
    %v3813 = vadd.f32 %v3789, %v3812
    %3814 = vmatmul.bf16.gmra.mxu0 %v2480
    %v3815 = vpop.f32.mrf.mxu0
    %v3816 = vadd.f32 %v3792, %v3815
    %v3817 = vpop.f32.mrf.mxu0
    %v3818 = vadd.f32 %v3794, %v3817
    %3819 = vdwg.mxu0
    %3820 = vmatpush.bf16.msra.mxu0 %v3363
    %3821 = vmatpush.bf16.msra.mxu0 %v3362
    %3822 = vmatpush.bf16.msra.mxu0 %v3361
    %3823 = vmatpush.bf16.msra.mxu0 %v3360
    %3824 = vmatpush.bf16.msra.mxu0 %v3359
    %3825 = vmatpush.bf16.msra.mxu0 %v3358
    %3826 = vmatpush.bf16.msra.mxu0 %v3357
    %3827 = vmatpush.bf16.msra.mxu0 %v3356
    %3828 = vmatmul.bf16.gmra.mxu0 %v2449
    %v3829 = vpop.f32.mrf.mxu0
    %v3830 = vadd.f32 %v3806, %v3829
    %v3831 = vpop.f32.mrf.mxu0
    %v3832 = vadd.f32 %v3808, %v3831
    %3833 = vmatmul.bf16.gmra.mxu0 %v2465
    %v3834 = vpop.f32.mrf.mxu0
    %v3835 = vadd.f32 %v3811, %v3834
    %v3836 = vpop.f32.mrf.mxu0
    %v3837 = vadd.f32 %v3813, %v3836
    %3838 = vmatmul.bf16.gmra.mxu0 %v2481
    %v3839 = vpop.f32.mrf.mxu0
    %v3840 = vadd.f32 %v3816, %v3839
    %v3841 = vpop.f32.mrf.mxu0
    %v3842 = vadd.f32 %v3818, %v3841
    %3843 = vdwg.mxu0
    %3844 = vmatpush.bf16.msra.mxu0 %v3371
    %3845 = vmatpush.bf16.msra.mxu0 %v3370
    %3846 = vmatpush.bf16.msra.mxu0 %v3369
    %3847 = vmatpush.bf16.msra.mxu0 %v3368
    %3848 = vmatpush.bf16.msra.mxu0 %v3367
    %3849 = vmatpush.bf16.msra.mxu0 %v3366
    %3850 = vmatpush.bf16.msra.mxu0 %v3365
    %3851 = vmatpush.bf16.msra.mxu0 %v3364
    %3852 = vmatmul.bf16.gmra.mxu0 %v2450
    %v3853 = vpop.f32.mrf.mxu0
    %v3854 = vadd.f32 %v3830, %v3853
    %v3855 = vpop.f32.mrf.mxu0
    %v3856 = vadd.f32 %v3832, %v3855
    %3857 = vmatmul.bf16.gmra.mxu0 %v2466
    %v3858 = vpop.f32.mrf.mxu0
    %v3859 = vadd.f32 %v3835, %v3858
    %v3860 = vpop.f32.mrf.mxu0
    %v3861 = vadd.f32 %v3837, %v3860
    %3862 = vmatmul.bf16.gmra.mxu0 %v2482
    %v3863 = vpop.f32.mrf.mxu0
    %v3864 = vadd.f32 %v3840, %v3863
    %v3865 = vpop.f32.mrf.mxu0
    %v3866 = vadd.f32 %v3842, %v3865
    %3867 = vdwg.mxu0
    %3868 = vmatpush.bf16.msra.mxu0 %v3379
    %3869 = vmatpush.bf16.msra.mxu0 %v3378
    %3870 = vmatpush.bf16.msra.mxu0 %v3377
    %3871 = vmatpush.bf16.msra.mxu0 %v3376
    %3872 = vmatpush.bf16.msra.mxu0 %v3375
    %3873 = vmatpush.bf16.msra.mxu0 %v3374
    %3874 = vmatpush.bf16.msra.mxu0 %v3373
    %3875 = vmatpush.bf16.msra.mxu0 %v3372
    %3876 = vmatmul.bf16.gmra.mxu0 %v2451
    %v3877 = vpop.f32.mrf.mxu0
    %v3878 = vadd.f32 %v3854, %v3877
    %v3879 = vpop.f32.mrf.mxu0
    %v3880 = vadd.f32 %v3856, %v3879
    %3881 = vmatmul.bf16.gmra.mxu0 %v2467
    %v3882 = vpop.f32.mrf.mxu0
    %v3883 = vadd.f32 %v3859, %v3882
    %v3884 = vpop.f32.mrf.mxu0
    %v3885 = vadd.f32 %v3861, %v3884
    %3886 = vmatmul.bf16.gmra.mxu0 %v2483
    %v3887 = vpop.f32.mrf.mxu0
    %v3888 = vadd.f32 %v3864, %v3887
    %v3889 = vpop.f32.mrf.mxu0
    %v3890 = vadd.f32 %v3866, %v3889
    %3891 = vdwg.mxu0
    %v3892 = vadd.f32 %v1558, %v3878
    %v3893 = vadd.f32 %v1559, %v3880
    %v3894 = vadd.f32 %v1560, %v3883
    %v3895 = vadd.f32 %v1561, %v3885
    %v3896 = vadd.f32 %v1562, %v3888
    %v3897 = vadd.f32 %v1563, %v3890
    %v3898 = vld [vmem:[%s29] sm:$0x1]
    %v3900 = vperm.slane %v3898, 0
    %v3902 = vadd.f32 %v3892, %v3900
    %v3903 = vadd.f32 %v3893, %v3900
    %v3904 = vadd.f32 %v3894, %v3900
    %v3905 = vadd.f32 %v3895, %v3900
    %v3906 = vadd.f32 %v3896, %v3900
    %v3907 = vadd.f32 %v3897, %v3900
    %v3908 = vld [vmem:[%s31] sm:$0x1]
    %v3909 = vld [vmem:[%s33] sm:$0x1]
    %v3910 = vsel %vm214, %v3902, 0.0
    %3911 = vadd.xlane.f32.xlu0 %v3910
    %v3912 = vpop.xlane.xlu0 %3911
    %v3913 = vsel %vm214, %v3903, 0.0
    %3914 = vadd.xlane.f32.xlu0 %v3913
    %v3915 = vpop.xlane.xlu0 %3914
    %v3916 = vsel %vm214, %v3904, 0.0
    %3917 = vadd.xlane.f32.xlu0 %v3916
    %v3918 = vpop.xlane.xlu0 %3917
    %v3919 = vsel %vm214, %v3905, 0.0
    %3920 = vadd.xlane.f32.xlu0 %v3919
    %v3921 = vpop.xlane.xlu0 %3920
    %v3922 = vsel %vm214, %v3906, 0.0
    %3923 = vadd.xlane.f32.xlu0 %v3922
    %v3924 = vpop.xlane.xlu0 %3923
    %v3925 = vsel %vm214, %v3907, 0.0
    %3926 = vadd.xlane.f32.xlu0 %v3925
    %v3927 = vpop.xlane.xlu0 %3926
    %v3928 = vmul.f32 %v3912, %v239
    %v3929 = vmul.f32 %v3915, %v239
    %v3930 = vmul.f32 %v3918, %v239
    %v3931 = vmul.f32 %v3921, %v239
    %v3932 = vmul.f32 %v3924, %v239
    %v3933 = vmul.f32 %v3927, %v239
    %v3934 = vsub.f32 %v3902, %v3928
    %v3935 = vsub.f32 %v3903, %v3929
    %v3936 = vsub.f32 %v3904, %v3930
    %v3937 = vsub.f32 %v3905, %v3931
    %v3938 = vsub.f32 %v3906, %v3932
    %v3939 = vsub.f32 %v3907, %v3933
    %v3940 = vmul.f32 %v3934, %v3934
    %v3941 = vmul.f32 %v3935, %v3935
    %v3942 = vmul.f32 %v3936, %v3936
    %v3943 = vmul.f32 %v3937, %v3937
    %v3944 = vmul.f32 %v3938, %v3938
    %v3945 = vmul.f32 %v3939, %v3939
    %v3946 = vsel %vm214, %v3940, 0.0
    %3947 = vadd.xlane.f32.xlu0 %v3946
    %v3948 = vpop.xlane.xlu0 %3947
    %v3949 = vsel %vm214, %v3941, 0.0
    %3950 = vadd.xlane.f32.xlu0 %v3949
    %v3951 = vpop.xlane.xlu0 %3950
    %v3952 = vsel %vm214, %v3942, 0.0
    %3953 = vadd.xlane.f32.xlu0 %v3952
    %v3954 = vpop.xlane.xlu0 %3953
    %v3955 = vsel %vm214, %v3943, 0.0
    %3956 = vadd.xlane.f32.xlu0 %v3955
    %v3957 = vpop.xlane.xlu0 %3956
    %v3958 = vsel %vm214, %v3944, 0.0
    %3959 = vadd.xlane.f32.xlu0 %v3958
    %v3960 = vpop.xlane.xlu0 %3959
    %v3961 = vsel %vm214, %v3945, 0.0
    %3962 = vadd.xlane.f32.xlu0 %v3961
    %v3963 = vpop.xlane.xlu0 %3962
    %v3964 = vmul.f32 %v3948, %v239
    %v3965 = vmul.f32 %v3951, %v239
    %v3966 = vmul.f32 %v3954, %v239
    %v3967 = vmul.f32 %v3957, %v239
    %v3968 = vmul.f32 %v3960, %v239
    %v3969 = vmul.f32 %v3963, %v239
    %v3970 = vadd.f32 %v3964, 1e-05
    %v3971 = vadd.f32 %v3965, 1e-05
    %v3972 = vadd.f32 %v3966, 1e-05
    %v3973 = vadd.f32 %v3967, 1e-05
    %v3974 = vadd.f32 %v3968, 1e-05
    %v3975 = vadd.f32 %v3969, 1e-05
    %v3976 = vrsqrt.pop %v3970
    %v3977 = vmul.f32 %v3976, %v3970
    %v3978 = vmul.f32 %v3977, %v3976
    %v3979 = vmul.f32 0.5, %v3978
    %v3980 = vsub.f32 1.5, %v3979
    %v3981 = vmul.f32 %v3976, %v3980
    %vm3982 = vweird.f32 %v3970
    %vm3983 = vweird.f32 %v3976
    %vm3984 = vmor %vm3982, %vm3983
    %v3985 = vsel %vm3984, %v3976, %v3981
    %v3986 = vrsqrt.pop %v3971
    %v3987 = vmul.f32 %v3986, %v3971
    %v3988 = vmul.f32 %v3987, %v3986
    %v3989 = vmul.f32 0.5, %v3988
    %v3990 = vsub.f32 1.5, %v3989
    %v3991 = vmul.f32 %v3986, %v3990
    %vm3992 = vweird.f32 %v3971
    %vm3993 = vweird.f32 %v3986
    %vm3994 = vmor %vm3992, %vm3993
    %v3995 = vsel %vm3994, %v3986, %v3991
    %v3996 = vrsqrt.pop %v3972
    %v3997 = vmul.f32 %v3996, %v3972
    %v3998 = vmul.f32 %v3997, %v3996
    %v3999 = vmul.f32 0.5, %v3998
    %v4000 = vsub.f32 1.5, %v3999
    %v4001 = vmul.f32 %v3996, %v4000
    %vm4002 = vweird.f32 %v3972
    %vm4003 = vweird.f32 %v3996
    %vm4004 = vmor %vm4002, %vm4003
    %v4005 = vsel %vm4004, %v3996, %v4001
    %v4006 = vrsqrt.pop %v3973
    %v4007 = vmul.f32 %v4006, %v3973
    %v4008 = vmul.f32 %v4007, %v4006
    %v4009 = vmul.f32 0.5, %v4008
    %v4010 = vsub.f32 1.5, %v4009
    %v4011 = vmul.f32 %v4006, %v4010
    %vm4012 = vweird.f32 %v3973
    %vm4013 = vweird.f32 %v4006
    %vm4014 = vmor %vm4012, %vm4013
    %v4015 = vsel %vm4014, %v4006, %v4011
    %v4016 = vrsqrt.pop %v3974
    %v4017 = vmul.f32 %v4016, %v3974
    %v4018 = vmul.f32 %v4017, %v4016
    %v4019 = vmul.f32 0.5, %v4018
    %v4020 = vsub.f32 1.5, %v4019
    %v4021 = vmul.f32 %v4016, %v4020
    %vm4022 = vweird.f32 %v3974
    %vm4023 = vweird.f32 %v4016
    %vm4024 = vmor %vm4022, %vm4023
    %v4025 = vsel %vm4024, %v4016, %v4021
    %v4026 = vrsqrt.pop %v3975
    %v4027 = vmul.f32 %v4026, %v3975
    %v4028 = vmul.f32 %v4027, %v4026
    %v4029 = vmul.f32 0.5, %v4028
    %v4030 = vsub.f32 1.5, %v4029
    %v4031 = vmul.f32 %v4026, %v4030
    %vm4032 = vweird.f32 %v3975
    %vm4033 = vweird.f32 %v4026
    %vm4034 = vmor %vm4032, %vm4033
    %v4035 = vsel %vm4034, %v4026, %v4031
    %v4036 = vmul.f32 %v3934, %v3985
    %v4037 = vmul.f32 %v3935, %v3995
    %v4038 = vmul.f32 %v3936, %v4005
    %v4039 = vmul.f32 %v3937, %v4015
    %v4040 = vmul.f32 %v3938, %v4025
    %v4041 = vmul.f32 %v3939, %v4035
    %v4043 = vperm.slane %v3908, 0
    %v4045 = vmul.f32 %v4036, %v4043
    %v4046 = vmul.f32 %v4037, %v4043
    %v4047 = vmul.f32 %v4038, %v4043
    %v4048 = vmul.f32 %v4039, %v4043
    %v4049 = vmul.f32 %v4040, %v4043
    %v4050 = vmul.f32 %v4041, %v4043
    %v4052 = vperm.slane %v3909, 0
    %v4054 = vadd.f32 %v4045, %v4052
    %v4055 = vadd.f32 %v4046, %v4052
    %v4056 = vadd.f32 %v4047, %v4052
    %v4057 = vadd.f32 %v4048, %v4052
    %v4058 = vadd.f32 %v4049, %v4052
    %v4059 = vadd.f32 %v4050, %v4052
    %v4060 = vpack.c.bf16 %v4055, %v4054
    %v4061 = vpack.c.bf16 %v4057, %v4056
    %v4062 = vpack.c.bf16 %v4059, %v4058
    %v4063 = vld [vmem:[%s35] sm:$0xf]
    %v4064 = vld [vmem:[%s35 + $0x4] sm:$0xf]
    %v4065 = vld [vmem:[%s35 + $0x8] sm:$0xf]
    %v4066 = vld [vmem:[%s35 + $0xc] sm:$0xf]
    %v4067 = vld [vmem:[%s37] sm:$0x1]
    %v4069 = vperm.slane %v4067, 0
    %v4075 = vunpack.c.l.b16 %v4063
    %v4076 = vunpack.c.l.b16 %v4064
    %v4077 = vunpack.c.l.b16 %v4065
    %v4078 = vunpack.c.l.b16 %v4066
    %v4079 = vpack.c.b16 %v4076, %v4075
    %v4080 = vpack.c.b16 %v4078, %v4077
    %v4084 = vsel %vm214, %v4060, 0
    %v4087 = vsel %vm214, %v4061, 0
    %v4090 = vsel %vm214, %v4062, 0
    %4092 = vmatpush.bf16.msra.mxu0 0
    %4093 = vmatpush.bf16.msra.mxu0 0
    %4094 = vmatpush.bf16.msra.mxu0 0
    %4095 = vmatpush.bf16.msra.mxu0 0
    %4096 = vmatpush.bf16.msra.mxu0 0
    %4097 = vmatpush.bf16.msra.mxu0 0
    %4098 = vmatpush.bf16.msra.mxu0 %v4080
    %4099 = vmatpush.bf16.msra.mxu0 %v4079
    %4100 = vmatmul.bf16.gmra.mxu0 %v4084
    %v4101 = vpop.f32.mrf.mxu0
    %v4102 = vadd.f32 %v4069, %v4101
    %v4103 = vpop.f32.mrf.mxu0
    %v4104 = vadd.f32 %v4069, %v4103
    %4105 = vmatmul.bf16.gmra.mxu0 %v4087
    %v4106 = vpop.f32.mrf.mxu0
    %v4107 = vadd.f32 %v4069, %v4106
    %v4108 = vpop.f32.mrf.mxu0
    %v4109 = vadd.f32 %v4069, %v4108
    %4110 = vmatmul.bf16.gmra.mxu0 %v4090
    %v4111 = vpop.f32.mrf.mxu0
    %v4112 = vadd.f32 %v4069, %v4111
    %v4113 = vpop.f32.mrf.mxu0
    %v4114 = vadd.f32 %v4069, %v4113
    %4115 = vdwg.mxu0
    %v4116 = vpack.c.bf16 %v4102, %v4102
    %v4117 = vpack.c.bf16 %v4104, %v4104
    %v4118 = vpack.c.bf16 %v4107, %v4107
    %v4119 = vpack.c.bf16 %v4109, %v4109
    %v4120 = vpack.c.bf16 %v4112, %v4112
    %v4121 = vpack.c.bf16 %v4114, %v4114
    %v4125 = vunpack.c.l.b16 %v4116
    %v4126 = vunpack.c.l.b16 %v4117
    %v4127 = vunpack.c.l.b16 %v4118
    %v4128 = vpack.c.b16 %v4126, %v4125
    %v4129 = vpack.c.b16 %v4127, %v4127
    %4130 = vrot.lane.b32.xlu0 %v4128, 96
    %v4131 = vpop.permute.xlu0 %4130
    %4132 = vrot.lane.b32.xlu0 %v4129, 96
    %v4133 = vpop.permute.xlu0 %4132
    %v4135 = vsel %vm446, %v4128, 0
    %v4138 = vsel %vm446, %v4129, 0
    %v4141 = vsel %vm446, %v4131, 0
    %v4144 = vsel %vm446, %v4133, 0
    %4146 = vmatpush.bf16.xpose.msra.mxu0 0
    %4147 = vmatpush.bf16.xpose.msra.mxu0 0
    %4148 = vmatpush.bf16.xpose.msra.mxu0 0
    %4149 = vmatpush.bf16.xpose.msra.mxu0 0
    %4150 = vmatpush.bf16.xpose.msra.mxu0 0
    %4151 = vmatpush.bf16.xpose.msra.mxu0 0
    %4152 = vmatpush.bf16.xpose.msra.mxu0 %v4144
    %4153 = vmatpush.bf16.xpose.msra.mxu0 %v4141
    %4154 = vmatmul.bf16.gmra.mxu0 %v4135
    %v4155 = vpop.f32.mrf.mxu0
    %v4156 = vadd.f32 0.0, %v4155
    %v4157 = vpop.f32.mrf.mxu0
    %v4158 = vadd.f32 0.0, %v4157
    %4159 = vmatmul.bf16.gmra.mxu0 %v4138
    %v4160 = vpop.f32.mrf.mxu0
    %v4161 = vadd.f32 0.0, %v4160
    %v4162 = vpop.f32.mrf.mxu0
    %4163 = vdwg.mxu0
    %v4167 = vunpack.c.l.b16 %v4119
    %v4168 = vunpack.c.l.b16 %v4120
    %v4169 = vunpack.c.l.b16 %v4121
    %v4170 = vpack.c.b16 %v4168, %v4167
    %v4171 = vpack.c.b16 %v4169, %v4169
    %4172 = vrot.lane.b32.xlu0 %v4170, 96
    %v4173 = vpop.permute.xlu0 %4172
    %4174 = vrot.lane.b32.xlu0 %v4171, 96
    %v4175 = vpop.permute.xlu0 %4174
    %v4177 = vsel %vm446, %v4170, 0
    %v4180 = vsel %vm446, %v4171, 0
    %v4183 = vsel %vm446, %v4173, 0
    %v4186 = vsel %vm446, %v4175, 0
    %4188 = vmatpush.bf16.xpose.msra.mxu0 0
    %4189 = vmatpush.bf16.xpose.msra.mxu0 0
    %4190 = vmatpush.bf16.xpose.msra.mxu0 0
    %4191 = vmatpush.bf16.xpose.msra.mxu0 0
    %4192 = vmatpush.bf16.xpose.msra.mxu0 0
    %4193 = vmatpush.bf16.xpose.msra.mxu0 0
    %4194 = vmatpush.bf16.xpose.msra.mxu0 %v4186
    %4195 = vmatpush.bf16.xpose.msra.mxu0 %v4183
    %4196 = vmatmul.bf16.gmra.mxu0 %v4177
    %v4197 = vpop.f32.mrf.mxu0
    %v4198 = vadd.f32 0.0, %v4197
    %v4199 = vpop.f32.mrf.mxu0
    %v4200 = vadd.f32 0.0, %v4199
    %4201 = vmatmul.bf16.gmra.mxu0 %v4180
    %v4202 = vpop.f32.mrf.mxu0
    %v4203 = vadd.f32 0.0, %v4202
    %v4204 = vpop.f32.mrf.mxu0
    %4205 = vdwg.mxu0
    %v4206 = vmul.f32 %v4156, 0.35355338
    %v4207 = vmul.f32 %v4158, 0.35355338
    %v4208 = vmul.f32 %v4161, 0.35355338
    %v4209 = vmul.f32 %v4198, 0.35355338
    %v4210 = vmul.f32 %v4200, 0.35355338
    %v4211 = vmul.f32 %v4203, 0.35355338
    %v4212 = vadd.f32 %v4206, %v211
    %v4213 = vadd.f32 %v4207, %v211
    %v4214 = vadd.f32 %v4208, %v211
    %v4215 = vadd.f32 %v4209, %v211
    %v4216 = vadd.f32 %v4210, %v211
    %v4217 = vadd.f32 %v4211, %v211
    %v4218 = vsel %vm531, %v4212, -inf
    %4219 = vmax.xlane.f32.xlu0 %v4218
    %v4220 = vpop.xlane.xlu0 %4219
    %v4221 = vsel %vm531, %v4213, -inf
    %4222 = vmax.xlane.f32.xlu0 %v4221
    %v4223 = vpop.xlane.xlu0 %4222
    %v4224 = vsel %vm531, %v4214, -inf
    %4225 = vmax.xlane.f32.xlu0 %v4224
    %v4226 = vpop.xlane.xlu0 %4225
    %v4227 = vsel %vm531, %v4215, -inf
    %4228 = vmax.xlane.f32.xlu0 %v4227
    %v4229 = vpop.xlane.xlu0 %4228
    %v4230 = vsel %vm531, %v4216, -inf
    %4231 = vmax.xlane.f32.xlu0 %v4230
    %v4232 = vpop.xlane.xlu0 %4231
    %v4233 = vsel %vm531, %v4217, -inf
    %4234 = vmax.xlane.f32.xlu0 %v4233
    %v4235 = vpop.xlane.xlu0 %4234
    %v4236 = vsub.f32 %v4212, %v4220
    %v4237 = vsub.f32 %v4213, %v4223
    %v4238 = vsub.f32 %v4214, %v4226
    %v4239 = vsub.f32 %v4215, %v4229
    %v4240 = vsub.f32 %v4216, %v4232
    %v4241 = vsub.f32 %v4217, %v4235
    %v4242 = vmul.f32 %v4236, 1.442695
    %v4243 = vpow.pop %v4242
    %v4244 = vmul.f32 %v4237, 1.442695
    %v4245 = vpow.pop %v4244
    %v4246 = vmul.f32 %v4238, 1.442695
    %v4247 = vpow.pop %v4246
    %v4248 = vmul.f32 %v4239, 1.442695
    %v4249 = vpow.pop %v4248
    %v4250 = vmul.f32 %v4240, 1.442695
    %v4251 = vpow.pop %v4250
    %v4252 = vmul.f32 %v4241, 1.442695
    %v4253 = vpow.pop %v4252
    %v4254 = vsel %vm531, %v4243, 0.0
    %4255 = vadd.xlane.f32.xlu0 %v4254
    %v4256 = vpop.xlane.xlu0 %4255
    %v4257 = vsel %vm531, %v4245, 0.0
    %4258 = vadd.xlane.f32.xlu0 %v4257
    %v4259 = vpop.xlane.xlu0 %4258
    %v4260 = vsel %vm531, %v4247, 0.0
    %4261 = vadd.xlane.f32.xlu0 %v4260
    %v4262 = vpop.xlane.xlu0 %4261
    %v4263 = vsel %vm531, %v4249, 0.0
    %4264 = vadd.xlane.f32.xlu0 %v4263
    %v4265 = vpop.xlane.xlu0 %4264
    %v4266 = vsel %vm531, %v4251, 0.0
    %4267 = vadd.xlane.f32.xlu0 %v4266
    %v4268 = vpop.xlane.xlu0 %4267
    %v4269 = vsel %vm531, %v4253, 0.0
    %4270 = vadd.xlane.f32.xlu0 %v4269
    %v4271 = vpop.xlane.xlu0 %4270
    %v4272 = vrcp.pop %v4256
    %v4273 = vrcp.pop %v4259
    %v4274 = vrcp.pop %v4262
    %v4275 = vrcp.pop %v4265
    %v4276 = vrcp.pop %v4268
    %v4277 = vrcp.pop %v4271
    %v4278 = vmul.f32 %v4243, %v4272
    %v4279 = vmul.f32 %v4245, %v4273
    %v4280 = vmul.f32 %v4247, %v4274
    %v4281 = vmul.f32 %v4249, %v4275
    %v4282 = vmul.f32 %v4251, %v4276
    %v4283 = vmul.f32 %v4253, %v4277
    %v4284 = vpack.c.bf16 %v4278, %v4278
    %v4285 = vpack.c.bf16 %v4279, %v4279
    %v4286 = vpack.c.bf16 %v4280, %v4280
    %v4287 = vpack.c.bf16 %v4281, %v4281
    %v4288 = vpack.c.bf16 %v4282, %v4282
    %v4289 = vpack.c.bf16 %v4283, %v4283
    %v4293 = vunpack.c.l.b16 %v4284
    %v4294 = vunpack.c.l.b16 %v4285
    %v4295 = vunpack.c.l.b16 %v4286
    %v4296 = vpack.c.b16 %v4294, %v4293
    %v4297 = vpack.c.b16 %v4295, %v4295
    %4298 = vrot.lane.b32.xlu0 %v4128, 64
    %v4299 = vpop.permute.xlu0 %4298
    %4300 = vrot.lane.b32.xlu0 %v4129, 64
    %v4301 = vpop.permute.xlu0 %4300
    %v4304 = vsel %vm531, %v4296, 0
    %v4307 = vsel %vm531, %v4297, 0
    %v4310 = vsel %vm623, %v4301, 0
    %4312 = vmatpush.bf16.msra.mxu0 0
    %4313 = vmatpush.bf16.msra.mxu0 0
    %4314 = vmatpush.bf16.msra.mxu0 0
    %4315 = vmatpush.bf16.msra.mxu0 0
    %4316 = vmatpush.bf16.msra.mxu0 0
    %4317 = vmatpush.bf16.msra.mxu0 0
    %4318 = vmatpush.bf16.msra.mxu0 %v4310
    %4319 = vmatpush.bf16.msra.mxu0 %v4299
    %4320 = vmatmul.bf16.gmra.mxu0 %v4304
    %v4321 = vpop.f32.mrf.mxu0
    %v4322 = vadd.f32 0.0, %v4321
    %v4323 = vpop.f32.mrf.mxu0
    %v4324 = vadd.f32 0.0, %v4323
    %4325 = vmatmul.bf16.gmra.mxu0 %v4307
    %v4326 = vpop.f32.mrf.mxu0
    %v4327 = vadd.f32 0.0, %v4326
    %v4328 = vpop.f32.mrf.mxu0
    %4329 = vdwg.mxu0
    %v4333 = vunpack.c.l.b16 %v4287
    %v4334 = vunpack.c.l.b16 %v4288
    %v4335 = vunpack.c.l.b16 %v4289
    %v4336 = vpack.c.b16 %v4334, %v4333
    %v4337 = vpack.c.b16 %v4335, %v4335
    %4338 = vrot.lane.b32.xlu0 %v4170, 64
    %v4339 = vpop.permute.xlu0 %4338
    %4340 = vrot.lane.b32.xlu0 %v4171, 64
    %v4341 = vpop.permute.xlu0 %4340
    %v4344 = vsel %vm531, %v4336, 0
    %v4347 = vsel %vm531, %v4337, 0
    %v4350 = vsel %vm623, %v4341, 0
    %4352 = vmatpush.bf16.msra.mxu0 0
    %4353 = vmatpush.bf16.msra.mxu0 0
    %4354 = vmatpush.bf16.msra.mxu0 0
    %4355 = vmatpush.bf16.msra.mxu0 0
    %4356 = vmatpush.bf16.msra.mxu0 0
    %4357 = vmatpush.bf16.msra.mxu0 0
    %4358 = vmatpush.bf16.msra.mxu0 %v4350
    %4359 = vmatpush.bf16.msra.mxu0 %v4339
    %4360 = vmatmul.bf16.gmra.mxu0 %v4344
    %v4361 = vpop.f32.mrf.mxu0
    %v4362 = vadd.f32 0.0, %v4361
    %v4363 = vpop.f32.mrf.mxu0
    %v4364 = vadd.f32 0.0, %v4363
    %4365 = vmatmul.bf16.gmra.mxu0 %v4347
    %v4366 = vpop.f32.mrf.mxu0
    %v4367 = vadd.f32 0.0, %v4366
    %v4368 = vpop.f32.mrf.mxu0
    %4369 = vdwg.mxu0
    %4370 = vrot.lane.b32.xlu0 %v4128, 120
    %v4371 = vpop.permute.xlu0 %4370
    %4372 = vrot.lane.b32.xlu0 %v4129, 120
    %v4373 = vpop.permute.xlu0 %4372
    %4374 = vrot.lane.b32.xlu0 %v4128, 88
    %v4375 = vpop.permute.xlu0 %4374
    %4376 = vrot.lane.b32.xlu0 %v4129, 88
    %v4377 = vpop.permute.xlu0 %4376
    %v4379 = vsel %vm446, %v4371, 0
    %v4382 = vsel %vm446, %v4373, 0
    %v4385 = vsel %vm446, %v4375, 0
    %v4388 = vsel %vm446, %v4377, 0
    %4390 = vmatpush.bf16.xpose.msra.mxu0 0
    %4391 = vmatpush.bf16.xpose.msra.mxu0 0
    %4392 = vmatpush.bf16.xpose.msra.mxu0 0
    %4393 = vmatpush.bf16.xpose.msra.mxu0 0
    %4394 = vmatpush.bf16.xpose.msra.mxu0 0
    %4395 = vmatpush.bf16.xpose.msra.mxu0 0
    %4396 = vmatpush.bf16.xpose.msra.mxu0 %v4388
    %4397 = vmatpush.bf16.xpose.msra.mxu0 %v4385
    %4398 = vmatmul.bf16.gmra.mxu0 %v4379
    %v4399 = vpop.f32.mrf.mxu0
    %v4400 = vadd.f32 0.0, %v4399
    %v4401 = vpop.f32.mrf.mxu0
    %v4402 = vadd.f32 0.0, %v4401
    %4403 = vmatmul.bf16.gmra.mxu0 %v4382
    %v4404 = vpop.f32.mrf.mxu0
    %v4405 = vadd.f32 0.0, %v4404
    %v4406 = vpop.f32.mrf.mxu0
    %4407 = vdwg.mxu0
    %4408 = vrot.lane.b32.xlu0 %v4170, 120
    %v4409 = vpop.permute.xlu0 %4408
    %4410 = vrot.lane.b32.xlu0 %v4171, 120
    %v4411 = vpop.permute.xlu0 %4410
    %4412 = vrot.lane.b32.xlu0 %v4170, 88
    %v4413 = vpop.permute.xlu0 %4412
    %4414 = vrot.lane.b32.xlu0 %v4171, 88
    %v4415 = vpop.permute.xlu0 %4414
    %v4417 = vsel %vm446, %v4409, 0
    %v4420 = vsel %vm446, %v4411, 0
    %v4423 = vsel %vm446, %v4413, 0
    %v4426 = vsel %vm446, %v4415, 0
    %4428 = vmatpush.bf16.xpose.msra.mxu0 0
    %4429 = vmatpush.bf16.xpose.msra.mxu0 0
    %4430 = vmatpush.bf16.xpose.msra.mxu0 0
    %4431 = vmatpush.bf16.xpose.msra.mxu0 0
    %4432 = vmatpush.bf16.xpose.msra.mxu0 0
    %4433 = vmatpush.bf16.xpose.msra.mxu0 0
    %4434 = vmatpush.bf16.xpose.msra.mxu0 %v4426
    %4435 = vmatpush.bf16.xpose.msra.mxu0 %v4423
    %4436 = vmatmul.bf16.gmra.mxu0 %v4417
    %v4437 = vpop.f32.mrf.mxu0
    %v4438 = vadd.f32 0.0, %v4437
    %v4439 = vpop.f32.mrf.mxu0
    %v4440 = vadd.f32 0.0, %v4439
    %4441 = vmatmul.bf16.gmra.mxu0 %v4420
    %v4442 = vpop.f32.mrf.mxu0
    %v4443 = vadd.f32 0.0, %v4442
    %v4444 = vpop.f32.mrf.mxu0
    %4445 = vdwg.mxu0
    %v4446 = vmul.f32 %v4400, 0.35355338
    %v4447 = vmul.f32 %v4402, 0.35355338
    %v4448 = vmul.f32 %v4405, 0.35355338
    %v4449 = vmul.f32 %v4438, 0.35355338
    %v4450 = vmul.f32 %v4440, 0.35355338
    %v4451 = vmul.f32 %v4443, 0.35355338
    %v4452 = vadd.f32 %v4446, %v211
    %v4453 = vadd.f32 %v4447, %v211
    %v4454 = vadd.f32 %v4448, %v211
    %v4455 = vadd.f32 %v4449, %v211
    %v4456 = vadd.f32 %v4450, %v211
    %v4457 = vadd.f32 %v4451, %v211
    %v4458 = vsel %vm531, %v4452, -inf
    %4459 = vmax.xlane.f32.xlu0 %v4458
    %v4460 = vpop.xlane.xlu0 %4459
    %v4461 = vsel %vm531, %v4453, -inf
    %4462 = vmax.xlane.f32.xlu0 %v4461
    %v4463 = vpop.xlane.xlu0 %4462
    %v4464 = vsel %vm531, %v4454, -inf
    %4465 = vmax.xlane.f32.xlu0 %v4464
    %v4466 = vpop.xlane.xlu0 %4465
    %v4467 = vsel %vm531, %v4455, -inf
    %4468 = vmax.xlane.f32.xlu0 %v4467
    %v4469 = vpop.xlane.xlu0 %4468
    %v4470 = vsel %vm531, %v4456, -inf
    %4471 = vmax.xlane.f32.xlu0 %v4470
    %v4472 = vpop.xlane.xlu0 %4471
    %v4473 = vsel %vm531, %v4457, -inf
    %4474 = vmax.xlane.f32.xlu0 %v4473
    %v4475 = vpop.xlane.xlu0 %4474
    %v4476 = vsub.f32 %v4452, %v4460
    %v4477 = vsub.f32 %v4453, %v4463
    %v4478 = vsub.f32 %v4454, %v4466
    %v4479 = vsub.f32 %v4455, %v4469
    %v4480 = vsub.f32 %v4456, %v4472
    %v4481 = vsub.f32 %v4457, %v4475
    %v4482 = vmul.f32 %v4476, 1.442695
    %v4483 = vpow.pop %v4482
    %v4484 = vmul.f32 %v4477, 1.442695
    %v4485 = vpow.pop %v4484
    %v4486 = vmul.f32 %v4478, 1.442695
    %v4487 = vpow.pop %v4486
    %v4488 = vmul.f32 %v4479, 1.442695
    %v4489 = vpow.pop %v4488
    %v4490 = vmul.f32 %v4480, 1.442695
    %v4491 = vpow.pop %v4490
    %v4492 = vmul.f32 %v4481, 1.442695
    %v4493 = vpow.pop %v4492
    %v4494 = vsel %vm531, %v4483, 0.0
    %4495 = vadd.xlane.f32.xlu0 %v4494
    %v4496 = vpop.xlane.xlu0 %4495
    %v4497 = vsel %vm531, %v4485, 0.0
    %4498 = vadd.xlane.f32.xlu0 %v4497
    %v4499 = vpop.xlane.xlu0 %4498
    %v4500 = vsel %vm531, %v4487, 0.0
    %4501 = vadd.xlane.f32.xlu0 %v4500
    %v4502 = vpop.xlane.xlu0 %4501
    %v4503 = vsel %vm531, %v4489, 0.0
    %4504 = vadd.xlane.f32.xlu0 %v4503
    %v4505 = vpop.xlane.xlu0 %4504
    %v4506 = vsel %vm531, %v4491, 0.0
    %4507 = vadd.xlane.f32.xlu0 %v4506
    %v4508 = vpop.xlane.xlu0 %4507
    %v4509 = vsel %vm531, %v4493, 0.0
    %4510 = vadd.xlane.f32.xlu0 %v4509
    %v4511 = vpop.xlane.xlu0 %4510
    %v4512 = vrcp.pop %v4496
    %v4513 = vrcp.pop %v4499
    %v4514 = vrcp.pop %v4502
    %v4515 = vrcp.pop %v4505
    %v4516 = vrcp.pop %v4508
    %v4517 = vrcp.pop %v4511
    %v4518 = vmul.f32 %v4483, %v4512
    %v4519 = vmul.f32 %v4485, %v4513
    %v4520 = vmul.f32 %v4487, %v4514
    %v4521 = vmul.f32 %v4489, %v4515
    %v4522 = vmul.f32 %v4491, %v4516
    %v4523 = vmul.f32 %v4493, %v4517
    %v4524 = vpack.c.bf16 %v4518, %v4518
    %v4525 = vpack.c.bf16 %v4519, %v4519
    %v4526 = vpack.c.bf16 %v4520, %v4520
    %v4527 = vpack.c.bf16 %v4521, %v4521
    %v4528 = vpack.c.bf16 %v4522, %v4522
    %v4529 = vpack.c.bf16 %v4523, %v4523
    %v4533 = vunpack.c.l.b16 %v4524
    %v4534 = vunpack.c.l.b16 %v4525
    %v4535 = vunpack.c.l.b16 %v4526
    %v4536 = vpack.c.b16 %v4534, %v4533
    %v4537 = vpack.c.b16 %v4535, %v4535
    %4538 = vrot.lane.b32.xlu0 %v4128, 56
    %v4539 = vpop.permute.xlu0 %4538
    %4540 = vrot.lane.b32.xlu0 %v4129, 56
    %v4541 = vpop.permute.xlu0 %4540
    %v4544 = vsel %vm531, %v4536, 0
    %v4547 = vsel %vm531, %v4537, 0
    %v4550 = vsel %vm623, %v4541, 0
    %4552 = vmatpush.bf16.msra.mxu0 0
    %4553 = vmatpush.bf16.msra.mxu0 0
    %4554 = vmatpush.bf16.msra.mxu0 0
    %4555 = vmatpush.bf16.msra.mxu0 0
    %4556 = vmatpush.bf16.msra.mxu0 0
    %4557 = vmatpush.bf16.msra.mxu0 0
    %4558 = vmatpush.bf16.msra.mxu0 %v4550
    %4559 = vmatpush.bf16.msra.mxu0 %v4539
    %4560 = vmatmul.bf16.gmra.mxu0 %v4544
    %v4561 = vpop.f32.mrf.mxu0
    %v4562 = vadd.f32 0.0, %v4561
    %v4563 = vpop.f32.mrf.mxu0
    %v4564 = vadd.f32 0.0, %v4563
    %4565 = vmatmul.bf16.gmra.mxu0 %v4547
    %v4566 = vpop.f32.mrf.mxu0
    %v4567 = vadd.f32 0.0, %v4566
    %v4568 = vpop.f32.mrf.mxu0
    %4569 = vdwg.mxu0
    %v4573 = vunpack.c.l.b16 %v4527
    %v4574 = vunpack.c.l.b16 %v4528
    %v4575 = vunpack.c.l.b16 %v4529
    %v4576 = vpack.c.b16 %v4574, %v4573
    %v4577 = vpack.c.b16 %v4575, %v4575
    %4578 = vrot.lane.b32.xlu0 %v4170, 56
    %v4579 = vpop.permute.xlu0 %4578
    %4580 = vrot.lane.b32.xlu0 %v4171, 56
    %v4581 = vpop.permute.xlu0 %4580
    %v4584 = vsel %vm531, %v4576, 0
    %v4587 = vsel %vm531, %v4577, 0
    %v4590 = vsel %vm623, %v4581, 0
    %4592 = vmatpush.bf16.msra.mxu0 0
    %4593 = vmatpush.bf16.msra.mxu0 0
    %4594 = vmatpush.bf16.msra.mxu0 0
    %4595 = vmatpush.bf16.msra.mxu0 0
    %4596 = vmatpush.bf16.msra.mxu0 0
    %4597 = vmatpush.bf16.msra.mxu0 0
    %4598 = vmatpush.bf16.msra.mxu0 %v4590
    %4599 = vmatpush.bf16.msra.mxu0 %v4579
    %4600 = vmatmul.bf16.gmra.mxu0 %v4584
    %v4601 = vpop.f32.mrf.mxu0
    %v4602 = vadd.f32 0.0, %v4601
    %v4603 = vpop.f32.mrf.mxu0
    %v4604 = vadd.f32 0.0, %v4603
    %4605 = vmatmul.bf16.gmra.mxu0 %v4587
    %v4606 = vpop.f32.mrf.mxu0
    %v4607 = vadd.f32 0.0, %v4606
    %v4608 = vpop.f32.mrf.mxu0
    %4609 = vdwg.mxu0
    %4610 = vrot.lane.b32.xlu0 %v4128, 112
    %v4611 = vpop.permute.xlu0 %4610
    %4612 = vrot.lane.b32.xlu0 %v4129, 112
    %v4613 = vpop.permute.xlu0 %4612
    %4614 = vrot.lane.b32.xlu0 %v4128, 80
    %v4615 = vpop.permute.xlu0 %4614
    %4616 = vrot.lane.b32.xlu0 %v4129, 80
    %v4617 = vpop.permute.xlu0 %4616
    %v4619 = vsel %vm446, %v4611, 0
    %v4622 = vsel %vm446, %v4613, 0
    %v4625 = vsel %vm446, %v4615, 0
    %v4628 = vsel %vm446, %v4617, 0
    %4630 = vmatpush.bf16.xpose.msra.mxu0 0
    %4631 = vmatpush.bf16.xpose.msra.mxu0 0
    %4632 = vmatpush.bf16.xpose.msra.mxu0 0
    %4633 = vmatpush.bf16.xpose.msra.mxu0 0
    %4634 = vmatpush.bf16.xpose.msra.mxu0 0
    %4635 = vmatpush.bf16.xpose.msra.mxu0 0
    %4636 = vmatpush.bf16.xpose.msra.mxu0 %v4628
    %4637 = vmatpush.bf16.xpose.msra.mxu0 %v4625
    %4638 = vmatmul.bf16.gmra.mxu0 %v4619
    %v4639 = vpop.f32.mrf.mxu0
    %v4640 = vadd.f32 0.0, %v4639
    %v4641 = vpop.f32.mrf.mxu0
    %v4642 = vadd.f32 0.0, %v4641
    %4643 = vmatmul.bf16.gmra.mxu0 %v4622
    %v4644 = vpop.f32.mrf.mxu0
    %v4645 = vadd.f32 0.0, %v4644
    %v4646 = vpop.f32.mrf.mxu0
    %4647 = vdwg.mxu0
    %4648 = vrot.lane.b32.xlu0 %v4170, 112
    %v4649 = vpop.permute.xlu0 %4648
    %4650 = vrot.lane.b32.xlu0 %v4171, 112
    %v4651 = vpop.permute.xlu0 %4650
    %4652 = vrot.lane.b32.xlu0 %v4170, 80
    %v4653 = vpop.permute.xlu0 %4652
    %4654 = vrot.lane.b32.xlu0 %v4171, 80
    %v4655 = vpop.permute.xlu0 %4654
    %v4657 = vsel %vm446, %v4649, 0
    %v4660 = vsel %vm446, %v4651, 0
    %v4663 = vsel %vm446, %v4653, 0
    %v4666 = vsel %vm446, %v4655, 0
    %4668 = vmatpush.bf16.xpose.msra.mxu0 0
    %4669 = vmatpush.bf16.xpose.msra.mxu0 0
    %4670 = vmatpush.bf16.xpose.msra.mxu0 0
    %4671 = vmatpush.bf16.xpose.msra.mxu0 0
    %4672 = vmatpush.bf16.xpose.msra.mxu0 0
    %4673 = vmatpush.bf16.xpose.msra.mxu0 0
    %4674 = vmatpush.bf16.xpose.msra.mxu0 %v4666
    %4675 = vmatpush.bf16.xpose.msra.mxu0 %v4663
    %4676 = vmatmul.bf16.gmra.mxu0 %v4657
    %v4677 = vpop.f32.mrf.mxu0
    %v4678 = vadd.f32 0.0, %v4677
    %v4679 = vpop.f32.mrf.mxu0
    %v4680 = vadd.f32 0.0, %v4679
    %4681 = vmatmul.bf16.gmra.mxu0 %v4660
    %v4682 = vpop.f32.mrf.mxu0
    %v4683 = vadd.f32 0.0, %v4682
    %v4684 = vpop.f32.mrf.mxu0
    %4685 = vdwg.mxu0
    %v4686 = vmul.f32 %v4640, 0.35355338
    %v4687 = vmul.f32 %v4642, 0.35355338
    %v4688 = vmul.f32 %v4645, 0.35355338
    %v4689 = vmul.f32 %v4678, 0.35355338
    %v4690 = vmul.f32 %v4680, 0.35355338
    %v4691 = vmul.f32 %v4683, 0.35355338
    %v4692 = vadd.f32 %v4686, %v211
    %v4693 = vadd.f32 %v4687, %v211
    %v4694 = vadd.f32 %v4688, %v211
    %v4695 = vadd.f32 %v4689, %v211
    %v4696 = vadd.f32 %v4690, %v211
    %v4697 = vadd.f32 %v4691, %v211
    %v4698 = vsel %vm531, %v4692, -inf
    %4699 = vmax.xlane.f32.xlu0 %v4698
    %v4700 = vpop.xlane.xlu0 %4699
    %v4701 = vsel %vm531, %v4693, -inf
    %4702 = vmax.xlane.f32.xlu0 %v4701
    %v4703 = vpop.xlane.xlu0 %4702
    %v4704 = vsel %vm531, %v4694, -inf
    %4705 = vmax.xlane.f32.xlu0 %v4704
    %v4706 = vpop.xlane.xlu0 %4705
    %v4707 = vsel %vm531, %v4695, -inf
    %4708 = vmax.xlane.f32.xlu0 %v4707
    %v4709 = vpop.xlane.xlu0 %4708
    %v4710 = vsel %vm531, %v4696, -inf
    %4711 = vmax.xlane.f32.xlu0 %v4710
    %v4712 = vpop.xlane.xlu0 %4711
    %v4713 = vsel %vm531, %v4697, -inf
    %4714 = vmax.xlane.f32.xlu0 %v4713
    %v4715 = vpop.xlane.xlu0 %4714
    %v4716 = vsub.f32 %v4692, %v4700
    %v4717 = vsub.f32 %v4693, %v4703
    %v4718 = vsub.f32 %v4694, %v4706
    %v4719 = vsub.f32 %v4695, %v4709
    %v4720 = vsub.f32 %v4696, %v4712
    %v4721 = vsub.f32 %v4697, %v4715
    %v4722 = vmul.f32 %v4716, 1.442695
    %v4723 = vpow.pop %v4722
    %v4724 = vmul.f32 %v4717, 1.442695
    %v4725 = vpow.pop %v4724
    %v4726 = vmul.f32 %v4718, 1.442695
    %v4727 = vpow.pop %v4726
    %v4728 = vmul.f32 %v4719, 1.442695
    %v4729 = vpow.pop %v4728
    %v4730 = vmul.f32 %v4720, 1.442695
    %v4731 = vpow.pop %v4730
    %v4732 = vmul.f32 %v4721, 1.442695
    %v4733 = vpow.pop %v4732
    %v4734 = vsel %vm531, %v4723, 0.0
    %4735 = vadd.xlane.f32.xlu0 %v4734
    %v4736 = vpop.xlane.xlu0 %4735
    %v4737 = vsel %vm531, %v4725, 0.0
    %4738 = vadd.xlane.f32.xlu0 %v4737
    %v4739 = vpop.xlane.xlu0 %4738
    %v4740 = vsel %vm531, %v4727, 0.0
    %4741 = vadd.xlane.f32.xlu0 %v4740
    %v4742 = vpop.xlane.xlu0 %4741
    %v4743 = vsel %vm531, %v4729, 0.0
    %4744 = vadd.xlane.f32.xlu0 %v4743
    %v4745 = vpop.xlane.xlu0 %4744
    %v4746 = vsel %vm531, %v4731, 0.0
    %4747 = vadd.xlane.f32.xlu0 %v4746
    %v4748 = vpop.xlane.xlu0 %4747
    %v4749 = vsel %vm531, %v4733, 0.0
    %4750 = vadd.xlane.f32.xlu0 %v4749
    %v4751 = vpop.xlane.xlu0 %4750
    %v4752 = vrcp.pop %v4736
    %v4753 = vrcp.pop %v4739
    %v4754 = vrcp.pop %v4742
    %v4755 = vrcp.pop %v4745
    %v4756 = vrcp.pop %v4748
    %v4757 = vrcp.pop %v4751
    %v4758 = vmul.f32 %v4723, %v4752
    %v4759 = vmul.f32 %v4725, %v4753
    %v4760 = vmul.f32 %v4727, %v4754
    %v4761 = vmul.f32 %v4729, %v4755
    %v4762 = vmul.f32 %v4731, %v4756
    %v4763 = vmul.f32 %v4733, %v4757
    %v4764 = vpack.c.bf16 %v4758, %v4758
    %v4765 = vpack.c.bf16 %v4759, %v4759
    %v4766 = vpack.c.bf16 %v4760, %v4760
    %v4767 = vpack.c.bf16 %v4761, %v4761
    %v4768 = vpack.c.bf16 %v4762, %v4762
    %v4769 = vpack.c.bf16 %v4763, %v4763
    %v4773 = vunpack.c.l.b16 %v4764
    %v4774 = vunpack.c.l.b16 %v4765
    %v4775 = vunpack.c.l.b16 %v4766
    %v4776 = vpack.c.b16 %v4774, %v4773
    %v4777 = vpack.c.b16 %v4775, %v4775
    %4778 = vrot.lane.b32.xlu0 %v4128, 48
    %v4779 = vpop.permute.xlu0 %4778
    %4780 = vrot.lane.b32.xlu0 %v4129, 48
    %v4781 = vpop.permute.xlu0 %4780
    %v4784 = vsel %vm531, %v4776, 0
    %v4787 = vsel %vm531, %v4777, 0
    %v4790 = vsel %vm623, %v4781, 0
    %4792 = vmatpush.bf16.msra.mxu0 0
    %4793 = vmatpush.bf16.msra.mxu0 0
    %4794 = vmatpush.bf16.msra.mxu0 0
    %4795 = vmatpush.bf16.msra.mxu0 0
    %4796 = vmatpush.bf16.msra.mxu0 0
    %4797 = vmatpush.bf16.msra.mxu0 0
    %4798 = vmatpush.bf16.msra.mxu0 %v4790
    %4799 = vmatpush.bf16.msra.mxu0 %v4779
    %4800 = vmatmul.bf16.gmra.mxu0 %v4784
    %v4801 = vpop.f32.mrf.mxu0
    %v4802 = vadd.f32 0.0, %v4801
    %v4803 = vpop.f32.mrf.mxu0
    %v4804 = vadd.f32 0.0, %v4803
    %4805 = vmatmul.bf16.gmra.mxu0 %v4787
    %v4806 = vpop.f32.mrf.mxu0
    %v4807 = vadd.f32 0.0, %v4806
    %v4808 = vpop.f32.mrf.mxu0
    %4809 = vdwg.mxu0
    %v4813 = vunpack.c.l.b16 %v4767
    %v4814 = vunpack.c.l.b16 %v4768
    %v4815 = vunpack.c.l.b16 %v4769
    %v4816 = vpack.c.b16 %v4814, %v4813
    %v4817 = vpack.c.b16 %v4815, %v4815
    %4818 = vrot.lane.b32.xlu0 %v4170, 48
    %v4819 = vpop.permute.xlu0 %4818
    %4820 = vrot.lane.b32.xlu0 %v4171, 48
    %v4821 = vpop.permute.xlu0 %4820
    %v4824 = vsel %vm531, %v4816, 0
    %v4827 = vsel %vm531, %v4817, 0
    %v4830 = vsel %vm623, %v4821, 0
    %4832 = vmatpush.bf16.msra.mxu0 0
    %4833 = vmatpush.bf16.msra.mxu0 0
    %4834 = vmatpush.bf16.msra.mxu0 0
    %4835 = vmatpush.bf16.msra.mxu0 0
    %4836 = vmatpush.bf16.msra.mxu0 0
    %4837 = vmatpush.bf16.msra.mxu0 0
    %4838 = vmatpush.bf16.msra.mxu0 %v4830
    %4839 = vmatpush.bf16.msra.mxu0 %v4819
    %4840 = vmatmul.bf16.gmra.mxu0 %v4824
    %v4841 = vpop.f32.mrf.mxu0
    %v4842 = vadd.f32 0.0, %v4841
    %v4843 = vpop.f32.mrf.mxu0
    %v4844 = vadd.f32 0.0, %v4843
    %4845 = vmatmul.bf16.gmra.mxu0 %v4827
    %v4846 = vpop.f32.mrf.mxu0
    %v4847 = vadd.f32 0.0, %v4846
    %v4848 = vpop.f32.mrf.mxu0
    %4849 = vdwg.mxu0
    %4850 = vrot.lane.b32.xlu0 %v4128, 104
    %v4851 = vpop.permute.xlu0 %4850
    %4852 = vrot.lane.b32.xlu0 %v4129, 104
    %v4853 = vpop.permute.xlu0 %4852
    %4854 = vrot.lane.b32.xlu0 %v4128, 72
    %v4855 = vpop.permute.xlu0 %4854
    %4856 = vrot.lane.b32.xlu0 %v4129, 72
    %v4857 = vpop.permute.xlu0 %4856
    %v4859 = vsel %vm446, %v4851, 0
    %v4862 = vsel %vm446, %v4853, 0
    %v4865 = vsel %vm446, %v4855, 0
    %v4868 = vsel %vm446, %v4857, 0
    %4870 = vmatpush.bf16.xpose.msra.mxu0 0
    %4871 = vmatpush.bf16.xpose.msra.mxu0 0
    %4872 = vmatpush.bf16.xpose.msra.mxu0 0
    %4873 = vmatpush.bf16.xpose.msra.mxu0 0
    %4874 = vmatpush.bf16.xpose.msra.mxu0 0
    %4875 = vmatpush.bf16.xpose.msra.mxu0 0
    %4876 = vmatpush.bf16.xpose.msra.mxu0 %v4868
    %4877 = vmatpush.bf16.xpose.msra.mxu0 %v4865
    %4878 = vmatmul.bf16.gmra.mxu0 %v4859
    %v4879 = vpop.f32.mrf.mxu0
    %v4880 = vadd.f32 0.0, %v4879
    %v4881 = vpop.f32.mrf.mxu0
    %v4882 = vadd.f32 0.0, %v4881
    %4883 = vmatmul.bf16.gmra.mxu0 %v4862
    %v4884 = vpop.f32.mrf.mxu0
    %v4885 = vadd.f32 0.0, %v4884
    %v4886 = vpop.f32.mrf.mxu0
    %4887 = vdwg.mxu0
    %4888 = vrot.lane.b32.xlu0 %v4170, 104
    %v4889 = vpop.permute.xlu0 %4888
    %4890 = vrot.lane.b32.xlu0 %v4171, 104
    %v4891 = vpop.permute.xlu0 %4890
    %4892 = vrot.lane.b32.xlu0 %v4170, 72
    %v4893 = vpop.permute.xlu0 %4892
    %4894 = vrot.lane.b32.xlu0 %v4171, 72
    %v4895 = vpop.permute.xlu0 %4894
    %v4897 = vsel %vm446, %v4889, 0
    %v4900 = vsel %vm446, %v4891, 0
    %v4903 = vsel %vm446, %v4893, 0
    %v4906 = vsel %vm446, %v4895, 0
    %4908 = vmatpush.bf16.xpose.msra.mxu0 0
    %4909 = vmatpush.bf16.xpose.msra.mxu0 0
    %4910 = vmatpush.bf16.xpose.msra.mxu0 0
    %4911 = vmatpush.bf16.xpose.msra.mxu0 0
    %4912 = vmatpush.bf16.xpose.msra.mxu0 0
    %4913 = vmatpush.bf16.xpose.msra.mxu0 0
    %4914 = vmatpush.bf16.xpose.msra.mxu0 %v4906
    %4915 = vmatpush.bf16.xpose.msra.mxu0 %v4903
    %4916 = vmatmul.bf16.gmra.mxu0 %v4897
    %v4917 = vpop.f32.mrf.mxu0
    %v4918 = vadd.f32 0.0, %v4917
    %v4919 = vpop.f32.mrf.mxu0
    %v4920 = vadd.f32 0.0, %v4919
    %4921 = vmatmul.bf16.gmra.mxu0 %v4900
    %v4922 = vpop.f32.mrf.mxu0
    %v4923 = vadd.f32 0.0, %v4922
    %v4924 = vpop.f32.mrf.mxu0
    %4925 = vdwg.mxu0
    %v4926 = vmul.f32 %v4880, 0.35355338
    %v4927 = vmul.f32 %v4882, 0.35355338
    %v4928 = vmul.f32 %v4885, 0.35355338
    %v4929 = vmul.f32 %v4918, 0.35355338
    %v4930 = vmul.f32 %v4920, 0.35355338
    %v4931 = vmul.f32 %v4923, 0.35355338
    %v4932 = vadd.f32 %v4926, %v211
    %v4933 = vadd.f32 %v4927, %v211
    %v4934 = vadd.f32 %v4928, %v211
    %v4935 = vadd.f32 %v4929, %v211
    %v4936 = vadd.f32 %v4930, %v211
    %v4937 = vadd.f32 %v4931, %v211
    %v4938 = vsel %vm531, %v4932, -inf
    %4939 = vmax.xlane.f32.xlu0 %v4938
    %v4940 = vpop.xlane.xlu0 %4939
    %v4941 = vsel %vm531, %v4933, -inf
    %4942 = vmax.xlane.f32.xlu0 %v4941
    %v4943 = vpop.xlane.xlu0 %4942
    %v4944 = vsel %vm531, %v4934, -inf
    %4945 = vmax.xlane.f32.xlu0 %v4944
    %v4946 = vpop.xlane.xlu0 %4945
    %v4947 = vsel %vm531, %v4935, -inf
    %4948 = vmax.xlane.f32.xlu0 %v4947
    %v4949 = vpop.xlane.xlu0 %4948
    %v4950 = vsel %vm531, %v4936, -inf
    %4951 = vmax.xlane.f32.xlu0 %v4950
    %v4952 = vpop.xlane.xlu0 %4951
    %v4953 = vsel %vm531, %v4937, -inf
    %4954 = vmax.xlane.f32.xlu0 %v4953
    %v4955 = vpop.xlane.xlu0 %4954
    %v4956 = vsub.f32 %v4932, %v4940
    %v4957 = vsub.f32 %v4933, %v4943
    %v4958 = vsub.f32 %v4934, %v4946
    %v4959 = vsub.f32 %v4935, %v4949
    %v4960 = vsub.f32 %v4936, %v4952
    %v4961 = vsub.f32 %v4937, %v4955
    %v4962 = vmul.f32 %v4956, 1.442695
    %v4963 = vpow.pop %v4962
    %v4964 = vmul.f32 %v4957, 1.442695
    %v4965 = vpow.pop %v4964
    %v4966 = vmul.f32 %v4958, 1.442695
    %v4967 = vpow.pop %v4966
    %v4968 = vmul.f32 %v4959, 1.442695
    %v4969 = vpow.pop %v4968
    %v4970 = vmul.f32 %v4960, 1.442695
    %v4971 = vpow.pop %v4970
    %v4972 = vmul.f32 %v4961, 1.442695
    %v4973 = vpow.pop %v4972
    %v4974 = vsel %vm531, %v4963, 0.0
    %4975 = vadd.xlane.f32.xlu0 %v4974
    %v4976 = vpop.xlane.xlu0 %4975
    %v4977 = vsel %vm531, %v4965, 0.0
    %4978 = vadd.xlane.f32.xlu0 %v4977
    %v4979 = vpop.xlane.xlu0 %4978
    %v4980 = vsel %vm531, %v4967, 0.0
    %4981 = vadd.xlane.f32.xlu0 %v4980
    %v4982 = vpop.xlane.xlu0 %4981
    %v4983 = vsel %vm531, %v4969, 0.0
    %4984 = vadd.xlane.f32.xlu0 %v4983
    %v4985 = vpop.xlane.xlu0 %4984
    %v4986 = vsel %vm531, %v4971, 0.0
    %4987 = vadd.xlane.f32.xlu0 %v4986
    %v4988 = vpop.xlane.xlu0 %4987
    %v4989 = vsel %vm531, %v4973, 0.0
    %4990 = vadd.xlane.f32.xlu0 %v4989
    %v4991 = vpop.xlane.xlu0 %4990
    %v4992 = vrcp.pop %v4976
    %v4993 = vrcp.pop %v4979
    %v4994 = vrcp.pop %v4982
    %v4995 = vrcp.pop %v4985
    %v4996 = vrcp.pop %v4988
    %v4997 = vrcp.pop %v4991
    %v4998 = vmul.f32 %v4963, %v4992
    %v4999 = vmul.f32 %v4965, %v4993
    %v5000 = vmul.f32 %v4967, %v4994
    %v5001 = vmul.f32 %v4969, %v4995
    %v5002 = vmul.f32 %v4971, %v4996
    %v5003 = vmul.f32 %v4973, %v4997
    %v5004 = vpack.c.bf16 %v4998, %v4998
    %v5005 = vpack.c.bf16 %v4999, %v4999
    %v5006 = vpack.c.bf16 %v5000, %v5000
    %v5007 = vpack.c.bf16 %v5001, %v5001
    %v5008 = vpack.c.bf16 %v5002, %v5002
    %v5009 = vpack.c.bf16 %v5003, %v5003
    %v5013 = vunpack.c.l.b16 %v5004
    %v5014 = vunpack.c.l.b16 %v5005
    %v5015 = vunpack.c.l.b16 %v5006
    %v5016 = vpack.c.b16 %v5014, %v5013
    %v5017 = vpack.c.b16 %v5015, %v5015
    %5018 = vrot.lane.b32.xlu0 %v4128, 40
    %v5019 = vpop.permute.xlu0 %5018
    %5020 = vrot.lane.b32.xlu0 %v4129, 40
    %v5021 = vpop.permute.xlu0 %5020
    %v5024 = vsel %vm531, %v5016, 0
    %v5027 = vsel %vm531, %v5017, 0
    %v5030 = vsel %vm623, %v5021, 0
    %5032 = vmatpush.bf16.msra.mxu0 0
    %5033 = vmatpush.bf16.msra.mxu0 0
    %5034 = vmatpush.bf16.msra.mxu0 0
    %5035 = vmatpush.bf16.msra.mxu0 0
    %5036 = vmatpush.bf16.msra.mxu0 0
    %5037 = vmatpush.bf16.msra.mxu0 0
    %5038 = vmatpush.bf16.msra.mxu0 %v5030
    %5039 = vmatpush.bf16.msra.mxu0 %v5019
    %5040 = vmatmul.bf16.gmra.mxu0 %v5024
    %v5041 = vpop.f32.mrf.mxu0
    %v5042 = vadd.f32 0.0, %v5041
    %v5043 = vpop.f32.mrf.mxu0
    %v5044 = vadd.f32 0.0, %v5043
    %5045 = vmatmul.bf16.gmra.mxu0 %v5027
    %v5046 = vpop.f32.mrf.mxu0
    %v5047 = vadd.f32 0.0, %v5046
    %v5048 = vpop.f32.mrf.mxu0
    %5049 = vdwg.mxu0
    %v5053 = vunpack.c.l.b16 %v5007
    %v5054 = vunpack.c.l.b16 %v5008
    %v5055 = vunpack.c.l.b16 %v5009
    %v5056 = vpack.c.b16 %v5054, %v5053
    %v5057 = vpack.c.b16 %v5055, %v5055
    %5058 = vrot.lane.b32.xlu0 %v4170, 40
    %v5059 = vpop.permute.xlu0 %5058
    %5060 = vrot.lane.b32.xlu0 %v4171, 40
    %v5061 = vpop.permute.xlu0 %5060
    %v5064 = vsel %vm531, %v5056, 0
    %v5067 = vsel %vm531, %v5057, 0
    %v5070 = vsel %vm623, %v5061, 0
    %5072 = vmatpush.bf16.msra.mxu0 0
    %5073 = vmatpush.bf16.msra.mxu0 0
    %5074 = vmatpush.bf16.msra.mxu0 0
    %5075 = vmatpush.bf16.msra.mxu0 0
    %5076 = vmatpush.bf16.msra.mxu0 0
    %5077 = vmatpush.bf16.msra.mxu0 0
    %5078 = vmatpush.bf16.msra.mxu0 %v5070
    %5079 = vmatpush.bf16.msra.mxu0 %v5059
    %5080 = vmatmul.bf16.gmra.mxu0 %v5064
    %v5081 = vpop.f32.mrf.mxu0
    %v5082 = vadd.f32 0.0, %v5081
    %v5083 = vpop.f32.mrf.mxu0
    %v5084 = vadd.f32 0.0, %v5083
    %5085 = vmatmul.bf16.gmra.mxu0 %v5067
    %v5086 = vpop.f32.mrf.mxu0
    %v5087 = vadd.f32 0.0, %v5086
    %v5088 = vpop.f32.mrf.mxu0
    %5089 = vdwg.mxu0
    %5096 = vrot.lane.b32.xlu0 %v4562, 8
    %v5097 = vpop.permute.xlu0 %5096
    %5098 = vrot.lane.b32.xlu0 %v4564, 8
    %v5099 = vpop.permute.xlu0 %5098
    %5100 = vrot.lane.b32.xlu0 %v4567, 8
    %v5101 = vpop.permute.xlu0 %5100
    %5102 = vrot.lane.b32.xlu0 %v4602, 8
    %v5103 = vpop.permute.xlu0 %5102
    %5104 = vrot.lane.b32.xlu0 %v4604, 8
    %v5105 = vpop.permute.xlu0 %5104
    %5106 = vrot.lane.b32.xlu0 %v4607, 8
    %v5107 = vpop.permute.xlu0 %5106
    %5120 = vrot.lane.b32.xlu0 %v4802, 16
    %v5121 = vpop.permute.xlu0 %5120
    %5122 = vrot.lane.b32.xlu0 %v4804, 16
    %v5123 = vpop.permute.xlu0 %5122
    %5124 = vrot.lane.b32.xlu0 %v4807, 16
    %v5125 = vpop.permute.xlu0 %5124
    %5126 = vrot.lane.b32.xlu0 %v4842, 16
    %v5127 = vpop.permute.xlu0 %5126
    %5128 = vrot.lane.b32.xlu0 %v4844, 16
    %v5129 = vpop.permute.xlu0 %5128
    %5130 = vrot.lane.b32.xlu0 %v4847, 16
    %v5131 = vpop.permute.xlu0 %5130
    %5144 = vrot.lane.b32.xlu0 %v5042, 24
    %v5145 = vpop.permute.xlu0 %5144
    %5146 = vrot.lane.b32.xlu0 %v5044, 24
    %v5147 = vpop.permute.xlu0 %5146
    %5148 = vrot.lane.b32.xlu0 %v5047, 24
    %v5149 = vpop.permute.xlu0 %5148
    %5150 = vrot.lane.b32.xlu0 %v5082, 24
    %v5151 = vpop.permute.xlu0 %5150
    %5152 = vrot.lane.b32.xlu0 %v5084, 24
    %v5153 = vpop.permute.xlu0 %5152
    %5154 = vrot.lane.b32.xlu0 %v5087, 24
    %v5155 = vpop.permute.xlu0 %5154
    %v5162 = vsel %vm446, %v4322, %v5097
    %v5163 = vsel %vm446, %v4324, %v5099
    %v5164 = vsel %vm446, %v4327, %v5101
    %v5165 = vsel %vm446, %v4362, %v5103
    %v5166 = vsel %vm446, %v4364, %v5105
    %v5167 = vsel %vm446, %v4367, %v5107
    %v5168 = vsel %vm1483, %v5162, %v5121
    %v5169 = vsel %vm1483, %v5163, %v5123
    %v5170 = vsel %vm1483, %v5164, %v5125
    %v5171 = vsel %vm1483, %v5165, %v5127
    %v5172 = vsel %vm1483, %v5166, %v5129
    %v5173 = vsel %vm1483, %v5167, %v5131
    %v5174 = vsel %vm531, %v5168, %v5145
    %v5175 = vsel %vm531, %v5169, %v5147
    %v5176 = vsel %vm531, %v5170, %v5149
    %v5177 = vsel %vm531, %v5171, %v5151
    %v5178 = vsel %vm531, %v5172, %v5153
    %v5179 = vsel %vm531, %v5173, %v5155
    %v5180 = vpack.c.bf16 %v5175, %v5174
    %v5181 = vpack.c.bf16 %v5177, %v5176
    %v5182 = vpack.c.bf16 %v5179, %v5178
    %v5183 = vld [vmem:[%s39] sm:$0xf]
    %v5184 = vld [vmem:[%s39 + $0x4] sm:$0xf]
    %v5185 = vld [vmem:[%s39 + $0x8] sm:$0xf]
    %v5186 = vld [vmem:[%s39 + $0xc] sm:$0xf]
    %v5191 = vunpack.c.l.b16 %v5183
    %v5192 = vunpack.c.l.b16 %v5184
    %v5193 = vunpack.c.l.b16 %v5185
    %v5194 = vunpack.c.l.b16 %v5186
    %v5195 = vpack.c.b16 %v5192, %v5191
    %v5196 = vpack.c.b16 %v5194, %v5193
    %v5200 = vsel %vm214, %v5180, 0
    %v5203 = vsel %vm214, %v5181, 0
    %v5206 = vsel %vm214, %v5182, 0
    %5208 = vmatpush.bf16.msra.mxu0 0
    %5209 = vmatpush.bf16.msra.mxu0 0
    %5210 = vmatpush.bf16.msra.mxu0 0
    %5211 = vmatpush.bf16.msra.mxu0 0
    %5212 = vmatpush.bf16.msra.mxu0 0
    %5213 = vmatpush.bf16.msra.mxu0 0
    %5214 = vmatpush.bf16.msra.mxu0 %v5196
    %5215 = vmatpush.bf16.msra.mxu0 %v5195
    %5216 = vmatmul.bf16.gmra.mxu0 %v5200
    %v5217 = vpop.f32.mrf.mxu0
    %v5218 = vadd.f32 0.0, %v5217
    %v5219 = vpop.f32.mrf.mxu0
    %v5220 = vadd.f32 0.0, %v5219
    %5221 = vmatmul.bf16.gmra.mxu0 %v5203
    %v5222 = vpop.f32.mrf.mxu0
    %v5223 = vadd.f32 0.0, %v5222
    %v5224 = vpop.f32.mrf.mxu0
    %v5225 = vadd.f32 0.0, %v5224
    %5226 = vmatmul.bf16.gmra.mxu0 %v5206
    %v5227 = vpop.f32.mrf.mxu0
    %v5228 = vadd.f32 0.0, %v5227
    %v5229 = vpop.f32.mrf.mxu0
    %v5230 = vadd.f32 0.0, %v5229
    %5231 = vdwg.mxu0
    %v5232 = vadd.f32 %v3902, %v5218
    %v5233 = vadd.f32 %v3903, %v5220
    %v5234 = vadd.f32 %v3904, %v5223
    %v5235 = vadd.f32 %v3905, %v5225
    %v5236 = vadd.f32 %v3906, %v5228
    %v5237 = vadd.f32 %v3907, %v5230
    %v5238 = vld [vmem:[%s41] sm:$0x1]
    %v5240 = vperm.slane %v5238, 0
    %v5242 = vadd.f32 %v5232, %v5240
    %v5243 = vadd.f32 %v5233, %v5240
    %v5244 = vadd.f32 %v5234, %v5240
    %v5245 = vadd.f32 %v5235, %v5240
    %v5246 = vadd.f32 %v5236, %v5240
    %v5247 = vadd.f32 %v5237, %v5240
    %v5248 = vld [vmem:[%s43] sm:$0x1]
    %v5249 = vld [vmem:[%s45] sm:$0x1]
    %v5250 = vsel %vm214, %v5242, 0.0
    %5251 = vadd.xlane.f32.xlu0 %v5250
    %v5252 = vpop.xlane.xlu0 %5251
    %v5253 = vsel %vm214, %v5243, 0.0
    %5254 = vadd.xlane.f32.xlu0 %v5253
    %v5255 = vpop.xlane.xlu0 %5254
    %v5256 = vsel %vm214, %v5244, 0.0
    %5257 = vadd.xlane.f32.xlu0 %v5256
    %v5258 = vpop.xlane.xlu0 %5257
    %v5259 = vsel %vm214, %v5245, 0.0
    %5260 = vadd.xlane.f32.xlu0 %v5259
    %v5261 = vpop.xlane.xlu0 %5260
    %v5262 = vsel %vm214, %v5246, 0.0
    %5263 = vadd.xlane.f32.xlu0 %v5262
    %v5264 = vpop.xlane.xlu0 %5263
    %v5265 = vsel %vm214, %v5247, 0.0
    %5266 = vadd.xlane.f32.xlu0 %v5265
    %v5267 = vpop.xlane.xlu0 %5266
    %v5268 = vmul.f32 %v5252, %v239
    %v5269 = vmul.f32 %v5255, %v239
    %v5270 = vmul.f32 %v5258, %v239
    %v5271 = vmul.f32 %v5261, %v239
    %v5272 = vmul.f32 %v5264, %v239
    %v5273 = vmul.f32 %v5267, %v239
    %v5274 = vsub.f32 %v5242, %v5268
    %v5275 = vsub.f32 %v5243, %v5269
    %v5276 = vsub.f32 %v5244, %v5270
    %v5277 = vsub.f32 %v5245, %v5271
    %v5278 = vsub.f32 %v5246, %v5272
    %v5279 = vsub.f32 %v5247, %v5273
    %v5280 = vmul.f32 %v5274, %v5274
    %v5281 = vmul.f32 %v5275, %v5275
    %v5282 = vmul.f32 %v5276, %v5276
    %v5283 = vmul.f32 %v5277, %v5277
    %v5284 = vmul.f32 %v5278, %v5278
    %v5285 = vmul.f32 %v5279, %v5279
    %v5286 = vsel %vm214, %v5280, 0.0
    %5287 = vadd.xlane.f32.xlu0 %v5286
    %v5288 = vpop.xlane.xlu0 %5287
    %v5289 = vsel %vm214, %v5281, 0.0
    %5290 = vadd.xlane.f32.xlu0 %v5289
    %v5291 = vpop.xlane.xlu0 %5290
    %v5292 = vsel %vm214, %v5282, 0.0
    %5293 = vadd.xlane.f32.xlu0 %v5292
    %v5294 = vpop.xlane.xlu0 %5293
    %v5295 = vsel %vm214, %v5283, 0.0
    %5296 = vadd.xlane.f32.xlu0 %v5295
    %v5297 = vpop.xlane.xlu0 %5296
    %v5298 = vsel %vm214, %v5284, 0.0
    %5299 = vadd.xlane.f32.xlu0 %v5298
    %v5300 = vpop.xlane.xlu0 %5299
    %v5301 = vsel %vm214, %v5285, 0.0
    %5302 = vadd.xlane.f32.xlu0 %v5301
    %v5303 = vpop.xlane.xlu0 %5302
    %v5304 = vmul.f32 %v5288, %v239
    %v5305 = vmul.f32 %v5291, %v239
    %v5306 = vmul.f32 %v5294, %v239
    %v5307 = vmul.f32 %v5297, %v239
    %v5308 = vmul.f32 %v5300, %v239
    %v5309 = vmul.f32 %v5303, %v239
    %v5310 = vadd.f32 %v5304, 1e-05
    %v5311 = vadd.f32 %v5305, 1e-05
    %v5312 = vadd.f32 %v5306, 1e-05
    %v5313 = vadd.f32 %v5307, 1e-05
    %v5314 = vadd.f32 %v5308, 1e-05
    %v5315 = vadd.f32 %v5309, 1e-05
    %v5316 = vrsqrt.pop %v5310
    %v5317 = vmul.f32 %v5316, %v5310
    %v5318 = vmul.f32 %v5317, %v5316
    %v5319 = vmul.f32 0.5, %v5318
    %v5320 = vsub.f32 1.5, %v5319
    %v5321 = vmul.f32 %v5316, %v5320
    %vm5322 = vweird.f32 %v5310
    %vm5323 = vweird.f32 %v5316
    %vm5324 = vmor %vm5322, %vm5323
    %v5325 = vsel %vm5324, %v5316, %v5321
    %v5326 = vrsqrt.pop %v5311
    %v5327 = vmul.f32 %v5326, %v5311
    %v5328 = vmul.f32 %v5327, %v5326
    %v5329 = vmul.f32 0.5, %v5328
    %v5330 = vsub.f32 1.5, %v5329
    %v5331 = vmul.f32 %v5326, %v5330
    %vm5332 = vweird.f32 %v5311
    %vm5333 = vweird.f32 %v5326
    %vm5334 = vmor %vm5332, %vm5333
    %v5335 = vsel %vm5334, %v5326, %v5331
    %v5336 = vrsqrt.pop %v5312
    %v5337 = vmul.f32 %v5336, %v5312
    %v5338 = vmul.f32 %v5337, %v5336
    %v5339 = vmul.f32 0.5, %v5338
    %v5340 = vsub.f32 1.5, %v5339
    %v5341 = vmul.f32 %v5336, %v5340
    %vm5342 = vweird.f32 %v5312
    %vm5343 = vweird.f32 %v5336
    %vm5344 = vmor %vm5342, %vm5343
    %v5345 = vsel %vm5344, %v5336, %v5341
    %v5346 = vrsqrt.pop %v5313
    %v5347 = vmul.f32 %v5346, %v5313
    %v5348 = vmul.f32 %v5347, %v5346
    %v5349 = vmul.f32 0.5, %v5348
    %v5350 = vsub.f32 1.5, %v5349
    %v5351 = vmul.f32 %v5346, %v5350
    %vm5352 = vweird.f32 %v5313
    %vm5353 = vweird.f32 %v5346
    %vm5354 = vmor %vm5352, %vm5353
    %v5355 = vsel %vm5354, %v5346, %v5351
    %v5356 = vrsqrt.pop %v5314
    %v5357 = vmul.f32 %v5356, %v5314
    %v5358 = vmul.f32 %v5357, %v5356
    %v5359 = vmul.f32 0.5, %v5358
    %v5360 = vsub.f32 1.5, %v5359
    %v5361 = vmul.f32 %v5356, %v5360
    %vm5362 = vweird.f32 %v5314
    %vm5363 = vweird.f32 %v5356
    %vm5364 = vmor %vm5362, %vm5363
    %v5365 = vsel %vm5364, %v5356, %v5361
    %v5366 = vrsqrt.pop %v5315
    %v5367 = vmul.f32 %v5366, %v5315
    %v5368 = vmul.f32 %v5367, %v5366
    %v5369 = vmul.f32 0.5, %v5368
    %v5370 = vsub.f32 1.5, %v5369
    %v5371 = vmul.f32 %v5366, %v5370
    %vm5372 = vweird.f32 %v5315
    %vm5373 = vweird.f32 %v5366
    %vm5374 = vmor %vm5372, %vm5373
    %v5375 = vsel %vm5374, %v5366, %v5371
    %v5376 = vmul.f32 %v5274, %v5325
    %v5377 = vmul.f32 %v5275, %v5335
    %v5378 = vmul.f32 %v5276, %v5345
    %v5379 = vmul.f32 %v5277, %v5355
    %v5380 = vmul.f32 %v5278, %v5365
    %v5381 = vmul.f32 %v5279, %v5375
    %v5383 = vperm.slane %v5248, 0
    %v5385 = vmul.f32 %v5376, %v5383
    %v5386 = vmul.f32 %v5377, %v5383
    %v5387 = vmul.f32 %v5378, %v5383
    %v5388 = vmul.f32 %v5379, %v5383
    %v5389 = vmul.f32 %v5380, %v5383
    %v5390 = vmul.f32 %v5381, %v5383
    %v5392 = vperm.slane %v5249, 0
    %v5394 = vadd.f32 %v5385, %v5392
    %v5395 = vadd.f32 %v5386, %v5392
    %v5396 = vadd.f32 %v5387, %v5392
    %v5397 = vadd.f32 %v5388, %v5392
    %v5398 = vadd.f32 %v5389, %v5392
    %v5399 = vadd.f32 %v5390, %v5392
    %v5400 = vpack.c.bf16 %v5395, %v5394
    %v5401 = vpack.c.bf16 %v5397, %v5396
    %v5402 = vpack.c.bf16 %v5399, %v5398
    %v5403 = vld [vmem:[%s47] sm:$0xff]
    %v5404 = vld [vmem:[%s47 + $0x8] sm:$0xff]
    %v5405 = vld [vmem:[%s47 + $0x10] sm:$0xff]
    %v5406 = vld [vmem:[%s47 + $0x18] sm:$0xff]
    %v5407 = vld [vmem:[%s47 + $0x20] sm:$0xff]
    %v5408 = vld [vmem:[%s47 + $0x28] sm:$0xff]
    %v5409 = vld [vmem:[%s47 + $0x30] sm:$0xff]
    %v5410 = vld [vmem:[%s47 + $0x38] sm:$0xff]
    %v5411 = vld [vmem:[%s47 + $0x40] sm:$0xff]
    %v5412 = vld [vmem:[%s47 + $0x48] sm:$0xff]
    %v5413 = vld [vmem:[%s47 + $0x50] sm:$0xff]
    %v5414 = vld [vmem:[%s47 + $0x58] sm:$0xff]
    %v5415 = vld [vmem:[%s47 + $0x60] sm:$0xff]
    %v5416 = vld [vmem:[%s47 + $0x68] sm:$0xff]
    %v5417 = vld [vmem:[%s47 + $0x70] sm:$0xff]
    %v5418 = vld [vmem:[%s47 + $0x78] sm:$0xff]
    %v5419 = vld [vmem:[%s47 + $0x80] sm:$0xff]
    %v5420 = vld [vmem:[%s47 + $0x88] sm:$0xff]
    %v5421 = vld [vmem:[%s47 + $0x90] sm:$0xff]
    %v5422 = vld [vmem:[%s47 + $0x98] sm:$0xff]
    %v5423 = vld [vmem:[%s47 + $0xa0] sm:$0xff]
    %v5424 = vld [vmem:[%s47 + $0xa8] sm:$0xff]
    %v5425 = vld [vmem:[%s47 + $0xb0] sm:$0xff]
    %v5426 = vld [vmem:[%s47 + $0xb8] sm:$0xff]
    %v5427 = vld [vmem:[%s47 + $0xc0] sm:$0xff]
    %v5428 = vld [vmem:[%s47 + $0xc8] sm:$0xff]
    %v5429 = vld [vmem:[%s47 + $0xd0] sm:$0xff]
    %v5430 = vld [vmem:[%s47 + $0xd8] sm:$0xff]
    %v5431 = vld [vmem:[%s47 + $0xe0] sm:$0xff]
    %v5432 = vld [vmem:[%s47 + $0xe8] sm:$0xff]
    %v5433 = vld [vmem:[%s47 + $0xf0] sm:$0xff]
    %v5434 = vld [vmem:[%s47 + $0xf8] sm:$0xff]
    %v5435 = vld [vmem:[%s49] sm:$0xff]
    %v5436 = vld [vmem:[%s49 + $0x8] sm:$0xff]
    %v5439 = vperm.slane %v5435, 0
    %v5440 = vperm.slane %v5435, 1
    %v5441 = vperm.slane %v5435, 2
    %v5442 = vperm.slane %v5435, 3
    %v5443 = vperm.slane %v5435, 4
    %v5444 = vperm.slane %v5435, 5
    %v5445 = vperm.slane %v5435, 6
    %v5446 = vperm.slane %v5435, 7
    %v5447 = vperm.slane %v5436, 0
    %v5448 = vperm.slane %v5436, 1
    %v5449 = vperm.slane %v5436, 2
    %v5450 = vperm.slane %v5436, 3
    %v5451 = vperm.slane %v5436, 4
    %v5452 = vperm.slane %v5436, 5
    %v5453 = vperm.slane %v5436, 6
    %v5454 = vperm.slane %v5436, 7
    %v5503 = vunpack.c.l.b16 %v5403
    %v5504 = vunpack.c.h.b16 %v5403
    %v5505 = vunpack.c.l.b16 %v5404
    %v5506 = vunpack.c.h.b16 %v5404
    %v5507 = vunpack.c.l.b16 %v5405
    %v5508 = vunpack.c.h.b16 %v5405
    %v5509 = vunpack.c.l.b16 %v5406
    %v5510 = vunpack.c.h.b16 %v5406
    %v5511 = vunpack.c.l.b16 %v5407
    %v5512 = vunpack.c.h.b16 %v5407
    %v5513 = vunpack.c.l.b16 %v5408
    %v5514 = vunpack.c.h.b16 %v5408
    %v5515 = vunpack.c.l.b16 %v5409
    %v5516 = vunpack.c.h.b16 %v5409
    %v5517 = vunpack.c.l.b16 %v5410
    %v5518 = vunpack.c.h.b16 %v5410
    %v5519 = vunpack.c.l.b16 %v5411
    %v5520 = vunpack.c.h.b16 %v5411
    %v5521 = vunpack.c.l.b16 %v5412
    %v5522 = vunpack.c.h.b16 %v5412
    %v5523 = vunpack.c.l.b16 %v5413
    %v5524 = vunpack.c.h.b16 %v5413
    %v5525 = vunpack.c.l.b16 %v5414
    %v5526 = vunpack.c.h.b16 %v5414
    %v5527 = vunpack.c.l.b16 %v5415
    %v5528 = vunpack.c.h.b16 %v5415
    %v5529 = vunpack.c.l.b16 %v5416
    %v5530 = vunpack.c.h.b16 %v5416
    %v5531 = vunpack.c.l.b16 %v5417
    %v5532 = vunpack.c.h.b16 %v5417
    %v5533 = vunpack.c.l.b16 %v5418
    %v5534 = vunpack.c.h.b16 %v5418
    %v5535 = vunpack.c.l.b16 %v5419
    %v5536 = vunpack.c.h.b16 %v5419
    %v5537 = vunpack.c.l.b16 %v5420
    %v5538 = vunpack.c.h.b16 %v5420
    %v5539 = vunpack.c.l.b16 %v5421
    %v5540 = vunpack.c.h.b16 %v5421
    %v5541 = vunpack.c.l.b16 %v5422
    %v5542 = vunpack.c.h.b16 %v5422
    %v5543 = vunpack.c.l.b16 %v5423
    %v5544 = vunpack.c.h.b16 %v5423
    %v5545 = vunpack.c.l.b16 %v5424
    %v5546 = vunpack.c.h.b16 %v5424
    %v5547 = vunpack.c.l.b16 %v5425
    %v5548 = vunpack.c.h.b16 %v5425
    %v5549 = vunpack.c.l.b16 %v5426
    %v5550 = vunpack.c.h.b16 %v5426
    %v5551 = vunpack.c.l.b16 %v5427
    %v5552 = vunpack.c.h.b16 %v5427
    %v5553 = vunpack.c.l.b16 %v5428
    %v5554 = vunpack.c.h.b16 %v5428
    %v5555 = vunpack.c.l.b16 %v5429
    %v5556 = vunpack.c.h.b16 %v5429
    %v5557 = vunpack.c.l.b16 %v5430
    %v5558 = vunpack.c.h.b16 %v5430
    %v5559 = vunpack.c.l.b16 %v5431
    %v5560 = vunpack.c.h.b16 %v5431
    %v5561 = vunpack.c.l.b16 %v5432
    %v5562 = vunpack.c.h.b16 %v5432
    %v5563 = vunpack.c.l.b16 %v5433
    %v5564 = vunpack.c.h.b16 %v5433
    %v5565 = vunpack.c.l.b16 %v5434
    %v5566 = vunpack.c.h.b16 %v5434
    %v5567 = vpack.c.b16 %v5519, %v5503
    %v5568 = vpack.c.b16 %v5520, %v5504
    %v5569 = vpack.c.b16 %v5521, %v5505
    %v5570 = vpack.c.b16 %v5522, %v5506
    %v5571 = vpack.c.b16 %v5523, %v5507
    %v5572 = vpack.c.b16 %v5524, %v5508
    %v5573 = vpack.c.b16 %v5525, %v5509
    %v5574 = vpack.c.b16 %v5526, %v5510
    %v5575 = vpack.c.b16 %v5527, %v5511
    %v5576 = vpack.c.b16 %v5528, %v5512
    %v5577 = vpack.c.b16 %v5529, %v5513
    %v5578 = vpack.c.b16 %v5530, %v5514
    %v5579 = vpack.c.b16 %v5531, %v5515
    %v5580 = vpack.c.b16 %v5532, %v5516
    %v5581 = vpack.c.b16 %v5533, %v5517
    %v5582 = vpack.c.b16 %v5534, %v5518
    %v5583 = vpack.c.b16 %v5551, %v5535
    %v5584 = vpack.c.b16 %v5552, %v5536
    %v5585 = vpack.c.b16 %v5553, %v5537
    %v5586 = vpack.c.b16 %v5554, %v5538
    %v5587 = vpack.c.b16 %v5555, %v5539
    %v5588 = vpack.c.b16 %v5556, %v5540
    %v5589 = vpack.c.b16 %v5557, %v5541
    %v5590 = vpack.c.b16 %v5558, %v5542
    %v5591 = vpack.c.b16 %v5559, %v5543
    %v5592 = vpack.c.b16 %v5560, %v5544
    %v5593 = vpack.c.b16 %v5561, %v5545
    %v5594 = vpack.c.b16 %v5562, %v5546
    %v5595 = vpack.c.b16 %v5563, %v5547
    %v5596 = vpack.c.b16 %v5564, %v5548
    %v5597 = vpack.c.b16 %v5565, %v5549
    %v5598 = vpack.c.b16 %v5566, %v5550
    %v5632 = vsel %vm214, %v5400, 0
    %v5635 = vsel %vm214, %v5401, 0
    %v5638 = vsel %vm214, %v5402, 0
    %5640 = vmatpush.bf16.msra.mxu0 0
    %5641 = vmatpush.bf16.msra.mxu0 0
    %5642 = vmatpush.bf16.msra.mxu0 0
    %5643 = vmatpush.bf16.msra.mxu0 0
    %5644 = vmatpush.bf16.msra.mxu0 0
    %5645 = vmatpush.bf16.msra.mxu0 0
    %5646 = vmatpush.bf16.msra.mxu0 %v5583
    %5647 = vmatpush.bf16.msra.mxu0 %v5567
    %5648 = vmatmul.bf16.gmra.mxu0 %v5632
    %v5649 = vpop.f32.mrf.mxu0
    %v5650 = vadd.f32 %v5439, %v5649
    %v5651 = vpop.f32.mrf.mxu0
    %v5652 = vadd.f32 %v5439, %v5651
    %5653 = vmatmul.bf16.gmra.mxu0 %v5635
    %v5654 = vpop.f32.mrf.mxu0
    %v5655 = vadd.f32 %v5439, %v5654
    %v5656 = vpop.f32.mrf.mxu0
    %v5657 = vadd.f32 %v5439, %v5656
    %5658 = vmatmul.bf16.gmra.mxu0 %v5638
    %v5659 = vpop.f32.mrf.mxu0
    %v5660 = vadd.f32 %v5439, %v5659
    %v5661 = vpop.f32.mrf.mxu0
    %v5662 = vadd.f32 %v5439, %v5661
    %5663 = vdwg.mxu0
    %5664 = vmatpush.bf16.msra.mxu0 0
    %5665 = vmatpush.bf16.msra.mxu0 0
    %5666 = vmatpush.bf16.msra.mxu0 0
    %5667 = vmatpush.bf16.msra.mxu0 0
    %5668 = vmatpush.bf16.msra.mxu0 0
    %5669 = vmatpush.bf16.msra.mxu0 0
    %5670 = vmatpush.bf16.msra.mxu0 %v5584
    %5671 = vmatpush.bf16.msra.mxu0 %v5568
    %5672 = vmatmul.bf16.gmra.mxu0 %v5632
    %v5673 = vpop.f32.mrf.mxu0
    %v5674 = vadd.f32 %v5440, %v5673
    %v5675 = vpop.f32.mrf.mxu0
    %v5676 = vadd.f32 %v5440, %v5675
    %5677 = vmatmul.bf16.gmra.mxu0 %v5635
    %v5678 = vpop.f32.mrf.mxu0
    %v5679 = vadd.f32 %v5440, %v5678
    %v5680 = vpop.f32.mrf.mxu0
    %v5681 = vadd.f32 %v5440, %v5680
    %5682 = vmatmul.bf16.gmra.mxu0 %v5638
    %v5683 = vpop.f32.mrf.mxu0
    %v5684 = vadd.f32 %v5440, %v5683
    %v5685 = vpop.f32.mrf.mxu0
    %v5686 = vadd.f32 %v5440, %v5685
    %5687 = vdwg.mxu0
    %5688 = vmatpush.bf16.msra.mxu0 0
    %5689 = vmatpush.bf16.msra.mxu0 0
    %5690 = vmatpush.bf16.msra.mxu0 0
    %5691 = vmatpush.bf16.msra.mxu0 0
    %5692 = vmatpush.bf16.msra.mxu0 0
    %5693 = vmatpush.bf16.msra.mxu0 0
    %5694 = vmatpush.bf16.msra.mxu0 %v5585
    %5695 = vmatpush.bf16.msra.mxu0 %v5569
    %5696 = vmatmul.bf16.gmra.mxu0 %v5632
    %v5697 = vpop.f32.mrf.mxu0
    %v5698 = vadd.f32 %v5441, %v5697
    %v5699 = vpop.f32.mrf.mxu0
    %v5700 = vadd.f32 %v5441, %v5699
    %5701 = vmatmul.bf16.gmra.mxu0 %v5635
    %v5702 = vpop.f32.mrf.mxu0
    %v5703 = vadd.f32 %v5441, %v5702
    %v5704 = vpop.f32.mrf.mxu0
    %v5705 = vadd.f32 %v5441, %v5704
    %5706 = vmatmul.bf16.gmra.mxu0 %v5638
    %v5707 = vpop.f32.mrf.mxu0
    %v5708 = vadd.f32 %v5441, %v5707
    %v5709 = vpop.f32.mrf.mxu0
    %v5710 = vadd.f32 %v5441, %v5709
    %5711 = vdwg.mxu0
    %5712 = vmatpush.bf16.msra.mxu0 0
    %5713 = vmatpush.bf16.msra.mxu0 0
    %5714 = vmatpush.bf16.msra.mxu0 0
    %5715 = vmatpush.bf16.msra.mxu0 0
    %5716 = vmatpush.bf16.msra.mxu0 0
    %5717 = vmatpush.bf16.msra.mxu0 0
    %5718 = vmatpush.bf16.msra.mxu0 %v5586
    %5719 = vmatpush.bf16.msra.mxu0 %v5570
    %5720 = vmatmul.bf16.gmra.mxu0 %v5632
    %v5721 = vpop.f32.mrf.mxu0
    %v5722 = vadd.f32 %v5442, %v5721
    %v5723 = vpop.f32.mrf.mxu0
    %v5724 = vadd.f32 %v5442, %v5723
    %5725 = vmatmul.bf16.gmra.mxu0 %v5635
    %v5726 = vpop.f32.mrf.mxu0
    %v5727 = vadd.f32 %v5442, %v5726
    %v5728 = vpop.f32.mrf.mxu0
    %v5729 = vadd.f32 %v5442, %v5728
    %5730 = vmatmul.bf16.gmra.mxu0 %v5638
    %v5731 = vpop.f32.mrf.mxu0
    %v5732 = vadd.f32 %v5442, %v5731
    %v5733 = vpop.f32.mrf.mxu0
    %v5734 = vadd.f32 %v5442, %v5733
    %5735 = vdwg.mxu0
    %5736 = vmatpush.bf16.msra.mxu0 0
    %5737 = vmatpush.bf16.msra.mxu0 0
    %5738 = vmatpush.bf16.msra.mxu0 0
    %5739 = vmatpush.bf16.msra.mxu0 0
    %5740 = vmatpush.bf16.msra.mxu0 0
    %5741 = vmatpush.bf16.msra.mxu0 0
    %5742 = vmatpush.bf16.msra.mxu0 %v5587
    %5743 = vmatpush.bf16.msra.mxu0 %v5571
    %5744 = vmatmul.bf16.gmra.mxu0 %v5632
    %v5745 = vpop.f32.mrf.mxu0
    %v5746 = vadd.f32 %v5443, %v5745
    %v5747 = vpop.f32.mrf.mxu0
    %v5748 = vadd.f32 %v5443, %v5747
    %5749 = vmatmul.bf16.gmra.mxu0 %v5635
    %v5750 = vpop.f32.mrf.mxu0
    %v5751 = vadd.f32 %v5443, %v5750
    %v5752 = vpop.f32.mrf.mxu0
    %v5753 = vadd.f32 %v5443, %v5752
    %5754 = vmatmul.bf16.gmra.mxu0 %v5638
    %v5755 = vpop.f32.mrf.mxu0
    %v5756 = vadd.f32 %v5443, %v5755
    %v5757 = vpop.f32.mrf.mxu0
    %v5758 = vadd.f32 %v5443, %v5757
    %5759 = vdwg.mxu0
    %5760 = vmatpush.bf16.msra.mxu0 0
    %5761 = vmatpush.bf16.msra.mxu0 0
    %5762 = vmatpush.bf16.msra.mxu0 0
    %5763 = vmatpush.bf16.msra.mxu0 0
    %5764 = vmatpush.bf16.msra.mxu0 0
    %5765 = vmatpush.bf16.msra.mxu0 0
    %5766 = vmatpush.bf16.msra.mxu0 %v5588
    %5767 = vmatpush.bf16.msra.mxu0 %v5572
    %5768 = vmatmul.bf16.gmra.mxu0 %v5632
    %v5769 = vpop.f32.mrf.mxu0
    %v5770 = vadd.f32 %v5444, %v5769
    %v5771 = vpop.f32.mrf.mxu0
    %v5772 = vadd.f32 %v5444, %v5771
    %5773 = vmatmul.bf16.gmra.mxu0 %v5635
    %v5774 = vpop.f32.mrf.mxu0
    %v5775 = vadd.f32 %v5444, %v5774
    %v5776 = vpop.f32.mrf.mxu0
    %v5777 = vadd.f32 %v5444, %v5776
    %5778 = vmatmul.bf16.gmra.mxu0 %v5638
    %v5779 = vpop.f32.mrf.mxu0
    %v5780 = vadd.f32 %v5444, %v5779
    %v5781 = vpop.f32.mrf.mxu0
    %v5782 = vadd.f32 %v5444, %v5781
    %5783 = vdwg.mxu0
    %5784 = vmatpush.bf16.msra.mxu0 0
    %5785 = vmatpush.bf16.msra.mxu0 0
    %5786 = vmatpush.bf16.msra.mxu0 0
    %5787 = vmatpush.bf16.msra.mxu0 0
    %5788 = vmatpush.bf16.msra.mxu0 0
    %5789 = vmatpush.bf16.msra.mxu0 0
    %5790 = vmatpush.bf16.msra.mxu0 %v5589
    %5791 = vmatpush.bf16.msra.mxu0 %v5573
    %5792 = vmatmul.bf16.gmra.mxu0 %v5632
    %v5793 = vpop.f32.mrf.mxu0
    %v5794 = vadd.f32 %v5445, %v5793
    %v5795 = vpop.f32.mrf.mxu0
    %v5796 = vadd.f32 %v5445, %v5795
    %5797 = vmatmul.bf16.gmra.mxu0 %v5635
    %v5798 = vpop.f32.mrf.mxu0
    %v5799 = vadd.f32 %v5445, %v5798
    %v5800 = vpop.f32.mrf.mxu0
    %v5801 = vadd.f32 %v5445, %v5800
    %5802 = vmatmul.bf16.gmra.mxu0 %v5638
    %v5803 = vpop.f32.mrf.mxu0
    %v5804 = vadd.f32 %v5445, %v5803
    %v5805 = vpop.f32.mrf.mxu0
    %v5806 = vadd.f32 %v5445, %v5805
    %5807 = vdwg.mxu0
    %5808 = vmatpush.bf16.msra.mxu0 0
    %5809 = vmatpush.bf16.msra.mxu0 0
    %5810 = vmatpush.bf16.msra.mxu0 0
    %5811 = vmatpush.bf16.msra.mxu0 0
    %5812 = vmatpush.bf16.msra.mxu0 0
    %5813 = vmatpush.bf16.msra.mxu0 0
    %5814 = vmatpush.bf16.msra.mxu0 %v5590
    %5815 = vmatpush.bf16.msra.mxu0 %v5574
    %5816 = vmatmul.bf16.gmra.mxu0 %v5632
    %v5817 = vpop.f32.mrf.mxu0
    %v5818 = vadd.f32 %v5446, %v5817
    %v5819 = vpop.f32.mrf.mxu0
    %v5820 = vadd.f32 %v5446, %v5819
    %5821 = vmatmul.bf16.gmra.mxu0 %v5635
    %v5822 = vpop.f32.mrf.mxu0
    %v5823 = vadd.f32 %v5446, %v5822
    %v5824 = vpop.f32.mrf.mxu0
    %v5825 = vadd.f32 %v5446, %v5824
    %5826 = vmatmul.bf16.gmra.mxu0 %v5638
    %v5827 = vpop.f32.mrf.mxu0
    %v5828 = vadd.f32 %v5446, %v5827
    %v5829 = vpop.f32.mrf.mxu0
    %v5830 = vadd.f32 %v5446, %v5829
    %5831 = vdwg.mxu0
    %5832 = vmatpush.bf16.msra.mxu0 0
    %5833 = vmatpush.bf16.msra.mxu0 0
    %5834 = vmatpush.bf16.msra.mxu0 0
    %5835 = vmatpush.bf16.msra.mxu0 0
    %5836 = vmatpush.bf16.msra.mxu0 0
    %5837 = vmatpush.bf16.msra.mxu0 0
    %5838 = vmatpush.bf16.msra.mxu0 %v5591
    %5839 = vmatpush.bf16.msra.mxu0 %v5575
    %5840 = vmatmul.bf16.gmra.mxu0 %v5632
    %v5841 = vpop.f32.mrf.mxu0
    %v5842 = vadd.f32 %v5447, %v5841
    %v5843 = vpop.f32.mrf.mxu0
    %v5844 = vadd.f32 %v5447, %v5843
    %5845 = vmatmul.bf16.gmra.mxu0 %v5635
    %v5846 = vpop.f32.mrf.mxu0
    %v5847 = vadd.f32 %v5447, %v5846
    %v5848 = vpop.f32.mrf.mxu0
    %v5849 = vadd.f32 %v5447, %v5848
    %5850 = vmatmul.bf16.gmra.mxu0 %v5638
    %v5851 = vpop.f32.mrf.mxu0
    %v5852 = vadd.f32 %v5447, %v5851
    %v5853 = vpop.f32.mrf.mxu0
    %v5854 = vadd.f32 %v5447, %v5853
    %5855 = vdwg.mxu0
    %5856 = vmatpush.bf16.msra.mxu0 0
    %5857 = vmatpush.bf16.msra.mxu0 0
    %5858 = vmatpush.bf16.msra.mxu0 0
    %5859 = vmatpush.bf16.msra.mxu0 0
    %5860 = vmatpush.bf16.msra.mxu0 0
    %5861 = vmatpush.bf16.msra.mxu0 0
    %5862 = vmatpush.bf16.msra.mxu0 %v5592
    %5863 = vmatpush.bf16.msra.mxu0 %v5576
    %5864 = vmatmul.bf16.gmra.mxu0 %v5632
    %v5865 = vpop.f32.mrf.mxu0
    %v5866 = vadd.f32 %v5448, %v5865
    %v5867 = vpop.f32.mrf.mxu0
    %v5868 = vadd.f32 %v5448, %v5867
    %5869 = vmatmul.bf16.gmra.mxu0 %v5635
    %v5870 = vpop.f32.mrf.mxu0
    %v5871 = vadd.f32 %v5448, %v5870
    %v5872 = vpop.f32.mrf.mxu0
    %v5873 = vadd.f32 %v5448, %v5872
    %5874 = vmatmul.bf16.gmra.mxu0 %v5638
    %v5875 = vpop.f32.mrf.mxu0
    %v5876 = vadd.f32 %v5448, %v5875
    %v5877 = vpop.f32.mrf.mxu0
    %v5878 = vadd.f32 %v5448, %v5877
    %5879 = vdwg.mxu0
    %5880 = vmatpush.bf16.msra.mxu0 0
    %5881 = vmatpush.bf16.msra.mxu0 0
    %5882 = vmatpush.bf16.msra.mxu0 0
    %5883 = vmatpush.bf16.msra.mxu0 0
    %5884 = vmatpush.bf16.msra.mxu0 0
    %5885 = vmatpush.bf16.msra.mxu0 0
    %5886 = vmatpush.bf16.msra.mxu0 %v5593
    %5887 = vmatpush.bf16.msra.mxu0 %v5577
    %5888 = vmatmul.bf16.gmra.mxu0 %v5632
    %v5889 = vpop.f32.mrf.mxu0
    %v5890 = vadd.f32 %v5449, %v5889
    %v5891 = vpop.f32.mrf.mxu0
    %v5892 = vadd.f32 %v5449, %v5891
    %5893 = vmatmul.bf16.gmra.mxu0 %v5635
    %v5894 = vpop.f32.mrf.mxu0
    %v5895 = vadd.f32 %v5449, %v5894
    %v5896 = vpop.f32.mrf.mxu0
    %v5897 = vadd.f32 %v5449, %v5896
    %5898 = vmatmul.bf16.gmra.mxu0 %v5638
    %v5899 = vpop.f32.mrf.mxu0
    %v5900 = vadd.f32 %v5449, %v5899
    %v5901 = vpop.f32.mrf.mxu0
    %v5902 = vadd.f32 %v5449, %v5901
    %5903 = vdwg.mxu0
    %5904 = vmatpush.bf16.msra.mxu0 0
    %5905 = vmatpush.bf16.msra.mxu0 0
    %5906 = vmatpush.bf16.msra.mxu0 0
    %5907 = vmatpush.bf16.msra.mxu0 0
    %5908 = vmatpush.bf16.msra.mxu0 0
    %5909 = vmatpush.bf16.msra.mxu0 0
    %5910 = vmatpush.bf16.msra.mxu0 %v5594
    %5911 = vmatpush.bf16.msra.mxu0 %v5578
    %5912 = vmatmul.bf16.gmra.mxu0 %v5632
    %v5913 = vpop.f32.mrf.mxu0
    %v5914 = vadd.f32 %v5450, %v5913
    %v5915 = vpop.f32.mrf.mxu0
    %v5916 = vadd.f32 %v5450, %v5915
    %5917 = vmatmul.bf16.gmra.mxu0 %v5635
    %v5918 = vpop.f32.mrf.mxu0
    %v5919 = vadd.f32 %v5450, %v5918
    %v5920 = vpop.f32.mrf.mxu0
    %v5921 = vadd.f32 %v5450, %v5920
    %5922 = vmatmul.bf16.gmra.mxu0 %v5638
    %v5923 = vpop.f32.mrf.mxu0
    %v5924 = vadd.f32 %v5450, %v5923
    %v5925 = vpop.f32.mrf.mxu0
    %v5926 = vadd.f32 %v5450, %v5925
    %5927 = vdwg.mxu0
    %5928 = vmatpush.bf16.msra.mxu0 0
    %5929 = vmatpush.bf16.msra.mxu0 0
    %5930 = vmatpush.bf16.msra.mxu0 0
    %5931 = vmatpush.bf16.msra.mxu0 0
    %5932 = vmatpush.bf16.msra.mxu0 0
    %5933 = vmatpush.bf16.msra.mxu0 0
    %5934 = vmatpush.bf16.msra.mxu0 %v5595
    %5935 = vmatpush.bf16.msra.mxu0 %v5579
    %5936 = vmatmul.bf16.gmra.mxu0 %v5632
    %v5937 = vpop.f32.mrf.mxu0
    %v5938 = vadd.f32 %v5451, %v5937
    %v5939 = vpop.f32.mrf.mxu0
    %v5940 = vadd.f32 %v5451, %v5939
    %5941 = vmatmul.bf16.gmra.mxu0 %v5635
    %v5942 = vpop.f32.mrf.mxu0
    %v5943 = vadd.f32 %v5451, %v5942
    %v5944 = vpop.f32.mrf.mxu0
    %v5945 = vadd.f32 %v5451, %v5944
    %5946 = vmatmul.bf16.gmra.mxu0 %v5638
    %v5947 = vpop.f32.mrf.mxu0
    %v5948 = vadd.f32 %v5451, %v5947
    %v5949 = vpop.f32.mrf.mxu0
    %v5950 = vadd.f32 %v5451, %v5949
    %5951 = vdwg.mxu0
    %5952 = vmatpush.bf16.msra.mxu0 0
    %5953 = vmatpush.bf16.msra.mxu0 0
    %5954 = vmatpush.bf16.msra.mxu0 0
    %5955 = vmatpush.bf16.msra.mxu0 0
    %5956 = vmatpush.bf16.msra.mxu0 0
    %5957 = vmatpush.bf16.msra.mxu0 0
    %5958 = vmatpush.bf16.msra.mxu0 %v5596
    %5959 = vmatpush.bf16.msra.mxu0 %v5580
    %5960 = vmatmul.bf16.gmra.mxu0 %v5632
    %v5961 = vpop.f32.mrf.mxu0
    %v5962 = vadd.f32 %v5452, %v5961
    %v5963 = vpop.f32.mrf.mxu0
    %v5964 = vadd.f32 %v5452, %v5963
    %5965 = vmatmul.bf16.gmra.mxu0 %v5635
    %v5966 = vpop.f32.mrf.mxu0
    %v5967 = vadd.f32 %v5452, %v5966
    %v5968 = vpop.f32.mrf.mxu0
    %v5969 = vadd.f32 %v5452, %v5968
    %5970 = vmatmul.bf16.gmra.mxu0 %v5638
    %v5971 = vpop.f32.mrf.mxu0
    %v5972 = vadd.f32 %v5452, %v5971
    %v5973 = vpop.f32.mrf.mxu0
    %v5974 = vadd.f32 %v5452, %v5973
    %5975 = vdwg.mxu0
    %5976 = vmatpush.bf16.msra.mxu0 0
    %5977 = vmatpush.bf16.msra.mxu0 0
    %5978 = vmatpush.bf16.msra.mxu0 0
    %5979 = vmatpush.bf16.msra.mxu0 0
    %5980 = vmatpush.bf16.msra.mxu0 0
    %5981 = vmatpush.bf16.msra.mxu0 0
    %5982 = vmatpush.bf16.msra.mxu0 %v5597
    %5983 = vmatpush.bf16.msra.mxu0 %v5581
    %5984 = vmatmul.bf16.gmra.mxu0 %v5632
    %v5985 = vpop.f32.mrf.mxu0
    %v5986 = vadd.f32 %v5453, %v5985
    %v5987 = vpop.f32.mrf.mxu0
    %v5988 = vadd.f32 %v5453, %v5987
    %5989 = vmatmul.bf16.gmra.mxu0 %v5635
    %v5990 = vpop.f32.mrf.mxu0
    %v5991 = vadd.f32 %v5453, %v5990
    %v5992 = vpop.f32.mrf.mxu0
    %v5993 = vadd.f32 %v5453, %v5992
    %5994 = vmatmul.bf16.gmra.mxu0 %v5638
    %v5995 = vpop.f32.mrf.mxu0
    %v5996 = vadd.f32 %v5453, %v5995
    %v5997 = vpop.f32.mrf.mxu0
    %v5998 = vadd.f32 %v5453, %v5997
    %5999 = vdwg.mxu0
    %6000 = vmatpush.bf16.msra.mxu0 0
    %6001 = vmatpush.bf16.msra.mxu0 0
    %6002 = vmatpush.bf16.msra.mxu0 0
    %6003 = vmatpush.bf16.msra.mxu0 0
    %6004 = vmatpush.bf16.msra.mxu0 0
    %6005 = vmatpush.bf16.msra.mxu0 0
    %6006 = vmatpush.bf16.msra.mxu0 %v5598
    %6007 = vmatpush.bf16.msra.mxu0 %v5582
    %6008 = vmatmul.bf16.gmra.mxu0 %v5632
    %v6009 = vpop.f32.mrf.mxu0
    %v6010 = vadd.f32 %v5454, %v6009
    %v6011 = vpop.f32.mrf.mxu0
    %v6012 = vadd.f32 %v5454, %v6011
    %6013 = vmatmul.bf16.gmra.mxu0 %v5635
    %v6014 = vpop.f32.mrf.mxu0
    %v6015 = vadd.f32 %v5454, %v6014
    %v6016 = vpop.f32.mrf.mxu0
    %v6017 = vadd.f32 %v5454, %v6016
    %6018 = vmatmul.bf16.gmra.mxu0 %v5638
    %v6019 = vpop.f32.mrf.mxu0
    %v6020 = vadd.f32 %v5454, %v6019
    %v6021 = vpop.f32.mrf.mxu0
    %v6022 = vadd.f32 %v5454, %v6021
    %6023 = vdwg.mxu0
    %v6024 = vmax.f32 %v5650, 0.0
    %v6025 = vmax.f32 %v5674, 0.0
    %v6026 = vmax.f32 %v5698, 0.0
    %v6027 = vmax.f32 %v5722, 0.0
    %v6028 = vmax.f32 %v5746, 0.0
    %v6029 = vmax.f32 %v5770, 0.0
    %v6030 = vmax.f32 %v5794, 0.0
    %v6031 = vmax.f32 %v5818, 0.0
    %v6032 = vmax.f32 %v5842, 0.0
    %v6033 = vmax.f32 %v5866, 0.0
    %v6034 = vmax.f32 %v5890, 0.0
    %v6035 = vmax.f32 %v5914, 0.0
    %v6036 = vmax.f32 %v5938, 0.0
    %v6037 = vmax.f32 %v5962, 0.0
    %v6038 = vmax.f32 %v5986, 0.0
    %v6039 = vmax.f32 %v6010, 0.0
    %v6040 = vmax.f32 %v5652, 0.0
    %v6041 = vmax.f32 %v5676, 0.0
    %v6042 = vmax.f32 %v5700, 0.0
    %v6043 = vmax.f32 %v5724, 0.0
    %v6044 = vmax.f32 %v5748, 0.0
    %v6045 = vmax.f32 %v5772, 0.0
    %v6046 = vmax.f32 %v5796, 0.0
    %v6047 = vmax.f32 %v5820, 0.0
    %v6048 = vmax.f32 %v5844, 0.0
    %v6049 = vmax.f32 %v5868, 0.0
    %v6050 = vmax.f32 %v5892, 0.0
    %v6051 = vmax.f32 %v5916, 0.0
    %v6052 = vmax.f32 %v5940, 0.0
    %v6053 = vmax.f32 %v5964, 0.0
    %v6054 = vmax.f32 %v5988, 0.0
    %v6055 = vmax.f32 %v6012, 0.0
    %v6056 = vmax.f32 %v5655, 0.0
    %v6057 = vmax.f32 %v5679, 0.0
    %v6058 = vmax.f32 %v5703, 0.0
    %v6059 = vmax.f32 %v5727, 0.0
    %v6060 = vmax.f32 %v5751, 0.0
    %v6061 = vmax.f32 %v5775, 0.0
    %v6062 = vmax.f32 %v5799, 0.0
    %v6063 = vmax.f32 %v5823, 0.0
    %v6064 = vmax.f32 %v5847, 0.0
    %v6065 = vmax.f32 %v5871, 0.0
    %v6066 = vmax.f32 %v5895, 0.0
    %v6067 = vmax.f32 %v5919, 0.0
    %v6068 = vmax.f32 %v5943, 0.0
    %v6069 = vmax.f32 %v5967, 0.0
    %v6070 = vmax.f32 %v5991, 0.0
    %v6071 = vmax.f32 %v6015, 0.0
    %v6072 = vmax.f32 %v5657, 0.0
    %v6073 = vmax.f32 %v5681, 0.0
    %v6074 = vmax.f32 %v5705, 0.0
    %v6075 = vmax.f32 %v5729, 0.0
    %v6076 = vmax.f32 %v5753, 0.0
    %v6077 = vmax.f32 %v5777, 0.0
    %v6078 = vmax.f32 %v5801, 0.0
    %v6079 = vmax.f32 %v5825, 0.0
    %v6080 = vmax.f32 %v5849, 0.0
    %v6081 = vmax.f32 %v5873, 0.0
    %v6082 = vmax.f32 %v5897, 0.0
    %v6083 = vmax.f32 %v5921, 0.0
    %v6084 = vmax.f32 %v5945, 0.0
    %v6085 = vmax.f32 %v5969, 0.0
    %v6086 = vmax.f32 %v5993, 0.0
    %v6087 = vmax.f32 %v6017, 0.0
    %v6088 = vmax.f32 %v5660, 0.0
    %v6089 = vmax.f32 %v5684, 0.0
    %v6090 = vmax.f32 %v5708, 0.0
    %v6091 = vmax.f32 %v5732, 0.0
    %v6092 = vmax.f32 %v5756, 0.0
    %v6093 = vmax.f32 %v5780, 0.0
    %v6094 = vmax.f32 %v5804, 0.0
    %v6095 = vmax.f32 %v5828, 0.0
    %v6096 = vmax.f32 %v5852, 0.0
    %v6097 = vmax.f32 %v5876, 0.0
    %v6098 = vmax.f32 %v5900, 0.0
    %v6099 = vmax.f32 %v5924, 0.0
    %v6100 = vmax.f32 %v5948, 0.0
    %v6101 = vmax.f32 %v5972, 0.0
    %v6102 = vmax.f32 %v5996, 0.0
    %v6103 = vmax.f32 %v6020, 0.0
    %v6104 = vmax.f32 %v5662, 0.0
    %v6105 = vmax.f32 %v5686, 0.0
    %v6106 = vmax.f32 %v5710, 0.0
    %v6107 = vmax.f32 %v5734, 0.0
    %v6108 = vmax.f32 %v5758, 0.0
    %v6109 = vmax.f32 %v5782, 0.0
    %v6110 = vmax.f32 %v5806, 0.0
    %v6111 = vmax.f32 %v5830, 0.0
    %v6112 = vmax.f32 %v5854, 0.0
    %v6113 = vmax.f32 %v5878, 0.0
    %v6114 = vmax.f32 %v5902, 0.0
    %v6115 = vmax.f32 %v5926, 0.0
    %v6116 = vmax.f32 %v5950, 0.0
    %v6117 = vmax.f32 %v5974, 0.0
    %v6118 = vmax.f32 %v5998, 0.0
    %v6119 = vmax.f32 %v6022, 0.0
    %v6120 = vpack.c.bf16 %v6040, %v6024
    %v6121 = vpack.c.bf16 %v6041, %v6025
    %v6122 = vpack.c.bf16 %v6042, %v6026
    %v6123 = vpack.c.bf16 %v6043, %v6027
    %v6124 = vpack.c.bf16 %v6044, %v6028
    %v6125 = vpack.c.bf16 %v6045, %v6029
    %v6126 = vpack.c.bf16 %v6046, %v6030
    %v6127 = vpack.c.bf16 %v6047, %v6031
    %v6128 = vpack.c.bf16 %v6048, %v6032
    %v6129 = vpack.c.bf16 %v6049, %v6033
    %v6130 = vpack.c.bf16 %v6050, %v6034
    %v6131 = vpack.c.bf16 %v6051, %v6035
    %v6132 = vpack.c.bf16 %v6052, %v6036
    %v6133 = vpack.c.bf16 %v6053, %v6037
    %v6134 = vpack.c.bf16 %v6054, %v6038
    %v6135 = vpack.c.bf16 %v6055, %v6039
    %v6136 = vpack.c.bf16 %v6072, %v6056
    %v6137 = vpack.c.bf16 %v6073, %v6057
    %v6138 = vpack.c.bf16 %v6074, %v6058
    %v6139 = vpack.c.bf16 %v6075, %v6059
    %v6140 = vpack.c.bf16 %v6076, %v6060
    %v6141 = vpack.c.bf16 %v6077, %v6061
    %v6142 = vpack.c.bf16 %v6078, %v6062
    %v6143 = vpack.c.bf16 %v6079, %v6063
    %v6144 = vpack.c.bf16 %v6080, %v6064
    %v6145 = vpack.c.bf16 %v6081, %v6065
    %v6146 = vpack.c.bf16 %v6082, %v6066
    %v6147 = vpack.c.bf16 %v6083, %v6067
    %v6148 = vpack.c.bf16 %v6084, %v6068
    %v6149 = vpack.c.bf16 %v6085, %v6069
    %v6150 = vpack.c.bf16 %v6086, %v6070
    %v6151 = vpack.c.bf16 %v6087, %v6071
    %v6152 = vpack.c.bf16 %v6104, %v6088
    %v6153 = vpack.c.bf16 %v6105, %v6089
    %v6154 = vpack.c.bf16 %v6106, %v6090
    %v6155 = vpack.c.bf16 %v6107, %v6091
    %v6156 = vpack.c.bf16 %v6108, %v6092
    %v6157 = vpack.c.bf16 %v6109, %v6093
    %v6158 = vpack.c.bf16 %v6110, %v6094
    %v6159 = vpack.c.bf16 %v6111, %v6095
    %v6160 = vpack.c.bf16 %v6112, %v6096
    %v6161 = vpack.c.bf16 %v6113, %v6097
    %v6162 = vpack.c.bf16 %v6114, %v6098
    %v6163 = vpack.c.bf16 %v6115, %v6099
    %v6164 = vpack.c.bf16 %v6116, %v6100
    %v6165 = vpack.c.bf16 %v6117, %v6101
    %v6166 = vpack.c.bf16 %v6118, %v6102
    %v6167 = vpack.c.bf16 %v6119, %v6103
    %v6168 = vld [vmem:[%s51] sm:$0xf]
    %v6169 = vld [vmem:[%s51 + $0x4] sm:$0xf]
    %v6170 = vld [vmem:[%s51 + $0x8] sm:$0xf]
    %v6171 = vld [vmem:[%s51 + $0xc] sm:$0xf]
    %v6172 = vld [vmem:[%s51 + $0x10] sm:$0xf]
    %v6173 = vld [vmem:[%s51 + $0x14] sm:$0xf]
    %v6174 = vld [vmem:[%s51 + $0x18] sm:$0xf]
    %v6175 = vld [vmem:[%s51 + $0x1c] sm:$0xf]
    %v6176 = vld [vmem:[%s51 + $0x20] sm:$0xf]
    %v6177 = vld [vmem:[%s51 + $0x24] sm:$0xf]
    %v6178 = vld [vmem:[%s51 + $0x28] sm:$0xf]
    %v6179 = vld [vmem:[%s51 + $0x2c] sm:$0xf]
    %v6180 = vld [vmem:[%s51 + $0x30] sm:$0xf]
    %v6181 = vld [vmem:[%s51 + $0x34] sm:$0xf]
    %v6182 = vld [vmem:[%s51 + $0x38] sm:$0xf]
    %v6183 = vld [vmem:[%s51 + $0x3c] sm:$0xf]
    %v6184 = vld [vmem:[%s51 + $0x40] sm:$0xf]
    %v6185 = vld [vmem:[%s51 + $0x44] sm:$0xf]
    %v6186 = vld [vmem:[%s51 + $0x48] sm:$0xf]
    %v6187 = vld [vmem:[%s51 + $0x4c] sm:$0xf]
    %v6188 = vld [vmem:[%s51 + $0x50] sm:$0xf]
    %v6189 = vld [vmem:[%s51 + $0x54] sm:$0xf]
    %v6190 = vld [vmem:[%s51 + $0x58] sm:$0xf]
    %v6191 = vld [vmem:[%s51 + $0x5c] sm:$0xf]
    %v6192 = vld [vmem:[%s51 + $0x60] sm:$0xf]
    %v6193 = vld [vmem:[%s51 + $0x64] sm:$0xf]
    %v6194 = vld [vmem:[%s51 + $0x68] sm:$0xf]
    %v6195 = vld [vmem:[%s51 + $0x6c] sm:$0xf]
    %v6196 = vld [vmem:[%s51 + $0x70] sm:$0xf]
    %v6197 = vld [vmem:[%s51 + $0x74] sm:$0xf]
    %v6198 = vld [vmem:[%s51 + $0x78] sm:$0xf]
    %v6199 = vld [vmem:[%s51 + $0x7c] sm:$0xf]
    %v6200 = vld [vmem:[%s51 + $0x80] sm:$0xf]
    %v6201 = vld [vmem:[%s51 + $0x84] sm:$0xf]
    %v6202 = vld [vmem:[%s51 + $0x88] sm:$0xf]
    %v6203 = vld [vmem:[%s51 + $0x8c] sm:$0xf]
    %v6204 = vld [vmem:[%s51 + $0x90] sm:$0xf]
    %v6205 = vld [vmem:[%s51 + $0x94] sm:$0xf]
    %v6206 = vld [vmem:[%s51 + $0x98] sm:$0xf]
    %v6207 = vld [vmem:[%s51 + $0x9c] sm:$0xf]
    %v6208 = vld [vmem:[%s51 + $0xa0] sm:$0xf]
    %v6209 = vld [vmem:[%s51 + $0xa4] sm:$0xf]
    %v6210 = vld [vmem:[%s51 + $0xa8] sm:$0xf]
    %v6211 = vld [vmem:[%s51 + $0xac] sm:$0xf]
    %v6212 = vld [vmem:[%s51 + $0xb0] sm:$0xf]
    %v6213 = vld [vmem:[%s51 + $0xb4] sm:$0xf]
    %v6214 = vld [vmem:[%s51 + $0xb8] sm:$0xf]
    %v6215 = vld [vmem:[%s51 + $0xbc] sm:$0xf]
    %v6216 = vld [vmem:[%s51 + $0xc0] sm:$0xf]
    %v6217 = vld [vmem:[%s51 + $0xc4] sm:$0xf]
    %v6218 = vld [vmem:[%s51 + $0xc8] sm:$0xf]
    %v6219 = vld [vmem:[%s51 + $0xcc] sm:$0xf]
    %v6220 = vld [vmem:[%s51 + $0xd0] sm:$0xf]
    %v6221 = vld [vmem:[%s51 + $0xd4] sm:$0xf]
    %v6222 = vld [vmem:[%s51 + $0xd8] sm:$0xf]
    %v6223 = vld [vmem:[%s51 + $0xdc] sm:$0xf]
    %v6224 = vld [vmem:[%s51 + $0xe0] sm:$0xf]
    %v6225 = vld [vmem:[%s51 + $0xe4] sm:$0xf]
    %v6226 = vld [vmem:[%s51 + $0xe8] sm:$0xf]
    %v6227 = vld [vmem:[%s51 + $0xec] sm:$0xf]
    %v6228 = vld [vmem:[%s51 + $0xf0] sm:$0xf]
    %v6229 = vld [vmem:[%s51 + $0xf4] sm:$0xf]
    %v6230 = vld [vmem:[%s51 + $0xf8] sm:$0xf]
    %v6231 = vld [vmem:[%s51 + $0xfc] sm:$0xf]
    %v6232 = vld [vmem:[%s51 + $0x100] sm:$0xf]
    %v6233 = vld [vmem:[%s51 + $0x104] sm:$0xf]
    %v6234 = vld [vmem:[%s51 + $0x108] sm:$0xf]
    %v6235 = vld [vmem:[%s51 + $0x10c] sm:$0xf]
    %v6236 = vld [vmem:[%s51 + $0x110] sm:$0xf]
    %v6237 = vld [vmem:[%s51 + $0x114] sm:$0xf]
    %v6238 = vld [vmem:[%s51 + $0x118] sm:$0xf]
    %v6239 = vld [vmem:[%s51 + $0x11c] sm:$0xf]
    %v6240 = vld [vmem:[%s51 + $0x120] sm:$0xf]
    %v6241 = vld [vmem:[%s51 + $0x124] sm:$0xf]
    %v6242 = vld [vmem:[%s51 + $0x128] sm:$0xf]
    %v6243 = vld [vmem:[%s51 + $0x12c] sm:$0xf]
    %v6244 = vld [vmem:[%s51 + $0x130] sm:$0xf]
    %v6245 = vld [vmem:[%s51 + $0x134] sm:$0xf]
    %v6246 = vld [vmem:[%s51 + $0x138] sm:$0xf]
    %v6247 = vld [vmem:[%s51 + $0x13c] sm:$0xf]
    %v6248 = vld [vmem:[%s51 + $0x140] sm:$0xf]
    %v6249 = vld [vmem:[%s51 + $0x144] sm:$0xf]
    %v6250 = vld [vmem:[%s51 + $0x148] sm:$0xf]
    %v6251 = vld [vmem:[%s51 + $0x14c] sm:$0xf]
    %v6252 = vld [vmem:[%s51 + $0x150] sm:$0xf]
    %v6253 = vld [vmem:[%s51 + $0x154] sm:$0xf]
    %v6254 = vld [vmem:[%s51 + $0x158] sm:$0xf]
    %v6255 = vld [vmem:[%s51 + $0x15c] sm:$0xf]
    %v6256 = vld [vmem:[%s51 + $0x160] sm:$0xf]
    %v6257 = vld [vmem:[%s51 + $0x164] sm:$0xf]
    %v6258 = vld [vmem:[%s51 + $0x168] sm:$0xf]
    %v6259 = vld [vmem:[%s51 + $0x16c] sm:$0xf]
    %v6260 = vld [vmem:[%s51 + $0x170] sm:$0xf]
    %v6261 = vld [vmem:[%s51 + $0x174] sm:$0xf]
    %v6262 = vld [vmem:[%s51 + $0x178] sm:$0xf]
    %v6263 = vld [vmem:[%s51 + $0x17c] sm:$0xf]
    %v6264 = vld [vmem:[%s51 + $0x180] sm:$0xf]
    %v6265 = vld [vmem:[%s51 + $0x184] sm:$0xf]
    %v6266 = vld [vmem:[%s51 + $0x188] sm:$0xf]
    %v6267 = vld [vmem:[%s51 + $0x18c] sm:$0xf]
    %v6268 = vld [vmem:[%s51 + $0x190] sm:$0xf]
    %v6269 = vld [vmem:[%s51 + $0x194] sm:$0xf]
    %v6270 = vld [vmem:[%s51 + $0x198] sm:$0xf]
    %v6271 = vld [vmem:[%s51 + $0x19c] sm:$0xf]
    %v6272 = vld [vmem:[%s51 + $0x1a0] sm:$0xf]
    %v6273 = vld [vmem:[%s51 + $0x1a4] sm:$0xf]
    %v6274 = vld [vmem:[%s51 + $0x1a8] sm:$0xf]
    %v6275 = vld [vmem:[%s51 + $0x1ac] sm:$0xf]
    %v6276 = vld [vmem:[%s51 + $0x1b0] sm:$0xf]
    %v6277 = vld [vmem:[%s51 + $0x1b4] sm:$0xf]
    %v6278 = vld [vmem:[%s51 + $0x1b8] sm:$0xf]
    %v6279 = vld [vmem:[%s51 + $0x1bc] sm:$0xf]
    %v6280 = vld [vmem:[%s51 + $0x1c0] sm:$0xf]
    %v6281 = vld [vmem:[%s51 + $0x1c4] sm:$0xf]
    %v6282 = vld [vmem:[%s51 + $0x1c8] sm:$0xf]
    %v6283 = vld [vmem:[%s51 + $0x1cc] sm:$0xf]
    %v6284 = vld [vmem:[%s51 + $0x1d0] sm:$0xf]
    %v6285 = vld [vmem:[%s51 + $0x1d4] sm:$0xf]
    %v6286 = vld [vmem:[%s51 + $0x1d8] sm:$0xf]
    %v6287 = vld [vmem:[%s51 + $0x1dc] sm:$0xf]
    %v6288 = vld [vmem:[%s51 + $0x1e0] sm:$0xf]
    %v6289 = vld [vmem:[%s51 + $0x1e4] sm:$0xf]
    %v6290 = vld [vmem:[%s51 + $0x1e8] sm:$0xf]
    %v6291 = vld [vmem:[%s51 + $0x1ec] sm:$0xf]
    %v6292 = vld [vmem:[%s51 + $0x1f0] sm:$0xf]
    %v6293 = vld [vmem:[%s51 + $0x1f4] sm:$0xf]
    %v6294 = vld [vmem:[%s51 + $0x1f8] sm:$0xf]
    %v6295 = vld [vmem:[%s51 + $0x1fc] sm:$0xf]
    %v6296 = vld [vmem:[%s51 + $0x200] sm:$0xf]
    %v6297 = vld [vmem:[%s51 + $0x204] sm:$0xf]
    %v6298 = vld [vmem:[%s51 + $0x208] sm:$0xf]
    %v6299 = vld [vmem:[%s51 + $0x20c] sm:$0xf]
    %v6300 = vld [vmem:[%s51 + $0x210] sm:$0xf]
    %v6301 = vld [vmem:[%s51 + $0x214] sm:$0xf]
    %v6302 = vld [vmem:[%s51 + $0x218] sm:$0xf]
    %v6303 = vld [vmem:[%s51 + $0x21c] sm:$0xf]
    %v6304 = vld [vmem:[%s51 + $0x220] sm:$0xf]
    %v6305 = vld [vmem:[%s51 + $0x224] sm:$0xf]
    %v6306 = vld [vmem:[%s51 + $0x228] sm:$0xf]
    %v6307 = vld [vmem:[%s51 + $0x22c] sm:$0xf]
    %v6308 = vld [vmem:[%s51 + $0x230] sm:$0xf]
    %v6309 = vld [vmem:[%s51 + $0x234] sm:$0xf]
    %v6310 = vld [vmem:[%s51 + $0x238] sm:$0xf]
    %v6311 = vld [vmem:[%s51 + $0x23c] sm:$0xf]
    %v6312 = vld [vmem:[%s51 + $0x240] sm:$0xf]
    %v6313 = vld [vmem:[%s51 + $0x244] sm:$0xf]
    %v6314 = vld [vmem:[%s51 + $0x248] sm:$0xf]
    %v6315 = vld [vmem:[%s51 + $0x24c] sm:$0xf]
    %v6316 = vld [vmem:[%s51 + $0x250] sm:$0xf]
    %v6317 = vld [vmem:[%s51 + $0x254] sm:$0xf]
    %v6318 = vld [vmem:[%s51 + $0x258] sm:$0xf]
    %v6319 = vld [vmem:[%s51 + $0x25c] sm:$0xf]
    %v6320 = vld [vmem:[%s51 + $0x260] sm:$0xf]
    %v6321 = vld [vmem:[%s51 + $0x264] sm:$0xf]
    %v6322 = vld [vmem:[%s51 + $0x268] sm:$0xf]
    %v6323 = vld [vmem:[%s51 + $0x26c] sm:$0xf]
    %v6324 = vld [vmem:[%s51 + $0x270] sm:$0xf]
    %v6325 = vld [vmem:[%s51 + $0x274] sm:$0xf]
    %v6326 = vld [vmem:[%s51 + $0x278] sm:$0xf]
    %v6327 = vld [vmem:[%s51 + $0x27c] sm:$0xf]
    %v6328 = vld [vmem:[%s51 + $0x280] sm:$0xf]
    %v6329 = vld [vmem:[%s51 + $0x284] sm:$0xf]
    %v6330 = vld [vmem:[%s51 + $0x288] sm:$0xf]
    %v6331 = vld [vmem:[%s51 + $0x28c] sm:$0xf]
    %v6332 = vld [vmem:[%s51 + $0x290] sm:$0xf]
    %v6333 = vld [vmem:[%s51 + $0x294] sm:$0xf]
    %v6334 = vld [vmem:[%s51 + $0x298] sm:$0xf]
    %v6335 = vld [vmem:[%s51 + $0x29c] sm:$0xf]
    %v6336 = vld [vmem:[%s51 + $0x2a0] sm:$0xf]
    %v6337 = vld [vmem:[%s51 + $0x2a4] sm:$0xf]
    %v6338 = vld [vmem:[%s51 + $0x2a8] sm:$0xf]
    %v6339 = vld [vmem:[%s51 + $0x2ac] sm:$0xf]
    %v6340 = vld [vmem:[%s51 + $0x2b0] sm:$0xf]
    %v6341 = vld [vmem:[%s51 + $0x2b4] sm:$0xf]
    %v6342 = vld [vmem:[%s51 + $0x2b8] sm:$0xf]
    %v6343 = vld [vmem:[%s51 + $0x2bc] sm:$0xf]
    %v6344 = vld [vmem:[%s51 + $0x2c0] sm:$0xf]
    %v6345 = vld [vmem:[%s51 + $0x2c4] sm:$0xf]
    %v6346 = vld [vmem:[%s51 + $0x2c8] sm:$0xf]
    %v6347 = vld [vmem:[%s51 + $0x2cc] sm:$0xf]
    %v6348 = vld [vmem:[%s51 + $0x2d0] sm:$0xf]
    %v6349 = vld [vmem:[%s51 + $0x2d4] sm:$0xf]
    %v6350 = vld [vmem:[%s51 + $0x2d8] sm:$0xf]
    %v6351 = vld [vmem:[%s51 + $0x2dc] sm:$0xf]
    %v6352 = vld [vmem:[%s51 + $0x2e0] sm:$0xf]
    %v6353 = vld [vmem:[%s51 + $0x2e4] sm:$0xf]
    %v6354 = vld [vmem:[%s51 + $0x2e8] sm:$0xf]
    %v6355 = vld [vmem:[%s51 + $0x2ec] sm:$0xf]
    %v6356 = vld [vmem:[%s51 + $0x2f0] sm:$0xf]
    %v6357 = vld [vmem:[%s51 + $0x2f4] sm:$0xf]
    %v6358 = vld [vmem:[%s51 + $0x2f8] sm:$0xf]
    %v6359 = vld [vmem:[%s51 + $0x2fc] sm:$0xf]
    %v6360 = vld [vmem:[%s51 + $0x300] sm:$0xf]
    %v6361 = vld [vmem:[%s51 + $0x304] sm:$0xf]
    %v6362 = vld [vmem:[%s51 + $0x308] sm:$0xf]
    %v6363 = vld [vmem:[%s51 + $0x30c] sm:$0xf]
    %v6364 = vld [vmem:[%s51 + $0x310] sm:$0xf]
    %v6365 = vld [vmem:[%s51 + $0x314] sm:$0xf]
    %v6366 = vld [vmem:[%s51 + $0x318] sm:$0xf]
    %v6367 = vld [vmem:[%s51 + $0x31c] sm:$0xf]
    %v6368 = vld [vmem:[%s51 + $0x320] sm:$0xf]
    %v6369 = vld [vmem:[%s51 + $0x324] sm:$0xf]
    %v6370 = vld [vmem:[%s51 + $0x328] sm:$0xf]
    %v6371 = vld [vmem:[%s51 + $0x32c] sm:$0xf]
    %v6372 = vld [vmem:[%s51 + $0x330] sm:$0xf]
    %v6373 = vld [vmem:[%s51 + $0x334] sm:$0xf]
    %v6374 = vld [vmem:[%s51 + $0x338] sm:$0xf]
    %v6375 = vld [vmem:[%s51 + $0x33c] sm:$0xf]
    %v6376 = vld [vmem:[%s51 + $0x340] sm:$0xf]
    %v6377 = vld [vmem:[%s51 + $0x344] sm:$0xf]
    %v6378 = vld [vmem:[%s51 + $0x348] sm:$0xf]
    %v6379 = vld [vmem:[%s51 + $0x34c] sm:$0xf]
    %v6380 = vld [vmem:[%s51 + $0x350] sm:$0xf]
    %v6381 = vld [vmem:[%s51 + $0x354] sm:$0xf]
    %v6382 = vld [vmem:[%s51 + $0x358] sm:$0xf]
    %v6383 = vld [vmem:[%s51 + $0x35c] sm:$0xf]
    %v6384 = vld [vmem:[%s51 + $0x360] sm:$0xf]
    %v6385 = vld [vmem:[%s51 + $0x364] sm:$0xf]
    %v6386 = vld [vmem:[%s51 + $0x368] sm:$0xf]
    %v6387 = vld [vmem:[%s51 + $0x36c] sm:$0xf]
    %v6388 = vld [vmem:[%s51 + $0x370] sm:$0xf]
    %v6389 = vld [vmem:[%s51 + $0x374] sm:$0xf]
    %v6390 = vld [vmem:[%s51 + $0x378] sm:$0xf]
    %v6391 = vld [vmem:[%s51 + $0x37c] sm:$0xf]
    %v6392 = vld [vmem:[%s51 + $0x380] sm:$0xf]
    %v6393 = vld [vmem:[%s51 + $0x384] sm:$0xf]
    %v6394 = vld [vmem:[%s51 + $0x388] sm:$0xf]
    %v6395 = vld [vmem:[%s51 + $0x38c] sm:$0xf]
    %v6396 = vld [vmem:[%s51 + $0x390] sm:$0xf]
    %v6397 = vld [vmem:[%s51 + $0x394] sm:$0xf]
    %v6398 = vld [vmem:[%s51 + $0x398] sm:$0xf]
    %v6399 = vld [vmem:[%s51 + $0x39c] sm:$0xf]
    %v6400 = vld [vmem:[%s51 + $0x3a0] sm:$0xf]
    %v6401 = vld [vmem:[%s51 + $0x3a4] sm:$0xf]
    %v6402 = vld [vmem:[%s51 + $0x3a8] sm:$0xf]
    %v6403 = vld [vmem:[%s51 + $0x3ac] sm:$0xf]
    %v6404 = vld [vmem:[%s51 + $0x3b0] sm:$0xf]
    %v6405 = vld [vmem:[%s51 + $0x3b4] sm:$0xf]
    %v6406 = vld [vmem:[%s51 + $0x3b8] sm:$0xf]
    %v6407 = vld [vmem:[%s51 + $0x3bc] sm:$0xf]
    %v6408 = vld [vmem:[%s51 + $0x3c0] sm:$0xf]
    %v6409 = vld [vmem:[%s51 + $0x3c4] sm:$0xf]
    %v6410 = vld [vmem:[%s51 + $0x3c8] sm:$0xf]
    %v6411 = vld [vmem:[%s51 + $0x3cc] sm:$0xf]
    %v6412 = vld [vmem:[%s51 + $0x3d0] sm:$0xf]
    %v6413 = vld [vmem:[%s51 + $0x3d4] sm:$0xf]
    %v6414 = vld [vmem:[%s51 + $0x3d8] sm:$0xf]
    %v6415 = vld [vmem:[%s51 + $0x3dc] sm:$0xf]
    %v6416 = vld [vmem:[%s51 + $0x3e0] sm:$0xf]
    %v6417 = vld [vmem:[%s51 + $0x3e4] sm:$0xf]
    %v6418 = vld [vmem:[%s51 + $0x3e8] sm:$0xf]
    %v6419 = vld [vmem:[%s51 + $0x3ec] sm:$0xf]
    %v6420 = vld [vmem:[%s51 + $0x3f0] sm:$0xf]
    %v6421 = vld [vmem:[%s51 + $0x3f4] sm:$0xf]
    %v6422 = vld [vmem:[%s51 + $0x3f8] sm:$0xf]
    %v6423 = vld [vmem:[%s51 + $0x3fc] sm:$0xf]
    %v6680 = vunpack.c.l.b16 %v6168
    %v6681 = vunpack.c.l.b16 %v6169
    %v6682 = vunpack.c.l.b16 %v6170
    %v6683 = vunpack.c.l.b16 %v6171
    %v6684 = vunpack.c.l.b16 %v6172
    %v6685 = vunpack.c.l.b16 %v6173
    %v6686 = vunpack.c.l.b16 %v6174
    %v6687 = vunpack.c.l.b16 %v6175
    %v6688 = vunpack.c.l.b16 %v6176
    %v6689 = vunpack.c.l.b16 %v6177
    %v6690 = vunpack.c.l.b16 %v6178
    %v6691 = vunpack.c.l.b16 %v6179
    %v6692 = vunpack.c.l.b16 %v6180
    %v6693 = vunpack.c.l.b16 %v6181
    %v6694 = vunpack.c.l.b16 %v6182
    %v6695 = vunpack.c.l.b16 %v6183
    %v6696 = vunpack.c.l.b16 %v6184
    %v6697 = vunpack.c.l.b16 %v6185
    %v6698 = vunpack.c.l.b16 %v6186
    %v6699 = vunpack.c.l.b16 %v6187
    %v6700 = vunpack.c.l.b16 %v6188
    %v6701 = vunpack.c.l.b16 %v6189
    %v6702 = vunpack.c.l.b16 %v6190
    %v6703 = vunpack.c.l.b16 %v6191
    %v6704 = vunpack.c.l.b16 %v6192
    %v6705 = vunpack.c.l.b16 %v6193
    %v6706 = vunpack.c.l.b16 %v6194
    %v6707 = vunpack.c.l.b16 %v6195
    %v6708 = vunpack.c.l.b16 %v6196
    %v6709 = vunpack.c.l.b16 %v6197
    %v6710 = vunpack.c.l.b16 %v6198
    %v6711 = vunpack.c.l.b16 %v6199
    %v6712 = vunpack.c.l.b16 %v6200
    %v6713 = vunpack.c.l.b16 %v6201
    %v6714 = vunpack.c.l.b16 %v6202
    %v6715 = vunpack.c.l.b16 %v6203
    %v6716 = vunpack.c.l.b16 %v6204
    %v6717 = vunpack.c.l.b16 %v6205
    %v6718 = vunpack.c.l.b16 %v6206
    %v6719 = vunpack.c.l.b16 %v6207
    %v6720 = vunpack.c.l.b16 %v6208
    %v6721 = vunpack.c.l.b16 %v6209
    %v6722 = vunpack.c.l.b16 %v6210
    %v6723 = vunpack.c.l.b16 %v6211
    %v6724 = vunpack.c.l.b16 %v6212
    %v6725 = vunpack.c.l.b16 %v6213
    %v6726 = vunpack.c.l.b16 %v6214
    %v6727 = vunpack.c.l.b16 %v6215
    %v6728 = vunpack.c.l.b16 %v6216
    %v6729 = vunpack.c.l.b16 %v6217
    %v6730 = vunpack.c.l.b16 %v6218
    %v6731 = vunpack.c.l.b16 %v6219
    %v6732 = vunpack.c.l.b16 %v6220
    %v6733 = vunpack.c.l.b16 %v6221
    %v6734 = vunpack.c.l.b16 %v6222
    %v6735 = vunpack.c.l.b16 %v6223
    %v6736 = vunpack.c.l.b16 %v6224
    %v6737 = vunpack.c.l.b16 %v6225
    %v6738 = vunpack.c.l.b16 %v6226
    %v6739 = vunpack.c.l.b16 %v6227
    %v6740 = vunpack.c.l.b16 %v6228
    %v6741 = vunpack.c.l.b16 %v6229
    %v6742 = vunpack.c.l.b16 %v6230
    %v6743 = vunpack.c.l.b16 %v6231
    %v6744 = vunpack.c.l.b16 %v6232
    %v6745 = vunpack.c.l.b16 %v6233
    %v6746 = vunpack.c.l.b16 %v6234
    %v6747 = vunpack.c.l.b16 %v6235
    %v6748 = vunpack.c.l.b16 %v6236
    %v6749 = vunpack.c.l.b16 %v6237
    %v6750 = vunpack.c.l.b16 %v6238
    %v6751 = vunpack.c.l.b16 %v6239
    %v6752 = vunpack.c.l.b16 %v6240
    %v6753 = vunpack.c.l.b16 %v6241
    %v6754 = vunpack.c.l.b16 %v6242
    %v6755 = vunpack.c.l.b16 %v6243
    %v6756 = vunpack.c.l.b16 %v6244
    %v6757 = vunpack.c.l.b16 %v6245
    %v6758 = vunpack.c.l.b16 %v6246
    %v6759 = vunpack.c.l.b16 %v6247
    %v6760 = vunpack.c.l.b16 %v6248
    %v6761 = vunpack.c.l.b16 %v6249
    %v6762 = vunpack.c.l.b16 %v6250
    %v6763 = vunpack.c.l.b16 %v6251
    %v6764 = vunpack.c.l.b16 %v6252
    %v6765 = vunpack.c.l.b16 %v6253
    %v6766 = vunpack.c.l.b16 %v6254
    %v6767 = vunpack.c.l.b16 %v6255
    %v6768 = vunpack.c.l.b16 %v6256
    %v6769 = vunpack.c.l.b16 %v6257
    %v6770 = vunpack.c.l.b16 %v6258
    %v6771 = vunpack.c.l.b16 %v6259
    %v6772 = vunpack.c.l.b16 %v6260
    %v6773 = vunpack.c.l.b16 %v6261
    %v6774 = vunpack.c.l.b16 %v6262
    %v6775 = vunpack.c.l.b16 %v6263
    %v6776 = vunpack.c.l.b16 %v6264
    %v6777 = vunpack.c.l.b16 %v6265
    %v6778 = vunpack.c.l.b16 %v6266
    %v6779 = vunpack.c.l.b16 %v6267
    %v6780 = vunpack.c.l.b16 %v6268
    %v6781 = vunpack.c.l.b16 %v6269
    %v6782 = vunpack.c.l.b16 %v6270
    %v6783 = vunpack.c.l.b16 %v6271
    %v6784 = vunpack.c.l.b16 %v6272
    %v6785 = vunpack.c.l.b16 %v6273
    %v6786 = vunpack.c.l.b16 %v6274
    %v6787 = vunpack.c.l.b16 %v6275
    %v6788 = vunpack.c.l.b16 %v6276
    %v6789 = vunpack.c.l.b16 %v6277
    %v6790 = vunpack.c.l.b16 %v6278
    %v6791 = vunpack.c.l.b16 %v6279
    %v6792 = vunpack.c.l.b16 %v6280
    %v6793 = vunpack.c.l.b16 %v6281
    %v6794 = vunpack.c.l.b16 %v6282
    %v6795 = vunpack.c.l.b16 %v6283
    %v6796 = vunpack.c.l.b16 %v6284
    %v6797 = vunpack.c.l.b16 %v6285
    %v6798 = vunpack.c.l.b16 %v6286
    %v6799 = vunpack.c.l.b16 %v6287
    %v6800 = vunpack.c.l.b16 %v6288
    %v6801 = vunpack.c.l.b16 %v6289
    %v6802 = vunpack.c.l.b16 %v6290
    %v6803 = vunpack.c.l.b16 %v6291
    %v6804 = vunpack.c.l.b16 %v6292
    %v6805 = vunpack.c.l.b16 %v6293
    %v6806 = vunpack.c.l.b16 %v6294
    %v6807 = vunpack.c.l.b16 %v6295
    %v6808 = vunpack.c.l.b16 %v6296
    %v6809 = vunpack.c.l.b16 %v6297
    %v6810 = vunpack.c.l.b16 %v6298
    %v6811 = vunpack.c.l.b16 %v6299
    %v6812 = vunpack.c.l.b16 %v6300
    %v6813 = vunpack.c.l.b16 %v6301
    %v6814 = vunpack.c.l.b16 %v6302
    %v6815 = vunpack.c.l.b16 %v6303
    %v6816 = vunpack.c.l.b16 %v6304
    %v6817 = vunpack.c.l.b16 %v6305
    %v6818 = vunpack.c.l.b16 %v6306
    %v6819 = vunpack.c.l.b16 %v6307
    %v6820 = vunpack.c.l.b16 %v6308
    %v6821 = vunpack.c.l.b16 %v6309
    %v6822 = vunpack.c.l.b16 %v6310
    %v6823 = vunpack.c.l.b16 %v6311
    %v6824 = vunpack.c.l.b16 %v6312
    %v6825 = vunpack.c.l.b16 %v6313
    %v6826 = vunpack.c.l.b16 %v6314
    %v6827 = vunpack.c.l.b16 %v6315
    %v6828 = vunpack.c.l.b16 %v6316
    %v6829 = vunpack.c.l.b16 %v6317
    %v6830 = vunpack.c.l.b16 %v6318
    %v6831 = vunpack.c.l.b16 %v6319
    %v6832 = vunpack.c.l.b16 %v6320
    %v6833 = vunpack.c.l.b16 %v6321
    %v6834 = vunpack.c.l.b16 %v6322
    %v6835 = vunpack.c.l.b16 %v6323
    %v6836 = vunpack.c.l.b16 %v6324
    %v6837 = vunpack.c.l.b16 %v6325
    %v6838 = vunpack.c.l.b16 %v6326
    %v6839 = vunpack.c.l.b16 %v6327
    %v6840 = vunpack.c.l.b16 %v6328
    %v6841 = vunpack.c.l.b16 %v6329
    %v6842 = vunpack.c.l.b16 %v6330
    %v6843 = vunpack.c.l.b16 %v6331
    %v6844 = vunpack.c.l.b16 %v6332
    %v6845 = vunpack.c.l.b16 %v6333
    %v6846 = vunpack.c.l.b16 %v6334
    %v6847 = vunpack.c.l.b16 %v6335
    %v6848 = vunpack.c.l.b16 %v6336
    %v6849 = vunpack.c.l.b16 %v6337
    %v6850 = vunpack.c.l.b16 %v6338
    %v6851 = vunpack.c.l.b16 %v6339
    %v6852 = vunpack.c.l.b16 %v6340
    %v6853 = vunpack.c.l.b16 %v6341
    %v6854 = vunpack.c.l.b16 %v6342
    %v6855 = vunpack.c.l.b16 %v6343
    %v6856 = vunpack.c.l.b16 %v6344
    %v6857 = vunpack.c.l.b16 %v6345
    %v6858 = vunpack.c.l.b16 %v6346
    %v6859 = vunpack.c.l.b16 %v6347
    %v6860 = vunpack.c.l.b16 %v6348
    %v6861 = vunpack.c.l.b16 %v6349
    %v6862 = vunpack.c.l.b16 %v6350
    %v6863 = vunpack.c.l.b16 %v6351
    %v6864 = vunpack.c.l.b16 %v6352
    %v6865 = vunpack.c.l.b16 %v6353
    %v6866 = vunpack.c.l.b16 %v6354
    %v6867 = vunpack.c.l.b16 %v6355
    %v6868 = vunpack.c.l.b16 %v6356
    %v6869 = vunpack.c.l.b16 %v6357
    %v6870 = vunpack.c.l.b16 %v6358
    %v6871 = vunpack.c.l.b16 %v6359
    %v6872 = vunpack.c.l.b16 %v6360
    %v6873 = vunpack.c.l.b16 %v6361
    %v6874 = vunpack.c.l.b16 %v6362
    %v6875 = vunpack.c.l.b16 %v6363
    %v6876 = vunpack.c.l.b16 %v6364
    %v6877 = vunpack.c.l.b16 %v6365
    %v6878 = vunpack.c.l.b16 %v6366
    %v6879 = vunpack.c.l.b16 %v6367
    %v6880 = vunpack.c.l.b16 %v6368
    %v6881 = vunpack.c.l.b16 %v6369
    %v6882 = vunpack.c.l.b16 %v6370
    %v6883 = vunpack.c.l.b16 %v6371
    %v6884 = vunpack.c.l.b16 %v6372
    %v6885 = vunpack.c.l.b16 %v6373
    %v6886 = vunpack.c.l.b16 %v6374
    %v6887 = vunpack.c.l.b16 %v6375
    %v6888 = vunpack.c.l.b16 %v6376
    %v6889 = vunpack.c.l.b16 %v6377
    %v6890 = vunpack.c.l.b16 %v6378
    %v6891 = vunpack.c.l.b16 %v6379
    %v6892 = vunpack.c.l.b16 %v6380
    %v6893 = vunpack.c.l.b16 %v6381
    %v6894 = vunpack.c.l.b16 %v6382
    %v6895 = vunpack.c.l.b16 %v6383
    %v6896 = vunpack.c.l.b16 %v6384
    %v6897 = vunpack.c.l.b16 %v6385
    %v6898 = vunpack.c.l.b16 %v6386
    %v6899 = vunpack.c.l.b16 %v6387
    %v6900 = vunpack.c.l.b16 %v6388
    %v6901 = vunpack.c.l.b16 %v6389
    %v6902 = vunpack.c.l.b16 %v6390
    %v6903 = vunpack.c.l.b16 %v6391
    %v6904 = vunpack.c.l.b16 %v6392
    %v6905 = vunpack.c.l.b16 %v6393
    %v6906 = vunpack.c.l.b16 %v6394
    %v6907 = vunpack.c.l.b16 %v6395
    %v6908 = vunpack.c.l.b16 %v6396
    %v6909 = vunpack.c.l.b16 %v6397
    %v6910 = vunpack.c.l.b16 %v6398
    %v6911 = vunpack.c.l.b16 %v6399
    %v6912 = vunpack.c.l.b16 %v6400
    %v6913 = vunpack.c.l.b16 %v6401
    %v6914 = vunpack.c.l.b16 %v6402
    %v6915 = vunpack.c.l.b16 %v6403
    %v6916 = vunpack.c.l.b16 %v6404
    %v6917 = vunpack.c.l.b16 %v6405
    %v6918 = vunpack.c.l.b16 %v6406
    %v6919 = vunpack.c.l.b16 %v6407
    %v6920 = vunpack.c.l.b16 %v6408
    %v6921 = vunpack.c.l.b16 %v6409
    %v6922 = vunpack.c.l.b16 %v6410
    %v6923 = vunpack.c.l.b16 %v6411
    %v6924 = vunpack.c.l.b16 %v6412
    %v6925 = vunpack.c.l.b16 %v6413
    %v6926 = vunpack.c.l.b16 %v6414
    %v6927 = vunpack.c.l.b16 %v6415
    %v6928 = vunpack.c.l.b16 %v6416
    %v6929 = vunpack.c.l.b16 %v6417
    %v6930 = vunpack.c.l.b16 %v6418
    %v6931 = vunpack.c.l.b16 %v6419
    %v6932 = vunpack.c.l.b16 %v6420
    %v6933 = vunpack.c.l.b16 %v6421
    %v6934 = vunpack.c.l.b16 %v6422
    %v6935 = vunpack.c.l.b16 %v6423
    %v6936 = vpack.c.b16 %v6681, %v6680
    %v6937 = vpack.c.b16 %v6683, %v6682
    %v6938 = vpack.c.b16 %v6685, %v6684
    %v6939 = vpack.c.b16 %v6687, %v6686
    %v6940 = vpack.c.b16 %v6689, %v6688
    %v6941 = vpack.c.b16 %v6691, %v6690
    %v6942 = vpack.c.b16 %v6693, %v6692
    %v6943 = vpack.c.b16 %v6695, %v6694
    %v6944 = vpack.c.b16 %v6697, %v6696
    %v6945 = vpack.c.b16 %v6699, %v6698
    %v6946 = vpack.c.b16 %v6701, %v6700
    %v6947 = vpack.c.b16 %v6703, %v6702
    %v6948 = vpack.c.b16 %v6705, %v6704
    %v6949 = vpack.c.b16 %v6707, %v6706
    %v6950 = vpack.c.b16 %v6709, %v6708
    %v6951 = vpack.c.b16 %v6711, %v6710
    %v6952 = vpack.c.b16 %v6713, %v6712
    %v6953 = vpack.c.b16 %v6715, %v6714
    %v6954 = vpack.c.b16 %v6717, %v6716
    %v6955 = vpack.c.b16 %v6719, %v6718
    %v6956 = vpack.c.b16 %v6721, %v6720
    %v6957 = vpack.c.b16 %v6723, %v6722
    %v6958 = vpack.c.b16 %v6725, %v6724
    %v6959 = vpack.c.b16 %v6727, %v6726
    %v6960 = vpack.c.b16 %v6729, %v6728
    %v6961 = vpack.c.b16 %v6731, %v6730
    %v6962 = vpack.c.b16 %v6733, %v6732
    %v6963 = vpack.c.b16 %v6735, %v6734
    %v6964 = vpack.c.b16 %v6737, %v6736
    %v6965 = vpack.c.b16 %v6739, %v6738
    %v6966 = vpack.c.b16 %v6741, %v6740
    %v6967 = vpack.c.b16 %v6743, %v6742
    %v6968 = vpack.c.b16 %v6745, %v6744
    %v6969 = vpack.c.b16 %v6747, %v6746
    %v6970 = vpack.c.b16 %v6749, %v6748
    %v6971 = vpack.c.b16 %v6751, %v6750
    %v6972 = vpack.c.b16 %v6753, %v6752
    %v6973 = vpack.c.b16 %v6755, %v6754
    %v6974 = vpack.c.b16 %v6757, %v6756
    %v6975 = vpack.c.b16 %v6759, %v6758
    %v6976 = vpack.c.b16 %v6761, %v6760
    %v6977 = vpack.c.b16 %v6763, %v6762
    %v6978 = vpack.c.b16 %v6765, %v6764
    %v6979 = vpack.c.b16 %v6767, %v6766
    %v6980 = vpack.c.b16 %v6769, %v6768
    %v6981 = vpack.c.b16 %v6771, %v6770
    %v6982 = vpack.c.b16 %v6773, %v6772
    %v6983 = vpack.c.b16 %v6775, %v6774
    %v6984 = vpack.c.b16 %v6777, %v6776
    %v6985 = vpack.c.b16 %v6779, %v6778
    %v6986 = vpack.c.b16 %v6781, %v6780
    %v6987 = vpack.c.b16 %v6783, %v6782
    %v6988 = vpack.c.b16 %v6785, %v6784
    %v6989 = vpack.c.b16 %v6787, %v6786
    %v6990 = vpack.c.b16 %v6789, %v6788
    %v6991 = vpack.c.b16 %v6791, %v6790
    %v6992 = vpack.c.b16 %v6793, %v6792
    %v6993 = vpack.c.b16 %v6795, %v6794
    %v6994 = vpack.c.b16 %v6797, %v6796
    %v6995 = vpack.c.b16 %v6799, %v6798
    %v6996 = vpack.c.b16 %v6801, %v6800
    %v6997 = vpack.c.b16 %v6803, %v6802
    %v6998 = vpack.c.b16 %v6805, %v6804
    %v6999 = vpack.c.b16 %v6807, %v6806
    %v7000 = vpack.c.b16 %v6809, %v6808
    %v7001 = vpack.c.b16 %v6811, %v6810
    %v7002 = vpack.c.b16 %v6813, %v6812
    %v7003 = vpack.c.b16 %v6815, %v6814
    %v7004 = vpack.c.b16 %v6817, %v6816
    %v7005 = vpack.c.b16 %v6819, %v6818
    %v7006 = vpack.c.b16 %v6821, %v6820
    %v7007 = vpack.c.b16 %v6823, %v6822
    %v7008 = vpack.c.b16 %v6825, %v6824
    %v7009 = vpack.c.b16 %v6827, %v6826
    %v7010 = vpack.c.b16 %v6829, %v6828
    %v7011 = vpack.c.b16 %v6831, %v6830
    %v7012 = vpack.c.b16 %v6833, %v6832
    %v7013 = vpack.c.b16 %v6835, %v6834
    %v7014 = vpack.c.b16 %v6837, %v6836
    %v7015 = vpack.c.b16 %v6839, %v6838
    %v7016 = vpack.c.b16 %v6841, %v6840
    %v7017 = vpack.c.b16 %v6843, %v6842
    %v7018 = vpack.c.b16 %v6845, %v6844
    %v7019 = vpack.c.b16 %v6847, %v6846
    %v7020 = vpack.c.b16 %v6849, %v6848
    %v7021 = vpack.c.b16 %v6851, %v6850
    %v7022 = vpack.c.b16 %v6853, %v6852
    %v7023 = vpack.c.b16 %v6855, %v6854
    %v7024 = vpack.c.b16 %v6857, %v6856
    %v7025 = vpack.c.b16 %v6859, %v6858
    %v7026 = vpack.c.b16 %v6861, %v6860
    %v7027 = vpack.c.b16 %v6863, %v6862
    %v7028 = vpack.c.b16 %v6865, %v6864
    %v7029 = vpack.c.b16 %v6867, %v6866
    %v7030 = vpack.c.b16 %v6869, %v6868
    %v7031 = vpack.c.b16 %v6871, %v6870
    %v7032 = vpack.c.b16 %v6873, %v6872
    %v7033 = vpack.c.b16 %v6875, %v6874
    %v7034 = vpack.c.b16 %v6877, %v6876
    %v7035 = vpack.c.b16 %v6879, %v6878
    %v7036 = vpack.c.b16 %v6881, %v6880
    %v7037 = vpack.c.b16 %v6883, %v6882
    %v7038 = vpack.c.b16 %v6885, %v6884
    %v7039 = vpack.c.b16 %v6887, %v6886
    %v7040 = vpack.c.b16 %v6889, %v6888
    %v7041 = vpack.c.b16 %v6891, %v6890
    %v7042 = vpack.c.b16 %v6893, %v6892
    %v7043 = vpack.c.b16 %v6895, %v6894
    %v7044 = vpack.c.b16 %v6897, %v6896
    %v7045 = vpack.c.b16 %v6899, %v6898
    %v7046 = vpack.c.b16 %v6901, %v6900
    %v7047 = vpack.c.b16 %v6903, %v6902
    %v7048 = vpack.c.b16 %v6905, %v6904
    %v7049 = vpack.c.b16 %v6907, %v6906
    %v7050 = vpack.c.b16 %v6909, %v6908
    %v7051 = vpack.c.b16 %v6911, %v6910
    %v7052 = vpack.c.b16 %v6913, %v6912
    %v7053 = vpack.c.b16 %v6915, %v6914
    %v7054 = vpack.c.b16 %v6917, %v6916
    %v7055 = vpack.c.b16 %v6919, %v6918
    %v7056 = vpack.c.b16 %v6921, %v6920
    %v7057 = vpack.c.b16 %v6923, %v6922
    %v7058 = vpack.c.b16 %v6925, %v6924
    %v7059 = vpack.c.b16 %v6927, %v6926
    %v7060 = vpack.c.b16 %v6929, %v6928
    %v7061 = vpack.c.b16 %v6931, %v6930
    %v7062 = vpack.c.b16 %v6933, %v6932
    %v7063 = vpack.c.b16 %v6935, %v6934
    %7192 = vmatpush.bf16.msra.mxu0 %v6943
    %7193 = vmatpush.bf16.msra.mxu0 %v6942
    %7194 = vmatpush.bf16.msra.mxu0 %v6941
    %7195 = vmatpush.bf16.msra.mxu0 %v6940
    %7196 = vmatpush.bf16.msra.mxu0 %v6939
    %7197 = vmatpush.bf16.msra.mxu0 %v6938
    %7198 = vmatpush.bf16.msra.mxu0 %v6937
    %7199 = vmatpush.bf16.msra.mxu0 %v6936
    %7200 = vmatmul.bf16.gmra.mxu0 %v6120
    %v7201 = vpop.f32.mrf.mxu0
    %v7202 = vadd.f32 0.0, %v7201
    %v7203 = vpop.f32.mrf.mxu0
    %7204 = vmatmul.bf16.gmra.mxu0 %v6136
    %v7205 = vpop.f32.mrf.mxu0
    %v7206 = vpop.f32.mrf.mxu0
    %v7207 = vadd.f32 0.0, %v7206
    %7208 = vmatmul.bf16.gmra.mxu0 %v6152
    %v7209 = vpop.f32.mrf.mxu0
    %v7210 = vpop.f32.mrf.mxu0
    %7211 = vdwg.mxu0
    %7212 = vmatpush.bf16.msra.mxu0 %v6951
    %7213 = vmatpush.bf16.msra.mxu0 %v6950
    %7214 = vmatpush.bf16.msra.mxu0 %v6949
    %7215 = vmatpush.bf16.msra.mxu0 %v6948
    %7216 = vmatpush.bf16.msra.mxu0 %v6947
    %7217 = vmatpush.bf16.msra.mxu0 %v6946
    %7218 = vmatpush.bf16.msra.mxu0 %v6945
    %7219 = vmatpush.bf16.msra.mxu0 %v6944
    %7220 = vmatmul.bf16.gmra.mxu0 %v6121
    %v7221 = vpop.f32.mrf.mxu0
    %v7222 = vadd.f32 %v7202, %v7221
    %v7223 = vpop.f32.mrf.mxu0
    %7224 = vmatmul.bf16.gmra.mxu0 %v6137
    %v7225 = vpop.f32.mrf.mxu0
    %v7226 = vpop.f32.mrf.mxu0
    %v7227 = vadd.f32 %v7207, %v7226
    %7228 = vmatmul.bf16.gmra.mxu0 %v6153
    %v7229 = vpop.f32.mrf.mxu0
    %v7230 = vpop.f32.mrf.mxu0
    %7231 = vdwg.mxu0
    %7232 = vmatpush.bf16.msra.mxu0 %v6959
    %7233 = vmatpush.bf16.msra.mxu0 %v6958
    %7234 = vmatpush.bf16.msra.mxu0 %v6957
    %7235 = vmatpush.bf16.msra.mxu0 %v6956
    %7236 = vmatpush.bf16.msra.mxu0 %v6955
    %7237 = vmatpush.bf16.msra.mxu0 %v6954
    %7238 = vmatpush.bf16.msra.mxu0 %v6953
    %7239 = vmatpush.bf16.msra.mxu0 %v6952
    %7240 = vmatmul.bf16.gmra.mxu0 %v6122
    %v7241 = vpop.f32.mrf.mxu0
    %v7242 = vadd.f32 %v7222, %v7241
    %v7243 = vpop.f32.mrf.mxu0
    %7244 = vmatmul.bf16.gmra.mxu0 %v6138
    %v7245 = vpop.f32.mrf.mxu0
    %v7246 = vpop.f32.mrf.mxu0
    %v7247 = vadd.f32 %v7227, %v7246
    %7248 = vmatmul.bf16.gmra.mxu0 %v6154
    %v7249 = vpop.f32.mrf.mxu0
    %v7250 = vpop.f32.mrf.mxu0
    %7251 = vdwg.mxu0
    %7252 = vmatpush.bf16.msra.mxu0 %v6967
    %7253 = vmatpush.bf16.msra.mxu0 %v6966
    %7254 = vmatpush.bf16.msra.mxu0 %v6965
    %7255 = vmatpush.bf16.msra.mxu0 %v6964
    %7256 = vmatpush.bf16.msra.mxu0 %v6963
    %7257 = vmatpush.bf16.msra.mxu0 %v6962
    %7258 = vmatpush.bf16.msra.mxu0 %v6961
    %7259 = vmatpush.bf16.msra.mxu0 %v6960
    %7260 = vmatmul.bf16.gmra.mxu0 %v6123
    %v7261 = vpop.f32.mrf.mxu0
    %v7262 = vadd.f32 %v7242, %v7261
    %v7263 = vpop.f32.mrf.mxu0
    %7264 = vmatmul.bf16.gmra.mxu0 %v6139
    %v7265 = vpop.f32.mrf.mxu0
    %v7266 = vpop.f32.mrf.mxu0
    %v7267 = vadd.f32 %v7247, %v7266
    %7268 = vmatmul.bf16.gmra.mxu0 %v6155
    %v7269 = vpop.f32.mrf.mxu0
    %v7270 = vpop.f32.mrf.mxu0
    %7271 = vdwg.mxu0
    %7272 = vmatpush.bf16.msra.mxu0 %v6975
    %7273 = vmatpush.bf16.msra.mxu0 %v6974
    %7274 = vmatpush.bf16.msra.mxu0 %v6973
    %7275 = vmatpush.bf16.msra.mxu0 %v6972
    %7276 = vmatpush.bf16.msra.mxu0 %v6971
    %7277 = vmatpush.bf16.msra.mxu0 %v6970
    %7278 = vmatpush.bf16.msra.mxu0 %v6969
    %7279 = vmatpush.bf16.msra.mxu0 %v6968
    %7280 = vmatmul.bf16.gmra.mxu0 %v6124
    %v7281 = vpop.f32.mrf.mxu0
    %v7282 = vadd.f32 %v7262, %v7281
    %v7283 = vpop.f32.mrf.mxu0
    %7284 = vmatmul.bf16.gmra.mxu0 %v6140
    %v7285 = vpop.f32.mrf.mxu0
    %v7286 = vpop.f32.mrf.mxu0
    %v7287 = vadd.f32 %v7267, %v7286
    %7288 = vmatmul.bf16.gmra.mxu0 %v6156
    %v7289 = vpop.f32.mrf.mxu0
    %v7290 = vpop.f32.mrf.mxu0
    %7291 = vdwg.mxu0
    %7292 = vmatpush.bf16.msra.mxu0 %v6983
    %7293 = vmatpush.bf16.msra.mxu0 %v6982
    %7294 = vmatpush.bf16.msra.mxu0 %v6981
    %7295 = vmatpush.bf16.msra.mxu0 %v6980
    %7296 = vmatpush.bf16.msra.mxu0 %v6979
    %7297 = vmatpush.bf16.msra.mxu0 %v6978
    %7298 = vmatpush.bf16.msra.mxu0 %v6977
    %7299 = vmatpush.bf16.msra.mxu0 %v6976
    %7300 = vmatmul.bf16.gmra.mxu0 %v6125
    %v7301 = vpop.f32.mrf.mxu0
    %v7302 = vadd.f32 %v7282, %v7301
    %v7303 = vpop.f32.mrf.mxu0
    %7304 = vmatmul.bf16.gmra.mxu0 %v6141
    %v7305 = vpop.f32.mrf.mxu0
    %v7306 = vpop.f32.mrf.mxu0
    %v7307 = vadd.f32 %v7287, %v7306
    %7308 = vmatmul.bf16.gmra.mxu0 %v6157
    %v7309 = vpop.f32.mrf.mxu0
    %v7310 = vpop.f32.mrf.mxu0
    %7311 = vdwg.mxu0
    %7312 = vmatpush.bf16.msra.mxu0 %v6991
    %7313 = vmatpush.bf16.msra.mxu0 %v6990
    %7314 = vmatpush.bf16.msra.mxu0 %v6989
    %7315 = vmatpush.bf16.msra.mxu0 %v6988
    %7316 = vmatpush.bf16.msra.mxu0 %v6987
    %7317 = vmatpush.bf16.msra.mxu0 %v6986
    %7318 = vmatpush.bf16.msra.mxu0 %v6985
    %7319 = vmatpush.bf16.msra.mxu0 %v6984
    %7320 = vmatmul.bf16.gmra.mxu0 %v6126
    %v7321 = vpop.f32.mrf.mxu0
    %v7322 = vadd.f32 %v7302, %v7321
    %v7323 = vpop.f32.mrf.mxu0
    %7324 = vmatmul.bf16.gmra.mxu0 %v6142
    %v7325 = vpop.f32.mrf.mxu0
    %v7326 = vpop.f32.mrf.mxu0
    %v7327 = vadd.f32 %v7307, %v7326
    %7328 = vmatmul.bf16.gmra.mxu0 %v6158
    %v7329 = vpop.f32.mrf.mxu0
    %v7330 = vpop.f32.mrf.mxu0
    %7331 = vdwg.mxu0
    %7332 = vmatpush.bf16.msra.mxu0 %v6999
    %7333 = vmatpush.bf16.msra.mxu0 %v6998
    %7334 = vmatpush.bf16.msra.mxu0 %v6997
    %7335 = vmatpush.bf16.msra.mxu0 %v6996
    %7336 = vmatpush.bf16.msra.mxu0 %v6995
    %7337 = vmatpush.bf16.msra.mxu0 %v6994
    %7338 = vmatpush.bf16.msra.mxu0 %v6993
    %7339 = vmatpush.bf16.msra.mxu0 %v6992
    %7340 = vmatmul.bf16.gmra.mxu0 %v6127
    %v7341 = vpop.f32.mrf.mxu0
    %v7342 = vadd.f32 %v7322, %v7341
    %v7343 = vpop.f32.mrf.mxu0
    %7344 = vmatmul.bf16.gmra.mxu0 %v6143
    %v7345 = vpop.f32.mrf.mxu0
    %v7346 = vpop.f32.mrf.mxu0
    %v7347 = vadd.f32 %v7327, %v7346
    %7348 = vmatmul.bf16.gmra.mxu0 %v6159
    %v7349 = vpop.f32.mrf.mxu0
    %v7350 = vpop.f32.mrf.mxu0
    %7351 = vdwg.mxu0
    %7352 = vmatpush.bf16.msra.mxu0 %v7007
    %7353 = vmatpush.bf16.msra.mxu0 %v7006
    %7354 = vmatpush.bf16.msra.mxu0 %v7005
    %7355 = vmatpush.bf16.msra.mxu0 %v7004
    %7356 = vmatpush.bf16.msra.mxu0 %v7003
    %7357 = vmatpush.bf16.msra.mxu0 %v7002
    %7358 = vmatpush.bf16.msra.mxu0 %v7001
    %7359 = vmatpush.bf16.msra.mxu0 %v7000
    %7360 = vmatmul.bf16.gmra.mxu0 %v6128
    %v7361 = vpop.f32.mrf.mxu0
    %v7362 = vadd.f32 %v7342, %v7361
    %v7363 = vpop.f32.mrf.mxu0
    %7364 = vmatmul.bf16.gmra.mxu0 %v6144
    %v7365 = vpop.f32.mrf.mxu0
    %v7366 = vpop.f32.mrf.mxu0
    %v7367 = vadd.f32 %v7347, %v7366
    %7368 = vmatmul.bf16.gmra.mxu0 %v6160
    %v7369 = vpop.f32.mrf.mxu0
    %v7370 = vpop.f32.mrf.mxu0
    %7371 = vdwg.mxu0
    %7372 = vmatpush.bf16.msra.mxu0 %v7015
    %7373 = vmatpush.bf16.msra.mxu0 %v7014
    %7374 = vmatpush.bf16.msra.mxu0 %v7013
    %7375 = vmatpush.bf16.msra.mxu0 %v7012
    %7376 = vmatpush.bf16.msra.mxu0 %v7011
    %7377 = vmatpush.bf16.msra.mxu0 %v7010
    %7378 = vmatpush.bf16.msra.mxu0 %v7009
    %7379 = vmatpush.bf16.msra.mxu0 %v7008
    %7380 = vmatmul.bf16.gmra.mxu0 %v6129
    %v7381 = vpop.f32.mrf.mxu0
    %v7382 = vadd.f32 %v7362, %v7381
    %v7383 = vpop.f32.mrf.mxu0
    %7384 = vmatmul.bf16.gmra.mxu0 %v6145
    %v7385 = vpop.f32.mrf.mxu0
    %v7386 = vpop.f32.mrf.mxu0
    %v7387 = vadd.f32 %v7367, %v7386
    %7388 = vmatmul.bf16.gmra.mxu0 %v6161
    %v7389 = vpop.f32.mrf.mxu0
    %v7390 = vpop.f32.mrf.mxu0
    %7391 = vdwg.mxu0
    %7392 = vmatpush.bf16.msra.mxu0 %v7023
    %7393 = vmatpush.bf16.msra.mxu0 %v7022
    %7394 = vmatpush.bf16.msra.mxu0 %v7021
    %7395 = vmatpush.bf16.msra.mxu0 %v7020
    %7396 = vmatpush.bf16.msra.mxu0 %v7019
    %7397 = vmatpush.bf16.msra.mxu0 %v7018
    %7398 = vmatpush.bf16.msra.mxu0 %v7017
    %7399 = vmatpush.bf16.msra.mxu0 %v7016
    %7400 = vmatmul.bf16.gmra.mxu0 %v6130
    %v7401 = vpop.f32.mrf.mxu0
    %v7402 = vadd.f32 %v7382, %v7401
    %v7403 = vpop.f32.mrf.mxu0
    %7404 = vmatmul.bf16.gmra.mxu0 %v6146
    %v7405 = vpop.f32.mrf.mxu0
    %v7406 = vpop.f32.mrf.mxu0
    %v7407 = vadd.f32 %v7387, %v7406
    %7408 = vmatmul.bf16.gmra.mxu0 %v6162
    %v7409 = vpop.f32.mrf.mxu0
    %v7410 = vpop.f32.mrf.mxu0
    %7411 = vdwg.mxu0
    %7412 = vmatpush.bf16.msra.mxu0 %v7031
    %7413 = vmatpush.bf16.msra.mxu0 %v7030
    %7414 = vmatpush.bf16.msra.mxu0 %v7029
    %7415 = vmatpush.bf16.msra.mxu0 %v7028
    %7416 = vmatpush.bf16.msra.mxu0 %v7027
    %7417 = vmatpush.bf16.msra.mxu0 %v7026
    %7418 = vmatpush.bf16.msra.mxu0 %v7025
    %7419 = vmatpush.bf16.msra.mxu0 %v7024
    %7420 = vmatmul.bf16.gmra.mxu0 %v6131
    %v7421 = vpop.f32.mrf.mxu0
    %v7422 = vadd.f32 %v7402, %v7421
    %v7423 = vpop.f32.mrf.mxu0
    %7424 = vmatmul.bf16.gmra.mxu0 %v6147
    %v7425 = vpop.f32.mrf.mxu0
    %v7426 = vpop.f32.mrf.mxu0
    %v7427 = vadd.f32 %v7407, %v7426
    %7428 = vmatmul.bf16.gmra.mxu0 %v6163
    %v7429 = vpop.f32.mrf.mxu0
    %v7430 = vpop.f32.mrf.mxu0
    %7431 = vdwg.mxu0
    %7432 = vmatpush.bf16.msra.mxu0 %v7039
    %7433 = vmatpush.bf16.msra.mxu0 %v7038
    %7434 = vmatpush.bf16.msra.mxu0 %v7037
    %7435 = vmatpush.bf16.msra.mxu0 %v7036
    %7436 = vmatpush.bf16.msra.mxu0 %v7035
    %7437 = vmatpush.bf16.msra.mxu0 %v7034
    %7438 = vmatpush.bf16.msra.mxu0 %v7033
    %7439 = vmatpush.bf16.msra.mxu0 %v7032
    %7440 = vmatmul.bf16.gmra.mxu0 %v6132
    %v7441 = vpop.f32.mrf.mxu0
    %v7442 = vadd.f32 %v7422, %v7441
    %v7443 = vpop.f32.mrf.mxu0
    %7444 = vmatmul.bf16.gmra.mxu0 %v6148
    %v7445 = vpop.f32.mrf.mxu0
    %v7446 = vpop.f32.mrf.mxu0
    %v7447 = vadd.f32 %v7427, %v7446
    %7448 = vmatmul.bf16.gmra.mxu0 %v6164
    %v7449 = vpop.f32.mrf.mxu0
    %v7450 = vpop.f32.mrf.mxu0
    %7451 = vdwg.mxu0
    %7452 = vmatpush.bf16.msra.mxu0 %v7047
    %7453 = vmatpush.bf16.msra.mxu0 %v7046
    %7454 = vmatpush.bf16.msra.mxu0 %v7045
    %7455 = vmatpush.bf16.msra.mxu0 %v7044
    %7456 = vmatpush.bf16.msra.mxu0 %v7043
    %7457 = vmatpush.bf16.msra.mxu0 %v7042
    %7458 = vmatpush.bf16.msra.mxu0 %v7041
    %7459 = vmatpush.bf16.msra.mxu0 %v7040
    %7460 = vmatmul.bf16.gmra.mxu0 %v6133
    %v7461 = vpop.f32.mrf.mxu0
    %v7462 = vadd.f32 %v7442, %v7461
    %v7463 = vpop.f32.mrf.mxu0
    %7464 = vmatmul.bf16.gmra.mxu0 %v6149
    %v7465 = vpop.f32.mrf.mxu0
    %v7466 = vpop.f32.mrf.mxu0
    %v7467 = vadd.f32 %v7447, %v7466
    %7468 = vmatmul.bf16.gmra.mxu0 %v6165
    %v7469 = vpop.f32.mrf.mxu0
    %v7470 = vpop.f32.mrf.mxu0
    %7471 = vdwg.mxu0
    %7472 = vmatpush.bf16.msra.mxu0 %v7055
    %7473 = vmatpush.bf16.msra.mxu0 %v7054
    %7474 = vmatpush.bf16.msra.mxu0 %v7053
    %7475 = vmatpush.bf16.msra.mxu0 %v7052
    %7476 = vmatpush.bf16.msra.mxu0 %v7051
    %7477 = vmatpush.bf16.msra.mxu0 %v7050
    %7478 = vmatpush.bf16.msra.mxu0 %v7049
    %7479 = vmatpush.bf16.msra.mxu0 %v7048
    %7480 = vmatmul.bf16.gmra.mxu0 %v6134
    %v7481 = vpop.f32.mrf.mxu0
    %v7482 = vadd.f32 %v7462, %v7481
    %v7483 = vpop.f32.mrf.mxu0
    %7484 = vmatmul.bf16.gmra.mxu0 %v6150
    %v7485 = vpop.f32.mrf.mxu0
    %v7486 = vpop.f32.mrf.mxu0
    %v7487 = vadd.f32 %v7467, %v7486
    %7488 = vmatmul.bf16.gmra.mxu0 %v6166
    %v7489 = vpop.f32.mrf.mxu0
    %v7490 = vpop.f32.mrf.mxu0
    %7491 = vdwg.mxu0
    %7492 = vmatpush.bf16.msra.mxu0 %v7063
    %7493 = vmatpush.bf16.msra.mxu0 %v7062
    %7494 = vmatpush.bf16.msra.mxu0 %v7061
    %7495 = vmatpush.bf16.msra.mxu0 %v7060
    %7496 = vmatpush.bf16.msra.mxu0 %v7059
    %7497 = vmatpush.bf16.msra.mxu0 %v7058
    %7498 = vmatpush.bf16.msra.mxu0 %v7057
    %7499 = vmatpush.bf16.msra.mxu0 %v7056
    %7500 = vmatmul.bf16.gmra.mxu0 %v6135
    %v7501 = vpop.f32.mrf.mxu0
    %v7502 = vadd.f32 %v7482, %v7501
    %v7503 = vpop.f32.mrf.mxu0
    %7504 = vmatmul.bf16.gmra.mxu0 %v6151
    %v7505 = vpop.f32.mrf.mxu0
    %v7506 = vpop.f32.mrf.mxu0
    %v7507 = vadd.f32 %v7487, %v7506
    %7508 = vmatmul.bf16.gmra.mxu0 %v6167
    %v7509 = vpop.f32.mrf.mxu0
    %v7510 = vpop.f32.mrf.mxu0
    %7511 = vdwg.mxu0
    %v7512 = vadd.f32 %v5242, %v7502
    %v7513 = vadd.f32 %v5245, %v7507
    %v7514 = vld [vmem:[%s53] sm:$0x1]
    %v7516 = vperm.slane %v7514, 0
    %v7518 = vadd.f32 %v7512, %v7516
    %v7519 = vadd.f32 %v7513, %v7516
    %v7520 = vld [vmem:[%s55] sm:$0x1]
    %v7521 = vld [vmem:[%s57] sm:$0x1]
    %v7524 = vrot.slane %v7519, 7
    %vm7525 = vcmask 1041409
    %v7526 = vsel %vm7525, %v7524, %v7518
    %vm7528 = vcmask 254976
    %v7529 = vsel %vm7528, %v7526, 0.0
    %7530 = vadd.xlane.f32.xlu0 %v7529
    %v7531 = vpop.xlane.xlu0 %7530
    %v7532 = vmul.f32 %v7531, %v239
    %v7534 = vrot.slane %v7532, 1
    %v7537 = vsub.f32 %v7518, %v7532
    %v7538 = vsub.f32 %v7519, %v7534
    %v7539 = vmul.f32 %v7537, %v7537
    %v7540 = vmul.f32 %v7538, %v7538
    %v7543 = vrot.slane %v7540, 7
    %v7544 = vsel %vm7525, %v7543, %v7539
    %v7546 = vsel %vm7528, %v7544, 0.0
    %7547 = vadd.xlane.f32.xlu0 %v7546
    %v7548 = vpop.xlane.xlu0 %7547
    %v7549 = vmul.f32 %v7548, %v239
    %v7550 = vadd.f32 %v7549, 1e-05
    %v7551 = vrsqrt.pop %v7550
    %v7552 = vmul.f32 %v7551, %v7550
    %v7553 = vmul.f32 %v7552, %v7551
    %v7554 = vmul.f32 0.5, %v7553
    %v7555 = vsub.f32 1.5, %v7554
    %v7556 = vmul.f32 %v7551, %v7555
    %vm7557 = vweird.f32 %v7550
    %vm7558 = vweird.f32 %v7551
    %vm7559 = vmor %vm7557, %vm7558
    %v7560 = vsel %vm7559, %v7551, %v7556
    %v7562 = vrot.slane %v7560, 1
    %v7565 = vmul.f32 %v7537, %v7560
    %v7566 = vmul.f32 %v7538, %v7562
    %v7568 = vperm.slane %v7520, 0
    %v7570 = vmul.f32 %v7565, %v7568
    %v7571 = vmul.f32 %v7566, %v7568
    %v7573 = vperm.slane %v7521, 0
    %v7575 = vadd.f32 %v7570, %v7573
    %v7576 = vadd.f32 %v7571, %v7573
    %v7577 = vpack.c.bf16 %v7575, %v7575
    %v7578 = vpack.c.bf16 %v7576, %v7576
    %v7579 = vld [vmem:[%s59] sm:$0xf]
    %v7580 = vld [vmem:[%s59 + $0x4] sm:$0xf]
    %v7581 = vld [vmem:[%s59 + $0x8] sm:$0xf]
    %v7582 = vld [vmem:[%s59 + $0xc] sm:$0xf]
    %v7583 = vld [vmem:[%s61] sm:$0x1]
    %v7585 = vperm.slane %v7583, 0
    %v7589 = vunpack.c.l.b16 %v7577
    %v7590 = vunpack.c.l.b16 %v7578
    %v7591 = vrot.slane %v7590, 7
    %v7592 = vsel %vm7525, %v7591, %v7589
    %v7593 = vpack.c.b16 %v7592, %v7592
    %v7598 = vunpack.c.l.b16 %v7579
    %v7599 = vunpack.c.l.b16 %v7580
    %v7600 = vunpack.c.l.b16 %v7581
    %v7601 = vunpack.c.l.b16 %v7582
    %v7602 = vpack.c.b16 %v7599, %v7598
    %v7603 = vpack.c.b16 %v7601, %v7600
    %v7607 = vsel %vm214, %v7593, 0
    %7609 = vmatpush.bf16.msra.mxu0 0
    %7610 = vmatpush.bf16.msra.mxu0 0
    %7611 = vmatpush.bf16.msra.mxu0 0
    %7612 = vmatpush.bf16.msra.mxu0 0
    %7613 = vmatpush.bf16.msra.mxu0 0
    %7614 = vmatpush.bf16.msra.mxu0 0
    %7615 = vmatpush.bf16.msra.mxu0 %v7603
    %7616 = vmatpush.bf16.msra.mxu0 %v7602
    %7617 = vmatmul.bf16.gmra.mxu0 %v7607
    %v7618 = vpop.f32.mrf.mxu0
    %v7619 = vadd.f32 %v7585, %v7618
    %v7620 = vpop.f32.mrf.mxu0
    %7621 = vdwg.mxu0
    %vm7622 = vcmask 74752
    %7623 = vst.msk [vmem:[#allocation2] sm:$0x3] %vm7622, %v7619
    // Predicated region
    $region126: #{vit_forward.1} parent=1 // pred_check
      _
    $region127: #{vit_forward.1} parent=1 // pred_check_branch
      %7625 = sbr.rel (0) target = $region129
    $region128: #{vit_forward.1} parent=1 // pred_region
      %7627 = vsyncadd [#allocation3], 0
      %s7629 = sshll.u32 [#allocation2], 4
      %s7630 = int_to_ptr.vmem [resolvable:$true] %s7629
      %s7631 = sshll.u32 %s63, 4
      %s7632 = int_to_ptr.hbm [resolvable:$true] %s7631
      %7634 = dma.vmem_to_hbm [thread:$0]  %s7630, 32, %s7632, [#allocation3]
    $region129: #{vit_forward.1} parent=1 // pred_fallthru
      _
    // Predicated region
    $region130: #{vit_forward.1} parent=1 // pred_check
      _
    $region131: #{vit_forward.1} parent=1 // pred_check_branch
      %7636 = sbr.rel (0) target = $region133
    $region132: #{vit_forward.1} parent=1 // pred_region
      %7638 = dma.done [#allocation3], 32
    $region133: #{vit_forward.1} parent=1 // pred_fallthru
      _
    %7639 = vsyncpa [#allocation3], 1

</llo_original>
